<compile_context>
chip_gen: v7x
topology: tpu7x:2x2x1
jax: 0.10.0
libtpu: 0.0.40
codegen_flags: <defaults>
</compile_context>

<pallas_src>
import functools

import jax
import jax.numpy as jnp
from jax.experimental import pallas as pl
from jax.experimental.pallas import tpu as pltpu

EPS = 1e-5

PARAM_ORDER = [
    'ffn1_ln_w', 'ffn1_ln_b', 'ffn1_w1', 'ffn1_b1', 'ffn1_w2', 'ffn1_b2',
    'attn_ln_w', 'attn_ln_b', 'wqkv', 'bqkv', 'wo', 'bo',
    'conv_ln_w', 'conv_ln_b', 'pw1', 'pw1_b', 'dw', 'dw_b',
    'bn_w', 'bn_b', 'pw2', 'pw2_b',
    'ffn2_ln_w', 'ffn2_ln_b', 'ffn2_w1', 'ffn2_b1', 'ffn2_w2', 'ffn2_b2',
    'final_ln_w', 'final_ln_b',
]


def _layernorm(x, w, b):
    mu = jnp.mean(x, axis=-1, keepdims=True)
    var = jnp.mean((x - mu) ** 2, axis=-1, keepdims=True)
    return (x - mu) * jax.lax.rsqrt(var + EPS) * w + b


def _silu(x):
    return x * jax.nn.sigmoid(x)


# ---------------------------------------------------------------------------
# In-kernel building blocks (operate on values; everything stays in VMEM).
# ---------------------------------------------------------------------------

def _ffn_block(x, lnw, lnb, w1, b1, w2, b2):
    """Conformer FFN module with half-step residual: x + 0.5 * FFN(LN(x))."""
    B, T, D = x.shape
    h = _layernorm(x, lnw, lnb).reshape(B * T, D)
    h = jnp.dot(h, w1, preferred_element_type=jnp.float32) + b1
    h = _silu(h)
    h = jnp.dot(h, w2, preferred_element_type=jnp.float32) + b2
    return x + 0.5 * h.reshape(B, T, D)


def _mha_block(x, lnw, lnb, wqkv, bqkv, wo, bo, num_heads):
    """Pre-LN multi-head self-attention + residual (fused QKV projection)."""
    B, T, D = x.shape
    hd = D // num_heads
    scale = 1.0 / float(hd) ** 0.5
    xn = _layernorm(x, lnw, lnb).reshape(B * T, D)
    qkv = (jnp.dot(xn, wqkv, preferred_element_type=jnp.float32)
           + bqkv).reshape(B, T, 3 * D)
    q = qkv[:, :, :D] * scale
    k = qkv[:, :, D:2 * D]
    v = qkv[:, :, 2 * D:]
    acc = jnp.zeros((B * T, D), jnp.float32)
    for h in range(num_heads):              # static, num_heads = 4
        lo, hi = h * hd, (h + 1) * hd
        qh = q[:, :, lo:hi]
        kh = k[:, :, lo:hi]
        vh = v[:, :, lo:hi]
        s = jnp.einsum('btd,bsd->bts', qh, kh,
                       preferred_element_type=jnp.float32)
        s = s - jnp.max(s, axis=-1, keepdims=True)
        p = jnp.exp(s)
        p = p * pl.reciprocal(jnp.sum(p, axis=-1, keepdims=True), approx=True)
        ctx = jnp.einsum('bts,bsd->btd', p, vh,
                         preferred_element_type=jnp.float32)
        # Fold the output projection into the head loop: avoids the concat.
        acc = acc + jnp.dot(ctx.reshape(B * T, hd), wo[lo:hi, :],
                            preferred_element_type=jnp.float32)
    return x + (acc + bo).reshape(B, T, D)


def _conv_block(x, lnw, lnb, pw1, pw1b, dw, dwb, bnw, bnb, pw2, pw2b,
                gp_ref, kernel_size):
    """LN -> pw-conv -> GLU -> depthwise conv -> BN -> SiLU -> pw-conv, + residual."""
    B, T, D = x.shape
    pad = (kernel_size - 1) // 2
    xn = _layernorm(x, lnw, lnb).reshape(B * T, D)
    h = jnp.dot(xn, pw1, preferred_element_type=jnp.float32) + pw1b
    g = (h[:, :D] * jax.nn.sigmoid(h[:, D:])).reshape(B, T, D)   # GLU

    # Depthwise conv over time: write GLU output once into a zero-padded VMEM
    # scratch ref, then read each tap as a static sliced load (no concatenate,
    # no value-slice copies).
    gp_ref[:, pad:pad + T, :] = g
    acc = jnp.zeros((B, T, D), jnp.float32)
    for kk in range(kernel_size):           # static, kernel_size = 31
        acc = acc + gp_ref[:, kk:kk + T, :] * dw[kk]
    acc = acc.reshape(B * T, D) + dwb

    # BatchNorm1d, training-mode batch statistics over (B, T), biased variance.
    mu = jnp.mean(acc, axis=0, keepdims=True)
    var = jnp.mean((acc - mu) ** 2, axis=0, keepdims=True)
    y = (acc - mu) * jax.lax.rsqrt(var + EPS) * bnw + bnb
    y = _silu(y)
    out = jnp.dot(y, pw2, preferred_element_type=jnp.float32) + pw2b
    return x + out.reshape(B, T, D)


# ---------------------------------------------------------------------------
# Fused whole-model kernel (single grid point; everything VMEM-resident).
# ---------------------------------------------------------------------------

def heart_sound_kernel(
        x_ref,
        ffn1_ln_w_ref, ffn1_ln_b_ref, ffn1_w1_ref, ffn1_b1_ref,
        ffn1_w2_ref, ffn1_b2_ref,
        attn_ln_w_ref, attn_ln_b_ref, wqkv_ref, bqkv_ref, wo_ref, bo_ref,
        conv_ln_w_ref, conv_ln_b_ref, pw1_ref, pw1_b_ref, dw_ref, dw_b_ref,
        bn_w_ref, bn_b_ref, pw2_ref, pw2_b_ref,
        ffn2_ln_w_ref, ffn2_ln_b_ref, ffn2_w1_ref, ffn2_b1_ref,
        ffn2_w2_ref, ffn2_b2_ref,
        final_ln_w_ref, final_ln_b_ref,
        head_w_ref, head_b_ref,
        o_ref,
        gp_ref,
        *, num_heads, kernel_size):
    num_layers = ffn1_w1_ref.shape[0]

    # Zero the padded depthwise-conv scratch once; only the interior rows are
    # ever rewritten, so the halo rows stay zero across layers.
    gp_ref[...] = jnp.zeros_like(gp_ref)

    x = x_ref[...]
    for l in range(num_layers):             # static, num_layers = 2
        x = _ffn_block(x, ffn1_ln_w_ref[l], ffn1_ln_b_ref[l],
                       ffn1_w1_ref[l], ffn1_b1_ref[l],
                       ffn1_w2_ref[l], ffn1_b2_ref[l])
        x = _mha_block(x, attn_ln_w_ref[l], attn_ln_b_ref[l],
                       wqkv_ref[l], bqkv_ref[l], wo_ref[l], bo_ref[l],
                       num_heads)
        x = _conv_block(x, conv_ln_w_ref[l], conv_ln_b_ref[l],
                        pw1_ref[l], pw1_b_ref[l], dw_ref[l], dw_b_ref[l],
                        bn_w_ref[l], bn_b_ref[l], pw2_ref[l], pw2_b_ref[l],
                        gp_ref, kernel_size)
        x = _ffn_block(x, ffn2_ln_w_ref[l], ffn2_ln_b_ref[l],
                       ffn2_w1_ref[l], ffn2_b1_ref[l],
                       ffn2_w2_ref[l], ffn2_b2_ref[l])
        x = _layernorm(x, final_ln_w_ref[l], final_ln_b_ref[l])

    # Classifier head: mean over time commutes exactly with the affine head.
    xm = jnp.mean(x, axis=1)                                     # (B, D)
    o_ref[...] = (jnp.dot(xm, head_w_ref[...],
                          preferred_element_type=jnp.float32)
                  + head_b_ref[...])


# ---------------------------------------------------------------------------
# Wrapper, parameter init, demo.
# ---------------------------------------------------------------------------

def heart_sound_forward(x, params, head, *, num_heads, kernel_size):
    B, T, D = x.shape
    C = head['w'].shape[1]
    pad = (kernel_size - 1) // 2
    args = [x] + [params[name] for name in PARAM_ORDER] + [head['w'], head['b']]
    kernel = functools.partial(heart_sound_kernel,
                               num_heads=num_heads, kernel_size=kernel_size)
    return pl.pallas_call(
        kernel,
        out_shape=jax.ShapeDtypeStruct((B, C), jnp.float32),
        in_specs=[pl.BlockSpec(memory_space=pltpu.MemorySpace.VMEM)
                  for _ in args],
        out_specs=pl.BlockSpec(memory_space=pltpu.MemorySpace.VMEM),
        scratch_shapes=[pltpu.VMEM((B, T + 2 * pad, D), jnp.float32)],
        compiler_params=pltpu.CompilerParams(vmem_limit_bytes=64 << 20),
    )(*args)


def init_params(key, D, F, K, C, num_layers):
    def dense(k, shape, scale=0.05):
        return jax.random.normal(k, shape, jnp.float32) * scale

    L = num_layers
    ones = jnp.ones((L, 1, D), jnp.float32)
    zeros = jnp.zeros((L, 1, D), jnp.float32)
    key, *ks = jax.random.split(key, 20)
    params = dict(
        ffn1_ln_w=ones, ffn1_ln_b=zeros,
        ffn1_w1=dense(ks[0], (L, D, F)), ffn1_b1=dense(ks[1], (L, 1, F)),
        ffn1_w2=dense(ks[2], (L, F, D)), ffn1_b2=dense(ks[3], (L, 1, D)),
        attn_ln_w=ones, attn_ln_b=zeros,
        wqkv=dense(ks[4], (L, D, 3 * D)), bqkv=dense(ks[5], (L, 1, 3 * D)),
        wo=dense(ks[6], (L, D, D)), bo=dense(ks[7], (L, 1, D)),
        conv_ln_w=ones, conv_ln_b=zeros,
        pw1=dense(ks[8], (L, D, 2 * D)), pw1_b=dense(ks[9], (L, 1, 2 * D)),
        dw=dense(ks[10], (L, K, D)), dw_b=dense(ks[11], (L, 1, D)),
        bn_w=ones, bn_b=zeros,
        pw2=dense(ks[12], (L, D, D)), pw2_b=dense(ks[13], (L, 1, D)),
        ffn2_ln_w=ones, ffn2_ln_b=zeros,
        ffn2_w1=dense(ks[14], (L, D, F)), ffn2_b1=dense(ks[15], (L, 1, F)),
        ffn2_w2=dense(ks[16], (L, F, D)), ffn2_b2=dense(ks[17], (L, 1, D)),
        final_ln_w=ones, final_ln_b=zeros,
    )
    key, k1, k2 = jax.random.split(key, 3)
    head = dict(w=dense(k1, (D, C)), b=dense(k2, (1, C)))
    return params, head


if __name__ == "__main__":
    # module defaults: input_dim=64, heads=4, ffn_dim=128, layers=2, K=31, classes=4
    D, H, F, L, K, C = 64, 4, 128, 2, 31, 4
    B, T = 2, 16                       # small batch / sequence for the demo

    key = jax.random.PRNGKey(0)
    kx, kp = jax.random.split(key)
    x = jax.random.normal(kx, (B, T, D), jnp.float32)
    params, head = init_params(kp, D, F, K, C, L)

    fwd = jax.jit(functools.partial(heart_sound_forward,
                                    num_heads=H, kernel_size=K))
    out = jax.block_until_ready(fwd(x, params, head))
    assert out.shape == (B, C)
    assert bool(jnp.all(jnp.isfinite(out)))
    print("KERNEL_OK")
</pallas_src>

<mosaic_0001>
module attributes {stable_mosaic.version = 11 : i64} {
  func.func @heart_sound_kernel(%arg0: memref<2x16x64xf32, #tpu.memory_space<vmem>>, %arg1: memref<2x1x64xf32, #tpu.memory_space<vmem>>, %arg2: memref<2x1x64xf32, #tpu.memory_space<vmem>>, %arg3: memref<2x64x128xf32, #tpu.memory_space<vmem>>, %arg4: memref<2x1x128xf32, #tpu.memory_space<vmem>>, %arg5: memref<2x128x64xf32, #tpu.memory_space<vmem>>, %arg6: memref<2x1x64xf32, #tpu.memory_space<vmem>>, %arg7: memref<2x1x64xf32, #tpu.memory_space<vmem>>, %arg8: memref<2x1x64xf32, #tpu.memory_space<vmem>>, %arg9: memref<2x64x192xf32, #tpu.memory_space<vmem>>, %arg10: memref<2x1x192xf32, #tpu.memory_space<vmem>>, %arg11: memref<2x64x64xf32, #tpu.memory_space<vmem>>, %arg12: memref<2x1x64xf32, #tpu.memory_space<vmem>>, %arg13: memref<2x1x64xf32, #tpu.memory_space<vmem>>, %arg14: memref<2x1x64xf32, #tpu.memory_space<vmem>>, %arg15: memref<2x64x128xf32, #tpu.memory_space<vmem>>, %arg16: memref<2x1x128xf32, #tpu.memory_space<vmem>>, %arg17: memref<2x31x64xf32, #tpu.memory_space<vmem>>, %arg18: memref<2x1x64xf32, #tpu.memory_space<vmem>>, %arg19: memref<2x1x64xf32, #tpu.memory_space<vmem>>, %arg20: memref<2x1x64xf32, #tpu.memory_space<vmem>>, %arg21: memref<2x64x64xf32, #tpu.memory_space<vmem>>, %arg22: memref<2x1x64xf32, #tpu.memory_space<vmem>>, %arg23: memref<2x1x64xf32, #tpu.memory_space<vmem>>, %arg24: memref<2x1x64xf32, #tpu.memory_space<vmem>>, %arg25: memref<2x64x128xf32, #tpu.memory_space<vmem>>, %arg26: memref<2x1x128xf32, #tpu.memory_space<vmem>>, %arg27: memref<2x128x64xf32, #tpu.memory_space<vmem>>, %arg28: memref<2x1x64xf32, #tpu.memory_space<vmem>>, %arg29: memref<2x1x64xf32, #tpu.memory_space<vmem>>, %arg30: memref<2x1x64xf32, #tpu.memory_space<vmem>>, %arg31: memref<64x4xf32, #tpu.memory_space<vmem>>, %arg32: memref<1x4xf32, #tpu.memory_space<vmem>>, %arg33: memref<2x4xf32, #tpu.memory_space<vmem>>, %arg34: memref<2x46x64xf32, #tpu.memory_space<vmem>>) attributes {dimension_semantics = [], scalar_prefetch = 0 : i64, scratch_operands = 1 : i64, tpu.core_type = #tpu.core_type<tc>} {
    %cst = arith.constant 0.000000e+00 : f32
    %0 = vector.broadcast %cst : f32 to vector<2x46x64xf32>
    %c0 = arith.constant 0 : index
    %c0_0 = arith.constant 0 : index
    %c0_1 = arith.constant 0 : index
    %1 = vector.load %arg34[%c0, %c0_0, %c0_1] : memref<2x46x64xf32, #tpu.memory_space<vmem>>, vector<2x46x64xf32>
    tpu.vector_store %arg34[%c0, %c0_0, %c0_1], %0 {strides = array<i32>} : memref<2x46x64xf32, #tpu.memory_space<vmem>>, vector<2x46x64xf32>,
    %c0_2 = arith.constant 0 : index
    %c0_3 = arith.constant 0 : index
    %c0_4 = arith.constant 0 : index
    %2 = vector.load %arg0[%c0_2, %c0_3, %c0_4] : memref<2x16x64xf32, #tpu.memory_space<vmem>>, vector<2x16x64xf32>
    %c0_5 = arith.constant 0 : index
    %c0_6 = arith.constant 0 : index
    %c0_7 = arith.constant 0 : index
    %3 = vector.load %arg1[%c0_5, %c0_6, %c0_7] : memref<2x1x64xf32, #tpu.memory_space<vmem>>, vector<1x1x64xf32>
    %4 = vector.shape_cast %3 : vector<1x1x64xf32> to vector<1x64xf32>
    %c0_8 = arith.constant 0 : index
    %c0_9 = arith.constant 0 : index
    %c0_10 = arith.constant 0 : index
    %5 = vector.load %arg2[%c0_8, %c0_9, %c0_10] : memref<2x1x64xf32, #tpu.memory_space<vmem>>, vector<1x1x64xf32>
    %6 = vector.shape_cast %5 : vector<1x1x64xf32> to vector<1x64xf32>
    %c0_11 = arith.constant 0 : index
    %c0_12 = arith.constant 0 : index
    %c0_13 = arith.constant 0 : index
    %7 = vector.load %arg3[%c0_11, %c0_12, %c0_13] : memref<2x64x128xf32, #tpu.memory_space<vmem>>, vector<1x64x128xf32>
    %8 = vector.shape_cast %7 : vector<1x64x128xf32> to vector<64x128xf32>
    %c0_14 = arith.constant 0 : index
    %c0_15 = arith.constant 0 : index
    %c0_16 = arith.constant 0 : index
    %9 = vector.load %arg4[%c0_14, %c0_15, %c0_16] : memref<2x1x128xf32, #tpu.memory_space<vmem>>, vector<1x1x128xf32>
    %10 = vector.shape_cast %9 : vector<1x1x128xf32> to vector<1x128xf32>
    %c0_17 = arith.constant 0 : index
    %c0_18 = arith.constant 0 : index
    %c0_19 = arith.constant 0 : index
    %11 = vector.load %arg5[%c0_17, %c0_18, %c0_19] : memref<2x128x64xf32, #tpu.memory_space<vmem>>, vector<1x128x64xf32>
    %12 = vector.shape_cast %11 : vector<1x128x64xf32> to vector<128x64xf32>
    %c0_20 = arith.constant 0 : index
    %c0_21 = arith.constant 0 : index
    %c0_22 = arith.constant 0 : index
    %13 = vector.load %arg6[%c0_20, %c0_21, %c0_22] : memref<2x1x64xf32, #tpu.memory_space<vmem>>, vector<1x1x64xf32>
    %14 = vector.shape_cast %13 : vector<1x1x64xf32> to vector<1x64xf32>
    %cst_23 = arith.constant dense<0.000000e+00> : vector<2x16xf32>
    %15 = vector.multi_reduction <add>, %2, %cst_23 [2] : vector<2x16x64xf32> to vector<2x16xf32>
    %16 = vector.shape_cast %15 : vector<2x16xf32> to vector<2x16x1xf32>
    %cst_24 = arith.constant 6.400000e+01 : f32
    %17 = vector.broadcast %cst_24 : f32 to vector<2x16x1xf32>
    %18 = arith.divf %16, %17 : vector<2x16x1xf32>
    %19 = vector.broadcast %18 : vector<2x16x1xf32> to vector<2x16x64xf32>
    %20 = arith.subf %2, %19 : vector<2x16x64xf32>
    %21 = arith.mulf %20, %20 : vector<2x16x64xf32>
    %cst_25 = arith.constant dense<0.000000e+00> : vector<2x16xf32>
    %22 = vector.multi_reduction <add>, %21, %cst_25 [2] : vector<2x16x64xf32> to vector<2x16xf32>
    %23 = vector.shape_cast %22 : vector<2x16xf32> to vector<2x16x1xf32>
    %cst_26 = arith.constant 6.400000e+01 : f32
    %24 = vector.broadcast %cst_26 : f32 to vector<2x16x1xf32>
    %25 = arith.divf %23, %24 : vector<2x16x1xf32>
    %26 = vector.broadcast %18 : vector<2x16x1xf32> to vector<2x16x64xf32>
    %27 = arith.subf %2, %26 : vector<2x16x64xf32>
    %cst_27 = arith.constant 9.99999974E-6 : f32
    %28 = vector.broadcast %cst_27 : f32 to vector<2x16x1xf32>
    %29 = arith.addf %25, %28 : vector<2x16x1xf32>
    %30 = math.rsqrt %29 : vector<2x16x1xf32>
    %31 = vector.broadcast %30 : vector<2x16x1xf32> to vector<2x16x64xf32>
    %32 = arith.mulf %27, %31 : vector<2x16x64xf32>
    %33 = vector.shape_cast %4 : vector<1x64xf32> to vector<1x1x64xf32>
    %34 = vector.broadcast %33 : vector<1x1x64xf32> to vector<2x16x64xf32>
    %35 = arith.mulf %32, %34 : vector<2x16x64xf32>
    %36 = vector.shape_cast %6 : vector<1x64xf32> to vector<1x1x64xf32>
    %37 = vector.broadcast %36 : vector<1x1x64xf32> to vector<2x16x64xf32>
    %38 = arith.addf %35, %37 : vector<2x16x64xf32>
    %39 = vector.shape_cast %38 : vector<2x16x64xf32> to vector<32x64xf32>
    %cst_28 = arith.constant dense<0.000000e+00> : vector<32x128xf32>
    %40 = tpu.matmul %39, %8, %cst_28 {dimension_numbers = #tpu.dot_dimension_numbers<[1], [0], [0], [1], [0, 0, 1, 1], [], []>} : vector<32x64xf32>, vector<64x128xf32>, vector<32x128xf32> -> vector<32x128xf32>
    %41 = vector.broadcast %10 : vector<1x128xf32> to vector<32x128xf32>
    %42 = arith.addf %40, %41 : vector<32x128xf32>
    %43 = arith.negf %42 : vector<32x128xf32>
    %44 = math.exp %43 : vector<32x128xf32>
    %cst_29 = arith.constant 1.000000e+00 : f32
    %45 = vector.broadcast %cst_29 : f32 to vector<32x128xf32>
    %46 = arith.addf %45, %44 : vector<32x128xf32>
    %47 = arith.divf %45, %46 : vector<32x128xf32>
    %48 = arith.mulf %42, %47 : vector<32x128xf32>
    %cst_30 = arith.constant dense<0.000000e+00> : vector<32x64xf32>
    %49 = tpu.matmul %48, %12, %cst_30 {dimension_numbers = #tpu.dot_dimension_numbers<[1], [0], [0], [1], [0, 0, 1, 1], [], []>} : vector<32x128xf32>, vector<128x64xf32>, vector<32x64xf32> -> vector<32x64xf32>
    %50 = vector.broadcast %14 : vector<1x64xf32> to vector<32x64xf32>
    %51 = arith.addf %49, %50 : vector<32x64xf32>
    %52 = vector.shape_cast %51 : vector<32x64xf32> to vector<2x16x64xf32>
    %cst_31 = arith.constant 5.000000e-01 : f32
    %53 = vector.broadcast %cst_31 : f32 to vector<2x16x64xf32>
    %54 = arith.mulf %53, %52 : vector<2x16x64xf32>
    %55 = arith.addf %2, %54 : vector<2x16x64xf32>
    %c0_32 = arith.constant 0 : index
    %c0_33 = arith.constant 0 : index
    %c0_34 = arith.constant 0 : index
    %56 = vector.load %arg7[%c0_32, %c0_33, %c0_34] : memref<2x1x64xf32, #tpu.memory_space<vmem>>, vector<1x1x64xf32>
    %57 = vector.shape_cast %56 : vector<1x1x64xf32> to vector<1x64xf32>
    %c0_35 = arith.constant 0 : index
    %c0_36 = arith.constant 0 : index
    %c0_37 = arith.constant 0 : index
    %58 = vector.load %arg8[%c0_35, %c0_36, %c0_37] : memref<2x1x64xf32, #tpu.memory_space<vmem>>, vector<1x1x64xf32>
    %59 = vector.shape_cast %58 : vector<1x1x64xf32> to vector<1x64xf32>
    %c0_38 = arith.constant 0 : index
    %c0_39 = arith.constant 0 : index
    %c0_40 = arith.constant 0 : index
    %60 = vector.load %arg9[%c0_38, %c0_39, %c0_40] : memref<2x64x192xf32, #tpu.memory_space<vmem>>, vector<1x64x192xf32>
    %61 = vector.shape_cast %60 : vector<1x64x192xf32> to vector<64x192xf32>
    %c0_41 = arith.constant 0 : index
    %c0_42 = arith.constant 0 : index
    %c0_43 = arith.constant 0 : index
    %62 = vector.load %arg10[%c0_41, %c0_42, %c0_43] : memref<2x1x192xf32, #tpu.memory_space<vmem>>, vector<1x1x192xf32>
    %63 = vector.shape_cast %62 : vector<1x1x192xf32> to vector<1x192xf32>
    %c0_44 = arith.constant 0 : index
    %c0_45 = arith.constant 0 : index
    %c0_46 = arith.constant 0 : index
    %64 = vector.load %arg11[%c0_44, %c0_45, %c0_46] : memref<2x64x64xf32, #tpu.memory_space<vmem>>, vector<1x64x64xf32>
    %65 = vector.shape_cast %64 : vector<1x64x64xf32> to vector<64x64xf32>
    %c0_47 = arith.constant 0 : index
    %c0_48 = arith.constant 0 : index
    %c0_49 = arith.constant 0 : index
    %66 = vector.load %arg12[%c0_47, %c0_48, %c0_49] : memref<2x1x64xf32, #tpu.memory_space<vmem>>, vector<1x1x64xf32>
    %67 = vector.shape_cast %66 : vector<1x1x64xf32> to vector<1x64xf32>
    %cst_50 = arith.constant dense<0.000000e+00> : vector<2x16xf32>
    %68 = vector.multi_reduction <add>, %55, %cst_50 [2] : vector<2x16x64xf32> to vector<2x16xf32>
    %69 = vector.shape_cast %68 : vector<2x16xf32> to vector<2x16x1xf32>
    %cst_51 = arith.constant 6.400000e+01 : f32
    %70 = vector.broadcast %cst_51 : f32 to vector<2x16x1xf32>
    %71 = arith.divf %69, %70 : vector<2x16x1xf32>
    %72 = vector.broadcast %71 : vector<2x16x1xf32> to vector<2x16x64xf32>
    %73 = arith.subf %55, %72 : vector<2x16x64xf32>
    %74 = arith.mulf %73, %73 : vector<2x16x64xf32>
    %cst_52 = arith.constant dense<0.000000e+00> : vector<2x16xf32>
    %75 = vector.multi_reduction <add>, %74, %cst_52 [2] : vector<2x16x64xf32> to vector<2x16xf32>
    %76 = vector.shape_cast %75 : vector<2x16xf32> to vector<2x16x1xf32>
    %cst_53 = arith.constant 6.400000e+01 : f32
    %77 = vector.broadcast %cst_53 : f32 to vector<2x16x1xf32>
    %78 = arith.divf %76, %77 : vector<2x16x1xf32>
    %79 = vector.broadcast %71 : vector<2x16x1xf32> to vector<2x16x64xf32>
    %80 = arith.subf %55, %79 : vector<2x16x64xf32>
    %cst_54 = arith.constant 9.99999974E-6 : f32
    %81 = vector.broadcast %cst_54 : f32 to vector<2x16x1xf32>
    %82 = arith.addf %78, %81 : vector<2x16x1xf32>
    %83 = math.rsqrt %82 : vector<2x16x1xf32>
    %84 = vector.broadcast %83 : vector<2x16x1xf32> to vector<2x16x64xf32>
    %85 = arith.mulf %80, %84 : vector<2x16x64xf32>
    %86 = vector.shape_cast %57 : vector<1x64xf32> to vector<1x1x64xf32>
    %87 = vector.broadcast %86 : vector<1x1x64xf32> to vector<2x16x64xf32>
    %88 = arith.mulf %85, %87 : vector<2x16x64xf32>
    %89 = vector.shape_cast %59 : vector<1x64xf32> to vector<1x1x64xf32>
    %90 = vector.broadcast %89 : vector<1x1x64xf32> to vector<2x16x64xf32>
    %91 = arith.addf %88, %90 : vector<2x16x64xf32>
    %92 = vector.shape_cast %91 : vector<2x16x64xf32> to vector<32x64xf32>
    %cst_55 = arith.constant dense<0.000000e+00> : vector<32x192xf32>
    %93 = tpu.matmul %92, %61, %cst_55 {dimension_numbers = #tpu.dot_dimension_numbers<[1], [0], [0], [1], [0, 0, 1, 1], [], []>} : vector<32x64xf32>, vector<64x192xf32>, vector<32x192xf32> -> vector<32x192xf32>
    %94 = vector.broadcast %63 : vector<1x192xf32> to vector<32x192xf32>
    %95 = arith.addf %93, %94 : vector<32x192xf32>
    %96 = vector.shape_cast %95 : vector<32x192xf32> to vector<2x16x192xf32>
    %97 = vector.extract_strided_slice %96 {offsets = [0, 0, 0], sizes = [2, 16, 64], strides = [1, 1, 1]} : vector<2x16x192xf32> to vector<2x16x64xf32>
    %cst_56 = arith.constant 2.500000e-01 : f32
    %98 = vector.broadcast %cst_56 : f32 to vector<2x16x64xf32>
    %99 = arith.mulf %97, %98 : vector<2x16x64xf32>
    %100 = vector.extract_strided_slice %96 {offsets = [0, 0, 64], sizes = [2, 16, 64], strides = [1, 1, 1]} : vector<2x16x192xf32> to vector<2x16x64xf32>
    %101 = vector.extract_strided_slice %96 {offsets = [0, 0, 128], sizes = [2, 16, 64], strides = [1, 1, 1]} : vector<2x16x192xf32> to vector<2x16x64xf32>
    %cst_57 = arith.constant 0.000000e+00 : f32
    %102 = vector.broadcast %cst_57 : f32 to vector<32x64xf32>
    %103 = vector.extract_strided_slice %99 {offsets = [0, 0, 0], sizes = [2, 16, 16], strides = [1, 1, 1]} : vector<2x16x64xf32> to vector<2x16x16xf32>
    %104 = vector.extract_strided_slice %100 {offsets = [0, 0, 0], sizes = [2, 16, 16], strides = [1, 1, 1]} : vector<2x16x64xf32> to vector<2x16x16xf32>
    %105 = vector.extract_strided_slice %101 {offsets = [0, 0, 0], sizes = [2, 16, 16], strides = [1, 1, 1]} : vector<2x16x64xf32> to vector<2x16x16xf32>
    "tpu.trace_start"() <{level = 10 : i32, message = "btd,bsd->bts"}> : () -> ()
    %cst_58 = arith.constant dense<0.000000e+00> : vector<2x16x16xf32>
    %106 = tpu.matmul %103, %104, %cst_58 {dimension_numbers = #tpu.dot_dimension_numbers<[2], [2], [1], [1], [0, 0, 0, 1, 1, 1], [0], [0]>} : vector<2x16x16xf32>, vector<2x16x16xf32>, vector<2x16x16xf32> -> vector<2x16x16xf32>
    "tpu.trace_stop"() : () -> ()
    %cst_59 = arith.constant dense<0xFF800000> : vector<2x16xf32>
    %107 = vector.multi_reduction <maximumf>, %106, %cst_59 [2] : vector<2x16x16xf32> to vector<2x16xf32>
    %108 = vector.shape_cast %107 : vector<2x16xf32> to vector<2x16x1xf32>
    %109 = vector.broadcast %108 : vector<2x16x1xf32> to vector<2x16x16xf32>
    %110 = arith.subf %106, %109 : vector<2x16x16xf32>
    %111 = math.exp %110 : vector<2x16x16xf32>
    %cst_60 = arith.constant dense<0.000000e+00> : vector<2x16xf32>
    %112 = vector.multi_reduction <add>, %111, %cst_60 [2] : vector<2x16x16xf32> to vector<2x16xf32>
    %113 = vector.shape_cast %112 : vector<2x16xf32> to vector<2x16x1xf32>
    %114 = tpu.reciprocal %113 {approx = true} : vector<2x16x1xf32> -> vector<2x16x1xf32>
    %115 = vector.broadcast %114 : vector<2x16x1xf32> to vector<2x16x16xf32>
    %116 = arith.mulf %111, %115 : vector<2x16x16xf32>
    "tpu.trace_start"() <{level = 10 : i32, message = "bts,bsd->btd"}> : () -> ()
    %cst_61 = arith.constant dense<0.000000e+00> : vector<2x16x16xf32>
    %117 = tpu.matmul %116, %105, %cst_61 {dimension_numbers = #tpu.dot_dimension_numbers<[2], [1], [1], [2], [0, 0, 0, 1, 1, 2], [0], [0]>} : vector<2x16x16xf32>, vector<2x16x16xf32>, vector<2x16x16xf32> -> vector<2x16x16xf32>
    "tpu.trace_stop"() : () -> ()
    %118 = vector.shape_cast %117 : vector<2x16x16xf32> to vector<32x16xf32>
    %119 = vector.extract_strided_slice %65 {offsets = [0, 0], sizes = [16, 64], strides = [1, 1]} : vector<64x64xf32> to vector<16x64xf32>
    %cst_62 = arith.constant dense<0.000000e+00> : vector<32x64xf32>
    %120 = tpu.matmul %118, %119, %cst_62 {dimension_numbers = #tpu.dot_dimension_numbers<[1], [0], [0], [1], [0, 0, 1, 1], [], []>} : vector<32x16xf32>, vector<16x64xf32>, vector<32x64xf32> -> vector<32x64xf32>
    %121 = arith.addf %102, %120 : vector<32x64xf32>
    %122 = vector.extract_strided_slice %99 {offsets = [0, 0, 16], sizes = [2, 16, 16], strides = [1, 1, 1]} : vector<2x16x64xf32> to vector<2x16x16xf32>
    %123 = vector.extract_strided_slice %100 {offsets = [0, 0, 16], sizes = [2, 16, 16], strides = [1, 1, 1]} : vector<2x16x64xf32> to vector<2x16x16xf32>
    %124 = vector.extract_strided_slice %101 {offsets = [0, 0, 16], sizes = [2, 16, 16], strides = [1, 1, 1]} : vector<2x16x64xf32> to vector<2x16x16xf32>
    "tpu.trace_start"() <{level = 10 : i32, message = "btd,bsd->bts"}> : () -> ()
    %cst_63 = arith.constant dense<0.000000e+00> : vector<2x16x16xf32>
    %125 = tpu.matmul %122, %123, %cst_63 {dimension_numbers = #tpu.dot_dimension_numbers<[2], [2], [1], [1], [0, 0, 0, 1, 1, 1], [0], [0]>} : vector<2x16x16xf32>, vector<2x16x16xf32>, vector<2x16x16xf32> -> vector<2x16x16xf32>
    "tpu.trace_stop"() : () -> ()
    %cst_64 = arith.constant dense<0xFF800000> : vector<2x16xf32>
    %126 = vector.multi_reduction <maximumf>, %125, %cst_64 [2] : vector<2x16x16xf32> to vector<2x16xf32>
    %127 = vector.shape_cast %126 : vector<2x16xf32> to vector<2x16x1xf32>
    %128 = vector.broadcast %127 : vector<2x16x1xf32> to vector<2x16x16xf32>
    %129 = arith.subf %125, %128 : vector<2x16x16xf32>
    %130 = math.exp %129 : vector<2x16x16xf32>
    %cst_65 = arith.constant dense<0.000000e+00> : vector<2x16xf32>
    %131 = vector.multi_reduction <add>, %130, %cst_65 [2] : vector<2x16x16xf32> to vector<2x16xf32>
    %132 = vector.shape_cast %131 : vector<2x16xf32> to vector<2x16x1xf32>
    %133 = tpu.reciprocal %132 {approx = true} : vector<2x16x1xf32> -> vector<2x16x1xf32>
    %134 = vector.broadcast %133 : vector<2x16x1xf32> to vector<2x16x16xf32>
    %135 = arith.mulf %130, %134 : vector<2x16x16xf32>
    "tpu.trace_start"() <{level = 10 : i32, message = "bts,bsd->btd"}> : () -> ()
    %cst_66 = arith.constant dense<0.000000e+00> : vector<2x16x16xf32>
    %136 = tpu.matmul %135, %124, %cst_66 {dimension_numbers = #tpu.dot_dimension_numbers<[2], [1], [1], [2], [0, 0, 0, 1, 1, 2], [0], [0]>} : vector<2x16x16xf32>, vector<2x16x16xf32>, vector<2x16x16xf32> -> vector<2x16x16xf32>
    "tpu.trace_stop"() : () -> ()
    %137 = vector.shape_cast %136 : vector<2x16x16xf32> to vector<32x16xf32>
    %138 = vector.extract_strided_slice %65 {offsets = [16, 0], sizes = [16, 64], strides = [1, 1]} : vector<64x64xf32> to vector<16x64xf32>
    %cst_67 = arith.constant dense<0.000000e+00> : vector<32x64xf32>
    %139 = tpu.matmul %137, %138, %cst_67 {dimension_numbers = #tpu.dot_dimension_numbers<[1], [0], [0], [1], [0, 0, 1, 1], [], []>} : vector<32x16xf32>, vector<16x64xf32>, vector<32x64xf32> -> vector<32x64xf32>
    %140 = arith.addf %121, %139 : vector<32x64xf32>
    %141 = vector.extract_strided_slice %99 {offsets = [0, 0, 32], sizes = [2, 16, 16], strides = [1, 1, 1]} : vector<2x16x64xf32> to vector<2x16x16xf32>
    %142 = vector.extract_strided_slice %100 {offsets = [0, 0, 32], sizes = [2, 16, 16], strides = [1, 1, 1]} : vector<2x16x64xf32> to vector<2x16x16xf32>
    %143 = vector.extract_strided_slice %101 {offsets = [0, 0, 32], sizes = [2, 16, 16], strides = [1, 1, 1]} : vector<2x16x64xf32> to vector<2x16x16xf32>
    "tpu.trace_start"() <{level = 10 : i32, message = "btd,bsd->bts"}> : () -> ()
    %cst_68 = arith.constant dense<0.000000e+00> : vector<2x16x16xf32>
    %144 = tpu.matmul %141, %142, %cst_68 {dimension_numbers = #tpu.dot_dimension_numbers<[2], [2], [1], [1], [0, 0, 0, 1, 1, 1], [0], [0]>} : vector<2x16x16xf32>, vector<2x16x16xf32>, vector<2x16x16xf32> -> vector<2x16x16xf32>
    "tpu.trace_stop"() : () -> ()
    %cst_69 = arith.constant dense<0xFF800000> : vector<2x16xf32>
    %145 = vector.multi_reduction <maximumf>, %144, %cst_69 [2] : vector<2x16x16xf32> to vector<2x16xf32>
    %146 = vector.shape_cast %145 : vector<2x16xf32> to vector<2x16x1xf32>
    %147 = vector.broadcast %146 : vector<2x16x1xf32> to vector<2x16x16xf32>
    %148 = arith.subf %144, %147 : vector<2x16x16xf32>
    %149 = math.exp %148 : vector<2x16x16xf32>
    %cst_70 = arith.constant dense<0.000000e+00> : vector<2x16xf32>
    %150 = vector.multi_reduction <add>, %149, %cst_70 [2] : vector<2x16x16xf32> to vector<2x16xf32>
    %151 = vector.shape_cast %150 : vector<2x16xf32> to vector<2x16x1xf32>
    %152 = tpu.reciprocal %151 {approx = true} : vector<2x16x1xf32> -> vector<2x16x1xf32>
    %153 = vector.broadcast %152 : vector<2x16x1xf32> to vector<2x16x16xf32>
    %154 = arith.mulf %149, %153 : vector<2x16x16xf32>
    "tpu.trace_start"() <{level = 10 : i32, message = "bts,bsd->btd"}> : () -> ()
    %cst_71 = arith.constant dense<0.000000e+00> : vector<2x16x16xf32>
    %155 = tpu.matmul %154, %143, %cst_71 {dimension_numbers = #tpu.dot_dimension_numbers<[2], [1], [1], [2], [0, 0, 0, 1, 1, 2], [0], [0]>} : vector<2x16x16xf32>, vector<2x16x16xf32>, vector<2x16x16xf32> -> vector<2x16x16xf32>
    "tpu.trace_stop"() : () -> ()
    %156 = vector.shape_cast %155 : vector<2x16x16xf32> to vector<32x16xf32>
    %157 = vector.extract_strided_slice %65 {offsets = [32, 0], sizes = [16, 64], strides = [1, 1]} : vector<64x64xf32> to vector<16x64xf32>
    %cst_72 = arith.constant dense<0.000000e+00> : vector<32x64xf32>
    %158 = tpu.matmul %156, %157, %cst_72 {dimension_numbers = #tpu.dot_dimension_numbers<[1], [0], [0], [1], [0, 0, 1, 1], [], []>} : vector<32x16xf32>, vector<16x64xf32>, vector<32x64xf32> -> vector<32x64xf32>
    %159 = arith.addf %140, %158 : vector<32x64xf32>
    %160 = vector.extract_strided_slice %99 {offsets = [0, 0, 48], sizes = [2, 16, 16], strides = [1, 1, 1]} : vector<2x16x64xf32> to vector<2x16x16xf32>
    %161 = vector.extract_strided_slice %100 {offsets = [0, 0, 48], sizes = [2, 16, 16], strides = [1, 1, 1]} : vector<2x16x64xf32> to vector<2x16x16xf32>
    %162 = vector.extract_strided_slice %101 {offsets = [0, 0, 48], sizes = [2, 16, 16], strides = [1, 1, 1]} : vector<2x16x64xf32> to vector<2x16x16xf32>
    "tpu.trace_start"() <{level = 10 : i32, message = "btd,bsd->bts"}> : () -> ()
    %cst_73 = arith.constant dense<0.000000e+00> : vector<2x16x16xf32>
    %163 = tpu.matmul %160, %161, %cst_73 {dimension_numbers = #tpu.dot_dimension_numbers<[2], [2], [1], [1], [0, 0, 0, 1, 1, 1], [0], [0]>} : vector<2x16x16xf32>, vector<2x16x16xf32>, vector<2x16x16xf32> -> vector<2x16x16xf32>
    "tpu.trace_stop"() : () -> ()
    %cst_74 = arith.constant dense<0xFF800000> : vector<2x16xf32>
    %164 = vector.multi_reduction <maximumf>, %163, %cst_74 [2] : vector<2x16x16xf32> to vector<2x16xf32>
    %165 = vector.shape_cast %164 : vector<2x16xf32> to vector<2x16x1xf32>
    %166 = vector.broadcast %165 : vector<2x16x1xf32> to vector<2x16x16xf32>
    %167 = arith.subf %163, %166 : vector<2x16x16xf32>
    %168 = math.exp %167 : vector<2x16x16xf32>
    %cst_75 = arith.constant dense<0.000000e+00> : vector<2x16xf32>
    %169 = vector.multi_reduction <add>, %168, %cst_75 [2] : vector<2x16x16xf32> to vector<2x16xf32>
    %170 = vector.shape_cast %169 : vector<2x16xf32> to vector<2x16x1xf32>
    %171 = tpu.reciprocal %170 {approx = true} : vector<2x16x1xf32> -> vector<2x16x1xf32>
    %172 = vector.broadcast %171 : vector<2x16x1xf32> to vector<2x16x16xf32>
    %173 = arith.mulf %168, %172 : vector<2x16x16xf32>
    "tpu.trace_start"() <{level = 10 : i32, message = "bts,bsd->btd"}> : () -> ()
    %cst_76 = arith.constant dense<0.000000e+00> : vector<2x16x16xf32>
    %174 = tpu.matmul %173, %162, %cst_76 {dimension_numbers = #tpu.dot_dimension_numbers<[2], [1], [1], [2], [0, 0, 0, 1, 1, 2], [0], [0]>} : vector<2x16x16xf32>, vector<2x16x16xf32>, vector<2x16x16xf32> -> vector<2x16x16xf32>
    "tpu.trace_stop"() : () -> ()
    %175 = vector.shape_cast %174 : vector<2x16x16xf32> to vector<32x16xf32>
    %176 = vector.extract_strided_slice %65 {offsets = [48, 0], sizes = [16, 64], strides = [1, 1]} : vector<64x64xf32> to vector<16x64xf32>
    %cst_77 = arith.constant dense<0.000000e+00> : vector<32x64xf32>
    %177 = tpu.matmul %175, %176, %cst_77 {dimension_numbers = #tpu.dot_dimension_numbers<[1], [0], [0], [1], [0, 0, 1, 1], [], []>} : vector<32x16xf32>, vector<16x64xf32>, vector<32x64xf32> -> vector<32x64xf32>
    %178 = arith.addf %159, %177 : vector<32x64xf32>
    %179 = vector.broadcast %67 : vector<1x64xf32> to vector<32x64xf32>
    %180 = arith.addf %178, %179 : vector<32x64xf32>
    %181 = vector.shape_cast %180 : vector<32x64xf32> to vector<2x16x64xf32>
    %182 = arith.addf %55, %181 : vector<2x16x64xf32>
    %c0_78 = arith.constant 0 : index
    %c0_79 = arith.constant 0 : index
    %c0_80 = arith.constant 0 : index
    %183 = vector.load %arg13[%c0_78, %c0_79, %c0_80] : memref<2x1x64xf32, #tpu.memory_space<vmem>>, vector<1x1x64xf32>
    %184 = vector.shape_cast %183 : vector<1x1x64xf32> to vector<1x64xf32>
    %c0_81 = arith.constant 0 : index
    %c0_82 = arith.constant 0 : index
    %c0_83 = arith.constant 0 : index
    %185 = vector.load %arg14[%c0_81, %c0_82, %c0_83] : memref<2x1x64xf32, #tpu.memory_space<vmem>>, vector<1x1x64xf32>
    %186 = vector.shape_cast %185 : vector<1x1x64xf32> to vector<1x64xf32>
    %c0_84 = arith.constant 0 : index
    %c0_85 = arith.constant 0 : index
    %c0_86 = arith.constant 0 : index
    %187 = vector.load %arg15[%c0_84, %c0_85, %c0_86] : memref<2x64x128xf32, #tpu.memory_space<vmem>>, vector<1x64x128xf32>
    %188 = vector.shape_cast %187 : vector<1x64x128xf32> to vector<64x128xf32>
    %c0_87 = arith.constant 0 : index
    %c0_88 = arith.constant 0 : index
    %c0_89 = arith.constant 0 : index
    %189 = vector.load %arg16[%c0_87, %c0_88, %c0_89] : memref<2x1x128xf32, #tpu.memory_space<vmem>>, vector<1x1x128xf32>
    %190 = vector.shape_cast %189 : vector<1x1x128xf32> to vector<1x128xf32>
    %c0_90 = arith.constant 0 : index
    %c0_91 = arith.constant 0 : index
    %c0_92 = arith.constant 0 : index
    %191 = vector.load %arg17[%c0_90, %c0_91, %c0_92] : memref<2x31x64xf32, #tpu.memory_space<vmem>>, vector<1x31x64xf32>
    %192 = vector.shape_cast %191 : vector<1x31x64xf32> to vector<31x64xf32>
    %c0_93 = arith.constant 0 : index
    %c0_94 = arith.constant 0 : index
    %c0_95 = arith.constant 0 : index
    %193 = vector.load %arg18[%c0_93, %c0_94, %c0_95] : memref<2x1x64xf32, #tpu.memory_space<vmem>>, vector<1x1x64xf32>
    %194 = vector.shape_cast %193 : vector<1x1x64xf32> to vector<1x64xf32>
    %c0_96 = arith.constant 0 : index
    %c0_97 = arith.constant 0 : index
    %c0_98 = arith.constant 0 : index
    %195 = vector.load %arg19[%c0_96, %c0_97, %c0_98] : memref<2x1x64xf32, #tpu.memory_space<vmem>>, vector<1x1x64xf32>
    %196 = vector.shape_cast %195 : vector<1x1x64xf32> to vector<1x64xf32>
    %c0_99 = arith.constant 0 : index
    %c0_100 = arith.constant 0 : index
    %c0_101 = arith.constant 0 : index
    %197 = vector.load %arg20[%c0_99, %c0_100, %c0_101] : memref<2x1x64xf32, #tpu.memory_space<vmem>>, vector<1x1x64xf32>
    %198 = vector.shape_cast %197 : vector<1x1x64xf32> to vector<1x64xf32>
    %c0_102 = arith.constant 0 : index
    %c0_103 = arith.constant 0 : index
    %c0_104 = arith.constant 0 : index
    %199 = vector.load %arg21[%c0_102, %c0_103, %c0_104] : memref<2x64x64xf32, #tpu.memory_space<vmem>>, vector<1x64x64xf32>
    %200 = vector.shape_cast %199 : vector<1x64x64xf32> to vector<64x64xf32>
    %c0_105 = arith.constant 0 : index
    %c0_106 = arith.constant 0 : index
    %c0_107 = arith.constant 0 : index
    %201 = vector.load %arg22[%c0_105, %c0_106, %c0_107] : memref<2x1x64xf32, #tpu.memory_space<vmem>>, vector<1x1x64xf32>
    %202 = vector.shape_cast %201 : vector<1x1x64xf32> to vector<1x64xf32>
    %cst_108 = arith.constant dense<0.000000e+00> : vector<2x16xf32>
    %203 = vector.multi_reduction <add>, %182, %cst_108 [2] : vector<2x16x64xf32> to vector<2x16xf32>
    %204 = vector.shape_cast %203 : vector<2x16xf32> to vector<2x16x1xf32>
    %cst_109 = arith.constant 6.400000e+01 : f32
    %205 = vector.broadcast %cst_109 : f32 to vector<2x16x1xf32>
    %206 = arith.divf %204, %205 : vector<2x16x1xf32>
    %207 = vector.broadcast %206 : vector<2x16x1xf32> to vector<2x16x64xf32>
    %208 = arith.subf %182, %207 : vector<2x16x64xf32>
    %209 = arith.mulf %208, %208 : vector<2x16x64xf32>
    %cst_110 = arith.constant dense<0.000000e+00> : vector<2x16xf32>
    %210 = vector.multi_reduction <add>, %209, %cst_110 [2] : vector<2x16x64xf32> to vector<2x16xf32>
    %211 = vector.shape_cast %210 : vector<2x16xf32> to vector<2x16x1xf32>
    %cst_111 = arith.constant 6.400000e+01 : f32
    %212 = vector.broadcast %cst_111 : f32 to vector<2x16x1xf32>
    %213 = arith.divf %211, %212 : vector<2x16x1xf32>
    %214 = vector.broadcast %206 : vector<2x16x1xf32> to vector<2x16x64xf32>
    %215 = arith.subf %182, %214 : vector<2x16x64xf32>
    %cst_112 = arith.constant 9.99999974E-6 : f32
    %216 = vector.broadcast %cst_112 : f32 to vector<2x16x1xf32>
    %217 = arith.addf %213, %216 : vector<2x16x1xf32>
    %218 = math.rsqrt %217 : vector<2x16x1xf32>
    %219 = vector.broadcast %218 : vector<2x16x1xf32> to vector<2x16x64xf32>
    %220 = arith.mulf %215, %219 : vector<2x16x64xf32>
    %221 = vector.shape_cast %184 : vector<1x64xf32> to vector<1x1x64xf32>
    %222 = vector.broadcast %221 : vector<1x1x64xf32> to vector<2x16x64xf32>
    %223 = arith.mulf %220, %222 : vector<2x16x64xf32>
    %224 = vector.shape_cast %186 : vector<1x64xf32> to vector<1x1x64xf32>
    %225 = vector.broadcast %224 : vector<1x1x64xf32> to vector<2x16x64xf32>
    %226 = arith.addf %223, %225 : vector<2x16x64xf32>
    %227 = vector.shape_cast %226 : vector<2x16x64xf32> to vector<32x64xf32>
    %cst_113 = arith.constant dense<0.000000e+00> : vector<32x128xf32>
    %228 = tpu.matmul %227, %188, %cst_113 {dimension_numbers = #tpu.dot_dimension_numbers<[1], [0], [0], [1], [0, 0, 1, 1], [], []>} : vector<32x64xf32>, vector<64x128xf32>, vector<32x128xf32> -> vector<32x128xf32>
    %229 = vector.broadcast %190 : vector<1x128xf32> to vector<32x128xf32>
    %230 = arith.addf %228, %229 : vector<32x128xf32>
    %231 = vector.extract_strided_slice %230 {offsets = [0, 0], sizes = [32, 64], strides = [1, 1]} : vector<32x128xf32> to vector<32x64xf32>
    %232 = vector.extract_strided_slice %230 {offsets = [0, 64], sizes = [32, 64], strides = [1, 1]} : vector<32x128xf32> to vector<32x64xf32>
    %233 = arith.negf %232 : vector<32x64xf32>
    %234 = math.exp %233 : vector<32x64xf32>
    %cst_114 = arith.constant 1.000000e+00 : f32
    %235 = vector.broadcast %cst_114 : f32 to vector<32x64xf32>
    %236 = arith.addf %235, %234 : vector<32x64xf32>
    %237 = arith.divf %235, %236 : vector<32x64xf32>
    %238 = arith.mulf %231, %237 : vector<32x64xf32>
    %239 = vector.shape_cast %238 : vector<32x64xf32> to vector<2x16x64xf32>
    %c0_115 = arith.constant 0 : index
    %c15 = arith.constant 15 : index
    %c0_116 = arith.constant 0 : index
    %240 = vector.load %arg34[%c0_115, %c15, %c0_116] : memref<2x46x64xf32, #tpu.memory_space<vmem>>, vector<2x16x64xf32>
    tpu.vector_store %arg34[%c0_115, %c15, %c0_116], %239 {strides = array<i32>} : memref<2x46x64xf32, #tpu.memory_space<vmem>>, vector<2x16x64xf32>,
    %cst_117 = arith.constant 0.000000e+00 : f32
    %241 = vector.broadcast %cst_117 : f32 to vector<2x16x64xf32>
    %c0_118 = arith.constant 0 : index
    %c0_119 = arith.constant 0 : index
    %c0_120 = arith.constant 0 : index
    %242 = vector.load %arg34[%c0_118, %c0_119, %c0_120] : memref<2x46x64xf32, #tpu.memory_space<vmem>>, vector<2x16x64xf32>
    %243 = vector.extract_strided_slice %192 {offsets = [0, 0], sizes = [1, 64], strides = [1, 1]} : vector<31x64xf32> to vector<1x64xf32>
    %244 = vector.shape_cast %243 : vector<1x64xf32> to vector<64xf32>
    %245 = vector.shape_cast %244 : vector<64xf32> to vector<1x1x64xf32>
    %246 = vector.broadcast %245 : vector<1x1x64xf32> to vector<2x16x64xf32>
    %247 = arith.mulf %242, %246 : vector<2x16x64xf32>
    %248 = arith.addf %241, %247 : vector<2x16x64xf32>
    %c0_121 = arith.constant 0 : index
    %c1 = arith.constant 1 : index
    %c0_122 = arith.constant 0 : index
    %249 = vector.load %arg34[%c0_121, %c1, %c0_122] : memref<2x46x64xf32, #tpu.memory_space<vmem>>, vector<2x16x64xf32>
    %250 = vector.extract_strided_slice %192 {offsets = [1, 0], sizes = [1, 64], strides = [1, 1]} : vector<31x64xf32> to vector<1x64xf32>
    %251 = vector.shape_cast %250 : vector<1x64xf32> to vector<64xf32>
    %252 = vector.shape_cast %251 : vector<64xf32> to vector<1x1x64xf32>
    %253 = vector.broadcast %252 : vector<1x1x64xf32> to vector<2x16x64xf32>
    %254 = arith.mulf %249, %253 : vector<2x16x64xf32>
    %255 = arith.addf %248, %254 : vector<2x16x64xf32>
    %c0_123 = arith.constant 0 : index
    %c2 = arith.constant 2 : index
    %c0_124 = arith.constant 0 : index
    %256 = vector.load %arg34[%c0_123, %c2, %c0_124] : memref<2x46x64xf32, #tpu.memory_space<vmem>>, vector<2x16x64xf32>
    %257 = vector.extract_strided_slice %192 {offsets = [2, 0], sizes = [1, 64], strides = [1, 1]} : vector<31x64xf32> to vector<1x64xf32>
    %258 = vector.shape_cast %257 : vector<1x64xf32> to vector<64xf32>
    %259 = vector.shape_cast %258 : vector<64xf32> to vector<1x1x64xf32>
    %260 = vector.broadcast %259 : vector<1x1x64xf32> to vector<2x16x64xf32>
    %261 = arith.mulf %256, %260 : vector<2x16x64xf32>
    %262 = arith.addf %255, %261 : vector<2x16x64xf32>
    %c0_125 = arith.constant 0 : index
    %c3 = arith.constant 3 : index
    %c0_126 = arith.constant 0 : index
    %263 = vector.load %arg34[%c0_125, %c3, %c0_126] : memref<2x46x64xf32, #tpu.memory_space<vmem>>, vector<2x16x64xf32>
    %264 = vector.extract_strided_slice %192 {offsets = [3, 0], sizes = [1, 64], strides = [1, 1]} : vector<31x64xf32> to vector<1x64xf32>
    %265 = vector.shape_cast %264 : vector<1x64xf32> to vector<64xf32>
    %266 = vector.shape_cast %265 : vector<64xf32> to vector<1x1x64xf32>
    %267 = vector.broadcast %266 : vector<1x1x64xf32> to vector<2x16x64xf32>
    %268 = arith.mulf %263, %267 : vector<2x16x64xf32>
    %269 = arith.addf %262, %268 : vector<2x16x64xf32>
    %c0_127 = arith.constant 0 : index
    %c4 = arith.constant 4 : index
    %c0_128 = arith.constant 0 : index
    %270 = vector.load %arg34[%c0_127, %c4, %c0_128] : memref<2x46x64xf32, #tpu.memory_space<vmem>>, vector<2x16x64xf32>
    %271 = vector.extract_strided_slice %192 {offsets = [4, 0], sizes = [1, 64], strides = [1, 1]} : vector<31x64xf32> to vector<1x64xf32>
    %272 = vector.shape_cast %271 : vector<1x64xf32> to vector<64xf32>
    %273 = vector.shape_cast %272 : vector<64xf32> to vector<1x1x64xf32>
    %274 = vector.broadcast %273 : vector<1x1x64xf32> to vector<2x16x64xf32>
    %275 = arith.mulf %270, %274 : vector<2x16x64xf32>
    %276 = arith.addf %269, %275 : vector<2x16x64xf32>
    %c0_129 = arith.constant 0 : index
    %c5 = arith.constant 5 : index
    %c0_130 = arith.constant 0 : index
    %277 = vector.load %arg34[%c0_129, %c5, %c0_130] : memref<2x46x64xf32, #tpu.memory_space<vmem>>, vector<2x16x64xf32>
    %278 = vector.extract_strided_slice %192 {offsets = [5, 0], sizes = [1, 64], strides = [1, 1]} : vector<31x64xf32> to vector<1x64xf32>
    %279 = vector.shape_cast %278 : vector<1x64xf32> to vector<64xf32>
    %280 = vector.shape_cast %279 : vector<64xf32> to vector<1x1x64xf32>
    %281 = vector.broadcast %280 : vector<1x1x64xf32> to vector<2x16x64xf32>
    %282 = arith.mulf %277, %281 : vector<2x16x64xf32>
    %283 = arith.addf %276, %282 : vector<2x16x64xf32>
    %c0_131 = arith.constant 0 : index
    %c6 = arith.constant 6 : index
    %c0_132 = arith.constant 0 : index
    %284 = vector.load %arg34[%c0_131, %c6, %c0_132] : memref<2x46x64xf32, #tpu.memory_space<vmem>>, vector<2x16x64xf32>
    %285 = vector.extract_strided_slice %192 {offsets = [6, 0], sizes = [1, 64], strides = [1, 1]} : vector<31x64xf32> to vector<1x64xf32>
    %286 = vector.shape_cast %285 : vector<1x64xf32> to vector<64xf32>
    %287 = vector.shape_cast %286 : vector<64xf32> to vector<1x1x64xf32>
    %288 = vector.broadcast %287 : vector<1x1x64xf32> to vector<2x16x64xf32>
    %289 = arith.mulf %284, %288 : vector<2x16x64xf32>
    %290 = arith.addf %283, %289 : vector<2x16x64xf32>
    %c0_133 = arith.constant 0 : index
    %c7 = arith.constant 7 : index
    %c0_134 = arith.constant 0 : index
    %291 = vector.load %arg34[%c0_133, %c7, %c0_134] : memref<2x46x64xf32, #tpu.memory_space<vmem>>, vector<2x16x64xf32>
    %292 = vector.extract_strided_slice %192 {offsets = [7, 0], sizes = [1, 64], strides = [1, 1]} : vector<31x64xf32> to vector<1x64xf32>
    %293 = vector.shape_cast %292 : vector<1x64xf32> to vector<64xf32>
    %294 = vector.shape_cast %293 : vector<64xf32> to vector<1x1x64xf32>
    %295 = vector.broadcast %294 : vector<1x1x64xf32> to vector<2x16x64xf32>
    %296 = arith.mulf %291, %295 : vector<2x16x64xf32>
    %297 = arith.addf %290, %296 : vector<2x16x64xf32>
    %c0_135 = arith.constant 0 : index
    %c8 = arith.constant 8 : index
    %c0_136 = arith.constant 0 : index
    %298 = vector.load %arg34[%c0_135, %c8, %c0_136] : memref<2x46x64xf32, #tpu.memory_space<vmem>>, vector<2x16x64xf32>
    %299 = vector.extract_strided_slice %192 {offsets = [8, 0], sizes = [1, 64], strides = [1, 1]} : vector<31x64xf32> to vector<1x64xf32>
    %300 = vector.shape_cast %299 : vector<1x64xf32> to vector<64xf32>
    %301 = vector.shape_cast %300 : vector<64xf32> to vector<1x1x64xf32>
    %302 = vector.broadcast %301 : vector<1x1x64xf32> to vector<2x16x64xf32>
    %303 = arith.mulf %298, %302 : vector<2x16x64xf32>
    %304 = arith.addf %297, %303 : vector<2x16x64xf32>
    %c0_137 = arith.constant 0 : index
    %c9 = arith.constant 9 : index
    %c0_138 = arith.constant 0 : index
    %305 = vector.load %arg34[%c0_137, %c9, %c0_138] : memref<2x46x64xf32, #tpu.memory_space<vmem>>, vector<2x16x64xf32>
    %306 = vector.extract_strided_slice %192 {offsets = [9, 0], sizes = [1, 64], strides = [1, 1]} : vector<31x64xf32> to vector<1x64xf32>
    %307 = vector.shape_cast %306 : vector<1x64xf32> to vector<64xf32>
    %308 = vector.shape_cast %307 : vector<64xf32> to vector<1x1x64xf32>
    %309 = vector.broadcast %308 : vector<1x1x64xf32> to vector<2x16x64xf32>
    %310 = arith.mulf %305, %309 : vector<2x16x64xf32>
    %311 = arith.addf %304, %310 : vector<2x16x64xf32>
    %c0_139 = arith.constant 0 : index
    %c10 = arith.constant 10 : index
    %c0_140 = arith.constant 0 : index
    %312 = vector.load %arg34[%c0_139, %c10, %c0_140] : memref<2x46x64xf32, #tpu.memory_space<vmem>>, vector<2x16x64xf32>
    %313 = vector.extract_strided_slice %192 {offsets = [10, 0], sizes = [1, 64], strides = [1, 1]} : vector<31x64xf32> to vector<1x64xf32>
    %314 = vector.shape_cast %313 : vector<1x64xf32> to vector<64xf32>
    %315 = vector.shape_cast %314 : vector<64xf32> to vector<1x1x64xf32>
    %316 = vector.broadcast %315 : vector<1x1x64xf32> to vector<2x16x64xf32>
    %317 = arith.mulf %312, %316 : vector<2x16x64xf32>
    %318 = arith.addf %311, %317 : vector<2x16x64xf32>
    %c0_141 = arith.constant 0 : index
    %c11 = arith.constant 11 : index
    %c0_142 = arith.constant 0 : index
    %319 = vector.load %arg34[%c0_141, %c11, %c0_142] : memref<2x46x64xf32, #tpu.memory_space<vmem>>, vector<2x16x64xf32>
    %320 = vector.extract_strided_slice %192 {offsets = [11, 0], sizes = [1, 64], strides = [1, 1]} : vector<31x64xf32> to vector<1x64xf32>
    %321 = vector.shape_cast %320 : vector<1x64xf32> to vector<64xf32>
    %322 = vector.shape_cast %321 : vector<64xf32> to vector<1x1x64xf32>
    %323 = vector.broadcast %322 : vector<1x1x64xf32> to vector<2x16x64xf32>
    %324 = arith.mulf %319, %323 : vector<2x16x64xf32>
    %325 = arith.addf %318, %324 : vector<2x16x64xf32>
    %c0_143 = arith.constant 0 : index
    %c12 = arith.constant 12 : index
    %c0_144 = arith.constant 0 : index
    %326 = vector.load %arg34[%c0_143, %c12, %c0_144] : memref<2x46x64xf32, #tpu.memory_space<vmem>>, vector<2x16x64xf32>
    %327 = vector.extract_strided_slice %192 {offsets = [12, 0], sizes = [1, 64], strides = [1, 1]} : vector<31x64xf32> to vector<1x64xf32>
    %328 = vector.shape_cast %327 : vector<1x64xf32> to vector<64xf32>
    %329 = vector.shape_cast %328 : vector<64xf32> to vector<1x1x64xf32>
    %330 = vector.broadcast %329 : vector<1x1x64xf32> to vector<2x16x64xf32>
    %331 = arith.mulf %326, %330 : vector<2x16x64xf32>
    %332 = arith.addf %325, %331 : vector<2x16x64xf32>
    %c0_145 = arith.constant 0 : index
    %c13 = arith.constant 13 : index
    %c0_146 = arith.constant 0 : index
    %333 = vector.load %arg34[%c0_145, %c13, %c0_146] : memref<2x46x64xf32, #tpu.memory_space<vmem>>, vector<2x16x64xf32>
    %334 = vector.extract_strided_slice %192 {offsets = [13, 0], sizes = [1, 64], strides = [1, 1]} : vector<31x64xf32> to vector<1x64xf32>
    %335 = vector.shape_cast %334 : vector<1x64xf32> to vector<64xf32>
    %336 = vector.shape_cast %335 : vector<64xf32> to vector<1x1x64xf32>
    %337 = vector.broadcast %336 : vector<1x1x64xf32> to vector<2x16x64xf32>
    %338 = arith.mulf %333, %337 : vector<2x16x64xf32>
    %339 = arith.addf %332, %338 : vector<2x16x64xf32>
    %c0_147 = arith.constant 0 : index
    %c14 = arith.constant 14 : index
    %c0_148 = arith.constant 0 : index
    %340 = vector.load %arg34[%c0_147, %c14, %c0_148] : memref<2x46x64xf32, #tpu.memory_space<vmem>>, vector<2x16x64xf32>
    %341 = vector.extract_strided_slice %192 {offsets = [14, 0], sizes = [1, 64], strides = [1, 1]} : vector<31x64xf32> to vector<1x64xf32>
    %342 = vector.shape_cast %341 : vector<1x64xf32> to vector<64xf32>
    %343 = vector.shape_cast %342 : vector<64xf32> to vector<1x1x64xf32>
    %344 = vector.broadcast %343 : vector<1x1x64xf32> to vector<2x16x64xf32>
    %345 = arith.mulf %340, %344 : vector<2x16x64xf32>
    %346 = arith.addf %339, %345 : vector<2x16x64xf32>
    %c0_149 = arith.constant 0 : index
    %c15_150 = arith.constant 15 : index
    %c0_151 = arith.constant 0 : index
    %347 = vector.load %arg34[%c0_149, %c15_150, %c0_151] : memref<2x46x64xf32, #tpu.memory_space<vmem>>, vector<2x16x64xf32>
    %348 = vector.extract_strided_slice %192 {offsets = [15, 0], sizes = [1, 64], strides = [1, 1]} : vector<31x64xf32> to vector<1x64xf32>
    %349 = vector.shape_cast %348 : vector<1x64xf32> to vector<64xf32>
    %350 = vector.shape_cast %349 : vector<64xf32> to vector<1x1x64xf32>
    %351 = vector.broadcast %350 : vector<1x1x64xf32> to vector<2x16x64xf32>
    %352 = arith.mulf %347, %351 : vector<2x16x64xf32>
    %353 = arith.addf %346, %352 : vector<2x16x64xf32>
    %c0_152 = arith.constant 0 : index
    %c16 = arith.constant 16 : index
    %c0_153 = arith.constant 0 : index
    %354 = vector.load %arg34[%c0_152, %c16, %c0_153] : memref<2x46x64xf32, #tpu.memory_space<vmem>>, vector<2x16x64xf32>
    %355 = vector.extract_strided_slice %192 {offsets = [16, 0], sizes = [1, 64], strides = [1, 1]} : vector<31x64xf32> to vector<1x64xf32>
    %356 = vector.shape_cast %355 : vector<1x64xf32> to vector<64xf32>
    %357 = vector.shape_cast %356 : vector<64xf32> to vector<1x1x64xf32>
    %358 = vector.broadcast %357 : vector<1x1x64xf32> to vector<2x16x64xf32>
    %359 = arith.mulf %354, %358 : vector<2x16x64xf32>
    %360 = arith.addf %353, %359 : vector<2x16x64xf32>
    %c0_154 = arith.constant 0 : index
    %c17 = arith.constant 17 : index
    %c0_155 = arith.constant 0 : index
    %361 = vector.load %arg34[%c0_154, %c17, %c0_155] : memref<2x46x64xf32, #tpu.memory_space<vmem>>, vector<2x16x64xf32>
    %362 = vector.extract_strided_slice %192 {offsets = [17, 0], sizes = [1, 64], strides = [1, 1]} : vector<31x64xf32> to vector<1x64xf32>
    %363 = vector.shape_cast %362 : vector<1x64xf32> to vector<64xf32>
    %364 = vector.shape_cast %363 : vector<64xf32> to vector<1x1x64xf32>
    %365 = vector.broadcast %364 : vector<1x1x64xf32> to vector<2x16x64xf32>
    %366 = arith.mulf %361, %365 : vector<2x16x64xf32>
    %367 = arith.addf %360, %366 : vector<2x16x64xf32>
    %c0_156 = arith.constant 0 : index
    %c18 = arith.constant 18 : index
    %c0_157 = arith.constant 0 : index
    %368 = vector.load %arg34[%c0_156, %c18, %c0_157] : memref<2x46x64xf32, #tpu.memory_space<vmem>>, vector<2x16x64xf32>
    %369 = vector.extract_strided_slice %192 {offsets = [18, 0], sizes = [1, 64], strides = [1, 1]} : vector<31x64xf32> to vector<1x64xf32>
    %370 = vector.shape_cast %369 : vector<1x64xf32> to vector<64xf32>
    %371 = vector.shape_cast %370 : vector<64xf32> to vector<1x1x64xf32>
    %372 = vector.broadcast %371 : vector<1x1x64xf32> to vector<2x16x64xf32>
    %373 = arith.mulf %368, %372 : vector<2x16x64xf32>
    %374 = arith.addf %367, %373 : vector<2x16x64xf32>
    %c0_158 = arith.constant 0 : index
    %c19 = arith.constant 19 : index
    %c0_159 = arith.constant 0 : index
    %375 = vector.load %arg34[%c0_158, %c19, %c0_159] : memref<2x46x64xf32, #tpu.memory_space<vmem>>, vector<2x16x64xf32>
    %376 = vector.extract_strided_slice %192 {offsets = [19, 0], sizes = [1, 64], strides = [1, 1]} : vector<31x64xf32> to vector<1x64xf32>
    %377 = vector.shape_cast %376 : vector<1x64xf32> to vector<64xf32>
    %378 = vector.shape_cast %377 : vector<64xf32> to vector<1x1x64xf32>
    %379 = vector.broadcast %378 : vector<1x1x64xf32> to vector<2x16x64xf32>
    %380 = arith.mulf %375, %379 : vector<2x16x64xf32>
    %381 = arith.addf %374, %380 : vector<2x16x64xf32>
    %c0_160 = arith.constant 0 : index
    %c20 = arith.constant 20 : index
    %c0_161 = arith.constant 0 : index
    %382 = vector.load %arg34[%c0_160, %c20, %c0_161] : memref<2x46x64xf32, #tpu.memory_space<vmem>>, vector<2x16x64xf32>
    %383 = vector.extract_strided_slice %192 {offsets = [20, 0], sizes = [1, 64], strides = [1, 1]} : vector<31x64xf32> to vector<1x64xf32>
    %384 = vector.shape_cast %383 : vector<1x64xf32> to vector<64xf32>
    %385 = vector.shape_cast %384 : vector<64xf32> to vector<1x1x64xf32>
    %386 = vector.broadcast %385 : vector<1x1x64xf32> to vector<2x16x64xf32>
    %387 = arith.mulf %382, %386 : vector<2x16x64xf32>
    %388 = arith.addf %381, %387 : vector<2x16x64xf32>
    %c0_162 = arith.constant 0 : index
    %c21 = arith.constant 21 : index
    %c0_163 = arith.constant 0 : index
    %389 = vector.load %arg34[%c0_162, %c21, %c0_163] : memref<2x46x64xf32, #tpu.memory_space<vmem>>, vector<2x16x64xf32>
    %390 = vector.extract_strided_slice %192 {offsets = [21, 0], sizes = [1, 64], strides = [1, 1]} : vector<31x64xf32> to vector<1x64xf32>
    %391 = vector.shape_cast %390 : vector<1x64xf32> to vector<64xf32>
    %392 = vector.shape_cast %391 : vector<64xf32> to vector<1x1x64xf32>
    %393 = vector.broadcast %392 : vector<1x1x64xf32> to vector<2x16x64xf32>
    %394 = arith.mulf %389, %393 : vector<2x16x64xf32>
    %395 = arith.addf %388, %394 : vector<2x16x64xf32>
    %c0_164 = arith.constant 0 : index
    %c22 = arith.constant 22 : index
    %c0_165 = arith.constant 0 : index
    %396 = vector.load %arg34[%c0_164, %c22, %c0_165] : memref<2x46x64xf32, #tpu.memory_space<vmem>>, vector<2x16x64xf32>
    %397 = vector.extract_strided_slice %192 {offsets = [22, 0], sizes = [1, 64], strides = [1, 1]} : vector<31x64xf32> to vector<1x64xf32>
    %398 = vector.shape_cast %397 : vector<1x64xf32> to vector<64xf32>
    %399 = vector.shape_cast %398 : vector<64xf32> to vector<1x1x64xf32>
    %400 = vector.broadcast %399 : vector<1x1x64xf32> to vector<2x16x64xf32>
    %401 = arith.mulf %396, %400 : vector<2x16x64xf32>
    %402 = arith.addf %395, %401 : vector<2x16x64xf32>
    %c0_166 = arith.constant 0 : index
    %c23 = arith.constant 23 : index
    %c0_167 = arith.constant 0 : index
    %403 = vector.load %arg34[%c0_166, %c23, %c0_167] : memref<2x46x64xf32, #tpu.memory_space<vmem>>, vector<2x16x64xf32>
    %404 = vector.extract_strided_slice %192 {offsets = [23, 0], sizes = [1, 64], strides = [1, 1]} : vector<31x64xf32> to vector<1x64xf32>
    %405 = vector.shape_cast %404 : vector<1x64xf32> to vector<64xf32>
    %406 = vector.shape_cast %405 : vector<64xf32> to vector<1x1x64xf32>
    %407 = vector.broadcast %406 : vector<1x1x64xf32> to vector<2x16x64xf32>
    %408 = arith.mulf %403, %407 : vector<2x16x64xf32>
    %409 = arith.addf %402, %408 : vector<2x16x64xf32>
    %c0_168 = arith.constant 0 : index
    %c24 = arith.constant 24 : index
    %c0_169 = arith.constant 0 : index
    %410 = vector.load %arg34[%c0_168, %c24, %c0_169] : memref<2x46x64xf32, #tpu.memory_space<vmem>>, vector<2x16x64xf32>
    %411 = vector.extract_strided_slice %192 {offsets = [24, 0], sizes = [1, 64], strides = [1, 1]} : vector<31x64xf32> to vector<1x64xf32>
    %412 = vector.shape_cast %411 : vector<1x64xf32> to vector<64xf32>
    %413 = vector.shape_cast %412 : vector<64xf32> to vector<1x1x64xf32>
    %414 = vector.broadcast %413 : vector<1x1x64xf32> to vector<2x16x64xf32>
    %415 = arith.mulf %410, %414 : vector<2x16x64xf32>
    %416 = arith.addf %409, %415 : vector<2x16x64xf32>
    %c0_170 = arith.constant 0 : index
    %c25 = arith.constant 25 : index
    %c0_171 = arith.constant 0 : index
    %417 = vector.load %arg34[%c0_170, %c25, %c0_171] : memref<2x46x64xf32, #tpu.memory_space<vmem>>, vector<2x16x64xf32>
    %418 = vector.extract_strided_slice %192 {offsets = [25, 0], sizes = [1, 64], strides = [1, 1]} : vector<31x64xf32> to vector<1x64xf32>
    %419 = vector.shape_cast %418 : vector<1x64xf32> to vector<64xf32>
    %420 = vector.shape_cast %419 : vector<64xf32> to vector<1x1x64xf32>
    %421 = vector.broadcast %420 : vector<1x1x64xf32> to vector<2x16x64xf32>
    %422 = arith.mulf %417, %421 : vector<2x16x64xf32>
    %423 = arith.addf %416, %422 : vector<2x16x64xf32>
    %c0_172 = arith.constant 0 : index
    %c26 = arith.constant 26 : index
    %c0_173 = arith.constant 0 : index
    %424 = vector.load %arg34[%c0_172, %c26, %c0_173] : memref<2x46x64xf32, #tpu.memory_space<vmem>>, vector<2x16x64xf32>
    %425 = vector.extract_strided_slice %192 {offsets = [26, 0], sizes = [1, 64], strides = [1, 1]} : vector<31x64xf32> to vector<1x64xf32>
    %426 = vector.shape_cast %425 : vector<1x64xf32> to vector<64xf32>
    %427 = vector.shape_cast %426 : vector<64xf32> to vector<1x1x64xf32>
    %428 = vector.broadcast %427 : vector<1x1x64xf32> to vector<2x16x64xf32>
    %429 = arith.mulf %424, %428 : vector<2x16x64xf32>
    %430 = arith.addf %423, %429 : vector<2x16x64xf32>
    %c0_174 = arith.constant 0 : index
    %c27 = arith.constant 27 : index
    %c0_175 = arith.constant 0 : index
    %431 = vector.load %arg34[%c0_174, %c27, %c0_175] : memref<2x46x64xf32, #tpu.memory_space<vmem>>, vector<2x16x64xf32>
    %432 = vector.extract_strided_slice %192 {offsets = [27, 0], sizes = [1, 64], strides = [1, 1]} : vector<31x64xf32> to vector<1x64xf32>
    %433 = vector.shape_cast %432 : vector<1x64xf32> to vector<64xf32>
    %434 = vector.shape_cast %433 : vector<64xf32> to vector<1x1x64xf32>
    %435 = vector.broadcast %434 : vector<1x1x64xf32> to vector<2x16x64xf32>
    %436 = arith.mulf %431, %435 : vector<2x16x64xf32>
    %437 = arith.addf %430, %436 : vector<2x16x64xf32>
    %c0_176 = arith.constant 0 : index
    %c28 = arith.constant 28 : index
    %c0_177 = arith.constant 0 : index
    %438 = vector.load %arg34[%c0_176, %c28, %c0_177] : memref<2x46x64xf32, #tpu.memory_space<vmem>>, vector<2x16x64xf32>
    %439 = vector.extract_strided_slice %192 {offsets = [28, 0], sizes = [1, 64], strides = [1, 1]} : vector<31x64xf32> to vector<1x64xf32>
    %440 = vector.shape_cast %439 : vector<1x64xf32> to vector<64xf32>
    %441 = vector.shape_cast %440 : vector<64xf32> to vector<1x1x64xf32>
    %442 = vector.broadcast %441 : vector<1x1x64xf32> to vector<2x16x64xf32>
    %443 = arith.mulf %438, %442 : vector<2x16x64xf32>
    %444 = arith.addf %437, %443 : vector<2x16x64xf32>
    %c0_178 = arith.constant 0 : index
    %c29 = arith.constant 29 : index
    %c0_179 = arith.constant 0 : index
    %445 = vector.load %arg34[%c0_178, %c29, %c0_179] : memref<2x46x64xf32, #tpu.memory_space<vmem>>, vector<2x16x64xf32>
    %446 = vector.extract_strided_slice %192 {offsets = [29, 0], sizes = [1, 64], strides = [1, 1]} : vector<31x64xf32> to vector<1x64xf32>
    %447 = vector.shape_cast %446 : vector<1x64xf32> to vector<64xf32>
    %448 = vector.shape_cast %447 : vector<64xf32> to vector<1x1x64xf32>
    %449 = vector.broadcast %448 : vector<1x1x64xf32> to vector<2x16x64xf32>
    %450 = arith.mulf %445, %449 : vector<2x16x64xf32>
    %451 = arith.addf %444, %450 : vector<2x16x64xf32>
    %c0_180 = arith.constant 0 : index
    %c30 = arith.constant 30 : index
    %c0_181 = arith.constant 0 : index
    %452 = vector.load %arg34[%c0_180, %c30, %c0_181] : memref<2x46x64xf32, #tpu.memory_space<vmem>>, vector<2x16x64xf32>
    %453 = vector.extract_strided_slice %192 {offsets = [30, 0], sizes = [1, 64], strides = [1, 1]} : vector<31x64xf32> to vector<1x64xf32>
    %454 = vector.shape_cast %453 : vector<1x64xf32> to vector<64xf32>
    %455 = vector.shape_cast %454 : vector<64xf32> to vector<1x1x64xf32>
    %456 = vector.broadcast %455 : vector<1x1x64xf32> to vector<2x16x64xf32>
    %457 = arith.mulf %452, %456 : vector<2x16x64xf32>
    %458 = arith.addf %451, %457 : vector<2x16x64xf32>
    %459 = vector.shape_cast %458 : vector<2x16x64xf32> to vector<32x64xf32>
    %460 = vector.broadcast %194 : vector<1x64xf32> to vector<32x64xf32>
    %461 = arith.addf %459, %460 : vector<32x64xf32>
    %cst_182 = arith.constant dense<0.000000e+00> : vector<64xf32>
    %462 = vector.multi_reduction <add>, %461, %cst_182 [0] : vector<32x64xf32> to vector<64xf32>
    %463 = vector.shape_cast %462 : vector<64xf32> to vector<1x64xf32>
    %cst_183 = arith.constant 3.200000e+01 : f32
    %464 = vector.broadcast %cst_183 : f32 to vector<1x64xf32>
    %465 = arith.divf %463, %464 : vector<1x64xf32>
    %466 = vector.broadcast %465 : vector<1x64xf32> to vector<32x64xf32>
    %467 = arith.subf %461, %466 : vector<32x64xf32>
    %468 = arith.mulf %467, %467 : vector<32x64xf32>
    %cst_184 = arith.constant dense<0.000000e+00> : vector<64xf32>
    %469 = vector.multi_reduction <add>, %468, %cst_184 [0] : vector<32x64xf32> to vector<64xf32>
    %470 = vector.shape_cast %469 : vector<64xf32> to vector<1x64xf32>
    %cst_185 = arith.constant 3.200000e+01 : f32
    %471 = vector.broadcast %cst_185 : f32 to vector<1x64xf32>
    %472 = arith.divf %470, %471 : vector<1x64xf32>
    %473 = vector.broadcast %465 : vector<1x64xf32> to vector<32x64xf32>
    %474 = arith.subf %461, %473 : vector<32x64xf32>
    %cst_186 = arith.constant 9.99999974E-6 : f32
    %475 = vector.broadcast %cst_186 : f32 to vector<1x64xf32>
    %476 = arith.addf %472, %475 : vector<1x64xf32>
    %477 = math.rsqrt %476 : vector<1x64xf32>
    %478 = vector.broadcast %477 : vector<1x64xf32> to vector<32x64xf32>
    %479 = arith.mulf %474, %478 : vector<32x64xf32>
    %480 = vector.broadcast %196 : vector<1x64xf32> to vector<32x64xf32>
    %481 = arith.mulf %479, %480 : vector<32x64xf32>
    %482 = vector.broadcast %198 : vector<1x64xf32> to vector<32x64xf32>
    %483 = arith.addf %481, %482 : vector<32x64xf32>
    %484 = arith.negf %483 : vector<32x64xf32>
    %485 = math.exp %484 : vector<32x64xf32>
    %cst_187 = arith.constant 1.000000e+00 : f32
    %486 = vector.broadcast %cst_187 : f32 to vector<32x64xf32>
    %487 = arith.addf %486, %485 : vector<32x64xf32>
    %488 = arith.divf %486, %487 : vector<32x64xf32>
    %489 = arith.mulf %483, %488 : vector<32x64xf32>
    %cst_188 = arith.constant dense<0.000000e+00> : vector<32x64xf32>
    %490 = tpu.matmul %489, %200, %cst_188 {dimension_numbers = #tpu.dot_dimension_numbers<[1], [0], [0], [1], [0, 0, 1, 1], [], []>} : vector<32x64xf32>, vector<64x64xf32>, vector<32x64xf32> -> vector<32x64xf32>
    %491 = vector.broadcast %202 : vector<1x64xf32> to vector<32x64xf32>
    %492 = arith.addf %490, %491 : vector<32x64xf32>
    %493 = vector.shape_cast %492 : vector<32x64xf32> to vector<2x16x64xf32>
    %494 = arith.addf %182, %493 : vector<2x16x64xf32>
    %c0_189 = arith.constant 0 : index
    %c0_190 = arith.constant 0 : index
    %c0_191 = arith.constant 0 : index
    %495 = vector.load %arg23[%c0_189, %c0_190, %c0_191] : memref<2x1x64xf32, #tpu.memory_space<vmem>>, vector<1x1x64xf32>
    %496 = vector.shape_cast %495 : vector<1x1x64xf32> to vector<1x64xf32>
    %c0_192 = arith.constant 0 : index
    %c0_193 = arith.constant 0 : index
    %c0_194 = arith.constant 0 : index
    %497 = vector.load %arg24[%c0_192, %c0_193, %c0_194] : memref<2x1x64xf32, #tpu.memory_space<vmem>>, vector<1x1x64xf32>
    %498 = vector.shape_cast %497 : vector<1x1x64xf32> to vector<1x64xf32>
    %c0_195 = arith.constant 0 : index
    %c0_196 = arith.constant 0 : index
    %c0_197 = arith.constant 0 : index
    %499 = vector.load %arg25[%c0_195, %c0_196, %c0_197] : memref<2x64x128xf32, #tpu.memory_space<vmem>>, vector<1x64x128xf32>
    %500 = vector.shape_cast %499 : vector<1x64x128xf32> to vector<64x128xf32>
    %c0_198 = arith.constant 0 : index
    %c0_199 = arith.constant 0 : index
    %c0_200 = arith.constant 0 : index
    %501 = vector.load %arg26[%c0_198, %c0_199, %c0_200] : memref<2x1x128xf32, #tpu.memory_space<vmem>>, vector<1x1x128xf32>
    %502 = vector.shape_cast %501 : vector<1x1x128xf32> to vector<1x128xf32>
    %c0_201 = arith.constant 0 : index
    %c0_202 = arith.constant 0 : index
    %c0_203 = arith.constant 0 : index
    %503 = vector.load %arg27[%c0_201, %c0_202, %c0_203] : memref<2x128x64xf32, #tpu.memory_space<vmem>>, vector<1x128x64xf32>
    %504 = vector.shape_cast %503 : vector<1x128x64xf32> to vector<128x64xf32>
    %c0_204 = arith.constant 0 : index
    %c0_205 = arith.constant 0 : index
    %c0_206 = arith.constant 0 : index
    %505 = vector.load %arg28[%c0_204, %c0_205, %c0_206] : memref<2x1x64xf32, #tpu.memory_space<vmem>>, vector<1x1x64xf32>
    %506 = vector.shape_cast %505 : vector<1x1x64xf32> to vector<1x64xf32>
    %cst_207 = arith.constant dense<0.000000e+00> : vector<2x16xf32>
    %507 = vector.multi_reduction <add>, %494, %cst_207 [2] : vector<2x16x64xf32> to vector<2x16xf32>
    %508 = vector.shape_cast %507 : vector<2x16xf32> to vector<2x16x1xf32>
    %cst_208 = arith.constant 6.400000e+01 : f32
    %509 = vector.broadcast %cst_208 : f32 to vector<2x16x1xf32>
    %510 = arith.divf %508, %509 : vector<2x16x1xf32>
    %511 = vector.broadcast %510 : vector<2x16x1xf32> to vector<2x16x64xf32>
    %512 = arith.subf %494, %511 : vector<2x16x64xf32>
    %513 = arith.mulf %512, %512 : vector<2x16x64xf32>
    %cst_209 = arith.constant dense<0.000000e+00> : vector<2x16xf32>
    %514 = vector.multi_reduction <add>, %513, %cst_209 [2] : vector<2x16x64xf32> to vector<2x16xf32>
    %515 = vector.shape_cast %514 : vector<2x16xf32> to vector<2x16x1xf32>
    %cst_210 = arith.constant 6.400000e+01 : f32
    %516 = vector.broadcast %cst_210 : f32 to vector<2x16x1xf32>
    %517 = arith.divf %515, %516 : vector<2x16x1xf32>
    %518 = vector.broadcast %510 : vector<2x16x1xf32> to vector<2x16x64xf32>
    %519 = arith.subf %494, %518 : vector<2x16x64xf32>
    %cst_211 = arith.constant 9.99999974E-6 : f32
    %520 = vector.broadcast %cst_211 : f32 to vector<2x16x1xf32>
    %521 = arith.addf %517, %520 : vector<2x16x1xf32>
    %522 = math.rsqrt %521 : vector<2x16x1xf32>
    %523 = vector.broadcast %522 : vector<2x16x1xf32> to vector<2x16x64xf32>
    %524 = arith.mulf %519, %523 : vector<2x16x64xf32>
    %525 = vector.shape_cast %496 : vector<1x64xf32> to vector<1x1x64xf32>
    %526 = vector.broadcast %525 : vector<1x1x64xf32> to vector<2x16x64xf32>
    %527 = arith.mulf %524, %526 : vector<2x16x64xf32>
    %528 = vector.shape_cast %498 : vector<1x64xf32> to vector<1x1x64xf32>
    %529 = vector.broadcast %528 : vector<1x1x64xf32> to vector<2x16x64xf32>
    %530 = arith.addf %527, %529 : vector<2x16x64xf32>
    %531 = vector.shape_cast %530 : vector<2x16x64xf32> to vector<32x64xf32>
    %cst_212 = arith.constant dense<0.000000e+00> : vector<32x128xf32>
    %532 = tpu.matmul %531, %500, %cst_212 {dimension_numbers = #tpu.dot_dimension_numbers<[1], [0], [0], [1], [0, 0, 1, 1], [], []>} : vector<32x64xf32>, vector<64x128xf32>, vector<32x128xf32> -> vector<32x128xf32>
    %533 = vector.broadcast %502 : vector<1x128xf32> to vector<32x128xf32>
    %534 = arith.addf %532, %533 : vector<32x128xf32>
    %535 = arith.negf %534 : vector<32x128xf32>
    %536 = math.exp %535 : vector<32x128xf32>
    %cst_213 = arith.constant 1.000000e+00 : f32
    %537 = vector.broadcast %cst_213 : f32 to vector<32x128xf32>
    %538 = arith.addf %537, %536 : vector<32x128xf32>
    %539 = arith.divf %537, %538 : vector<32x128xf32>
    %540 = arith.mulf %534, %539 : vector<32x128xf32>
    %cst_214 = arith.constant dense<0.000000e+00> : vector<32x64xf32>
    %541 = tpu.matmul %540, %504, %cst_214 {dimension_numbers = #tpu.dot_dimension_numbers<[1], [0], [0], [1], [0, 0, 1, 1], [], []>} : vector<32x128xf32>, vector<128x64xf32>, vector<32x64xf32> -> vector<32x64xf32>
    %542 = vector.broadcast %506 : vector<1x64xf32> to vector<32x64xf32>
    %543 = arith.addf %541, %542 : vector<32x64xf32>
    %544 = vector.shape_cast %543 : vector<32x64xf32> to vector<2x16x64xf32>
    %cst_215 = arith.constant 5.000000e-01 : f32
    %545 = vector.broadcast %cst_215 : f32 to vector<2x16x64xf32>
    %546 = arith.mulf %545, %544 : vector<2x16x64xf32>
    %547 = arith.addf %494, %546 : vector<2x16x64xf32>
    %c0_216 = arith.constant 0 : index
    %c0_217 = arith.constant 0 : index
    %c0_218 = arith.constant 0 : index
    %548 = vector.load %arg29[%c0_216, %c0_217, %c0_218] : memref<2x1x64xf32, #tpu.memory_space<vmem>>, vector<1x1x64xf32>
    %549 = vector.shape_cast %548 : vector<1x1x64xf32> to vector<1x64xf32>
    %c0_219 = arith.constant 0 : index
    %c0_220 = arith.constant 0 : index
    %c0_221 = arith.constant 0 : index
    %550 = vector.load %arg30[%c0_219, %c0_220, %c0_221] : memref<2x1x64xf32, #tpu.memory_space<vmem>>, vector<1x1x64xf32>
    %551 = vector.shape_cast %550 : vector<1x1x64xf32> to vector<1x64xf32>
    %cst_222 = arith.constant dense<0.000000e+00> : vector<2x16xf32>
    %552 = vector.multi_reduction <add>, %547, %cst_222 [2] : vector<2x16x64xf32> to vector<2x16xf32>
    %553 = vector.shape_cast %552 : vector<2x16xf32> to vector<2x16x1xf32>
    %cst_223 = arith.constant 6.400000e+01 : f32
    %554 = vector.broadcast %cst_223 : f32 to vector<2x16x1xf32>
    %555 = arith.divf %553, %554 : vector<2x16x1xf32>
    %556 = vector.broadcast %555 : vector<2x16x1xf32> to vector<2x16x64xf32>
    %557 = arith.subf %547, %556 : vector<2x16x64xf32>
    %558 = arith.mulf %557, %557 : vector<2x16x64xf32>
    %cst_224 = arith.constant dense<0.000000e+00> : vector<2x16xf32>
    %559 = vector.multi_reduction <add>, %558, %cst_224 [2] : vector<2x16x64xf32> to vector<2x16xf32>
    %560 = vector.shape_cast %559 : vector<2x16xf32> to vector<2x16x1xf32>
    %cst_225 = arith.constant 6.400000e+01 : f32
    %561 = vector.broadcast %cst_225 : f32 to vector<2x16x1xf32>
    %562 = arith.divf %560, %561 : vector<2x16x1xf32>
    %563 = vector.broadcast %555 : vector<2x16x1xf32> to vector<2x16x64xf32>
    %564 = arith.subf %547, %563 : vector<2x16x64xf32>
    %cst_226 = arith.constant 9.99999974E-6 : f32
    %565 = vector.broadcast %cst_226 : f32 to vector<2x16x1xf32>
    %566 = arith.addf %562, %565 : vector<2x16x1xf32>
    %567 = math.rsqrt %566 : vector<2x16x1xf32>
    %568 = vector.broadcast %567 : vector<2x16x1xf32> to vector<2x16x64xf32>
    %569 = arith.mulf %564, %568 : vector<2x16x64xf32>
    %570 = vector.shape_cast %549 : vector<1x64xf32> to vector<1x1x64xf32>
    %571 = vector.broadcast %570 : vector<1x1x64xf32> to vector<2x16x64xf32>
    %572 = arith.mulf %569, %571 : vector<2x16x64xf32>
    %573 = vector.shape_cast %551 : vector<1x64xf32> to vector<1x1x64xf32>
    %574 = vector.broadcast %573 : vector<1x1x64xf32> to vector<2x16x64xf32>
    %575 = arith.addf %572, %574 : vector<2x16x64xf32>
    %c1_227 = arith.constant 1 : index
    %c0_228 = arith.constant 0 : index
    %c0_229 = arith.constant 0 : index
    %576 = vector.load %arg1[%c1_227, %c0_228, %c0_229] : memref<2x1x64xf32, #tpu.memory_space<vmem>>, vector<1x1x64xf32>
    %577 = vector.shape_cast %576 : vector<1x1x64xf32> to vector<1x64xf32>
    %c1_230 = arith.constant 1 : index
    %c0_231 = arith.constant 0 : index
    %c0_232 = arith.constant 0 : index
    %578 = vector.load %arg2[%c1_230, %c0_231, %c0_232] : memref<2x1x64xf32, #tpu.memory_space<vmem>>, vector<1x1x64xf32>
    %579 = vector.shape_cast %578 : vector<1x1x64xf32> to vector<1x64xf32>
    %c1_233 = arith.constant 1 : index
    %c0_234 = arith.constant 0 : index
    %c0_235 = arith.constant 0 : index
    %580 = vector.load %arg3[%c1_233, %c0_234, %c0_235] : memref<2x64x128xf32, #tpu.memory_space<vmem>>, vector<1x64x128xf32>
    %581 = vector.shape_cast %580 : vector<1x64x128xf32> to vector<64x128xf32>
    %c1_236 = arith.constant 1 : index
    %c0_237 = arith.constant 0 : index
    %c0_238 = arith.constant 0 : index
    %582 = vector.load %arg4[%c1_236, %c0_237, %c0_238] : memref<2x1x128xf32, #tpu.memory_space<vmem>>, vector<1x1x128xf32>
    %583 = vector.shape_cast %582 : vector<1x1x128xf32> to vector<1x128xf32>
    %c1_239 = arith.constant 1 : index
    %c0_240 = arith.constant 0 : index
    %c0_241 = arith.constant 0 : index
    %584 = vector.load %arg5[%c1_239, %c0_240, %c0_241] : memref<2x128x64xf32, #tpu.memory_space<vmem>>, vector<1x128x64xf32>
    %585 = vector.shape_cast %584 : vector<1x128x64xf32> to vector<128x64xf32>
    %c1_242 = arith.constant 1 : index
    %c0_243 = arith.constant 0 : index
    %c0_244 = arith.constant 0 : index
    %586 = vector.load %arg6[%c1_242, %c0_243, %c0_244] : memref<2x1x64xf32, #tpu.memory_space<vmem>>, vector<1x1x64xf32>
    %587 = vector.shape_cast %586 : vector<1x1x64xf32> to vector<1x64xf32>
    %cst_245 = arith.constant dense<0.000000e+00> : vector<2x16xf32>
    %588 = vector.multi_reduction <add>, %575, %cst_245 [2] : vector<2x16x64xf32> to vector<2x16xf32>
    %589 = vector.shape_cast %588 : vector<2x16xf32> to vector<2x16x1xf32>
    %cst_246 = arith.constant 6.400000e+01 : f32
    %590 = vector.broadcast %cst_246 : f32 to vector<2x16x1xf32>
    %591 = arith.divf %589, %590 : vector<2x16x1xf32>
    %592 = vector.broadcast %591 : vector<2x16x1xf32> to vector<2x16x64xf32>
    %593 = arith.subf %575, %592 : vector<2x16x64xf32>
    %594 = arith.mulf %593, %593 : vector<2x16x64xf32>
    %cst_247 = arith.constant dense<0.000000e+00> : vector<2x16xf32>
    %595 = vector.multi_reduction <add>, %594, %cst_247 [2] : vector<2x16x64xf32> to vector<2x16xf32>
    %596 = vector.shape_cast %595 : vector<2x16xf32> to vector<2x16x1xf32>
    %cst_248 = arith.constant 6.400000e+01 : f32
    %597 = vector.broadcast %cst_248 : f32 to vector<2x16x1xf32>
    %598 = arith.divf %596, %597 : vector<2x16x1xf32>
    %599 = vector.broadcast %591 : vector<2x16x1xf32> to vector<2x16x64xf32>
    %600 = arith.subf %575, %599 : vector<2x16x64xf32>
    %cst_249 = arith.constant 9.99999974E-6 : f32
    %601 = vector.broadcast %cst_249 : f32 to vector<2x16x1xf32>
    %602 = arith.addf %598, %601 : vector<2x16x1xf32>
    %603 = math.rsqrt %602 : vector<2x16x1xf32>
    %604 = vector.broadcast %603 : vector<2x16x1xf32> to vector<2x16x64xf32>
    %605 = arith.mulf %600, %604 : vector<2x16x64xf32>
    %606 = vector.shape_cast %577 : vector<1x64xf32> to vector<1x1x64xf32>
    %607 = vector.broadcast %606 : vector<1x1x64xf32> to vector<2x16x64xf32>
    %608 = arith.mulf %605, %607 : vector<2x16x64xf32>
    %609 = vector.shape_cast %579 : vector<1x64xf32> to vector<1x1x64xf32>
    %610 = vector.broadcast %609 : vector<1x1x64xf32> to vector<2x16x64xf32>
    %611 = arith.addf %608, %610 : vector<2x16x64xf32>
    %612 = vector.shape_cast %611 : vector<2x16x64xf32> to vector<32x64xf32>
    %cst_250 = arith.constant dense<0.000000e+00> : vector<32x128xf32>
    %613 = tpu.matmul %612, %581, %cst_250 {dimension_numbers = #tpu.dot_dimension_numbers<[1], [0], [0], [1], [0, 0, 1, 1], [], []>} : vector<32x64xf32>, vector<64x128xf32>, vector<32x128xf32> -> vector<32x128xf32>
    %614 = vector.broadcast %583 : vector<1x128xf32> to vector<32x128xf32>
    %615 = arith.addf %613, %614 : vector<32x128xf32>
    %616 = arith.negf %615 : vector<32x128xf32>
    %617 = math.exp %616 : vector<32x128xf32>
    %cst_251 = arith.constant 1.000000e+00 : f32
    %618 = vector.broadcast %cst_251 : f32 to vector<32x128xf32>
    %619 = arith.addf %618, %617 : vector<32x128xf32>
    %620 = arith.divf %618, %619 : vector<32x128xf32>
    %621 = arith.mulf %615, %620 : vector<32x128xf32>
    %cst_252 = arith.constant dense<0.000000e+00> : vector<32x64xf32>
    %622 = tpu.matmul %621, %585, %cst_252 {dimension_numbers = #tpu.dot_dimension_numbers<[1], [0], [0], [1], [0, 0, 1, 1], [], []>} : vector<32x128xf32>, vector<128x64xf32>, vector<32x64xf32> -> vector<32x64xf32>
    %623 = vector.broadcast %587 : vector<1x64xf32> to vector<32x64xf32>
    %624 = arith.addf %622, %623 : vector<32x64xf32>
    %625 = vector.shape_cast %624 : vector<32x64xf32> to vector<2x16x64xf32>
    %cst_253 = arith.constant 5.000000e-01 : f32
    %626 = vector.broadcast %cst_253 : f32 to vector<2x16x64xf32>
    %627 = arith.mulf %626, %625 : vector<2x16x64xf32>
    %628 = arith.addf %575, %627 : vector<2x16x64xf32>
    %c1_254 = arith.constant 1 : index
    %c0_255 = arith.constant 0 : index
    %c0_256 = arith.constant 0 : index
    %629 = vector.load %arg7[%c1_254, %c0_255, %c0_256] : memref<2x1x64xf32, #tpu.memory_space<vmem>>, vector<1x1x64xf32>
    %630 = vector.shape_cast %629 : vector<1x1x64xf32> to vector<1x64xf32>
    %c1_257 = arith.constant 1 : index
    %c0_258 = arith.constant 0 : index
    %c0_259 = arith.constant 0 : index
    %631 = vector.load %arg8[%c1_257, %c0_258, %c0_259] : memref<2x1x64xf32, #tpu.memory_space<vmem>>, vector<1x1x64xf32>
    %632 = vector.shape_cast %631 : vector<1x1x64xf32> to vector<1x64xf32>
    %c1_260 = arith.constant 1 : index
    %c0_261 = arith.constant 0 : index
    %c0_262 = arith.constant 0 : index
    %633 = vector.load %arg9[%c1_260, %c0_261, %c0_262] : memref<2x64x192xf32, #tpu.memory_space<vmem>>, vector<1x64x192xf32>
    %634 = vector.shape_cast %633 : vector<1x64x192xf32> to vector<64x192xf32>
    %c1_263 = arith.constant 1 : index
    %c0_264 = arith.constant 0 : index
    %c0_265 = arith.constant 0 : index
    %635 = vector.load %arg10[%c1_263, %c0_264, %c0_265] : memref<2x1x192xf32, #tpu.memory_space<vmem>>, vector<1x1x192xf32>
    %636 = vector.shape_cast %635 : vector<1x1x192xf32> to vector<1x192xf32>
    %c1_266 = arith.constant 1 : index
    %c0_267 = arith.constant 0 : index
    %c0_268 = arith.constant 0 : index
    %637 = vector.load %arg11[%c1_266, %c0_267, %c0_268] : memref<2x64x64xf32, #tpu.memory_space<vmem>>, vector<1x64x64xf32>
    %638 = vector.shape_cast %637 : vector<1x64x64xf32> to vector<64x64xf32>
    %c1_269 = arith.constant 1 : index
    %c0_270 = arith.constant 0 : index
    %c0_271 = arith.constant 0 : index
    %639 = vector.load %arg12[%c1_269, %c0_270, %c0_271] : memref<2x1x64xf32, #tpu.memory_space<vmem>>, vector<1x1x64xf32>
    %640 = vector.shape_cast %639 : vector<1x1x64xf32> to vector<1x64xf32>
    %cst_272 = arith.constant dense<0.000000e+00> : vector<2x16xf32>
    %641 = vector.multi_reduction <add>, %628, %cst_272 [2] : vector<2x16x64xf32> to vector<2x16xf32>
    %642 = vector.shape_cast %641 : vector<2x16xf32> to vector<2x16x1xf32>
    %cst_273 = arith.constant 6.400000e+01 : f32
    %643 = vector.broadcast %cst_273 : f32 to vector<2x16x1xf32>
    %644 = arith.divf %642, %643 : vector<2x16x1xf32>
    %645 = vector.broadcast %644 : vector<2x16x1xf32> to vector<2x16x64xf32>
    %646 = arith.subf %628, %645 : vector<2x16x64xf32>
    %647 = arith.mulf %646, %646 : vector<2x16x64xf32>
    %cst_274 = arith.constant dense<0.000000e+00> : vector<2x16xf32>
    %648 = vector.multi_reduction <add>, %647, %cst_274 [2] : vector<2x16x64xf32> to vector<2x16xf32>
    %649 = vector.shape_cast %648 : vector<2x16xf32> to vector<2x16x1xf32>
    %cst_275 = arith.constant 6.400000e+01 : f32
    %650 = vector.broadcast %cst_275 : f32 to vector<2x16x1xf32>
    %651 = arith.divf %649, %650 : vector<2x16x1xf32>
    %652 = vector.broadcast %644 : vector<2x16x1xf32> to vector<2x16x64xf32>
    %653 = arith.subf %628, %652 : vector<2x16x64xf32>
    %cst_276 = arith.constant 9.99999974E-6 : f32
    %654 = vector.broadcast %cst_276 : f32 to vector<2x16x1xf32>
    %655 = arith.addf %651, %654 : vector<2x16x1xf32>
    %656 = math.rsqrt %655 : vector<2x16x1xf32>
    %657 = vector.broadcast %656 : vector<2x16x1xf32> to vector<2x16x64xf32>
    %658 = arith.mulf %653, %657 : vector<2x16x64xf32>
    %659 = vector.shape_cast %630 : vector<1x64xf32> to vector<1x1x64xf32>
    %660 = vector.broadcast %659 : vector<1x1x64xf32> to vector<2x16x64xf32>
    %661 = arith.mulf %658, %660 : vector<2x16x64xf32>
    %662 = vector.shape_cast %632 : vector<1x64xf32> to vector<1x1x64xf32>
    %663 = vector.broadcast %662 : vector<1x1x64xf32> to vector<2x16x64xf32>
    %664 = arith.addf %661, %663 : vector<2x16x64xf32>
    %665 = vector.shape_cast %664 : vector<2x16x64xf32> to vector<32x64xf32>
    %cst_277 = arith.constant dense<0.000000e+00> : vector<32x192xf32>
    %666 = tpu.matmul %665, %634, %cst_277 {dimension_numbers = #tpu.dot_dimension_numbers<[1], [0], [0], [1], [0, 0, 1, 1], [], []>} : vector<32x64xf32>, vector<64x192xf32>, vector<32x192xf32> -> vector<32x192xf32>
    %667 = vector.broadcast %636 : vector<1x192xf32> to vector<32x192xf32>
    %668 = arith.addf %666, %667 : vector<32x192xf32>
    %669 = vector.shape_cast %668 : vector<32x192xf32> to vector<2x16x192xf32>
    %670 = vector.extract_strided_slice %669 {offsets = [0, 0, 0], sizes = [2, 16, 64], strides = [1, 1, 1]} : vector<2x16x192xf32> to vector<2x16x64xf32>
    %cst_278 = arith.constant 2.500000e-01 : f32
    %671 = vector.broadcast %cst_278 : f32 to vector<2x16x64xf32>
    %672 = arith.mulf %670, %671 : vector<2x16x64xf32>
    %673 = vector.extract_strided_slice %669 {offsets = [0, 0, 64], sizes = [2, 16, 64], strides = [1, 1, 1]} : vector<2x16x192xf32> to vector<2x16x64xf32>
    %674 = vector.extract_strided_slice %669 {offsets = [0, 0, 128], sizes = [2, 16, 64], strides = [1, 1, 1]} : vector<2x16x192xf32> to vector<2x16x64xf32>
    %cst_279 = arith.constant 0.000000e+00 : f32
    %675 = vector.broadcast %cst_279 : f32 to vector<32x64xf32>
    %676 = vector.extract_strided_slice %672 {offsets = [0, 0, 0], sizes = [2, 16, 16], strides = [1, 1, 1]} : vector<2x16x64xf32> to vector<2x16x16xf32>
    %677 = vector.extract_strided_slice %673 {offsets = [0, 0, 0], sizes = [2, 16, 16], strides = [1, 1, 1]} : vector<2x16x64xf32> to vector<2x16x16xf32>
    %678 = vector.extract_strided_slice %674 {offsets = [0, 0, 0], sizes = [2, 16, 16], strides = [1, 1, 1]} : vector<2x16x64xf32> to vector<2x16x16xf32>
    "tpu.trace_start"() <{level = 10 : i32, message = "btd,bsd->bts"}> : () -> ()
    %cst_280 = arith.constant dense<0.000000e+00> : vector<2x16x16xf32>
    %679 = tpu.matmul %676, %677, %cst_280 {dimension_numbers = #tpu.dot_dimension_numbers<[2], [2], [1], [1], [0, 0, 0, 1, 1, 1], [0], [0]>} : vector<2x16x16xf32>, vector<2x16x16xf32>, vector<2x16x16xf32> -> vector<2x16x16xf32>
    "tpu.trace_stop"() : () -> ()
    %cst_281 = arith.constant dense<0xFF800000> : vector<2x16xf32>
    %680 = vector.multi_reduction <maximumf>, %679, %cst_281 [2] : vector<2x16x16xf32> to vector<2x16xf32>
    %681 = vector.shape_cast %680 : vector<2x16xf32> to vector<2x16x1xf32>
    %682 = vector.broadcast %681 : vector<2x16x1xf32> to vector<2x16x16xf32>
    %683 = arith.subf %679, %682 : vector<2x16x16xf32>
    %684 = math.exp %683 : vector<2x16x16xf32>
    %cst_282 = arith.constant dense<0.000000e+00> : vector<2x16xf32>
    %685 = vector.multi_reduction <add>, %684, %cst_282 [2] : vector<2x16x16xf32> to vector<2x16xf32>
    %686 = vector.shape_cast %685 : vector<2x16xf32> to vector<2x16x1xf32>
    %687 = tpu.reciprocal %686 {approx = true} : vector<2x16x1xf32> -> vector<2x16x1xf32>
    %688 = vector.broadcast %687 : vector<2x16x1xf32> to vector<2x16x16xf32>
    %689 = arith.mulf %684, %688 : vector<2x16x16xf32>
    "tpu.trace_start"() <{level = 10 : i32, message = "bts,bsd->btd"}> : () -> ()
    %cst_283 = arith.constant dense<0.000000e+00> : vector<2x16x16xf32>
    %690 = tpu.matmul %689, %678, %cst_283 {dimension_numbers = #tpu.dot_dimension_numbers<[2], [1], [1], [2], [0, 0, 0, 1, 1, 2], [0], [0]>} : vector<2x16x16xf32>, vector<2x16x16xf32>, vector<2x16x16xf32> -> vector<2x16x16xf32>
    "tpu.trace_stop"() : () -> ()
    %691 = vector.shape_cast %690 : vector<2x16x16xf32> to vector<32x16xf32>
    %692 = vector.extract_strided_slice %638 {offsets = [0, 0], sizes = [16, 64], strides = [1, 1]} : vector<64x64xf32> to vector<16x64xf32>
    %cst_284 = arith.constant dense<0.000000e+00> : vector<32x64xf32>
    %693 = tpu.matmul %691, %692, %cst_284 {dimension_numbers = #tpu.dot_dimension_numbers<[1], [0], [0], [1], [0, 0, 1, 1], [], []>} : vector<32x16xf32>, vector<16x64xf32>, vector<32x64xf32> -> vector<32x64xf32>
    %694 = arith.addf %675, %693 : vector<32x64xf32>
    %695 = vector.extract_strided_slice %672 {offsets = [0, 0, 16], sizes = [2, 16, 16], strides = [1, 1, 1]} : vector<2x16x64xf32> to vector<2x16x16xf32>
    %696 = vector.extract_strided_slice %673 {offsets = [0, 0, 16], sizes = [2, 16, 16], strides = [1, 1, 1]} : vector<2x16x64xf32> to vector<2x16x16xf32>
    %697 = vector.extract_strided_slice %674 {offsets = [0, 0, 16], sizes = [2, 16, 16], strides = [1, 1, 1]} : vector<2x16x64xf32> to vector<2x16x16xf32>
    "tpu.trace_start"() <{level = 10 : i32, message = "btd,bsd->bts"}> : () -> ()
    %cst_285 = arith.constant dense<0.000000e+00> : vector<2x16x16xf32>
    %698 = tpu.matmul %695, %696, %cst_285 {dimension_numbers = #tpu.dot_dimension_numbers<[2], [2], [1], [1], [0, 0, 0, 1, 1, 1], [0], [0]>} : vector<2x16x16xf32>, vector<2x16x16xf32>, vector<2x16x16xf32> -> vector<2x16x16xf32>
    "tpu.trace_stop"() : () -> ()
    %cst_286 = arith.constant dense<0xFF800000> : vector<2x16xf32>
    %699 = vector.multi_reduction <maximumf>, %698, %cst_286 [2] : vector<2x16x16xf32> to vector<2x16xf32>
    %700 = vector.shape_cast %699 : vector<2x16xf32> to vector<2x16x1xf32>
    %701 = vector.broadcast %700 : vector<2x16x1xf32> to vector<2x16x16xf32>
    %702 = arith.subf %698, %701 : vector<2x16x16xf32>
    %703 = math.exp %702 : vector<2x16x16xf32>
    %cst_287 = arith.constant dense<0.000000e+00> : vector<2x16xf32>
    %704 = vector.multi_reduction <add>, %703, %cst_287 [2] : vector<2x16x16xf32> to vector<2x16xf32>
    %705 = vector.shape_cast %704 : vector<2x16xf32> to vector<2x16x1xf32>
    %706 = tpu.reciprocal %705 {approx = true} : vector<2x16x1xf32> -> vector<2x16x1xf32>
    %707 = vector.broadcast %706 : vector<2x16x1xf32> to vector<2x16x16xf32>
    %708 = arith.mulf %703, %707 : vector<2x16x16xf32>
    "tpu.trace_start"() <{level = 10 : i32, message = "bts,bsd->btd"}> : () -> ()
    %cst_288 = arith.constant dense<0.000000e+00> : vector<2x16x16xf32>
    %709 = tpu.matmul %708, %697, %cst_288 {dimension_numbers = #tpu.dot_dimension_numbers<[2], [1], [1], [2], [0, 0, 0, 1, 1, 2], [0], [0]>} : vector<2x16x16xf32>, vector<2x16x16xf32>, vector<2x16x16xf32> -> vector<2x16x16xf32>
    "tpu.trace_stop"() : () -> ()
    %710 = vector.shape_cast %709 : vector<2x16x16xf32> to vector<32x16xf32>
    %711 = vector.extract_strided_slice %638 {offsets = [16, 0], sizes = [16, 64], strides = [1, 1]} : vector<64x64xf32> to vector<16x64xf32>
    %cst_289 = arith.constant dense<0.000000e+00> : vector<32x64xf32>
    %712 = tpu.matmul %710, %711, %cst_289 {dimension_numbers = #tpu.dot_dimension_numbers<[1], [0], [0], [1], [0, 0, 1, 1], [], []>} : vector<32x16xf32>, vector<16x64xf32>, vector<32x64xf32> -> vector<32x64xf32>
    %713 = arith.addf %694, %712 : vector<32x64xf32>
    %714 = vector.extract_strided_slice %672 {offsets = [0, 0, 32], sizes = [2, 16, 16], strides = [1, 1, 1]} : vector<2x16x64xf32> to vector<2x16x16xf32>
    %715 = vector.extract_strided_slice %673 {offsets = [0, 0, 32], sizes = [2, 16, 16], strides = [1, 1, 1]} : vector<2x16x64xf32> to vector<2x16x16xf32>
    %716 = vector.extract_strided_slice %674 {offsets = [0, 0, 32], sizes = [2, 16, 16], strides = [1, 1, 1]} : vector<2x16x64xf32> to vector<2x16x16xf32>
    "tpu.trace_start"() <{level = 10 : i32, message = "btd,bsd->bts"}> : () -> ()
    %cst_290 = arith.constant dense<0.000000e+00> : vector<2x16x16xf32>
    %717 = tpu.matmul %714, %715, %cst_290 {dimension_numbers = #tpu.dot_dimension_numbers<[2], [2], [1], [1], [0, 0, 0, 1, 1, 1], [0], [0]>} : vector<2x16x16xf32>, vector<2x16x16xf32>, vector<2x16x16xf32> -> vector<2x16x16xf32>
    "tpu.trace_stop"() : () -> ()
    %cst_291 = arith.constant dense<0xFF800000> : vector<2x16xf32>
    %718 = vector.multi_reduction <maximumf>, %717, %cst_291 [2] : vector<2x16x16xf32> to vector<2x16xf32>
    %719 = vector.shape_cast %718 : vector<2x16xf32> to vector<2x16x1xf32>
    %720 = vector.broadcast %719 : vector<2x16x1xf32> to vector<2x16x16xf32>
    %721 = arith.subf %717, %720 : vector<2x16x16xf32>
    %722 = math.exp %721 : vector<2x16x16xf32>
    %cst_292 = arith.constant dense<0.000000e+00> : vector<2x16xf32>
    %723 = vector.multi_reduction <add>, %722, %cst_292 [2] : vector<2x16x16xf32> to vector<2x16xf32>
    %724 = vector.shape_cast %723 : vector<2x16xf32> to vector<2x16x1xf32>
    %725 = tpu.reciprocal %724 {approx = true} : vector<2x16x1xf32> -> vector<2x16x1xf32>
    %726 = vector.broadcast %725 : vector<2x16x1xf32> to vector<2x16x16xf32>
    %727 = arith.mulf %722, %726 : vector<2x16x16xf32>
    "tpu.trace_start"() <{level = 10 : i32, message = "bts,bsd->btd"}> : () -> ()
    %cst_293 = arith.constant dense<0.000000e+00> : vector<2x16x16xf32>
    %728 = tpu.matmul %727, %716, %cst_293 {dimension_numbers = #tpu.dot_dimension_numbers<[2], [1], [1], [2], [0, 0, 0, 1, 1, 2], [0], [0]>} : vector<2x16x16xf32>, vector<2x16x16xf32>, vector<2x16x16xf32> -> vector<2x16x16xf32>
    "tpu.trace_stop"() : () -> ()
    %729 = vector.shape_cast %728 : vector<2x16x16xf32> to vector<32x16xf32>
    %730 = vector.extract_strided_slice %638 {offsets = [32, 0], sizes = [16, 64], strides = [1, 1]} : vector<64x64xf32> to vector<16x64xf32>
    %cst_294 = arith.constant dense<0.000000e+00> : vector<32x64xf32>
    %731 = tpu.matmul %729, %730, %cst_294 {dimension_numbers = #tpu.dot_dimension_numbers<[1], [0], [0], [1], [0, 0, 1, 1], [], []>} : vector<32x16xf32>, vector<16x64xf32>, vector<32x64xf32> -> vector<32x64xf32>
    %732 = arith.addf %713, %731 : vector<32x64xf32>
    %733 = vector.extract_strided_slice %672 {offsets = [0, 0, 48], sizes = [2, 16, 16], strides = [1, 1, 1]} : vector<2x16x64xf32> to vector<2x16x16xf32>
    %734 = vector.extract_strided_slice %673 {offsets = [0, 0, 48], sizes = [2, 16, 16], strides = [1, 1, 1]} : vector<2x16x64xf32> to vector<2x16x16xf32>
    %735 = vector.extract_strided_slice %674 {offsets = [0, 0, 48], sizes = [2, 16, 16], strides = [1, 1, 1]} : vector<2x16x64xf32> to vector<2x16x16xf32>
    "tpu.trace_start"() <{level = 10 : i32, message = "btd,bsd->bts"}> : () -> ()
    %cst_295 = arith.constant dense<0.000000e+00> : vector<2x16x16xf32>
    %736 = tpu.matmul %733, %734, %cst_295 {dimension_numbers = #tpu.dot_dimension_numbers<[2], [2], [1], [1], [0, 0, 0, 1, 1, 1], [0], [0]>} : vector<2x16x16xf32>, vector<2x16x16xf32>, vector<2x16x16xf32> -> vector<2x16x16xf32>
    "tpu.trace_stop"() : () -> ()
    %cst_296 = arith.constant dense<0xFF800000> : vector<2x16xf32>
    %737 = vector.multi_reduction <maximumf>, %736, %cst_296 [2] : vector<2x16x16xf32> to vector<2x16xf32>
    %738 = vector.shape_cast %737 : vector<2x16xf32> to vector<2x16x1xf32>
    %739 = vector.broadcast %738 : vector<2x16x1xf32> to vector<2x16x16xf32>
    %740 = arith.subf %736, %739 : vector<2x16x16xf32>
    %741 = math.exp %740 : vector<2x16x16xf32>
    %cst_297 = arith.constant dense<0.000000e+00> : vector<2x16xf32>
    %742 = vector.multi_reduction <add>, %741, %cst_297 [2] : vector<2x16x16xf32> to vector<2x16xf32>
    %743 = vector.shape_cast %742 : vector<2x16xf32> to vector<2x16x1xf32>
    %744 = tpu.reciprocal %743 {approx = true} : vector<2x16x1xf32> -> vector<2x16x1xf32>
    %745 = vector.broadcast %744 : vector<2x16x1xf32> to vector<2x16x16xf32>
    %746 = arith.mulf %741, %745 : vector<2x16x16xf32>
    "tpu.trace_start"() <{level = 10 : i32, message = "bts,bsd->btd"}> : () -> ()
    %cst_298 = arith.constant dense<0.000000e+00> : vector<2x16x16xf32>
    %747 = tpu.matmul %746, %735, %cst_298 {dimension_numbers = #tpu.dot_dimension_numbers<[2], [1], [1], [2], [0, 0, 0, 1, 1, 2], [0], [0]>} : vector<2x16x16xf32>, vector<2x16x16xf32>, vector<2x16x16xf32> -> vector<2x16x16xf32>
    "tpu.trace_stop"() : () -> ()
    %748 = vector.shape_cast %747 : vector<2x16x16xf32> to vector<32x16xf32>
    %749 = vector.extract_strided_slice %638 {offsets = [48, 0], sizes = [16, 64], strides = [1, 1]} : vector<64x64xf32> to vector<16x64xf32>
    %cst_299 = arith.constant dense<0.000000e+00> : vector<32x64xf32>
    %750 = tpu.matmul %748, %749, %cst_299 {dimension_numbers = #tpu.dot_dimension_numbers<[1], [0], [0], [1], [0, 0, 1, 1], [], []>} : vector<32x16xf32>, vector<16x64xf32>, vector<32x64xf32> -> vector<32x64xf32>
    %751 = arith.addf %732, %750 : vector<32x64xf32>
    %752 = vector.broadcast %640 : vector<1x64xf32> to vector<32x64xf32>
    %753 = arith.addf %751, %752 : vector<32x64xf32>
    %754 = vector.shape_cast %753 : vector<32x64xf32> to vector<2x16x64xf32>
    %755 = arith.addf %628, %754 : vector<2x16x64xf32>
    %c1_300 = arith.constant 1 : index
    %c0_301 = arith.constant 0 : index
    %c0_302 = arith.constant 0 : index
    %756 = vector.load %arg13[%c1_300, %c0_301, %c0_302] : memref<2x1x64xf32, #tpu.memory_space<vmem>>, vector<1x1x64xf32>
    %757 = vector.shape_cast %756 : vector<1x1x64xf32> to vector<1x64xf32>
    %c1_303 = arith.constant 1 : index
    %c0_304 = arith.constant 0 : index
    %c0_305 = arith.constant 0 : index
    %758 = vector.load %arg14[%c1_303, %c0_304, %c0_305] : memref<2x1x64xf32, #tpu.memory_space<vmem>>, vector<1x1x64xf32>
    %759 = vector.shape_cast %758 : vector<1x1x64xf32> to vector<1x64xf32>
    %c1_306 = arith.constant 1 : index
    %c0_307 = arith.constant 0 : index
    %c0_308 = arith.constant 0 : index
    %760 = vector.load %arg15[%c1_306, %c0_307, %c0_308] : memref<2x64x128xf32, #tpu.memory_space<vmem>>, vector<1x64x128xf32>
    %761 = vector.shape_cast %760 : vector<1x64x128xf32> to vector<64x128xf32>
    %c1_309 = arith.constant 1 : index
    %c0_310 = arith.constant 0 : index
    %c0_311 = arith.constant 0 : index
    %762 = vector.load %arg16[%c1_309, %c0_310, %c0_311] : memref<2x1x128xf32, #tpu.memory_space<vmem>>, vector<1x1x128xf32>
    %763 = vector.shape_cast %762 : vector<1x1x128xf32> to vector<1x128xf32>
    %c1_312 = arith.constant 1 : index
    %c0_313 = arith.constant 0 : index
    %c0_314 = arith.constant 0 : index
    %764 = vector.load %arg17[%c1_312, %c0_313, %c0_314] : memref<2x31x64xf32, #tpu.memory_space<vmem>>, vector<1x31x64xf32>
    %765 = vector.shape_cast %764 : vector<1x31x64xf32> to vector<31x64xf32>
    %c1_315 = arith.constant 1 : index
    %c0_316 = arith.constant 0 : index
    %c0_317 = arith.constant 0 : index
    %766 = vector.load %arg18[%c1_315, %c0_316, %c0_317] : memref<2x1x64xf32, #tpu.memory_space<vmem>>, vector<1x1x64xf32>
    %767 = vector.shape_cast %766 : vector<1x1x64xf32> to vector<1x64xf32>
    %c1_318 = arith.constant 1 : index
    %c0_319 = arith.constant 0 : index
    %c0_320 = arith.constant 0 : index
    %768 = vector.load %arg19[%c1_318, %c0_319, %c0_320] : memref<2x1x64xf32, #tpu.memory_space<vmem>>, vector<1x1x64xf32>
    %769 = vector.shape_cast %768 : vector<1x1x64xf32> to vector<1x64xf32>
    %c1_321 = arith.constant 1 : index
    %c0_322 = arith.constant 0 : index
    %c0_323 = arith.constant 0 : index
    %770 = vector.load %arg20[%c1_321, %c0_322, %c0_323] : memref<2x1x64xf32, #tpu.memory_space<vmem>>, vector<1x1x64xf32>
    %771 = vector.shape_cast %770 : vector<1x1x64xf32> to vector<1x64xf32>
    %c1_324 = arith.constant 1 : index
    %c0_325 = arith.constant 0 : index
    %c0_326 = arith.constant 0 : index
    %772 = vector.load %arg21[%c1_324, %c0_325, %c0_326] : memref<2x64x64xf32, #tpu.memory_space<vmem>>, vector<1x64x64xf32>
    %773 = vector.shape_cast %772 : vector<1x64x64xf32> to vector<64x64xf32>
    %c1_327 = arith.constant 1 : index
    %c0_328 = arith.constant 0 : index
    %c0_329 = arith.constant 0 : index
    %774 = vector.load %arg22[%c1_327, %c0_328, %c0_329] : memref<2x1x64xf32, #tpu.memory_space<vmem>>, vector<1x1x64xf32>
    %775 = vector.shape_cast %774 : vector<1x1x64xf32> to vector<1x64xf32>
    %cst_330 = arith.constant dense<0.000000e+00> : vector<2x16xf32>
    %776 = vector.multi_reduction <add>, %755, %cst_330 [2] : vector<2x16x64xf32> to vector<2x16xf32>
    %777 = vector.shape_cast %776 : vector<2x16xf32> to vector<2x16x1xf32>
    %cst_331 = arith.constant 6.400000e+01 : f32
    %778 = vector.broadcast %cst_331 : f32 to vector<2x16x1xf32>
    %779 = arith.divf %777, %778 : vector<2x16x1xf32>
    %780 = vector.broadcast %779 : vector<2x16x1xf32> to vector<2x16x64xf32>
    %781 = arith.subf %755, %780 : vector<2x16x64xf32>
    %782 = arith.mulf %781, %781 : vector<2x16x64xf32>
    %cst_332 = arith.constant dense<0.000000e+00> : vector<2x16xf32>
    %783 = vector.multi_reduction <add>, %782, %cst_332 [2] : vector<2x16x64xf32> to vector<2x16xf32>
    %784 = vector.shape_cast %783 : vector<2x16xf32> to vector<2x16x1xf32>
    %cst_333 = arith.constant 6.400000e+01 : f32
    %785 = vector.broadcast %cst_333 : f32 to vector<2x16x1xf32>
    %786 = arith.divf %784, %785 : vector<2x16x1xf32>
    %787 = vector.broadcast %779 : vector<2x16x1xf32> to vector<2x16x64xf32>
    %788 = arith.subf %755, %787 : vector<2x16x64xf32>
    %cst_334 = arith.constant 9.99999974E-6 : f32
    %789 = vector.broadcast %cst_334 : f32 to vector<2x16x1xf32>
    %790 = arith.addf %786, %789 : vector<2x16x1xf32>
    %791 = math.rsqrt %790 : vector<2x16x1xf32>
    %792 = vector.broadcast %791 : vector<2x16x1xf32> to vector<2x16x64xf32>
    %793 = arith.mulf %788, %792 : vector<2x16x64xf32>
    %794 = vector.shape_cast %757 : vector<1x64xf32> to vector<1x1x64xf32>
    %795 = vector.broadcast %794 : vector<1x1x64xf32> to vector<2x16x64xf32>
    %796 = arith.mulf %793, %795 : vector<2x16x64xf32>
    %797 = vector.shape_cast %759 : vector<1x64xf32> to vector<1x1x64xf32>
    %798 = vector.broadcast %797 : vector<1x1x64xf32> to vector<2x16x64xf32>
    %799 = arith.addf %796, %798 : vector<2x16x64xf32>
    %800 = vector.shape_cast %799 : vector<2x16x64xf32> to vector<32x64xf32>
    %cst_335 = arith.constant dense<0.000000e+00> : vector<32x128xf32>
    %801 = tpu.matmul %800, %761, %cst_335 {dimension_numbers = #tpu.dot_dimension_numbers<[1], [0], [0], [1], [0, 0, 1, 1], [], []>} : vector<32x64xf32>, vector<64x128xf32>, vector<32x128xf32> -> vector<32x128xf32>
    %802 = vector.broadcast %763 : vector<1x128xf32> to vector<32x128xf32>
    %803 = arith.addf %801, %802 : vector<32x128xf32>
    %804 = vector.extract_strided_slice %803 {offsets = [0, 0], sizes = [32, 64], strides = [1, 1]} : vector<32x128xf32> to vector<32x64xf32>
    %805 = vector.extract_strided_slice %803 {offsets = [0, 64], sizes = [32, 64], strides = [1, 1]} : vector<32x128xf32> to vector<32x64xf32>
    %806 = arith.negf %805 : vector<32x64xf32>
    %807 = math.exp %806 : vector<32x64xf32>
    %cst_336 = arith.constant 1.000000e+00 : f32
    %808 = vector.broadcast %cst_336 : f32 to vector<32x64xf32>
    %809 = arith.addf %808, %807 : vector<32x64xf32>
    %810 = arith.divf %808, %809 : vector<32x64xf32>
    %811 = arith.mulf %804, %810 : vector<32x64xf32>
    %812 = vector.shape_cast %811 : vector<32x64xf32> to vector<2x16x64xf32>
    %c0_337 = arith.constant 0 : index
    %c15_338 = arith.constant 15 : index
    %c0_339 = arith.constant 0 : index
    %813 = vector.load %arg34[%c0_337, %c15_338, %c0_339] : memref<2x46x64xf32, #tpu.memory_space<vmem>>, vector<2x16x64xf32>
    tpu.vector_store %arg34[%c0_337, %c15_338, %c0_339], %812 {strides = array<i32>} : memref<2x46x64xf32, #tpu.memory_space<vmem>>, vector<2x16x64xf32>,
    %cst_340 = arith.constant 0.000000e+00 : f32
    %814 = vector.broadcast %cst_340 : f32 to vector<2x16x64xf32>
    %c0_341 = arith.constant 0 : index
    %c0_342 = arith.constant 0 : index
    %c0_343 = arith.constant 0 : index
    %815 = vector.load %arg34[%c0_341, %c0_342, %c0_343] : memref<2x46x64xf32, #tpu.memory_space<vmem>>, vector<2x16x64xf32>
    %816 = vector.extract_strided_slice %765 {offsets = [0, 0], sizes = [1, 64], strides = [1, 1]} : vector<31x64xf32> to vector<1x64xf32>
    %817 = vector.shape_cast %816 : vector<1x64xf32> to vector<64xf32>
    %818 = vector.shape_cast %817 : vector<64xf32> to vector<1x1x64xf32>
    %819 = vector.broadcast %818 : vector<1x1x64xf32> to vector<2x16x64xf32>
    %820 = arith.mulf %815, %819 : vector<2x16x64xf32>
    %821 = arith.addf %814, %820 : vector<2x16x64xf32>
    %c0_344 = arith.constant 0 : index
    %c1_345 = arith.constant 1 : index
    %c0_346 = arith.constant 0 : index
    %822 = vector.load %arg34[%c0_344, %c1_345, %c0_346] : memref<2x46x64xf32, #tpu.memory_space<vmem>>, vector<2x16x64xf32>
    %823 = vector.extract_strided_slice %765 {offsets = [1, 0], sizes = [1, 64], strides = [1, 1]} : vector<31x64xf32> to vector<1x64xf32>
    %824 = vector.shape_cast %823 : vector<1x64xf32> to vector<64xf32>
    %825 = vector.shape_cast %824 : vector<64xf32> to vector<1x1x64xf32>
    %826 = vector.broadcast %825 : vector<1x1x64xf32> to vector<2x16x64xf32>
    %827 = arith.mulf %822, %826 : vector<2x16x64xf32>
    %828 = arith.addf %821, %827 : vector<2x16x64xf32>
    %c0_347 = arith.constant 0 : index
    %c2_348 = arith.constant 2 : index
    %c0_349 = arith.constant 0 : index
    %829 = vector.load %arg34[%c0_347, %c2_348, %c0_349] : memref<2x46x64xf32, #tpu.memory_space<vmem>>, vector<2x16x64xf32>
    %830 = vector.extract_strided_slice %765 {offsets = [2, 0], sizes = [1, 64], strides = [1, 1]} : vector<31x64xf32> to vector<1x64xf32>
    %831 = vector.shape_cast %830 : vector<1x64xf32> to vector<64xf32>
    %832 = vector.shape_cast %831 : vector<64xf32> to vector<1x1x64xf32>
    %833 = vector.broadcast %832 : vector<1x1x64xf32> to vector<2x16x64xf32>
    %834 = arith.mulf %829, %833 : vector<2x16x64xf32>
    %835 = arith.addf %828, %834 : vector<2x16x64xf32>
    %c0_350 = arith.constant 0 : index
    %c3_351 = arith.constant 3 : index
    %c0_352 = arith.constant 0 : index
    %836 = vector.load %arg34[%c0_350, %c3_351, %c0_352] : memref<2x46x64xf32, #tpu.memory_space<vmem>>, vector<2x16x64xf32>
    %837 = vector.extract_strided_slice %765 {offsets = [3, 0], sizes = [1, 64], strides = [1, 1]} : vector<31x64xf32> to vector<1x64xf32>
    %838 = vector.shape_cast %837 : vector<1x64xf32> to vector<64xf32>
    %839 = vector.shape_cast %838 : vector<64xf32> to vector<1x1x64xf32>
    %840 = vector.broadcast %839 : vector<1x1x64xf32> to vector<2x16x64xf32>
    %841 = arith.mulf %836, %840 : vector<2x16x64xf32>
    %842 = arith.addf %835, %841 : vector<2x16x64xf32>
    %c0_353 = arith.constant 0 : index
    %c4_354 = arith.constant 4 : index
    %c0_355 = arith.constant 0 : index
    %843 = vector.load %arg34[%c0_353, %c4_354, %c0_355] : memref<2x46x64xf32, #tpu.memory_space<vmem>>, vector<2x16x64xf32>
    %844 = vector.extract_strided_slice %765 {offsets = [4, 0], sizes = [1, 64], strides = [1, 1]} : vector<31x64xf32> to vector<1x64xf32>
    %845 = vector.shape_cast %844 : vector<1x64xf32> to vector<64xf32>
    %846 = vector.shape_cast %845 : vector<64xf32> to vector<1x1x64xf32>
    %847 = vector.broadcast %846 : vector<1x1x64xf32> to vector<2x16x64xf32>
    %848 = arith.mulf %843, %847 : vector<2x16x64xf32>
    %849 = arith.addf %842, %848 : vector<2x16x64xf32>
    %c0_356 = arith.constant 0 : index
    %c5_357 = arith.constant 5 : index
    %c0_358 = arith.constant 0 : index
    %850 = vector.load %arg34[%c0_356, %c5_357, %c0_358] : memref<2x46x64xf32, #tpu.memory_space<vmem>>, vector<2x16x64xf32>
    %851 = vector.extract_strided_slice %765 {offsets = [5, 0], sizes = [1, 64], strides = [1, 1]} : vector<31x64xf32> to vector<1x64xf32>
    %852 = vector.shape_cast %851 : vector<1x64xf32> to vector<64xf32>
    %853 = vector.shape_cast %852 : vector<64xf32> to vector<1x1x64xf32>
    %854 = vector.broadcast %853 : vector<1x1x64xf32> to vector<2x16x64xf32>
    %855 = arith.mulf %850, %854 : vector<2x16x64xf32>
    %856 = arith.addf %849, %855 : vector<2x16x64xf32>
    %c0_359 = arith.constant 0 : index
    %c6_360 = arith.constant 6 : index
    %c0_361 = arith.constant 0 : index
    %857 = vector.load %arg34[%c0_359, %c6_360, %c0_361] : memref<2x46x64xf32, #tpu.memory_space<vmem>>, vector<2x16x64xf32>
    %858 = vector.extract_strided_slice %765 {offsets = [6, 0], sizes = [1, 64], strides = [1, 1]} : vector<31x64xf32> to vector<1x64xf32>
    %859 = vector.shape_cast %858 : vector<1x64xf32> to vector<64xf32>
    %860 = vector.shape_cast %859 : vector<64xf32> to vector<1x1x64xf32>
    %861 = vector.broadcast %860 : vector<1x1x64xf32> to vector<2x16x64xf32>
    %862 = arith.mulf %857, %861 : vector<2x16x64xf32>
    %863 = arith.addf %856, %862 : vector<2x16x64xf32>
    %c0_362 = arith.constant 0 : index
    %c7_363 = arith.constant 7 : index
    %c0_364 = arith.constant 0 : index
    %864 = vector.load %arg34[%c0_362, %c7_363, %c0_364] : memref<2x46x64xf32, #tpu.memory_space<vmem>>, vector<2x16x64xf32>
    %865 = vector.extract_strided_slice %765 {offsets = [7, 0], sizes = [1, 64], strides = [1, 1]} : vector<31x64xf32> to vector<1x64xf32>
    %866 = vector.shape_cast %865 : vector<1x64xf32> to vector<64xf32>
    %867 = vector.shape_cast %866 : vector<64xf32> to vector<1x1x64xf32>
    %868 = vector.broadcast %867 : vector<1x1x64xf32> to vector<2x16x64xf32>
    %869 = arith.mulf %864, %868 : vector<2x16x64xf32>
    %870 = arith.addf %863, %869 : vector<2x16x64xf32>
    %c0_365 = arith.constant 0 : index
    %c8_366 = arith.constant 8 : index
    %c0_367 = arith.constant 0 : index
    %871 = vector.load %arg34[%c0_365, %c8_366, %c0_367] : memref<2x46x64xf32, #tpu.memory_space<vmem>>, vector<2x16x64xf32>
    %872 = vector.extract_strided_slice %765 {offsets = [8, 0], sizes = [1, 64], strides = [1, 1]} : vector<31x64xf32> to vector<1x64xf32>
    %873 = vector.shape_cast %872 : vector<1x64xf32> to vector<64xf32>
    %874 = vector.shape_cast %873 : vector<64xf32> to vector<1x1x64xf32>
    %875 = vector.broadcast %874 : vector<1x1x64xf32> to vector<2x16x64xf32>
    %876 = arith.mulf %871, %875 : vector<2x16x64xf32>
    %877 = arith.addf %870, %876 : vector<2x16x64xf32>
    %c0_368 = arith.constant 0 : index
    %c9_369 = arith.constant 9 : index
    %c0_370 = arith.constant 0 : index
    %878 = vector.load %arg34[%c0_368, %c9_369, %c0_370] : memref<2x46x64xf32, #tpu.memory_space<vmem>>, vector<2x16x64xf32>
    %879 = vector.extract_strided_slice %765 {offsets = [9, 0], sizes = [1, 64], strides = [1, 1]} : vector<31x64xf32> to vector<1x64xf32>
    %880 = vector.shape_cast %879 : vector<1x64xf32> to vector<64xf32>
    %881 = vector.shape_cast %880 : vector<64xf32> to vector<1x1x64xf32>
    %882 = vector.broadcast %881 : vector<1x1x64xf32> to vector<2x16x64xf32>
    %883 = arith.mulf %878, %882 : vector<2x16x64xf32>
    %884 = arith.addf %877, %883 : vector<2x16x64xf32>
    %c0_371 = arith.constant 0 : index
    %c10_372 = arith.constant 10 : index
    %c0_373 = arith.constant 0 : index
    %885 = vector.load %arg34[%c0_371, %c10_372, %c0_373] : memref<2x46x64xf32, #tpu.memory_space<vmem>>, vector<2x16x64xf32>
    %886 = vector.extract_strided_slice %765 {offsets = [10, 0], sizes = [1, 64], strides = [1, 1]} : vector<31x64xf32> to vector<1x64xf32>
    %887 = vector.shape_cast %886 : vector<1x64xf32> to vector<64xf32>
    %888 = vector.shape_cast %887 : vector<64xf32> to vector<1x1x64xf32>
    %889 = vector.broadcast %888 : vector<1x1x64xf32> to vector<2x16x64xf32>
    %890 = arith.mulf %885, %889 : vector<2x16x64xf32>
    %891 = arith.addf %884, %890 : vector<2x16x64xf32>
    %c0_374 = arith.constant 0 : index
    %c11_375 = arith.constant 11 : index
    %c0_376 = arith.constant 0 : index
    %892 = vector.load %arg34[%c0_374, %c11_375, %c0_376] : memref<2x46x64xf32, #tpu.memory_space<vmem>>, vector<2x16x64xf32>
    %893 = vector.extract_strided_slice %765 {offsets = [11, 0], sizes = [1, 64], strides = [1, 1]} : vector<31x64xf32> to vector<1x64xf32>
    %894 = vector.shape_cast %893 : vector<1x64xf32> to vector<64xf32>
    %895 = vector.shape_cast %894 : vector<64xf32> to vector<1x1x64xf32>
    %896 = vector.broadcast %895 : vector<1x1x64xf32> to vector<2x16x64xf32>
    %897 = arith.mulf %892, %896 : vector<2x16x64xf32>
    %898 = arith.addf %891, %897 : vector<2x16x64xf32>
    %c0_377 = arith.constant 0 : index
    %c12_378 = arith.constant 12 : index
    %c0_379 = arith.constant 0 : index
    %899 = vector.load %arg34[%c0_377, %c12_378, %c0_379] : memref<2x46x64xf32, #tpu.memory_space<vmem>>, vector<2x16x64xf32>
    %900 = vector.extract_strided_slice %765 {offsets = [12, 0], sizes = [1, 64], strides = [1, 1]} : vector<31x64xf32> to vector<1x64xf32>
    %901 = vector.shape_cast %900 : vector<1x64xf32> to vector<64xf32>
    %902 = vector.shape_cast %901 : vector<64xf32> to vector<1x1x64xf32>
    %903 = vector.broadcast %902 : vector<1x1x64xf32> to vector<2x16x64xf32>
    %904 = arith.mulf %899, %903 : vector<2x16x64xf32>
    %905 = arith.addf %898, %904 : vector<2x16x64xf32>
    %c0_380 = arith.constant 0 : index
    %c13_381 = arith.constant 13 : index
    %c0_382 = arith.constant 0 : index
    %906 = vector.load %arg34[%c0_380, %c13_381, %c0_382] : memref<2x46x64xf32, #tpu.memory_space<vmem>>, vector<2x16x64xf32>
    %907 = vector.extract_strided_slice %765 {offsets = [13, 0], sizes = [1, 64], strides = [1, 1]} : vector<31x64xf32> to vector<1x64xf32>
    %908 = vector.shape_cast %907 : vector<1x64xf32> to vector<64xf32>
    %909 = vector.shape_cast %908 : vector<64xf32> to vector<1x1x64xf32>
    %910 = vector.broadcast %909 : vector<1x1x64xf32> to vector<2x16x64xf32>
    %911 = arith.mulf %906, %910 : vector<2x16x64xf32>
    %912 = arith.addf %905, %911 : vector<2x16x64xf32>
    %c0_383 = arith.constant 0 : index
    %c14_384 = arith.constant 14 : index
    %c0_385 = arith.constant 0 : index
    %913 = vector.load %arg34[%c0_383, %c14_384, %c0_385] : memref<2x46x64xf32, #tpu.memory_space<vmem>>, vector<2x16x64xf32>
    %914 = vector.extract_strided_slice %765 {offsets = [14, 0], sizes = [1, 64], strides = [1, 1]} : vector<31x64xf32> to vector<1x64xf32>
    %915 = vector.shape_cast %914 : vector<1x64xf32> to vector<64xf32>
    %916 = vector.shape_cast %915 : vector<64xf32> to vector<1x1x64xf32>
    %917 = vector.broadcast %916 : vector<1x1x64xf32> to vector<2x16x64xf32>
    %918 = arith.mulf %913, %917 : vector<2x16x64xf32>
    %919 = arith.addf %912, %918 : vector<2x16x64xf32>
    %c0_386 = arith.constant 0 : index
    %c15_387 = arith.constant 15 : index
    %c0_388 = arith.constant 0 : index
    %920 = vector.load %arg34[%c0_386, %c15_387, %c0_388] : memref<2x46x64xf32, #tpu.memory_space<vmem>>, vector<2x16x64xf32>
    %921 = vector.extract_strided_slice %765 {offsets = [15, 0], sizes = [1, 64], strides = [1, 1]} : vector<31x64xf32> to vector<1x64xf32>
    %922 = vector.shape_cast %921 : vector<1x64xf32> to vector<64xf32>
    %923 = vector.shape_cast %922 : vector<64xf32> to vector<1x1x64xf32>
    %924 = vector.broadcast %923 : vector<1x1x64xf32> to vector<2x16x64xf32>
    %925 = arith.mulf %920, %924 : vector<2x16x64xf32>
    %926 = arith.addf %919, %925 : vector<2x16x64xf32>
    %c0_389 = arith.constant 0 : index
    %c16_390 = arith.constant 16 : index
    %c0_391 = arith.constant 0 : index
    %927 = vector.load %arg34[%c0_389, %c16_390, %c0_391] : memref<2x46x64xf32, #tpu.memory_space<vmem>>, vector<2x16x64xf32>
    %928 = vector.extract_strided_slice %765 {offsets = [16, 0], sizes = [1, 64], strides = [1, 1]} : vector<31x64xf32> to vector<1x64xf32>
    %929 = vector.shape_cast %928 : vector<1x64xf32> to vector<64xf32>
    %930 = vector.shape_cast %929 : vector<64xf32> to vector<1x1x64xf32>
    %931 = vector.broadcast %930 : vector<1x1x64xf32> to vector<2x16x64xf32>
    %932 = arith.mulf %927, %931 : vector<2x16x64xf32>
    %933 = arith.addf %926, %932 : vector<2x16x64xf32>
    %c0_392 = arith.constant 0 : index
    %c17_393 = arith.constant 17 : index
    %c0_394 = arith.constant 0 : index
    %934 = vector.load %arg34[%c0_392, %c17_393, %c0_394] : memref<2x46x64xf32, #tpu.memory_space<vmem>>, vector<2x16x64xf32>
    %935 = vector.extract_strided_slice %765 {offsets = [17, 0], sizes = [1, 64], strides = [1, 1]} : vector<31x64xf32> to vector<1x64xf32>
    %936 = vector.shape_cast %935 : vector<1x64xf32> to vector<64xf32>
    %937 = vector.shape_cast %936 : vector<64xf32> to vector<1x1x64xf32>
    %938 = vector.broadcast %937 : vector<1x1x64xf32> to vector<2x16x64xf32>
    %939 = arith.mulf %934, %938 : vector<2x16x64xf32>
    %940 = arith.addf %933, %939 : vector<2x16x64xf32>
    %c0_395 = arith.constant 0 : index
    %c18_396 = arith.constant 18 : index
    %c0_397 = arith.constant 0 : index
    %941 = vector.load %arg34[%c0_395, %c18_396, %c0_397] : memref<2x46x64xf32, #tpu.memory_space<vmem>>, vector<2x16x64xf32>
    %942 = vector.extract_strided_slice %765 {offsets = [18, 0], sizes = [1, 64], strides = [1, 1]} : vector<31x64xf32> to vector<1x64xf32>
    %943 = vector.shape_cast %942 : vector<1x64xf32> to vector<64xf32>
    %944 = vector.shape_cast %943 : vector<64xf32> to vector<1x1x64xf32>
    %945 = vector.broadcast %944 : vector<1x1x64xf32> to vector<2x16x64xf32>
    %946 = arith.mulf %941, %945 : vector<2x16x64xf32>
    %947 = arith.addf %940, %946 : vector<2x16x64xf32>
    %c0_398 = arith.constant 0 : index
    %c19_399 = arith.constant 19 : index
    %c0_400 = arith.constant 0 : index
    %948 = vector.load %arg34[%c0_398, %c19_399, %c0_400] : memref<2x46x64xf32, #tpu.memory_space<vmem>>, vector<2x16x64xf32>
    %949 = vector.extract_strided_slice %765 {offsets = [19, 0], sizes = [1, 64], strides = [1, 1]} : vector<31x64xf32> to vector<1x64xf32>
    %950 = vector.shape_cast %949 : vector<1x64xf32> to vector<64xf32>
    %951 = vector.shape_cast %950 : vector<64xf32> to vector<1x1x64xf32>
    %952 = vector.broadcast %951 : vector<1x1x64xf32> to vector<2x16x64xf32>
    %953 = arith.mulf %948, %952 : vector<2x16x64xf32>
    %954 = arith.addf %947, %953 : vector<2x16x64xf32>
    %c0_401 = arith.constant 0 : index
    %c20_402 = arith.constant 20 : index
    %c0_403 = arith.constant 0 : index
    %955 = vector.load %arg34[%c0_401, %c20_402, %c0_403] : memref<2x46x64xf32, #tpu.memory_space<vmem>>, vector<2x16x64xf32>
    %956 = vector.extract_strided_slice %765 {offsets = [20, 0], sizes = [1, 64], strides = [1, 1]} : vector<31x64xf32> to vector<1x64xf32>
    %957 = vector.shape_cast %956 : vector<1x64xf32> to vector<64xf32>
    %958 = vector.shape_cast %957 : vector<64xf32> to vector<1x1x64xf32>
    %959 = vector.broadcast %958 : vector<1x1x64xf32> to vector<2x16x64xf32>
    %960 = arith.mulf %955, %959 : vector<2x16x64xf32>
    %961 = arith.addf %954, %960 : vector<2x16x64xf32>
    %c0_404 = arith.constant 0 : index
    %c21_405 = arith.constant 21 : index
    %c0_406 = arith.constant 0 : index
    %962 = vector.load %arg34[%c0_404, %c21_405, %c0_406] : memref<2x46x64xf32, #tpu.memory_space<vmem>>, vector<2x16x64xf32>
    %963 = vector.extract_strided_slice %765 {offsets = [21, 0], sizes = [1, 64], strides = [1, 1]} : vector<31x64xf32> to vector<1x64xf32>
    %964 = vector.shape_cast %963 : vector<1x64xf32> to vector<64xf32>
    %965 = vector.shape_cast %964 : vector<64xf32> to vector<1x1x64xf32>
    %966 = vector.broadcast %965 : vector<1x1x64xf32> to vector<2x16x64xf32>
    %967 = arith.mulf %962, %966 : vector<2x16x64xf32>
    %968 = arith.addf %961, %967 : vector<2x16x64xf32>
    %c0_407 = arith.constant 0 : index
    %c22_408 = arith.constant 22 : index
    %c0_409 = arith.constant 0 : index
    %969 = vector.load %arg34[%c0_407, %c22_408, %c0_409] : memref<2x46x64xf32, #tpu.memory_space<vmem>>, vector<2x16x64xf32>
    %970 = vector.extract_strided_slice %765 {offsets = [22, 0], sizes = [1, 64], strides = [1, 1]} : vector<31x64xf32> to vector<1x64xf32>
    %971 = vector.shape_cast %970 : vector<1x64xf32> to vector<64xf32>
    %972 = vector.shape_cast %971 : vector<64xf32> to vector<1x1x64xf32>
    %973 = vector.broadcast %972 : vector<1x1x64xf32> to vector<2x16x64xf32>
    %974 = arith.mulf %969, %973 : vector<2x16x64xf32>
    %975 = arith.addf %968, %974 : vector<2x16x64xf32>
    %c0_410 = arith.constant 0 : index
    %c23_411 = arith.constant 23 : index
    %c0_412 = arith.constant 0 : index
    %976 = vector.load %arg34[%c0_410, %c23_411, %c0_412] : memref<2x46x64xf32, #tpu.memory_space<vmem>>, vector<2x16x64xf32>
    %977 = vector.extract_strided_slice %765 {offsets = [23, 0], sizes = [1, 64], strides = [1, 1]} : vector<31x64xf32> to vector<1x64xf32>
    %978 = vector.shape_cast %977 : vector<1x64xf32> to vector<64xf32>
    %979 = vector.shape_cast %978 : vector<64xf32> to vector<1x1x64xf32>
    %980 = vector.broadcast %979 : vector<1x1x64xf32> to vector<2x16x64xf32>
    %981 = arith.mulf %976, %980 : vector<2x16x64xf32>
    %982 = arith.addf %975, %981 : vector<2x16x64xf32>
    %c0_413 = arith.constant 0 : index
    %c24_414 = arith.constant 24 : index
    %c0_415 = arith.constant 0 : index
    %983 = vector.load %arg34[%c0_413, %c24_414, %c0_415] : memref<2x46x64xf32, #tpu.memory_space<vmem>>, vector<2x16x64xf32>
    %984 = vector.extract_strided_slice %765 {offsets = [24, 0], sizes = [1, 64], strides = [1, 1]} : vector<31x64xf32> to vector<1x64xf32>
    %985 = vector.shape_cast %984 : vector<1x64xf32> to vector<64xf32>
    %986 = vector.shape_cast %985 : vector<64xf32> to vector<1x1x64xf32>
    %987 = vector.broadcast %986 : vector<1x1x64xf32> to vector<2x16x64xf32>
    %988 = arith.mulf %983, %987 : vector<2x16x64xf32>
    %989 = arith.addf %982, %988 : vector<2x16x64xf32>
    %c0_416 = arith.constant 0 : index
    %c25_417 = arith.constant 25 : index
    %c0_418 = arith.constant 0 : index
    %990 = vector.load %arg34[%c0_416, %c25_417, %c0_418] : memref<2x46x64xf32, #tpu.memory_space<vmem>>, vector<2x16x64xf32>
    %991 = vector.extract_strided_slice %765 {offsets = [25, 0], sizes = [1, 64], strides = [1, 1]} : vector<31x64xf32> to vector<1x64xf32>
    %992 = vector.shape_cast %991 : vector<1x64xf32> to vector<64xf32>
    %993 = vector.shape_cast %992 : vector<64xf32> to vector<1x1x64xf32>
    %994 = vector.broadcast %993 : vector<1x1x64xf32> to vector<2x16x64xf32>
    %995 = arith.mulf %990, %994 : vector<2x16x64xf32>
    %996 = arith.addf %989, %995 : vector<2x16x64xf32>
    %c0_419 = arith.constant 0 : index
    %c26_420 = arith.constant 26 : index
    %c0_421 = arith.constant 0 : index
    %997 = vector.load %arg34[%c0_419, %c26_420, %c0_421] : memref<2x46x64xf32, #tpu.memory_space<vmem>>, vector<2x16x64xf32>
    %998 = vector.extract_strided_slice %765 {offsets = [26, 0], sizes = [1, 64], strides = [1, 1]} : vector<31x64xf32> to vector<1x64xf32>
    %999 = vector.shape_cast %998 : vector<1x64xf32> to vector<64xf32>
    %1000 = vector.shape_cast %999 : vector<64xf32> to vector<1x1x64xf32>
    %1001 = vector.broadcast %1000 : vector<1x1x64xf32> to vector<2x16x64xf32>
    %1002 = arith.mulf %997, %1001 : vector<2x16x64xf32>
    %1003 = arith.addf %996, %1002 : vector<2x16x64xf32>
    %c0_422 = arith.constant 0 : index
    %c27_423 = arith.constant 27 : index
    %c0_424 = arith.constant 0 : index
    %1004 = vector.load %arg34[%c0_422, %c27_423, %c0_424] : memref<2x46x64xf32, #tpu.memory_space<vmem>>, vector<2x16x64xf32>
    %1005 = vector.extract_strided_slice %765 {offsets = [27, 0], sizes = [1, 64], strides = [1, 1]} : vector<31x64xf32> to vector<1x64xf32>
    %1006 = vector.shape_cast %1005 : vector<1x64xf32> to vector<64xf32>
    %1007 = vector.shape_cast %1006 : vector<64xf32> to vector<1x1x64xf32>
    %1008 = vector.broadcast %1007 : vector<1x1x64xf32> to vector<2x16x64xf32>
    %1009 = arith.mulf %1004, %1008 : vector<2x16x64xf32>
    %1010 = arith.addf %1003, %1009 : vector<2x16x64xf32>
    %c0_425 = arith.constant 0 : index
    %c28_426 = arith.constant 28 : index
    %c0_427 = arith.constant 0 : index
    %1011 = vector.load %arg34[%c0_425, %c28_426, %c0_427] : memref<2x46x64xf32, #tpu.memory_space<vmem>>, vector<2x16x64xf32>
    %1012 = vector.extract_strided_slice %765 {offsets = [28, 0], sizes = [1, 64], strides = [1, 1]} : vector<31x64xf32> to vector<1x64xf32>
    %1013 = vector.shape_cast %1012 : vector<1x64xf32> to vector<64xf32>
    %1014 = vector.shape_cast %1013 : vector<64xf32> to vector<1x1x64xf32>
    %1015 = vector.broadcast %1014 : vector<1x1x64xf32> to vector<2x16x64xf32>
    %1016 = arith.mulf %1011, %1015 : vector<2x16x64xf32>
    %1017 = arith.addf %1010, %1016 : vector<2x16x64xf32>
    %c0_428 = arith.constant 0 : index
    %c29_429 = arith.constant 29 : index
    %c0_430 = arith.constant 0 : index
    %1018 = vector.load %arg34[%c0_428, %c29_429, %c0_430] : memref<2x46x64xf32, #tpu.memory_space<vmem>>, vector<2x16x64xf32>
    %1019 = vector.extract_strided_slice %765 {offsets = [29, 0], sizes = [1, 64], strides = [1, 1]} : vector<31x64xf32> to vector<1x64xf32>
    %1020 = vector.shape_cast %1019 : vector<1x64xf32> to vector<64xf32>
    %1021 = vector.shape_cast %1020 : vector<64xf32> to vector<1x1x64xf32>
    %1022 = vector.broadcast %1021 : vector<1x1x64xf32> to vector<2x16x64xf32>
    %1023 = arith.mulf %1018, %1022 : vector<2x16x64xf32>
    %1024 = arith.addf %1017, %1023 : vector<2x16x64xf32>
    %c0_431 = arith.constant 0 : index
    %c30_432 = arith.constant 30 : index
    %c0_433 = arith.constant 0 : index
    %1025 = vector.load %arg34[%c0_431, %c30_432, %c0_433] : memref<2x46x64xf32, #tpu.memory_space<vmem>>, vector<2x16x64xf32>
    %1026 = vector.extract_strided_slice %765 {offsets = [30, 0], sizes = [1, 64], strides = [1, 1]} : vector<31x64xf32> to vector<1x64xf32>
    %1027 = vector.shape_cast %1026 : vector<1x64xf32> to vector<64xf32>
    %1028 = vector.shape_cast %1027 : vector<64xf32> to vector<1x1x64xf32>
    %1029 = vector.broadcast %1028 : vector<1x1x64xf32> to vector<2x16x64xf32>
    %1030 = arith.mulf %1025, %1029 : vector<2x16x64xf32>
    %1031 = arith.addf %1024, %1030 : vector<2x16x64xf32>
    %1032 = vector.shape_cast %1031 : vector<2x16x64xf32> to vector<32x64xf32>
    %1033 = vector.broadcast %767 : vector<1x64xf32> to vector<32x64xf32>
    %1034 = arith.addf %1032, %1033 : vector<32x64xf32>
    %cst_434 = arith.constant dense<0.000000e+00> : vector<64xf32>
    %1035 = vector.multi_reduction <add>, %1034, %cst_434 [0] : vector<32x64xf32> to vector<64xf32>
    %1036 = vector.shape_cast %1035 : vector<64xf32> to vector<1x64xf32>
    %cst_435 = arith.constant 3.200000e+01 : f32
    %1037 = vector.broadcast %cst_435 : f32 to vector<1x64xf32>
    %1038 = arith.divf %1036, %1037 : vector<1x64xf32>
    %1039 = vector.broadcast %1038 : vector<1x64xf32> to vector<32x64xf32>
    %1040 = arith.subf %1034, %1039 : vector<32x64xf32>
    %1041 = arith.mulf %1040, %1040 : vector<32x64xf32>
    %cst_436 = arith.constant dense<0.000000e+00> : vector<64xf32>
    %1042 = vector.multi_reduction <add>, %1041, %cst_436 [0] : vector<32x64xf32> to vector<64xf32>
    %1043 = vector.shape_cast %1042 : vector<64xf32> to vector<1x64xf32>
    %cst_437 = arith.constant 3.200000e+01 : f32
    %1044 = vector.broadcast %cst_437 : f32 to vector<1x64xf32>
    %1045 = arith.divf %1043, %1044 : vector<1x64xf32>
    %1046 = vector.broadcast %1038 : vector<1x64xf32> to vector<32x64xf32>
    %1047 = arith.subf %1034, %1046 : vector<32x64xf32>
    %cst_438 = arith.constant 9.99999974E-6 : f32
    %1048 = vector.broadcast %cst_438 : f32 to vector<1x64xf32>
    %1049 = arith.addf %1045, %1048 : vector<1x64xf32>
    %1050 = math.rsqrt %1049 : vector<1x64xf32>
    %1051 = vector.broadcast %1050 : vector<1x64xf32> to vector<32x64xf32>
    %1052 = arith.mulf %1047, %1051 : vector<32x64xf32>
    %1053 = vector.broadcast %769 : vector<1x64xf32> to vector<32x64xf32>
    %1054 = arith.mulf %1052, %1053 : vector<32x64xf32>
    %1055 = vector.broadcast %771 : vector<1x64xf32> to vector<32x64xf32>
    %1056 = arith.addf %1054, %1055 : vector<32x64xf32>
    %1057 = arith.negf %1056 : vector<32x64xf32>
    %1058 = math.exp %1057 : vector<32x64xf32>
    %cst_439 = arith.constant 1.000000e+00 : f32
    %1059 = vector.broadcast %cst_439 : f32 to vector<32x64xf32>
    %1060 = arith.addf %1059, %1058 : vector<32x64xf32>
    %1061 = arith.divf %1059, %1060 : vector<32x64xf32>
    %1062 = arith.mulf %1056, %1061 : vector<32x64xf32>
    %cst_440 = arith.constant dense<0.000000e+00> : vector<32x64xf32>
    %1063 = tpu.matmul %1062, %773, %cst_440 {dimension_numbers = #tpu.dot_dimension_numbers<[1], [0], [0], [1], [0, 0, 1, 1], [], []>} : vector<32x64xf32>, vector<64x64xf32>, vector<32x64xf32> -> vector<32x64xf32>
    %1064 = vector.broadcast %775 : vector<1x64xf32> to vector<32x64xf32>
    %1065 = arith.addf %1063, %1064 : vector<32x64xf32>
    %1066 = vector.shape_cast %1065 : vector<32x64xf32> to vector<2x16x64xf32>
    %1067 = arith.addf %755, %1066 : vector<2x16x64xf32>
    %c1_441 = arith.constant 1 : index
    %c0_442 = arith.constant 0 : index
    %c0_443 = arith.constant 0 : index
    %1068 = vector.load %arg23[%c1_441, %c0_442, %c0_443] : memref<2x1x64xf32, #tpu.memory_space<vmem>>, vector<1x1x64xf32>
    %1069 = vector.shape_cast %1068 : vector<1x1x64xf32> to vector<1x64xf32>
    %c1_444 = arith.constant 1 : index
    %c0_445 = arith.constant 0 : index
    %c0_446 = arith.constant 0 : index
    %1070 = vector.load %arg24[%c1_444, %c0_445, %c0_446] : memref<2x1x64xf32, #tpu.memory_space<vmem>>, vector<1x1x64xf32>
    %1071 = vector.shape_cast %1070 : vector<1x1x64xf32> to vector<1x64xf32>
    %c1_447 = arith.constant 1 : index
    %c0_448 = arith.constant 0 : index
    %c0_449 = arith.constant 0 : index
    %1072 = vector.load %arg25[%c1_447, %c0_448, %c0_449] : memref<2x64x128xf32, #tpu.memory_space<vmem>>, vector<1x64x128xf32>
    %1073 = vector.shape_cast %1072 : vector<1x64x128xf32> to vector<64x128xf32>
    %c1_450 = arith.constant 1 : index
    %c0_451 = arith.constant 0 : index
    %c0_452 = arith.constant 0 : index
    %1074 = vector.load %arg26[%c1_450, %c0_451, %c0_452] : memref<2x1x128xf32, #tpu.memory_space<vmem>>, vector<1x1x128xf32>
    %1075 = vector.shape_cast %1074 : vector<1x1x128xf32> to vector<1x128xf32>
    %c1_453 = arith.constant 1 : index
    %c0_454 = arith.constant 0 : index
    %c0_455 = arith.constant 0 : index
    %1076 = vector.load %arg27[%c1_453, %c0_454, %c0_455] : memref<2x128x64xf32, #tpu.memory_space<vmem>>, vector<1x128x64xf32>
    %1077 = vector.shape_cast %1076 : vector<1x128x64xf32> to vector<128x64xf32>
    %c1_456 = arith.constant 1 : index
    %c0_457 = arith.constant 0 : index
    %c0_458 = arith.constant 0 : index
    %1078 = vector.load %arg28[%c1_456, %c0_457, %c0_458] : memref<2x1x64xf32, #tpu.memory_space<vmem>>, vector<1x1x64xf32>
    %1079 = vector.shape_cast %1078 : vector<1x1x64xf32> to vector<1x64xf32>
    %cst_459 = arith.constant dense<0.000000e+00> : vector<2x16xf32>
    %1080 = vector.multi_reduction <add>, %1067, %cst_459 [2] : vector<2x16x64xf32> to vector<2x16xf32>
    %1081 = vector.shape_cast %1080 : vector<2x16xf32> to vector<2x16x1xf32>
    %cst_460 = arith.constant 6.400000e+01 : f32
    %1082 = vector.broadcast %cst_460 : f32 to vector<2x16x1xf32>
    %1083 = arith.divf %1081, %1082 : vector<2x16x1xf32>
    %1084 = vector.broadcast %1083 : vector<2x16x1xf32> to vector<2x16x64xf32>
    %1085 = arith.subf %1067, %1084 : vector<2x16x64xf32>
    %1086 = arith.mulf %1085, %1085 : vector<2x16x64xf32>
    %cst_461 = arith.constant dense<0.000000e+00> : vector<2x16xf32>
    %1087 = vector.multi_reduction <add>, %1086, %cst_461 [2] : vector<2x16x64xf32> to vector<2x16xf32>
    %1088 = vector.shape_cast %1087 : vector<2x16xf32> to vector<2x16x1xf32>
    %cst_462 = arith.constant 6.400000e+01 : f32
    %1089 = vector.broadcast %cst_462 : f32 to vector<2x16x1xf32>
    %1090 = arith.divf %1088, %1089 : vector<2x16x1xf32>
    %1091 = vector.broadcast %1083 : vector<2x16x1xf32> to vector<2x16x64xf32>
    %1092 = arith.subf %1067, %1091 : vector<2x16x64xf32>
    %cst_463 = arith.constant 9.99999974E-6 : f32
    %1093 = vector.broadcast %cst_463 : f32 to vector<2x16x1xf32>
    %1094 = arith.addf %1090, %1093 : vector<2x16x1xf32>
    %1095 = math.rsqrt %1094 : vector<2x16x1xf32>
    %1096 = vector.broadcast %1095 : vector<2x16x1xf32> to vector<2x16x64xf32>
    %1097 = arith.mulf %1092, %1096 : vector<2x16x64xf32>
    %1098 = vector.shape_cast %1069 : vector<1x64xf32> to vector<1x1x64xf32>
    %1099 = vector.broadcast %1098 : vector<1x1x64xf32> to vector<2x16x64xf32>
    %1100 = arith.mulf %1097, %1099 : vector<2x16x64xf32>
    %1101 = vector.shape_cast %1071 : vector<1x64xf32> to vector<1x1x64xf32>
    %1102 = vector.broadcast %1101 : vector<1x1x64xf32> to vector<2x16x64xf32>
    %1103 = arith.addf %1100, %1102 : vector<2x16x64xf32>
    %1104 = vector.shape_cast %1103 : vector<2x16x64xf32> to vector<32x64xf32>
    %cst_464 = arith.constant dense<0.000000e+00> : vector<32x128xf32>
    %1105 = tpu.matmul %1104, %1073, %cst_464 {dimension_numbers = #tpu.dot_dimension_numbers<[1], [0], [0], [1], [0, 0, 1, 1], [], []>} : vector<32x64xf32>, vector<64x128xf32>, vector<32x128xf32> -> vector<32x128xf32>
    %1106 = vector.broadcast %1075 : vector<1x128xf32> to vector<32x128xf32>
    %1107 = arith.addf %1105, %1106 : vector<32x128xf32>
    %1108 = arith.negf %1107 : vector<32x128xf32>
    %1109 = math.exp %1108 : vector<32x128xf32>
    %cst_465 = arith.constant 1.000000e+00 : f32
    %1110 = vector.broadcast %cst_465 : f32 to vector<32x128xf32>
    %1111 = arith.addf %1110, %1109 : vector<32x128xf32>
    %1112 = arith.divf %1110, %1111 : vector<32x128xf32>
    %1113 = arith.mulf %1107, %1112 : vector<32x128xf32>
    %cst_466 = arith.constant dense<0.000000e+00> : vector<32x64xf32>
    %1114 = tpu.matmul %1113, %1077, %cst_466 {dimension_numbers = #tpu.dot_dimension_numbers<[1], [0], [0], [1], [0, 0, 1, 1], [], []>} : vector<32x128xf32>, vector<128x64xf32>, vector<32x64xf32> -> vector<32x64xf32>
    %1115 = vector.broadcast %1079 : vector<1x64xf32> to vector<32x64xf32>
    %1116 = arith.addf %1114, %1115 : vector<32x64xf32>
    %1117 = vector.shape_cast %1116 : vector<32x64xf32> to vector<2x16x64xf32>
    %cst_467 = arith.constant 5.000000e-01 : f32
    %1118 = vector.broadcast %cst_467 : f32 to vector<2x16x64xf32>
    %1119 = arith.mulf %1118, %1117 : vector<2x16x64xf32>
    %1120 = arith.addf %1067, %1119 : vector<2x16x64xf32>
    %c1_468 = arith.constant 1 : index
    %c0_469 = arith.constant 0 : index
    %c0_470 = arith.constant 0 : index
    %1121 = vector.load %arg29[%c1_468, %c0_469, %c0_470] : memref<2x1x64xf32, #tpu.memory_space<vmem>>, vector<1x1x64xf32>
    %1122 = vector.shape_cast %1121 : vector<1x1x64xf32> to vector<1x64xf32>
    %c1_471 = arith.constant 1 : index
    %c0_472 = arith.constant 0 : index
    %c0_473 = arith.constant 0 : index
    %1123 = vector.load %arg30[%c1_471, %c0_472, %c0_473] : memref<2x1x64xf32, #tpu.memory_space<vmem>>, vector<1x1x64xf32>
    %1124 = vector.shape_cast %1123 : vector<1x1x64xf32> to vector<1x64xf32>
    %cst_474 = arith.constant dense<0.000000e+00> : vector<2x16xf32>
    %1125 = vector.multi_reduction <add>, %1120, %cst_474 [2] : vector<2x16x64xf32> to vector<2x16xf32>
    %1126 = vector.shape_cast %1125 : vector<2x16xf32> to vector<2x16x1xf32>
    %cst_475 = arith.constant 6.400000e+01 : f32
    %1127 = vector.broadcast %cst_475 : f32 to vector<2x16x1xf32>
    %1128 = arith.divf %1126, %1127 : vector<2x16x1xf32>
    %1129 = vector.broadcast %1128 : vector<2x16x1xf32> to vector<2x16x64xf32>
    %1130 = arith.subf %1120, %1129 : vector<2x16x64xf32>
    %1131 = arith.mulf %1130, %1130 : vector<2x16x64xf32>
    %cst_476 = arith.constant dense<0.000000e+00> : vector<2x16xf32>
    %1132 = vector.multi_reduction <add>, %1131, %cst_476 [2] : vector<2x16x64xf32> to vector<2x16xf32>
    %1133 = vector.shape_cast %1132 : vector<2x16xf32> to vector<2x16x1xf32>
    %cst_477 = arith.constant 6.400000e+01 : f32
    %1134 = vector.broadcast %cst_477 : f32 to vector<2x16x1xf32>
    %1135 = arith.divf %1133, %1134 : vector<2x16x1xf32>
    %1136 = vector.broadcast %1128 : vector<2x16x1xf32> to vector<2x16x64xf32>
    %1137 = arith.subf %1120, %1136 : vector<2x16x64xf32>
    %cst_478 = arith.constant 9.99999974E-6 : f32
    %1138 = vector.broadcast %cst_478 : f32 to vector<2x16x1xf32>
    %1139 = arith.addf %1135, %1138 : vector<2x16x1xf32>
    %1140 = math.rsqrt %1139 : vector<2x16x1xf32>
    %1141 = vector.broadcast %1140 : vector<2x16x1xf32> to vector<2x16x64xf32>
    %1142 = arith.mulf %1137, %1141 : vector<2x16x64xf32>
    %1143 = vector.shape_cast %1122 : vector<1x64xf32> to vector<1x1x64xf32>
    %1144 = vector.broadcast %1143 : vector<1x1x64xf32> to vector<2x16x64xf32>
    %1145 = arith.mulf %1142, %1144 : vector<2x16x64xf32>
    %1146 = vector.shape_cast %1124 : vector<1x64xf32> to vector<1x1x64xf32>
    %1147 = vector.broadcast %1146 : vector<1x1x64xf32> to vector<2x16x64xf32>
    %1148 = arith.addf %1145, %1147 : vector<2x16x64xf32>
    %cst_479 = arith.constant dense<0.000000e+00> : vector<2x64xf32>
    %1149 = vector.multi_reduction <add>, %1148, %cst_479 [1] : vector<2x16x64xf32> to vector<2x64xf32>
    %cst_480 = arith.constant 1.600000e+01 : f32
    %1150 = vector.broadcast %cst_480 : f32 to vector<2x64xf32>
    %1151 = arith.divf %1149, %1150 : vector<2x64xf32>
    %c0_481 = arith.constant 0 : index
    %c0_482 = arith.constant 0 : index
    %1152 = vector.load %arg31[%c0_481, %c0_482] : memref<64x4xf32, #tpu.memory_space<vmem>>, vector<64x4xf32>
    %cst_483 = arith.constant dense<0.000000e+00> : vector<2x4xf32>
    %1153 = tpu.matmul %1151, %1152, %cst_483 {dimension_numbers = #tpu.dot_dimension_numbers<[1], [0], [0], [1], [0, 0, 1, 1], [], []>} : vector<2x64xf32>, vector<64x4xf32>, vector<2x4xf32> -> vector<2x4xf32>
    %c0_484 = arith.constant 0 : index
    %c0_485 = arith.constant 0 : index
    %1154 = vector.load %arg32[%c0_484, %c0_485] : memref<1x4xf32, #tpu.memory_space<vmem>>, vector<1x4xf32>
    %1155 = vector.broadcast %1154 : vector<1x4xf32> to vector<2x4xf32>
    %1156 = arith.addf %1153, %1155 : vector<2x4xf32>
    %c0_486 = arith.constant 0 : index
    %c0_487 = arith.constant 0 : index
    %1157 = vector.load %arg33[%c0_486, %c0_487] : memref<2x4xf32, #tpu.memory_space<vmem>>, vector<2x4xf32>
    tpu.vector_store %arg33[%c0_486, %c0_487], %1156 {strides = array<i32>} : memref<2x4xf32, #tpu.memory_space<vmem>>, vector<2x4xf32>,
    return
  }
}

</mosaic_0001>

<llo_original>
// kernel: heart_sound_forward.1
$region0: #{heart_sound_forward.1}
  #allocation0 [shape = 'u32[]', space=smem, size = 0x4, offset = 0x4, fixed_abs, tag = 'smem constant byte address 0x4 - core index']
  #allocation1 [shape = 'u32[144,128]{1,0:T(1,128)}', space=vmem, size = 0x12000, scoped, tag = 'internal scratch']
  #allocation2 [shape = 'f32[2,46,64]{2,1,0:T(8,128)}', space=vmem, size = 0xc000, scoped, tag = 'scratch operand']
  %s0 = inlined_call_operand.smem [shape: u32[34], index: -1, kind: input, shape index: {}]
  %s1 = sld [smem:[%s0]]
  %s2 = scalar_lea.smem %s0, 1
  %s3 = sld [smem:[%s2]]
  %s4 = scalar_lea.smem %s0, 2
  %s5 = sld [smem:[%s4]]
  %s6 = scalar_lea.smem %s0, 3
  %s7 = sld [smem:[%s6]]
  %s8 = scalar_lea.smem %s0, 4
  %s9 = sld [smem:[%s8]]
  %s10 = scalar_lea.smem %s0, 5
  %s11 = sld [smem:[%s10]]
  %s12 = scalar_lea.smem %s0, 6
  %s13 = sld [smem:[%s12]]
  %s14 = scalar_lea.smem %s0, 7
  %s15 = sld [smem:[%s14]]
  %s16 = scalar_lea.smem %s0, 8
  %s17 = sld [smem:[%s16]]
  %s18 = scalar_lea.smem %s0, 9
  %s19 = sld [smem:[%s18]]
  %s20 = scalar_lea.smem %s0, 10
  %s21 = sld [smem:[%s20]]
  %s22 = scalar_lea.smem %s0, 11
  %s23 = sld [smem:[%s22]]
  %s24 = scalar_lea.smem %s0, 12
  %s25 = sld [smem:[%s24]]
  %s26 = scalar_lea.smem %s0, 13
  %s27 = sld [smem:[%s26]]
  %s28 = scalar_lea.smem %s0, 14
  %s29 = sld [smem:[%s28]]
  %s30 = scalar_lea.smem %s0, 15
  %s31 = sld [smem:[%s30]]
  %s32 = scalar_lea.smem %s0, 16
  %s33 = sld [smem:[%s32]]
  %s34 = scalar_lea.smem %s0, 17
  %s35 = sld [smem:[%s34]]
  %s36 = scalar_lea.smem %s0, 18
  %s37 = sld [smem:[%s36]]
  %s38 = scalar_lea.smem %s0, 19
  %s39 = sld [smem:[%s38]]
  %s40 = scalar_lea.smem %s0, 20
  %s41 = sld [smem:[%s40]]
  %s42 = scalar_lea.smem %s0, 21
  %s43 = sld [smem:[%s42]]
  %s44 = scalar_lea.smem %s0, 22
  %s45 = sld [smem:[%s44]]
  %s46 = scalar_lea.smem %s0, 23
  %s47 = sld [smem:[%s46]]
  %s48 = scalar_lea.smem %s0, 24
  %s49 = sld [smem:[%s48]]
  %s50 = scalar_lea.smem %s0, 25
  %s51 = sld [smem:[%s50]]
  %s52 = scalar_lea.smem %s0, 26
  %s53 = sld [smem:[%s52]]
  %s54 = scalar_lea.smem %s0, 27
  %s55 = sld [smem:[%s54]]
  %s56 = scalar_lea.smem %s0, 28
  %s57 = sld [smem:[%s56]]
  %s58 = scalar_lea.smem %s0, 29
  %s59 = sld [smem:[%s58]]
  %s60 = scalar_lea.smem %s0, 30
  %s61 = sld [smem:[%s60]]
  %s62 = scalar_lea.smem %s0, 31
  %s63 = sld [smem:[%s62]]
  %s64 = scalar_lea.smem %s0, 32
  %s65 = sld [smem:[%s64]]
  %s66 = scalar_lea.smem %s0, 33
  %s67 = sld [smem:[%s66]]
  %s68 = sld [smem:[#allocation0]]
  $region274: #{heart_sound_forward.1} parent=0
    _
  %s70 = ssub.s32 1, %s68
  %s71 = scalar_select 0, %s70, %s68
  $region1: #{heart_sound_forward.1} parent=0
    #allocation3 [shape = 'u8[16384]{0}', space=vmem, size = 0x4000, scoped, tag = 'input window, operand 0, single buffered']
    #allocation4 [shape = 's32[1]{0}', space=sflag, size = 0x4, scoped, tag = 'scoped memory for heart_sound_forward.1']
    #allocation5 [shape = 's32[1]{0}', space=sflag, size = 0x4, scoped, tag = 'scoped memory for heart_sound_forward.1']
    #allocation6 [shape = 'u8[1024]{0}', space=vmem, size = 0x400, scoped, tag = 'input window, operand 1, single buffered']
    #allocation7 [shape = 's32[1]{0}', space=sflag, size = 0x4, scoped, tag = 'scoped memory for heart_sound_forward.1']
    #allocation8 [shape = 'u8[1024]{0}', space=vmem, size = 0x400, scoped, tag = 'input window, operand 2, single buffered']
    #allocation9 [shape = 'u8[65536]{0}', space=vmem, size = 0x10000, scoped, tag = 'input window, operand 3, single buffered']
    #allocation10 [shape = 's32[1]{0}', space=sflag, size = 0x4, scoped, tag = 'scoped memory for heart_sound_forward.1']
    #allocation11 [shape = 'u8[1024]{0}', space=vmem, size = 0x400, scoped, tag = 'input window, operand 4, single buffered']
    #allocation12 [shape = 'u8[131072]{0}', space=vmem, size = 0x20000, scoped, tag = 'input window, operand 5, single buffered']
    #allocation13 [shape = 's32[1]{0}', space=sflag, size = 0x4, scoped, tag = 'scoped memory for heart_sound_forward.1']
    #allocation14 [shape = 'u8[1024]{0}', space=vmem, size = 0x400, scoped, tag = 'input window, operand 6, single buffered']
    #allocation15 [shape = 'u8[1024]{0}', space=vmem, size = 0x400, scoped, tag = 'input window, operand 7, single buffered']
    #allocation16 [shape = 's32[1]{0}', space=sflag, size = 0x4, scoped, tag = 'scoped memory for heart_sound_forward.1']
    #allocation17 [shape = 'u8[1024]{0}', space=vmem, size = 0x400, scoped, tag = 'input window, operand 8, single buffered']
    #allocation18 [shape = 'u8[131072]{0}', space=vmem, size = 0x20000, scoped, tag = 'input window, operand 9, single buffered']
    #allocation19 [shape = 's32[1]{0}', space=sflag, size = 0x4, scoped, tag = 'scoped memory for heart_sound_forward.1']
    #allocation20 [shape = 'u8[2048]{0}', space=vmem, size = 0x800, scoped, tag = 'input window, operand 10, single buffered']
    #allocation21 [shape = 'u8[65536]{0}', space=vmem, size = 0x10000, scoped, tag = 'input window, operand 11, single buffered']
    #allocation22 [shape = 's32[1]{0}', space=sflag, size = 0x4, scoped, tag = 'scoped memory for heart_sound_forward.1']
    #allocation23 [shape = 'u8[1024]{0}', space=vmem, size = 0x400, scoped, tag = 'input window, operand 12, single buffered']
    #allocation24 [shape = 'u8[1024]{0}', space=vmem, size = 0x400, scoped, tag = 'input window, operand 13, single buffered']
    #allocation25 [shape = 's32[1]{0}', space=sflag, size = 0x4, scoped, tag = 'scoped memory for heart_sound_forward.1']
    #allocation26 [shape = 'u8[1024]{0}', space=vmem, size = 0x400, scoped, tag = 'input window, operand 14, single buffered']
    #allocation27 [shape = 'u8[65536]{0}', space=vmem, size = 0x10000, scoped, tag = 'input window, operand 15, single buffered']
    #allocation28 [shape = 's32[1]{0}', space=sflag, size = 0x4, scoped, tag = 'scoped memory for heart_sound_forward.1']
    #allocation29 [shape = 'u8[1024]{0}', space=vmem, size = 0x400, scoped, tag = 'input window, operand 16, single buffered']
    #allocation30 [shape = 'u8[32768]{0}', space=vmem, size = 0x8000, scoped, tag = 'input window, operand 17, single buffered']
    #allocation31 [shape = 's32[1]{0}', space=sflag, size = 0x4, scoped, tag = 'scoped memory for heart_sound_forward.1']
    #allocation32 [shape = 'u8[1024]{0}', space=vmem, size = 0x400, scoped, tag = 'input window, operand 18, single buffered']
    #allocation33 [shape = 'u8[1024]{0}', space=vmem, size = 0x400, scoped, tag = 'input window, operand 19, single buffered']
    #allocation34 [shape = 's32[1]{0}', space=sflag, size = 0x4, scoped, tag = 'scoped memory for heart_sound_forward.1']
    #allocation35 [shape = 'u8[1024]{0}', space=vmem, size = 0x400, scoped, tag = 'input window, operand 20, single buffered']
    #allocation36 [shape = 'u8[65536]{0}', space=vmem, size = 0x10000, scoped, tag = 'input window, operand 21, single buffered']
    #allocation37 [shape = 's32[1]{0}', space=sflag, size = 0x4, scoped, tag = 'scoped memory for heart_sound_forward.1']
    #allocation38 [shape = 'u8[1024]{0}', space=vmem, size = 0x400, scoped, tag = 'input window, operand 22, single buffered']
    #allocation39 [shape = 'u8[1024]{0}', space=vmem, size = 0x400, scoped, tag = 'input window, operand 23, single buffered']
    #allocation40 [shape = 's32[1]{0}', space=sflag, size = 0x4, scoped, tag = 'scoped memory for heart_sound_forward.1']
    #allocation41 [shape = 'u8[1024]{0}', space=vmem, size = 0x400, scoped, tag = 'input window, operand 24, single buffered']
    #allocation42 [shape = 'u8[65536]{0}', space=vmem, size = 0x10000, scoped, tag = 'input window, operand 25, single buffered']
    #allocation43 [shape = 's32[1]{0}', space=sflag, size = 0x4, scoped, tag = 'scoped memory for heart_sound_forward.1']
    #allocation44 [shape = 'u8[1024]{0}', space=vmem, size = 0x400, scoped, tag = 'input window, operand 26, single buffered']
    #allocation45 [shape = 'u8[131072]{0}', space=vmem, size = 0x20000, scoped, tag = 'input window, operand 27, single buffered']
    #allocation46 [shape = 's32[1]{0}', space=sflag, size = 0x4, scoped, tag = 'scoped memory for heart_sound_forward.1']
    #allocation47 [shape = 'u8[1024]{0}', space=vmem, size = 0x400, scoped, tag = 'input window, operand 28, single buffered']
    #allocation48 [shape = 'u8[1024]{0}', space=vmem, size = 0x400, scoped, tag = 'input window, operand 29, single buffered']
    #allocation49 [shape = 's32[1]{0}', space=sflag, size = 0x4, scoped, tag = 'scoped memory for heart_sound_forward.1']
    #allocation50 [shape = 'u8[1024]{0}', space=vmem, size = 0x400, scoped, tag = 'input window, operand 30, single buffered']
    #allocation51 [shape = 'u8[32768]{0}', space=vmem, size = 0x8000, scoped, tag = 'input window, operand 31, single buffered']
    #allocation52 [shape = 's32[1]{0}', space=sflag, size = 0x4, scoped, tag = 'scoped memory for heart_sound_forward.1']
    #allocation53 [shape = 'u8[512]{0}', space=vmem, size = 0x400, scoped, tag = 'input window, operand 32, single buffered']
    #allocation54 [shape = 'u8[1024]{0}', space=vmem, size = 0x400, scoped, tag = 'output window, operand 0, single buffered']
    %72 = vsyncpa [#allocation4], 0
    %73 = vsyncpa [#allocation7], 0
    %74 = vsyncpa [#allocation10], 0
    %75 = vsyncpa [#allocation13], 0
    %76 = vsyncpa [#allocation16], 0
    %77 = vsyncpa [#allocation19], 0
    %78 = vsyncpa [#allocation22], 0
    %79 = vsyncpa [#allocation25], 0
    %80 = vsyncpa [#allocation28], 0
    %81 = vsyncpa [#allocation31], 0
    %82 = vsyncpa [#allocation34], 0
    %83 = vsyncpa [#allocation37], 0
    %84 = vsyncpa [#allocation40], 0
    %85 = vsyncpa [#allocation43], 0
    %86 = vsyncpa [#allocation46], 0
    %87 = vsyncpa [#allocation49], 0
    %88 = vsyncpa [#allocation52], 0
    %89 = vsyncpa [#allocation5], 0
    // Predicated region
    $region2: #{heart_sound_forward.1} parent=1 // pred_check
      _
    $region3: #{heart_sound_forward.1} parent=1 // pred_check_branch
      %91 = sbr.rel (0) target = $region5
    $region4: #{heart_sound_forward.1} parent=1 // pred_region
      %s93 = ssub.s32 512, 512
      %94 = vsyncadd [#allocation4], %s93
      %s95 = sshll.u32 [#allocation3], 4
      %s96 = int_to_ptr.vmem [resolvable:$true] %s95
      %101 = dma.hbm_to_vmem [thread:$0]  %s1, 512, %s96, [#allocation4], 128, 128, 8
    $region5: #{heart_sound_forward.1} parent=1 // pred_fallthru
      _
    // Predicated region
    $region6: #{heart_sound_forward.1} parent=1 // pred_check
      _
    $region7: #{heart_sound_forward.1} parent=1 // pred_check_branch
      %103 = sbr.rel (0) target = $region9
    $region8: #{heart_sound_forward.1} parent=1 // pred_region
      %s105 = ssub.s32 32, 32
      %106 = vsyncadd [#allocation7], %s105
      %s107 = sshll.u32 [#allocation6], 4
      %s108 = int_to_ptr.vmem [resolvable:$true] %s107
      %113 = dma.hbm_to_vmem [thread:$0]  %s3, 32, %s108, [#allocation7], 16, 16, 1
    $region9: #{heart_sound_forward.1} parent=1 // pred_fallthru
      _
    // Predicated region
    $region10: #{heart_sound_forward.1} parent=1 // pred_check
      _
    $region11: #{heart_sound_forward.1} parent=1 // pred_check_branch
      %115 = sbr.rel (0) target = $region13
    $region12: #{heart_sound_forward.1} parent=1 // pred_region
      %s117 = ssub.s32 32, 32
      %118 = vsyncadd [#allocation7], %s117
      %s119 = sshll.u32 [#allocation8], 4
      %s120 = int_to_ptr.vmem [resolvable:$true] %s119
      %125 = dma.hbm_to_vmem [thread:$0]  %s5, 32, %s120, [#allocation7], 16, 16, 1
    $region13: #{heart_sound_forward.1} parent=1 // pred_fallthru
      _
    // Predicated region
    $region14: #{heart_sound_forward.1} parent=1 // pred_check
      _
    $region15: #{heart_sound_forward.1} parent=1 // pred_check_branch
      %127 = sbr.rel (0) target = $region17
    $region16: #{heart_sound_forward.1} parent=1 // pred_region
      %s129 = ssub.s32 2048, 2048
      %130 = vsyncadd [#allocation10], %s129
      %s131 = sshll.u32 [#allocation9], 4
      %s132 = int_to_ptr.vmem [resolvable:$true] %s131
      %137 = dma.hbm_to_vmem [thread:$0]  %s7, 2048, %s132, [#allocation10], 128, 128, 8
    $region17: #{heart_sound_forward.1} parent=1 // pred_fallthru
      _
    // Predicated region
    $region18: #{heart_sound_forward.1} parent=1 // pred_check
      _
    $region19: #{heart_sound_forward.1} parent=1 // pred_check_branch
      %139 = sbr.rel (0) target = $region21
    $region20: #{heart_sound_forward.1} parent=1 // pred_region
      %s141 = ssub.s32 32, 32
      %142 = vsyncadd [#allocation10], %s141
      %s143 = sshll.u32 [#allocation11], 4
      %s144 = int_to_ptr.vmem [resolvable:$true] %s143
      %149 = dma.hbm_to_vmem [thread:$0]  %s9, 32, %s144, [#allocation10], 16, 16, 1
    $region21: #{heart_sound_forward.1} parent=1 // pred_fallthru
      _
    // Predicated region
    $region22: #{heart_sound_forward.1} parent=1 // pred_check
      _
    $region23: #{heart_sound_forward.1} parent=1 // pred_check_branch
      %151 = sbr.rel (0) target = $region25
    $region24: #{heart_sound_forward.1} parent=1 // pred_region
      %s153 = ssub.s32 4096, 4096
      %154 = vsyncadd [#allocation13], %s153
      %s155 = sshll.u32 [#allocation12], 4
      %s156 = int_to_ptr.vmem [resolvable:$true] %s155
      %161 = dma.hbm_to_vmem [thread:$0]  %s11, 4096, %s156, [#allocation13], 128, 128, 8
    $region25: #{heart_sound_forward.1} parent=1 // pred_fallthru
      _
    // Predicated region
    $region26: #{heart_sound_forward.1} parent=1 // pred_check
      _
    $region27: #{heart_sound_forward.1} parent=1 // pred_check_branch
      %163 = sbr.rel (0) target = $region29
    $region28: #{heart_sound_forward.1} parent=1 // pred_region
      %s165 = ssub.s32 32, 32
      %166 = vsyncadd [#allocation13], %s165
      %s167 = sshll.u32 [#allocation14], 4
      %s168 = int_to_ptr.vmem [resolvable:$true] %s167
      %173 = dma.hbm_to_vmem [thread:$0]  %s13, 32, %s168, [#allocation13], 16, 16, 1
    $region29: #{heart_sound_forward.1} parent=1 // pred_fallthru
      _
    // Predicated region
    $region30: #{heart_sound_forward.1} parent=1 // pred_check
      _
    $region31: #{heart_sound_forward.1} parent=1 // pred_check_branch
      %175 = sbr.rel (0) target = $region33
    $region32: #{heart_sound_forward.1} parent=1 // pred_region
      %s177 = ssub.s32 32, 32
      %178 = vsyncadd [#allocation16], %s177
      %s179 = sshll.u32 [#allocation15], 4
      %s180 = int_to_ptr.vmem [resolvable:$true] %s179
      %185 = dma.hbm_to_vmem [thread:$0]  %s15, 32, %s180, [#allocation16], 16, 16, 1
    $region33: #{heart_sound_forward.1} parent=1 // pred_fallthru
      _
    // Predicated region
    $region34: #{heart_sound_forward.1} parent=1 // pred_check
      _
    $region35: #{heart_sound_forward.1} parent=1 // pred_check_branch
      %187 = sbr.rel (0) target = $region37
    $region36: #{heart_sound_forward.1} parent=1 // pred_region
      %s189 = ssub.s32 32, 32
      %190 = vsyncadd [#allocation16], %s189
      %s191 = sshll.u32 [#allocation17], 4
      %s192 = int_to_ptr.vmem [resolvable:$true] %s191
      %197 = dma.hbm_to_vmem [thread:$0]  %s17, 32, %s192, [#allocation16], 16, 16, 1
    $region37: #{heart_sound_forward.1} parent=1 // pred_fallthru
      _
    // Predicated region
    $region38: #{heart_sound_forward.1} parent=1 // pred_check
      _
    $region39: #{heart_sound_forward.1} parent=1 // pred_check_branch
      %199 = sbr.rel (0) target = $region41
    $region40: #{heart_sound_forward.1} parent=1 // pred_region
      %s201 = ssub.s32 4096, 4096
      %202 = vsyncadd [#allocation19], %s201
      %s203 = sshll.u32 [#allocation18], 4
      %s204 = int_to_ptr.vmem [resolvable:$true] %s203
      %209 = dma.hbm_to_vmem [thread:$0]  %s19, 4096, %s204, [#allocation19], 256, 256, 16
    $region41: #{heart_sound_forward.1} parent=1 // pred_fallthru
      _
    // Predicated region
    $region42: #{heart_sound_forward.1} parent=1 // pred_check
      _
    $region43: #{heart_sound_forward.1} parent=1 // pred_check_branch
      %211 = sbr.rel (0) target = $region45
    $region44: #{heart_sound_forward.1} parent=1 // pred_region
      %s213 = ssub.s32 64, 64
      %214 = vsyncadd [#allocation19], %s213
      %s215 = sshll.u32 [#allocation20], 4
      %s216 = int_to_ptr.vmem [resolvable:$true] %s215
      %221 = dma.hbm_to_vmem [thread:$0]  %s21, 64, %s216, [#allocation19], 32, 32, 2
    $region45: #{heart_sound_forward.1} parent=1 // pred_fallthru
      _
    // Predicated region
    $region46: #{heart_sound_forward.1} parent=1 // pred_check
      _
    $region47: #{heart_sound_forward.1} parent=1 // pred_check_branch
      %223 = sbr.rel (0) target = $region49
    $region48: #{heart_sound_forward.1} parent=1 // pred_region
      %s225 = ssub.s32 2048, 2048
      %226 = vsyncadd [#allocation22], %s225
      %s227 = sshll.u32 [#allocation21], 4
      %s228 = int_to_ptr.vmem [resolvable:$true] %s227
      %233 = dma.hbm_to_vmem [thread:$0]  %s23, 2048, %s228, [#allocation22], 128, 128, 8
    $region49: #{heart_sound_forward.1} parent=1 // pred_fallthru
      _
    // Predicated region
    $region50: #{heart_sound_forward.1} parent=1 // pred_check
      _
    $region51: #{heart_sound_forward.1} parent=1 // pred_check_branch
      %235 = sbr.rel (0) target = $region53
    $region52: #{heart_sound_forward.1} parent=1 // pred_region
      %s237 = ssub.s32 32, 32
      %238 = vsyncadd [#allocation22], %s237
      %s239 = sshll.u32 [#allocation23], 4
      %s240 = int_to_ptr.vmem [resolvable:$true] %s239
      %245 = dma.hbm_to_vmem [thread:$0]  %s25, 32, %s240, [#allocation22], 16, 16, 1
    $region53: #{heart_sound_forward.1} parent=1 // pred_fallthru
      _
    // Predicated region
    $region54: #{heart_sound_forward.1} parent=1 // pred_check
      _
    $region55: #{heart_sound_forward.1} parent=1 // pred_check_branch
      %247 = sbr.rel (0) target = $region57
    $region56: #{heart_sound_forward.1} parent=1 // pred_region
      %s249 = ssub.s32 32, 32
      %250 = vsyncadd [#allocation25], %s249
      %s251 = sshll.u32 [#allocation24], 4
      %s252 = int_to_ptr.vmem [resolvable:$true] %s251
      %257 = dma.hbm_to_vmem [thread:$0]  %s27, 32, %s252, [#allocation25], 16, 16, 1
    $region57: #{heart_sound_forward.1} parent=1 // pred_fallthru
      _
    // Predicated region
    $region58: #{heart_sound_forward.1} parent=1 // pred_check
      _
    $region59: #{heart_sound_forward.1} parent=1 // pred_check_branch
      %259 = sbr.rel (0) target = $region61
    $region60: #{heart_sound_forward.1} parent=1 // pred_region
      %s261 = ssub.s32 32, 32
      %262 = vsyncadd [#allocation25], %s261
      %s263 = sshll.u32 [#allocation26], 4
      %s264 = int_to_ptr.vmem [resolvable:$true] %s263
      %269 = dma.hbm_to_vmem [thread:$0]  %s29, 32, %s264, [#allocation25], 16, 16, 1
    $region61: #{heart_sound_forward.1} parent=1 // pred_fallthru
      _
    // Predicated region
    $region62: #{heart_sound_forward.1} parent=1 // pred_check
      _
    $region63: #{heart_sound_forward.1} parent=1 // pred_check_branch
      %271 = sbr.rel (0) target = $region65
    $region64: #{heart_sound_forward.1} parent=1 // pred_region
      %s273 = ssub.s32 2048, 2048
      %274 = vsyncadd [#allocation28], %s273
      %s275 = sshll.u32 [#allocation27], 4
      %s276 = int_to_ptr.vmem [resolvable:$true] %s275
      %281 = dma.hbm_to_vmem [thread:$0]  %s31, 2048, %s276, [#allocation28], 128, 128, 8
    $region65: #{heart_sound_forward.1} parent=1 // pred_fallthru
      _
    // Predicated region
    $region66: #{heart_sound_forward.1} parent=1 // pred_check
      _
    $region67: #{heart_sound_forward.1} parent=1 // pred_check_branch
      %283 = sbr.rel (0) target = $region69
    $region68: #{heart_sound_forward.1} parent=1 // pred_region
      %s285 = ssub.s32 32, 32
      %286 = vsyncadd [#allocation28], %s285
      %s287 = sshll.u32 [#allocation29], 4
      %s288 = int_to_ptr.vmem [resolvable:$true] %s287
      %293 = dma.hbm_to_vmem [thread:$0]  %s33, 32, %s288, [#allocation28], 16, 16, 1
    $region69: #{heart_sound_forward.1} parent=1 // pred_fallthru
      _
    // Predicated region
    $region70: #{heart_sound_forward.1} parent=1 // pred_check
      _
    $region71: #{heart_sound_forward.1} parent=1 // pred_check_branch
      %295 = sbr.rel (0) target = $region73
    $region72: #{heart_sound_forward.1} parent=1 // pred_region
      %s297 = ssub.s32 1024, 1024
      %298 = vsyncadd [#allocation31], %s297
      %s299 = sshll.u32 [#allocation30], 4
      %s300 = int_to_ptr.vmem [resolvable:$true] %s299
      %305 = dma.hbm_to_vmem [thread:$0]  %s35, 1024, %s300, [#allocation31], 128, 128, 8
    $region73: #{heart_sound_forward.1} parent=1 // pred_fallthru
      _
    // Predicated region
    $region74: #{heart_sound_forward.1} parent=1 // pred_check
      _
    $region75: #{heart_sound_forward.1} parent=1 // pred_check_branch
      %307 = sbr.rel (0) target = $region77
    $region76: #{heart_sound_forward.1} parent=1 // pred_region
      %s309 = ssub.s32 32, 32
      %310 = vsyncadd [#allocation31], %s309
      %s311 = sshll.u32 [#allocation32], 4
      %s312 = int_to_ptr.vmem [resolvable:$true] %s311
      %317 = dma.hbm_to_vmem [thread:$0]  %s37, 32, %s312, [#allocation31], 16, 16, 1
    $region77: #{heart_sound_forward.1} parent=1 // pred_fallthru
      _
    // Predicated region
    $region78: #{heart_sound_forward.1} parent=1 // pred_check
      _
    $region79: #{heart_sound_forward.1} parent=1 // pred_check_branch
      %319 = sbr.rel (0) target = $region81
    $region80: #{heart_sound_forward.1} parent=1 // pred_region
      %s321 = ssub.s32 32, 32
      %322 = vsyncadd [#allocation34], %s321
      %s323 = sshll.u32 [#allocation33], 4
      %s324 = int_to_ptr.vmem [resolvable:$true] %s323
      %329 = dma.hbm_to_vmem [thread:$0]  %s39, 32, %s324, [#allocation34], 16, 16, 1
    $region81: #{heart_sound_forward.1} parent=1 // pred_fallthru
      _
    // Predicated region
    $region82: #{heart_sound_forward.1} parent=1 // pred_check
      _
    $region83: #{heart_sound_forward.1} parent=1 // pred_check_branch
      %331 = sbr.rel (0) target = $region85
    $region84: #{heart_sound_forward.1} parent=1 // pred_region
      %s333 = ssub.s32 32, 32
      %334 = vsyncadd [#allocation34], %s333
      %s335 = sshll.u32 [#allocation35], 4
      %s336 = int_to_ptr.vmem [resolvable:$true] %s335
      %341 = dma.hbm_to_vmem [thread:$0]  %s41, 32, %s336, [#allocation34], 16, 16, 1
    $region85: #{heart_sound_forward.1} parent=1 // pred_fallthru
      _
    // Predicated region
    $region86: #{heart_sound_forward.1} parent=1 // pred_check
      _
    $region87: #{heart_sound_forward.1} parent=1 // pred_check_branch
      %343 = sbr.rel (0) target = $region89
    $region88: #{heart_sound_forward.1} parent=1 // pred_region
      %s345 = ssub.s32 2048, 2048
      %346 = vsyncadd [#allocation37], %s345
      %s347 = sshll.u32 [#allocation36], 4
      %s348 = int_to_ptr.vmem [resolvable:$true] %s347
      %353 = dma.hbm_to_vmem [thread:$0]  %s43, 2048, %s348, [#allocation37], 128, 128, 8
    $region89: #{heart_sound_forward.1} parent=1 // pred_fallthru
      _
    // Predicated region
    $region90: #{heart_sound_forward.1} parent=1 // pred_check
      _
    $region91: #{heart_sound_forward.1} parent=1 // pred_check_branch
      %355 = sbr.rel (0) target = $region93
    $region92: #{heart_sound_forward.1} parent=1 // pred_region
      %s357 = ssub.s32 32, 32
      %358 = vsyncadd [#allocation37], %s357
      %s359 = sshll.u32 [#allocation38], 4
      %s360 = int_to_ptr.vmem [resolvable:$true] %s359
      %365 = dma.hbm_to_vmem [thread:$0]  %s45, 32, %s360, [#allocation37], 16, 16, 1
    $region93: #{heart_sound_forward.1} parent=1 // pred_fallthru
      _
    // Predicated region
    $region94: #{heart_sound_forward.1} parent=1 // pred_check
      _
    $region95: #{heart_sound_forward.1} parent=1 // pred_check_branch
      %367 = sbr.rel (0) target = $region97
    $region96: #{heart_sound_forward.1} parent=1 // pred_region
      %s369 = ssub.s32 32, 32
      %370 = vsyncadd [#allocation40], %s369
      %s371 = sshll.u32 [#allocation39], 4
      %s372 = int_to_ptr.vmem [resolvable:$true] %s371
      %377 = dma.hbm_to_vmem [thread:$0]  %s47, 32, %s372, [#allocation40], 16, 16, 1
    $region97: #{heart_sound_forward.1} parent=1 // pred_fallthru
      _
    // Predicated region
    $region98: #{heart_sound_forward.1} parent=1 // pred_check
      _
    $region99: #{heart_sound_forward.1} parent=1 // pred_check_branch
      %379 = sbr.rel (0) target = $region101
    $region100: #{heart_sound_forward.1} parent=1 // pred_region
      %s381 = ssub.s32 32, 32
      %382 = vsyncadd [#allocation40], %s381
      %s383 = sshll.u32 [#allocation41], 4
      %s384 = int_to_ptr.vmem [resolvable:$true] %s383
      %389 = dma.hbm_to_vmem [thread:$0]  %s49, 32, %s384, [#allocation40], 16, 16, 1
    $region101: #{heart_sound_forward.1} parent=1 // pred_fallthru
      _
    // Predicated region
    $region102: #{heart_sound_forward.1} parent=1 // pred_check
      _
    $region103: #{heart_sound_forward.1} parent=1 // pred_check_branch
      %391 = sbr.rel (0) target = $region105
    $region104: #{heart_sound_forward.1} parent=1 // pred_region
      %s393 = ssub.s32 2048, 2048
      %394 = vsyncadd [#allocation43], %s393
      %s395 = sshll.u32 [#allocation42], 4
      %s396 = int_to_ptr.vmem [resolvable:$true] %s395
      %401 = dma.hbm_to_vmem [thread:$0]  %s51, 2048, %s396, [#allocation43], 128, 128, 8
    $region105: #{heart_sound_forward.1} parent=1 // pred_fallthru
      _
    // Predicated region
    $region106: #{heart_sound_forward.1} parent=1 // pred_check
      _
    $region107: #{heart_sound_forward.1} parent=1 // pred_check_branch
      %403 = sbr.rel (0) target = $region109
    $region108: #{heart_sound_forward.1} parent=1 // pred_region
      %s405 = ssub.s32 32, 32
      %406 = vsyncadd [#allocation43], %s405
      %s407 = sshll.u32 [#allocation44], 4
      %s408 = int_to_ptr.vmem [resolvable:$true] %s407
      %413 = dma.hbm_to_vmem [thread:$0]  %s53, 32, %s408, [#allocation43], 16, 16, 1
    $region109: #{heart_sound_forward.1} parent=1 // pred_fallthru
      _
    // Predicated region
    $region110: #{heart_sound_forward.1} parent=1 // pred_check
      _
    $region111: #{heart_sound_forward.1} parent=1 // pred_check_branch
      %415 = sbr.rel (0) target = $region113
    $region112: #{heart_sound_forward.1} parent=1 // pred_region
      %s417 = ssub.s32 4096, 4096
      %418 = vsyncadd [#allocation46], %s417
      %s419 = sshll.u32 [#allocation45], 4
      %s420 = int_to_ptr.vmem [resolvable:$true] %s419
      %425 = dma.hbm_to_vmem [thread:$0]  %s55, 4096, %s420, [#allocation46], 128, 128, 8
    $region113: #{heart_sound_forward.1} parent=1 // pred_fallthru
      _
    // Predicated region
    $region114: #{heart_sound_forward.1} parent=1 // pred_check
      _
    $region115: #{heart_sound_forward.1} parent=1 // pred_check_branch
      %427 = sbr.rel (0) target = $region117
    $region116: #{heart_sound_forward.1} parent=1 // pred_region
      %s429 = ssub.s32 32, 32
      %430 = vsyncadd [#allocation46], %s429
      %s431 = sshll.u32 [#allocation47], 4
      %s432 = int_to_ptr.vmem [resolvable:$true] %s431
      %437 = dma.hbm_to_vmem [thread:$0]  %s57, 32, %s432, [#allocation46], 16, 16, 1
    $region117: #{heart_sound_forward.1} parent=1 // pred_fallthru
      _
    // Predicated region
    $region118: #{heart_sound_forward.1} parent=1 // pred_check
      _
    $region119: #{heart_sound_forward.1} parent=1 // pred_check_branch
      %439 = sbr.rel (0) target = $region121
    $region120: #{heart_sound_forward.1} parent=1 // pred_region
      %s441 = ssub.s32 32, 32
      %442 = vsyncadd [#allocation49], %s441
      %s443 = sshll.u32 [#allocation48], 4
      %s444 = int_to_ptr.vmem [resolvable:$true] %s443
      %449 = dma.hbm_to_vmem [thread:$0]  %s59, 32, %s444, [#allocation49], 16, 16, 1
    $region121: #{heart_sound_forward.1} parent=1 // pred_fallthru
      _
    // Predicated region
    $region122: #{heart_sound_forward.1} parent=1 // pred_check
      _
    $region123: #{heart_sound_forward.1} parent=1 // pred_check_branch
      %451 = sbr.rel (0) target = $region125
    $region124: #{heart_sound_forward.1} parent=1 // pred_region
      %s453 = ssub.s32 32, 32
      %454 = vsyncadd [#allocation49], %s453
      %s455 = sshll.u32 [#allocation50], 4
      %s456 = int_to_ptr.vmem [resolvable:$true] %s455
      %461 = dma.hbm_to_vmem [thread:$0]  %s61, 32, %s456, [#allocation49], 16, 16, 1
    $region125: #{heart_sound_forward.1} parent=1 // pred_fallthru
      _
    // Predicated region
    $region126: #{heart_sound_forward.1} parent=1 // pred_check
      _
    $region127: #{heart_sound_forward.1} parent=1 // pred_check_branch
      %463 = sbr.rel (0) target = $region129
    $region128: #{heart_sound_forward.1} parent=1 // pred_region
      %s465 = ssub.s32 1024, 1024
      %466 = vsyncadd [#allocation52], %s465
      %s467 = sshll.u32 [#allocation51], 4
      %s468 = int_to_ptr.vmem [resolvable:$true] %s467
      %473 = dma.hbm_to_vmem [thread:$0]  %s63, 1024, %s468, [#allocation52], 128, 128, 8
    $region129: #{heart_sound_forward.1} parent=1 // pred_fallthru
      _
    // Predicated region
    $region130: #{heart_sound_forward.1} parent=1 // pred_check
      _
    $region131: #{heart_sound_forward.1} parent=1 // pred_check_branch
      %475 = sbr.rel (0) target = $region133
    $region132: #{heart_sound_forward.1} parent=1 // pred_region
      %s477 = ssub.s32 16, 16
      %478 = vsyncadd [#allocation52], %s477
      %s480 = sshll.u32 [#allocation53], 4
      %s481 = int_to_ptr.vmem [resolvable:$true] %s480
      %483 = dma.hbm_to_vmem [thread:$0]  %s65, 16, %s481, [#allocation52]
    $region133: #{heart_sound_forward.1} parent=1 // pred_fallthru
      _
    // Predicated region
    $region134: #{heart_sound_forward.1} parent=1 // pred_check
      _
    $region135: #{heart_sound_forward.1} parent=1 // pred_check_branch
      %485 = sbr.rel (0) target = $region137
    $region136: #{heart_sound_forward.1} parent=1 // pred_region
      %486 = dma.done [#allocation4], 512
    $region137: #{heart_sound_forward.1} parent=1 // pred_fallthru
      _
    // Predicated region
    $region138: #{heart_sound_forward.1} parent=1 // pred_check
      _
    $region139: #{heart_sound_forward.1} parent=1 // pred_check_branch
      %488 = sbr.rel (0) target = $region141
    $region140: #{heart_sound_forward.1} parent=1 // pred_region
      %489 = dma.done [#allocation7], 32
    $region141: #{heart_sound_forward.1} parent=1 // pred_fallthru
      _
    // Predicated region
    $region142: #{heart_sound_forward.1} parent=1 // pred_check
      _
    $region143: #{heart_sound_forward.1} parent=1 // pred_check_branch
      %491 = sbr.rel (0) target = $region145
    $region144: #{heart_sound_forward.1} parent=1 // pred_region
      %492 = dma.done [#allocation7], 32
    $region145: #{heart_sound_forward.1} parent=1 // pred_fallthru
      _
    // Predicated region
    $region146: #{heart_sound_forward.1} parent=1 // pred_check
      _
    $region147: #{heart_sound_forward.1} parent=1 // pred_check_branch
      %494 = sbr.rel (0) target = $region149
    $region148: #{heart_sound_forward.1} parent=1 // pred_region
      %495 = dma.done [#allocation10], 2048
    $region149: #{heart_sound_forward.1} parent=1 // pred_fallthru
      _
    // Predicated region
    $region150: #{heart_sound_forward.1} parent=1 // pred_check
      _
    $region151: #{heart_sound_forward.1} parent=1 // pred_check_branch
      %497 = sbr.rel (0) target = $region153
    $region152: #{heart_sound_forward.1} parent=1 // pred_region
      %498 = dma.done [#allocation10], 32
    $region153: #{heart_sound_forward.1} parent=1 // pred_fallthru
      _
    // Predicated region
    $region154: #{heart_sound_forward.1} parent=1 // pred_check
      _
    $region155: #{heart_sound_forward.1} parent=1 // pred_check_branch
      %500 = sbr.rel (0) target = $region157
    $region156: #{heart_sound_forward.1} parent=1 // pred_region
      %501 = dma.done [#allocation13], 4096
    $region157: #{heart_sound_forward.1} parent=1 // pred_fallthru
      _
    // Predicated region
    $region158: #{heart_sound_forward.1} parent=1 // pred_check
      _
    $region159: #{heart_sound_forward.1} parent=1 // pred_check_branch
      %503 = sbr.rel (0) target = $region161
    $region160: #{heart_sound_forward.1} parent=1 // pred_region
      %504 = dma.done [#allocation13], 32
    $region161: #{heart_sound_forward.1} parent=1 // pred_fallthru
      _
    // Predicated region
    $region162: #{heart_sound_forward.1} parent=1 // pred_check
      _
    $region163: #{heart_sound_forward.1} parent=1 // pred_check_branch
      %506 = sbr.rel (0) target = $region165
    $region164: #{heart_sound_forward.1} parent=1 // pred_region
      %507 = dma.done [#allocation16], 32
    $region165: #{heart_sound_forward.1} parent=1 // pred_fallthru
      _
    // Predicated region
    $region166: #{heart_sound_forward.1} parent=1 // pred_check
      _
    $region167: #{heart_sound_forward.1} parent=1 // pred_check_branch
      %509 = sbr.rel (0) target = $region169
    $region168: #{heart_sound_forward.1} parent=1 // pred_region
      %510 = dma.done [#allocation16], 32
    $region169: #{heart_sound_forward.1} parent=1 // pred_fallthru
      _
    // Predicated region
    $region170: #{heart_sound_forward.1} parent=1 // pred_check
      _
    $region171: #{heart_sound_forward.1} parent=1 // pred_check_branch
      %512 = sbr.rel (0) target = $region173
    $region172: #{heart_sound_forward.1} parent=1 // pred_region
      %513 = dma.done [#allocation19], 4096
    $region173: #{heart_sound_forward.1} parent=1 // pred_fallthru
      _
    // Predicated region
    $region174: #{heart_sound_forward.1} parent=1 // pred_check
      _
    $region175: #{heart_sound_forward.1} parent=1 // pred_check_branch
      %515 = sbr.rel (0) target = $region177
    $region176: #{heart_sound_forward.1} parent=1 // pred_region
      %516 = dma.done [#allocation19], 64
    $region177: #{heart_sound_forward.1} parent=1 // pred_fallthru
      _
    // Predicated region
    $region178: #{heart_sound_forward.1} parent=1 // pred_check
      _
    $region179: #{heart_sound_forward.1} parent=1 // pred_check_branch
      %518 = sbr.rel (0) target = $region181
    $region180: #{heart_sound_forward.1} parent=1 // pred_region
      %519 = dma.done [#allocation22], 2048
    $region181: #{heart_sound_forward.1} parent=1 // pred_fallthru
      _
    // Predicated region
    $region182: #{heart_sound_forward.1} parent=1 // pred_check
      _
    $region183: #{heart_sound_forward.1} parent=1 // pred_check_branch
      %521 = sbr.rel (0) target = $region185
    $region184: #{heart_sound_forward.1} parent=1 // pred_region
      %522 = dma.done [#allocation22], 32
    $region185: #{heart_sound_forward.1} parent=1 // pred_fallthru
      _
    // Predicated region
    $region186: #{heart_sound_forward.1} parent=1 // pred_check
      _
    $region187: #{heart_sound_forward.1} parent=1 // pred_check_branch
      %524 = sbr.rel (0) target = $region189
    $region188: #{heart_sound_forward.1} parent=1 // pred_region
      %525 = dma.done [#allocation25], 32
    $region189: #{heart_sound_forward.1} parent=1 // pred_fallthru
      _
    // Predicated region
    $region190: #{heart_sound_forward.1} parent=1 // pred_check
      _
    $region191: #{heart_sound_forward.1} parent=1 // pred_check_branch
      %527 = sbr.rel (0) target = $region193
    $region192: #{heart_sound_forward.1} parent=1 // pred_region
      %528 = dma.done [#allocation25], 32
    $region193: #{heart_sound_forward.1} parent=1 // pred_fallthru
      _
    // Predicated region
    $region194: #{heart_sound_forward.1} parent=1 // pred_check
      _
    $region195: #{heart_sound_forward.1} parent=1 // pred_check_branch
      %530 = sbr.rel (0) target = $region197
    $region196: #{heart_sound_forward.1} parent=1 // pred_region
      %531 = dma.done [#allocation28], 2048
    $region197: #{heart_sound_forward.1} parent=1 // pred_fallthru
      _
    // Predicated region
    $region198: #{heart_sound_forward.1} parent=1 // pred_check
      _
    $region199: #{heart_sound_forward.1} parent=1 // pred_check_branch
      %533 = sbr.rel (0) target = $region201
    $region200: #{heart_sound_forward.1} parent=1 // pred_region
      %534 = dma.done [#allocation28], 32
    $region201: #{heart_sound_forward.1} parent=1 // pred_fallthru
      _
    // Predicated region
    $region202: #{heart_sound_forward.1} parent=1 // pred_check
      _
    $region203: #{heart_sound_forward.1} parent=1 // pred_check_branch
      %536 = sbr.rel (0) target = $region205
    $region204: #{heart_sound_forward.1} parent=1 // pred_region
      %537 = dma.done [#allocation31], 1024
    $region205: #{heart_sound_forward.1} parent=1 // pred_fallthru
      _
    // Predicated region
    $region206: #{heart_sound_forward.1} parent=1 // pred_check
      _
    $region207: #{heart_sound_forward.1} parent=1 // pred_check_branch
      %539 = sbr.rel (0) target = $region209
    $region208: #{heart_sound_forward.1} parent=1 // pred_region
      %540 = dma.done [#allocation31], 32
    $region209: #{heart_sound_forward.1} parent=1 // pred_fallthru
      _
    // Predicated region
    $region210: #{heart_sound_forward.1} parent=1 // pred_check
      _
    $region211: #{heart_sound_forward.1} parent=1 // pred_check_branch
      %542 = sbr.rel (0) target = $region213
    $region212: #{heart_sound_forward.1} parent=1 // pred_region
      %543 = dma.done [#allocation34], 32
    $region213: #{heart_sound_forward.1} parent=1 // pred_fallthru
      _
    // Predicated region
    $region214: #{heart_sound_forward.1} parent=1 // pred_check
      _
    $region215: #{heart_sound_forward.1} parent=1 // pred_check_branch
      %545 = sbr.rel (0) target = $region217
    $region216: #{heart_sound_forward.1} parent=1 // pred_region
      %546 = dma.done [#allocation34], 32
    $region217: #{heart_sound_forward.1} parent=1 // pred_fallthru
      _
    // Predicated region
    $region218: #{heart_sound_forward.1} parent=1 // pred_check
      _
    $region219: #{heart_sound_forward.1} parent=1 // pred_check_branch
      %548 = sbr.rel (0) target = $region221
    $region220: #{heart_sound_forward.1} parent=1 // pred_region
      %549 = dma.done [#allocation37], 2048
    $region221: #{heart_sound_forward.1} parent=1 // pred_fallthru
      _
    // Predicated region
    $region222: #{heart_sound_forward.1} parent=1 // pred_check
      _
    $region223: #{heart_sound_forward.1} parent=1 // pred_check_branch
      %551 = sbr.rel (0) target = $region225
    $region224: #{heart_sound_forward.1} parent=1 // pred_region
      %552 = dma.done [#allocation37], 32
    $region225: #{heart_sound_forward.1} parent=1 // pred_fallthru
      _
    // Predicated region
    $region226: #{heart_sound_forward.1} parent=1 // pred_check
      _
    $region227: #{heart_sound_forward.1} parent=1 // pred_check_branch
      %554 = sbr.rel (0) target = $region229
    $region228: #{heart_sound_forward.1} parent=1 // pred_region
      %555 = dma.done [#allocation40], 32
    $region229: #{heart_sound_forward.1} parent=1 // pred_fallthru
      _
    // Predicated region
    $region230: #{heart_sound_forward.1} parent=1 // pred_check
      _
    $region231: #{heart_sound_forward.1} parent=1 // pred_check_branch
      %557 = sbr.rel (0) target = $region233
    $region232: #{heart_sound_forward.1} parent=1 // pred_region
      %558 = dma.done [#allocation40], 32
    $region233: #{heart_sound_forward.1} parent=1 // pred_fallthru
      _
    // Predicated region
    $region234: #{heart_sound_forward.1} parent=1 // pred_check
      _
    $region235: #{heart_sound_forward.1} parent=1 // pred_check_branch
      %560 = sbr.rel (0) target = $region237
    $region236: #{heart_sound_forward.1} parent=1 // pred_region
      %561 = dma.done [#allocation43], 2048
    $region237: #{heart_sound_forward.1} parent=1 // pred_fallthru
      _
    // Predicated region
    $region238: #{heart_sound_forward.1} parent=1 // pred_check
      _
    $region239: #{heart_sound_forward.1} parent=1 // pred_check_branch
      %563 = sbr.rel (0) target = $region241
    $region240: #{heart_sound_forward.1} parent=1 // pred_region
      %564 = dma.done [#allocation43], 32
    $region241: #{heart_sound_forward.1} parent=1 // pred_fallthru
      _
    // Predicated region
    $region242: #{heart_sound_forward.1} parent=1 // pred_check
      _
    $region243: #{heart_sound_forward.1} parent=1 // pred_check_branch
      %566 = sbr.rel (0) target = $region245
    $region244: #{heart_sound_forward.1} parent=1 // pred_region
      %567 = dma.done [#allocation46], 4096
    $region245: #{heart_sound_forward.1} parent=1 // pred_fallthru
      _
    // Predicated region
    $region246: #{heart_sound_forward.1} parent=1 // pred_check
      _
    $region247: #{heart_sound_forward.1} parent=1 // pred_check_branch
      %569 = sbr.rel (0) target = $region249
    $region248: #{heart_sound_forward.1} parent=1 // pred_region
      %570 = dma.done [#allocation46], 32
    $region249: #{heart_sound_forward.1} parent=1 // pred_fallthru
      _
    // Predicated region
    $region250: #{heart_sound_forward.1} parent=1 // pred_check
      _
    $region251: #{heart_sound_forward.1} parent=1 // pred_check_branch
      %572 = sbr.rel (0) target = $region253
    $region252: #{heart_sound_forward.1} parent=1 // pred_region
      %573 = dma.done [#allocation49], 32
    $region253: #{heart_sound_forward.1} parent=1 // pred_fallthru
      _
    // Predicated region
    $region254: #{heart_sound_forward.1} parent=1 // pred_check
      _
    $region255: #{heart_sound_forward.1} parent=1 // pred_check_branch
      %575 = sbr.rel (0) target = $region257
    $region256: #{heart_sound_forward.1} parent=1 // pred_region
      %576 = dma.done [#allocation49], 32
    $region257: #{heart_sound_forward.1} parent=1 // pred_fallthru
      _
    // Predicated region
    $region258: #{heart_sound_forward.1} parent=1 // pred_check
      _
    $region259: #{heart_sound_forward.1} parent=1 // pred_check_branch
      %578 = sbr.rel (0) target = $region261
    $region260: #{heart_sound_forward.1} parent=1 // pred_region
      %579 = dma.done [#allocation52], 1024
    $region261: #{heart_sound_forward.1} parent=1 // pred_fallthru
      _
    // Predicated region
    $region262: #{heart_sound_forward.1} parent=1 // pred_check
      _
    $region263: #{heart_sound_forward.1} parent=1 // pred_check_branch
      %581 = sbr.rel (0) target = $region265
    $region264: #{heart_sound_forward.1} parent=1 // pred_region
      %582 = dma.done [#allocation52], 16
    $region265: #{heart_sound_forward.1} parent=1 // pred_fallthru
      _
    %vm583 = vcmask 523264
    %584 = vst.msk [vmem:[#allocation2] sm:$0xff] %vm583, 0.0
    %585 = vst.msk [vmem:[#allocation2 + $0x8] sm:$0xff] %vm583, 0.0
    %586 = vst.msk [vmem:[#allocation2 + $0x10] sm:$0xff] %vm583, 0.0
    %587 = vst.msk [vmem:[#allocation2 + $0x18] sm:$0xff] %vm583, 0.0
    %588 = vst.msk [vmem:[#allocation2 + $0x20] sm:$0xff] %vm583, 0.0
    %vm589 = vcmask 521216
    %590 = vst.msk [vmem:[#allocation2 + $0x28] sm:$0x3f] %vm589, 0.0
    %591 = vst.msk [vmem:[#allocation2 + $0x30] sm:$0xff] %vm583, 0.0
    %592 = vst.msk [vmem:[#allocation2 + $0x38] sm:$0xff] %vm583, 0.0
    %593 = vst.msk [vmem:[#allocation2 + $0x40] sm:$0xff] %vm583, 0.0
    %594 = vst.msk [vmem:[#allocation2 + $0x48] sm:$0xff] %vm583, 0.0
    %595 = vst.msk [vmem:[#allocation2 + $0x50] sm:$0xff] %vm583, 0.0
    %596 = vst.msk [vmem:[#allocation2 + $0x58] sm:$0x3f] %vm589, 0.0
    %v597 = vld [vmem:[#allocation3] sm:$0xff]
    %v598 = vld [vmem:[#allocation3 + $0x8] sm:$0xff]
    %v599 = vld [vmem:[#allocation3 + $0x10] sm:$0xff]
    %v600 = vld [vmem:[#allocation3 + $0x18] sm:$0xff]
    %v601 = vld [vmem:[#allocation6] sm:$0x1]
    %v602 = vld [vmem:[#allocation8] sm:$0x1]
    %v603 = vld [vmem:[#allocation9] sm:$0xff]
    %v604 = vld [vmem:[#allocation9 + $0x8] sm:$0xff]
    %v605 = vld [vmem:[#allocation9 + $0x10] sm:$0xff]
    %v606 = vld [vmem:[#allocation9 + $0x18] sm:$0xff]
    %v607 = vld [vmem:[#allocation9 + $0x20] sm:$0xff]
    %v608 = vld [vmem:[#allocation9 + $0x28] sm:$0xff]
    %v609 = vld [vmem:[#allocation9 + $0x30] sm:$0xff]
    %v610 = vld [vmem:[#allocation9 + $0x38] sm:$0xff]
    %v611 = vld [vmem:[#allocation11] sm:$0x1]
    %v612 = vld [vmem:[#allocation12] sm:$0xff]
    %v613 = vld [vmem:[#allocation12 + $0x8] sm:$0xff]
    %v614 = vld [vmem:[#allocation12 + $0x10] sm:$0xff]
    %v615 = vld [vmem:[#allocation12 + $0x18] sm:$0xff]
    %v616 = vld [vmem:[#allocation12 + $0x20] sm:$0xff]
    %v617 = vld [vmem:[#allocation12 + $0x28] sm:$0xff]
    %v618 = vld [vmem:[#allocation12 + $0x30] sm:$0xff]
    %v619 = vld [vmem:[#allocation12 + $0x38] sm:$0xff]
    %v620 = vld [vmem:[#allocation12 + $0x40] sm:$0xff]
    %v621 = vld [vmem:[#allocation12 + $0x48] sm:$0xff]
    %v622 = vld [vmem:[#allocation12 + $0x50] sm:$0xff]
    %v623 = vld [vmem:[#allocation12 + $0x58] sm:$0xff]
    %v624 = vld [vmem:[#allocation12 + $0x60] sm:$0xff]
    %v625 = vld [vmem:[#allocation12 + $0x68] sm:$0xff]
    %v626 = vld [vmem:[#allocation12 + $0x70] sm:$0xff]
    %v627 = vld [vmem:[#allocation12 + $0x78] sm:$0xff]
    %v628 = vld [vmem:[#allocation14] sm:$0x1]
    %v629 = vsel %vm583, %v597, 0.0
    %630 = vadd.xlane.f32.xlu0 %v629
    %v631 = vpop.xlane.xlu0 %630
    %v632 = vsel %vm583, %v598, 0.0
    %633 = vadd.xlane.f32.xlu0 %v632
    %v634 = vpop.xlane.xlu0 %633
    %v635 = vsel %vm583, %v599, 0.0
    %636 = vadd.xlane.f32.xlu0 %v635
    %v637 = vpop.xlane.xlu0 %636
    %v638 = vsel %vm583, %v600, 0.0
    %639 = vadd.xlane.f32.xlu0 %v638
    %v640 = vpop.xlane.xlu0 %639
    %v641 = vrcp.pop 64.0
    %v642 = vmul.f32 %v631, %v641
    %v643 = vmul.f32 %v634, %v641
    %v644 = vmul.f32 %v637, %v641
    %v645 = vmul.f32 %v640, %v641
    %v646 = vsub.f32 %v597, %v642
    %v647 = vsub.f32 %v598, %v643
    %v648 = vsub.f32 %v599, %v644
    %v649 = vsub.f32 %v600, %v645
    %v650 = vmul.f32 %v646, %v646
    %v651 = vmul.f32 %v647, %v647
    %v652 = vmul.f32 %v648, %v648
    %v653 = vmul.f32 %v649, %v649
    %v654 = vsel %vm583, %v650, 0.0
    %655 = vadd.xlane.f32.xlu0 %v654
    %v656 = vpop.xlane.xlu0 %655
    %v657 = vsel %vm583, %v651, 0.0
    %658 = vadd.xlane.f32.xlu0 %v657
    %v659 = vpop.xlane.xlu0 %658
    %v660 = vsel %vm583, %v652, 0.0
    %661 = vadd.xlane.f32.xlu0 %v660
    %v662 = vpop.xlane.xlu0 %661
    %v663 = vsel %vm583, %v653, 0.0
    %664 = vadd.xlane.f32.xlu0 %v663
    %v665 = vpop.xlane.xlu0 %664
    %v666 = vmul.f32 %v656, %v641
    %v667 = vmul.f32 %v659, %v641
    %v668 = vmul.f32 %v662, %v641
    %v669 = vmul.f32 %v665, %v641
    %v670 = vadd.f32 %v666, 1e-05
    %v671 = vadd.f32 %v667, 1e-05
    %v672 = vadd.f32 %v668, 1e-05
    %v673 = vadd.f32 %v669, 1e-05
    %v674 = vrsqrt.pop %v670
    %v675 = vrsqrt.pop %v671
    %v676 = vrsqrt.pop %v672
    %v677 = vrsqrt.pop %v673
    %v678 = vmul.f32 %v646, %v674
    %v679 = vmul.f32 %v647, %v675
    %v680 = vmul.f32 %v648, %v676
    %v681 = vmul.f32 %v649, %v677
    %v683 = vlaneseq
    %v684 = vshrl.u32 %v683, 7
    %v685 = vsub.s32 0, %v684
    %v686 = vrot.slane %v601, %v685
    %v688 = vmul.f32 %v678, %v686
    %v689 = vmul.f32 %v679, %v686
    %v690 = vmul.f32 %v680, %v686
    %v691 = vmul.f32 %v681, %v686
    %v693 = vlaneseq
    %v694 = vshrl.u32 %v693, 7
    %v695 = vsub.s32 0, %v694
    %v696 = vrot.slane %v602, %v695
    %v698 = vadd.f32 %v688, %v696
    %v699 = vadd.f32 %v689, %v696
    %v700 = vadd.f32 %v690, %v696
    %v701 = vadd.f32 %v691, %v696
    %v703 = vlaneseq
    %v704 = vshrl.u32 %v703, 7
    %v705 = vsub.s32 0, %v704
    %v706 = vrot.slane %v611, %v705
    %v709 = vsel %vm583, %v698, 0
    %v712 = vsel %vm583, %v699, 0
    %v715 = vsel %vm583, %v700, 0
    %v718 = vsel %vm583, %v701, 0
    %720 = vmatprep.subr.mxu0 0.0
    %721 = vmatpush1.msra.mxu0 %v603
    %722 = vmatprep.subr.mxu0 0.0
    %723 = vmatpush1.msra.mxu0 %v604
    %724 = vmatprep.subr.mxu0 0.0
    %725 = vmatpush1.msra.mxu0 %v605
    %726 = vmatprep.subr.mxu0 0.0
    %727 = vmatpush1.msra.mxu0 %v606
    %728 = vmatprep.subr.mxu0 0.0
    %729 = vmatpush1.msra.mxu0 %v607
    %730 = vmatprep.subr.mxu0 0.0
    %731 = vmatpush1.msra.mxu0 %v608
    %732 = vmatprep.subr.mxu0 0.0
    %733 = vmatpush1.msra.mxu0 %v609
    %734 = vmatprep.subr.mxu0 0.0
    %735 = vmatpush1.msra.mxu0 %v610
    %736 = vmatprep.subr.mxu0 0.0
    %737 = vmatpush1.msra.mxu0 0.0
    %738 = vmatprep.subr.mxu0 0.0
    %739 = vmatpush1.msra.mxu0 0.0
    %740 = vmatprep.subr.mxu0 0.0
    %741 = vmatpush1.msra.mxu0 0.0
    %742 = vmatprep.subr.mxu0 0.0
    %743 = vmatpush1.msra.mxu0 0.0
    %744 = vmatprep.subr.mxu0 0.0
    %745 = vmatpush1.msra.mxu0 0.0
    %746 = vmatprep.subr.mxu0 0.0
    %747 = vmatpush1.msra.mxu0 0.0
    %748 = vmatprep.subr.mxu0 0.0
    %749 = vmatpush1.msra.mxu0 0.0
    %750 = vmatprep.subr.mxu0 0.0
    %751 = vmatpush1.msra.mxu0 0.0
    %752 = vmatprep.subr.mxu0 0.0
    %753 = vmatpush1.msra.mxu0 0.0
    %754 = vmatprep.subr.mxu0 0.0
    %755 = vmatpush1.msra.mxu0 0.0
    %756 = vmatprep.subr.mxu0 0.0
    %757 = vmatpush1.msra.mxu0 0.0
    %758 = vmatprep.subr.mxu0 0.0
    %759 = vmatpush1.msra.mxu0 0.0
    %760 = vmatprep.subr.mxu0 0.0
    %761 = vmatpush1.msra.mxu0 0.0
    %762 = vmatprep.subr.mxu0 0.0
    %763 = vmatpush1.msra.mxu0 0.0
    %764 = vmatprep.subr.mxu0 0.0
    %765 = vmatpush1.msra.mxu0 0.0
    %766 = vmatprep.subr.mxu0 0.0
    %767 = vmatpush1.msra.mxu0 0.0
    %768 = vmatprep.subr.mxu0 0.0
    %769 = vmatpush1.msra.mxu0 0.0
    %770 = vmatprep.subr.mxu0 0.0
    %771 = vmatpush1.msra.mxu0 0.0
    %772 = vmatprep.subr.mxu0 0.0
    %773 = vmatpush1.msra.mxu0 0.0
    %774 = vmatprep.subr.mxu0 0.0
    %775 = vmatpush1.msra.mxu0 0.0
    %776 = vmatprep.subr.mxu0 0.0
    %777 = vmatpush1.msra.mxu0 0.0
    %778 = vmatprep.subr.mxu0 0.0
    %779 = vmatpush1.msra.mxu0 0.0
    %780 = vmatprep.subr.mxu0 0.0
    %781 = vmatpush1.msra.mxu0 0.0
    %782 = vmatprep.subr.mxu0 0.0
    %783 = vmatpush1.msra.mxu0 0.0
    %784 = vmatprep.mubr.f32.mxu0 0.0
    %785 = vmatmul.mubr.f32.gmra.mrb[0].mxu0 %v709
    %v786 = vpop.f32.mrb[0].mxu0
    %v787 = vadd.f32 %v706, %v786
    %v788 = vpop.f32.mrb[0].mxu0
    %789 = vmatprep.mubr.f32.mxu0 0.0
    %790 = vmatmul.mubr.f32.gmra.mrb[0].mxu0 %v712
    %v791 = vpop.f32.mrb[0].mxu0
    %v792 = vadd.f32 %v706, %v791
    %v793 = vpop.f32.mrb[0].mxu0
    %794 = vmatprep.mubr.f32.mxu0 0.0
    %795 = vmatmul.mubr.f32.gmra.mrb[0].mxu0 %v715
    %v796 = vpop.f32.mrb[0].mxu0
    %v797 = vadd.f32 %v706, %v796
    %v798 = vpop.f32.mrb[0].mxu0
    %799 = vmatprep.mubr.f32.mxu0 0.0
    %800 = vmatmul.mubr.f32.gmra.mrb[0].mxu0 %v718
    %v801 = vpop.f32.mrb[0].mxu0
    %v802 = vadd.f32 %v706, %v801
    %v803 = vpop.f32.mrb[0].mxu0
    %804 = vdwg.mxu0
    %v805 = vxor.u32 %v787, 2147483648
    %v806 = vxor.u32 %v792, 2147483648
    %v807 = vxor.u32 %v797, 2147483648
    %v808 = vxor.u32 %v802, 2147483648
    %v809 = vmul.f32 %v805, 1.442695
    %v810 = vpow.pop %v809
    %v811 = vmul.f32 %v806, 1.442695
    %v812 = vpow.pop %v811
    %v813 = vmul.f32 %v807, 1.442695
    %v814 = vpow.pop %v813
    %v815 = vmul.f32 %v808, 1.442695
    %v816 = vpow.pop %v815
    %v817 = vadd.f32 %v810, 1.0
    %v818 = vadd.f32 %v812, 1.0
    %v819 = vadd.f32 %v814, 1.0
    %v820 = vadd.f32 %v816, 1.0
    %v821 = vrcp.pop %v817
    %v822 = vmul.f32 1.0, %v821
    %v823 = vrcp.pop %v818
    %v824 = vmul.f32 1.0, %v823
    %v825 = vrcp.pop %v819
    %v826 = vmul.f32 1.0, %v825
    %v827 = vrcp.pop %v820
    %v828 = vmul.f32 1.0, %v827
    %v829 = vmul.f32 %v787, %v822
    %v830 = vmul.f32 %v792, %v824
    %v831 = vmul.f32 %v797, %v826
    %v832 = vmul.f32 %v802, %v828
    %v834 = vlaneseq
    %v835 = vshrl.u32 %v834, 7
    %v836 = vsub.s32 0, %v835
    %v837 = vrot.slane %v628, %v836
    %839 = vmatprep.subr.mxu0 0.0
    %840 = vmatpush1.msra.mxu0 %v612
    %841 = vmatprep.subr.mxu0 0.0
    %842 = vmatpush1.msra.mxu0 %v613
    %843 = vmatprep.subr.mxu0 0.0
    %844 = vmatpush1.msra.mxu0 %v614
    %845 = vmatprep.subr.mxu0 0.0
    %846 = vmatpush1.msra.mxu0 %v615
    %847 = vmatprep.subr.mxu0 0.0
    %848 = vmatpush1.msra.mxu0 %v616
    %849 = vmatprep.subr.mxu0 0.0
    %850 = vmatpush1.msra.mxu0 %v617
    %851 = vmatprep.subr.mxu0 0.0
    %852 = vmatpush1.msra.mxu0 %v618
    %853 = vmatprep.subr.mxu0 0.0
    %854 = vmatpush1.msra.mxu0 %v619
    %855 = vmatprep.subr.mxu0 0.0
    %856 = vmatpush1.msra.mxu0 %v620
    %857 = vmatprep.subr.mxu0 0.0
    %858 = vmatpush1.msra.mxu0 %v621
    %859 = vmatprep.subr.mxu0 0.0
    %860 = vmatpush1.msra.mxu0 %v622
    %861 = vmatprep.subr.mxu0 0.0
    %862 = vmatpush1.msra.mxu0 %v623
    %863 = vmatprep.subr.mxu0 0.0
    %864 = vmatpush1.msra.mxu0 %v624
    %865 = vmatprep.subr.mxu0 0.0
    %866 = vmatpush1.msra.mxu0 %v625
    %867 = vmatprep.subr.mxu0 0.0
    %868 = vmatpush1.msra.mxu0 %v626
    %869 = vmatprep.subr.mxu0 0.0
    %870 = vmatpush1.msra.mxu0 %v627
    %871 = vmatprep.subr.mxu0 0.0
    %872 = vmatpush1.msra.mxu0 0.0
    %873 = vmatprep.subr.mxu0 0.0
    %874 = vmatpush1.msra.mxu0 0.0
    %875 = vmatprep.subr.mxu0 0.0
    %876 = vmatpush1.msra.mxu0 0.0
    %877 = vmatprep.subr.mxu0 0.0
    %878 = vmatpush1.msra.mxu0 0.0
    %879 = vmatprep.subr.mxu0 0.0
    %880 = vmatpush1.msra.mxu0 0.0
    %881 = vmatprep.subr.mxu0 0.0
    %882 = vmatpush1.msra.mxu0 0.0
    %883 = vmatprep.subr.mxu0 0.0
    %884 = vmatpush1.msra.mxu0 0.0
    %885 = vmatprep.subr.mxu0 0.0
    %886 = vmatpush1.msra.mxu0 0.0
    %887 = vmatprep.subr.mxu0 0.0
    %888 = vmatpush1.msra.mxu0 0.0
    %889 = vmatprep.subr.mxu0 0.0
    %890 = vmatpush1.msra.mxu0 0.0
    %891 = vmatprep.subr.mxu0 0.0
    %892 = vmatpush1.msra.mxu0 0.0
    %893 = vmatprep.subr.mxu0 0.0
    %894 = vmatpush1.msra.mxu0 0.0
    %895 = vmatprep.subr.mxu0 0.0
    %896 = vmatpush1.msra.mxu0 0.0
    %897 = vmatprep.subr.mxu0 0.0
    %898 = vmatpush1.msra.mxu0 0.0
    %899 = vmatprep.subr.mxu0 0.0
    %900 = vmatpush1.msra.mxu0 0.0
    %901 = vmatprep.subr.mxu0 0.0
    %902 = vmatpush1.msra.mxu0 0.0
    %903 = vmatprep.mubr.f32.mxu0 0.0
    %904 = vmatmul.mubr.f32.gmra.mrb[0].mxu0 %v829
    %v905 = vpop.f32.mrb[0].mxu0
    %v906 = vadd.f32 %v837, %v905
    %v907 = vpop.f32.mrb[0].mxu0
    %908 = vmatprep.mubr.f32.mxu0 0.0
    %909 = vmatmul.mubr.f32.gmra.mrb[0].mxu0 %v830
    %v910 = vpop.f32.mrb[0].mxu0
    %v911 = vadd.f32 %v837, %v910
    %v912 = vpop.f32.mrb[0].mxu0
    %913 = vmatprep.mubr.f32.mxu0 0.0
    %914 = vmatmul.mubr.f32.gmra.mrb[0].mxu0 %v831
    %v915 = vpop.f32.mrb[0].mxu0
    %v916 = vadd.f32 %v837, %v915
    %v917 = vpop.f32.mrb[0].mxu0
    %918 = vmatprep.mubr.f32.mxu0 0.0
    %919 = vmatmul.mubr.f32.gmra.mrb[0].mxu0 %v832
    %v920 = vpop.f32.mrb[0].mxu0
    %v921 = vadd.f32 %v837, %v920
    %v922 = vpop.f32.mrb[0].mxu0
    %923 = vdwg.mxu0
    %v924 = vmul.f32 %v906, 0.5
    %v925 = vmul.f32 %v911, 0.5
    %v926 = vmul.f32 %v916, 0.5
    %v927 = vmul.f32 %v921, 0.5
    %v928 = vadd.f32 %v597, %v924
    %v929 = vadd.f32 %v598, %v925
    %v930 = vadd.f32 %v599, %v926
    %v931 = vadd.f32 %v600, %v927
    %v932 = vld [vmem:[#allocation15] sm:$0x1]
    %v933 = vld [vmem:[#allocation17] sm:$0x1]
    %v934 = vld [vmem:[#allocation18] sm:$0xff]
    %v935 = vld [vmem:[#allocation18 + $0x8] sm:$0xff]
    %v936 = vld [vmem:[#allocation18 + $0x10] sm:$0xff]
    %v937 = vld [vmem:[#allocation18 + $0x18] sm:$0xff]
    %v938 = vld [vmem:[#allocation18 + $0x20] sm:$0xff]
    %v939 = vld [vmem:[#allocation18 + $0x28] sm:$0xff]
    %v940 = vld [vmem:[#allocation18 + $0x30] sm:$0xff]
    %v941 = vld [vmem:[#allocation18 + $0x38] sm:$0xff]
    %v942 = vld [vmem:[#allocation18 + $0x40] sm:$0xff]
    %v943 = vld [vmem:[#allocation18 + $0x48] sm:$0xff]
    %v944 = vld [vmem:[#allocation18 + $0x50] sm:$0xff]
    %v945 = vld [vmem:[#allocation18 + $0x58] sm:$0xff]
    %v946 = vld [vmem:[#allocation18 + $0x60] sm:$0xff]
    %v947 = vld [vmem:[#allocation18 + $0x68] sm:$0xff]
    %v948 = vld [vmem:[#allocation18 + $0x70] sm:$0xff]
    %v949 = vld [vmem:[#allocation18 + $0x78] sm:$0xff]
    %v950 = vld [vmem:[#allocation20] sm:$0x3]
    %v951 = vld [vmem:[#allocation21] sm:$0xff]
    %v952 = vld [vmem:[#allocation21 + $0x8] sm:$0xff]
    %v953 = vld [vmem:[#allocation21 + $0x10] sm:$0xff]
    %v954 = vld [vmem:[#allocation21 + $0x18] sm:$0xff]
    %v955 = vld [vmem:[#allocation21 + $0x20] sm:$0xff]
    %v956 = vld [vmem:[#allocation21 + $0x28] sm:$0xff]
    %v957 = vld [vmem:[#allocation21 + $0x30] sm:$0xff]
    %v958 = vld [vmem:[#allocation21 + $0x38] sm:$0xff]
    %v959 = vld [vmem:[#allocation23] sm:$0x1]
    %v960 = vsel %vm583, %v928, 0.0
    %961 = vadd.xlane.f32.xlu0 %v960
    %v962 = vpop.xlane.xlu0 %961
    %v963 = vsel %vm583, %v929, 0.0
    %964 = vadd.xlane.f32.xlu0 %v963
    %v965 = vpop.xlane.xlu0 %964
    %v966 = vsel %vm583, %v930, 0.0
    %967 = vadd.xlane.f32.xlu0 %v966
    %v968 = vpop.xlane.xlu0 %967
    %v969 = vsel %vm583, %v931, 0.0
    %970 = vadd.xlane.f32.xlu0 %v969
    %v971 = vpop.xlane.xlu0 %970
    %v972 = vmul.f32 %v962, %v641
    %v973 = vmul.f32 %v965, %v641
    %v974 = vmul.f32 %v968, %v641
    %v975 = vmul.f32 %v971, %v641
    %v976 = vsub.f32 %v928, %v972
    %v977 = vsub.f32 %v929, %v973
    %v978 = vsub.f32 %v930, %v974
    %v979 = vsub.f32 %v931, %v975
    %v980 = vmul.f32 %v976, %v976
    %v981 = vmul.f32 %v977, %v977
    %v982 = vmul.f32 %v978, %v978
    %v983 = vmul.f32 %v979, %v979
    %v984 = vsel %vm583, %v980, 0.0
    %985 = vadd.xlane.f32.xlu0 %v984
    %v986 = vpop.xlane.xlu0 %985
    %v987 = vsel %vm583, %v981, 0.0
    %988 = vadd.xlane.f32.xlu0 %v987
    %v989 = vpop.xlane.xlu0 %988
    %v990 = vsel %vm583, %v982, 0.0
    %991 = vadd.xlane.f32.xlu0 %v990
    %v992 = vpop.xlane.xlu0 %991
    %v993 = vsel %vm583, %v983, 0.0
    %994 = vadd.xlane.f32.xlu0 %v993
    %v995 = vpop.xlane.xlu0 %994
    %v996 = vmul.f32 %v986, %v641
    %v997 = vmul.f32 %v989, %v641
    %v998 = vmul.f32 %v992, %v641
    %v999 = vmul.f32 %v995, %v641
    %v1000 = vadd.f32 %v996, 1e-05
    %v1001 = vadd.f32 %v997, 1e-05
    %v1002 = vadd.f32 %v998, 1e-05
    %v1003 = vadd.f32 %v999, 1e-05
    %v1004 = vrsqrt.pop %v1000
    %v1005 = vrsqrt.pop %v1001
    %v1006 = vrsqrt.pop %v1002
    %v1007 = vrsqrt.pop %v1003
    %v1008 = vmul.f32 %v976, %v1004
    %v1009 = vmul.f32 %v977, %v1005
    %v1010 = vmul.f32 %v978, %v1006
    %v1011 = vmul.f32 %v979, %v1007
    %v1013 = vlaneseq
    %v1014 = vshrl.u32 %v1013, 7
    %v1015 = vsub.s32 0, %v1014
    %v1016 = vrot.slane %v932, %v1015
    %v1018 = vmul.f32 %v1008, %v1016
    %v1019 = vmul.f32 %v1009, %v1016
    %v1020 = vmul.f32 %v1010, %v1016
    %v1021 = vmul.f32 %v1011, %v1016
    %v1023 = vlaneseq
    %v1024 = vshrl.u32 %v1023, 7
    %v1025 = vsub.s32 0, %v1024
    %v1026 = vrot.slane %v933, %v1025
    %v1028 = vadd.f32 %v1018, %v1026
    %v1029 = vadd.f32 %v1019, %v1026
    %v1030 = vadd.f32 %v1020, %v1026
    %v1031 = vadd.f32 %v1021, %v1026
    %v1033 = vlaneseq
    %v1034 = vshrl.u32 %v1033, 7
    %v1035 = vsub.s32 0, %v1034
    %v1036 = vrot.slane %v950, %v1035
    %v1037 = vlaneseq
    %v1038 = vshrl.u32 %v1037, 7
    %v1039 = vsub.s32 1, %v1038
    %v1040 = vrot.slane %v950, %v1039
    %v1044 = vsel %vm583, %v1028, 0
    %v1047 = vsel %vm583, %v1029, 0
    %v1050 = vsel %vm583, %v1030, 0
    %v1053 = vsel %vm583, %v1031, 0
    %1055 = vmatprep.subr.mxu0 %v935
    %1056 = vmatpush1.msra.mxu0 %v934
    %1057 = vmatprep.subr.mxu0 %v937
    %1058 = vmatpush1.msra.mxu0 %v936
    %1059 = vmatprep.subr.mxu0 %v939
    %1060 = vmatpush1.msra.mxu0 %v938
    %1061 = vmatprep.subr.mxu0 %v941
    %1062 = vmatpush1.msra.mxu0 %v940
    %1063 = vmatprep.subr.mxu0 %v943
    %1064 = vmatpush1.msra.mxu0 %v942
    %1065 = vmatprep.subr.mxu0 %v945
    %1066 = vmatpush1.msra.mxu0 %v944
    %1067 = vmatprep.subr.mxu0 %v947
    %1068 = vmatpush1.msra.mxu0 %v946
    %1069 = vmatprep.subr.mxu0 %v949
    %1070 = vmatpush1.msra.mxu0 %v948
    %1071 = vmatprep.subr.mxu0 0.0
    %1072 = vmatpush1.msra.mxu0 0.0
    %1073 = vmatprep.subr.mxu0 0.0
    %1074 = vmatpush1.msra.mxu0 0.0
    %1075 = vmatprep.subr.mxu0 0.0
    %1076 = vmatpush1.msra.mxu0 0.0
    %1077 = vmatprep.subr.mxu0 0.0
    %1078 = vmatpush1.msra.mxu0 0.0
    %1079 = vmatprep.subr.mxu0 0.0
    %1080 = vmatpush1.msra.mxu0 0.0
    %1081 = vmatprep.subr.mxu0 0.0
    %1082 = vmatpush1.msra.mxu0 0.0
    %1083 = vmatprep.subr.mxu0 0.0
    %1084 = vmatpush1.msra.mxu0 0.0
    %1085 = vmatprep.subr.mxu0 0.0
    %1086 = vmatpush1.msra.mxu0 0.0
    %1087 = vmatprep.subr.mxu0 0.0
    %1088 = vmatpush1.msra.mxu0 0.0
    %1089 = vmatprep.subr.mxu0 0.0
    %1090 = vmatpush1.msra.mxu0 0.0
    %1091 = vmatprep.subr.mxu0 0.0
    %1092 = vmatpush1.msra.mxu0 0.0
    %1093 = vmatprep.subr.mxu0 0.0
    %1094 = vmatpush1.msra.mxu0 0.0
    %1095 = vmatprep.subr.mxu0 0.0
    %1096 = vmatpush1.msra.mxu0 0.0
    %1097 = vmatprep.subr.mxu0 0.0
    %1098 = vmatpush1.msra.mxu0 0.0
    %1099 = vmatprep.subr.mxu0 0.0
    %1100 = vmatpush1.msra.mxu0 0.0
    %1101 = vmatprep.subr.mxu0 0.0
    %1102 = vmatpush1.msra.mxu0 0.0
    %1103 = vmatprep.subr.mxu0 0.0
    %1104 = vmatpush1.msra.mxu0 0.0
    %1105 = vmatprep.subr.mxu0 0.0
    %1106 = vmatpush1.msra.mxu0 0.0
    %1107 = vmatprep.subr.mxu0 0.0
    %1108 = vmatpush1.msra.mxu0 0.0
    %1109 = vmatprep.subr.mxu0 0.0
    %1110 = vmatpush1.msra.mxu0 0.0
    %1111 = vmatprep.subr.mxu0 0.0
    %1112 = vmatpush1.msra.mxu0 0.0
    %1113 = vmatprep.subr.mxu0 0.0
    %1114 = vmatpush1.msra.mxu0 0.0
    %1115 = vmatprep.subr.mxu0 0.0
    %1116 = vmatpush1.msra.mxu0 0.0
    %1117 = vmatprep.subr.mxu0 0.0
    %1118 = vmatpush1.msra.mxu0 0.0
    %1119 = vmatprep.mubr.f32.mxu0 0.0
    %1120 = vmatmul.mubr.f32.gmra.mrb[0].mxu0 %v1044
    %v1121 = vpop.f32.mrb[0].mxu0
    %v1122 = vadd.f32 %v1036, %v1121
    %v1123 = vpop.f32.mrb[0].mxu0
    %v1124 = vadd.f32 %v1040, %v1123
    %1125 = vmatprep.mubr.f32.mxu0 0.0
    %1126 = vmatmul.mubr.f32.gmra.mrb[0].mxu0 %v1047
    %v1127 = vpop.f32.mrb[0].mxu0
    %v1128 = vadd.f32 %v1036, %v1127
    %v1129 = vpop.f32.mrb[0].mxu0
    %v1130 = vadd.f32 %v1040, %v1129
    %1131 = vmatprep.mubr.f32.mxu0 0.0
    %1132 = vmatmul.mubr.f32.gmra.mrb[0].mxu0 %v1050
    %v1133 = vpop.f32.mrb[0].mxu0
    %v1134 = vadd.f32 %v1036, %v1133
    %v1135 = vpop.f32.mrb[0].mxu0
    %v1136 = vadd.f32 %v1040, %v1135
    %1137 = vmatprep.mubr.f32.mxu0 0.0
    %1138 = vmatmul.mubr.f32.gmra.mrb[0].mxu0 %v1053
    %v1139 = vpop.f32.mrb[0].mxu0
    %v1140 = vadd.f32 %v1036, %v1139
    %v1141 = vpop.f32.mrb[0].mxu0
    %v1142 = vadd.f32 %v1040, %v1141
    %1143 = vdwg.mxu0
    %v1144 = vmul.f32 %v1122, 0.25
    %v1145 = vmul.f32 %v1128, 0.25
    %v1146 = vmul.f32 %v1134, 0.25
    %v1147 = vmul.f32 %v1140, 0.25
    %1150 = vrot.lane.b32.xlu0 %v1122, 64
    %v1151 = vpop.permute.xlu0 %1150
    %1152 = vrot.lane.b32.xlu0 %v1128, 64
    %v1153 = vpop.permute.xlu0 %1152
    %vm1154 = vcmask 130048
    %v1156 = vsel %vm1154, %v1144, 0
    %v1159 = vsel %vm1154, %v1145, 0
    %v1161 = vsel %vm1154, %v1151, 0
    %v1163 = vsel %vm1154, %v1153, 0
    %1165 = vmatprep.subr.mxu0 0.0
    %1166 = vmatpush1.xpose.msra.mxu0 %v1161
    %1167 = vmatprep.subr.mxu0 0.0
    %1168 = vmatpush1.xpose.msra.mxu0 %v1163
    %1169 = vmatprep.subr.mxu0 0.0
    %1170 = vmatpush1.xpose.msra.mxu0 0.0
    %1171 = vmatprep.subr.mxu0 0.0
    %1172 = vmatpush1.xpose.msra.mxu0 0.0
    %1173 = vmatprep.subr.mxu0 0.0
    %1174 = vmatpush1.xpose.msra.mxu0 0.0
    %1175 = vmatprep.subr.mxu0 0.0
    %1176 = vmatpush1.xpose.msra.mxu0 0.0
    %1177 = vmatprep.subr.mxu0 0.0
    %1178 = vmatpush1.xpose.msra.mxu0 0.0
    %1179 = vmatprep.subr.mxu0 0.0
    %1180 = vmatpush1.xpose.msra.mxu0 0.0
    %1181 = vmatprep.subr.mxu0 0.0
    %1182 = vmatpush1.xpose.msra.mxu0 0.0
    %1183 = vmatprep.subr.mxu0 0.0
    %1184 = vmatpush1.xpose.msra.mxu0 0.0
    %1185 = vmatprep.subr.mxu0 0.0
    %1186 = vmatpush1.xpose.msra.mxu0 0.0
    %1187 = vmatprep.subr.mxu0 0.0
    %1188 = vmatpush1.xpose.msra.mxu0 0.0
    %1189 = vmatprep.subr.mxu0 0.0
    %1190 = vmatpush1.xpose.msra.mxu0 0.0
    %1191 = vmatprep.subr.mxu0 0.0
    %1192 = vmatpush1.xpose.msra.mxu0 0.0
    %1193 = vmatprep.subr.mxu0 0.0
    %1194 = vmatpush1.xpose.msra.mxu0 0.0
    %1195 = vmatprep.subr.mxu0 0.0
    %1196 = vmatpush1.xpose.msra.mxu0 0.0
    %1197 = vmatprep.subr.mxu0 0.0
    %1198 = vmatpush1.xpose.msra.mxu0 0.0
    %1199 = vmatprep.subr.mxu0 0.0
    %1200 = vmatpush1.xpose.msra.mxu0 0.0
    %1201 = vmatprep.subr.mxu0 0.0
    %1202 = vmatpush1.xpose.msra.mxu0 0.0
    %1203 = vmatprep.subr.mxu0 0.0
    %1204 = vmatpush1.xpose.msra.mxu0 0.0
    %1205 = vmatprep.subr.mxu0 0.0
    %1206 = vmatpush1.xpose.msra.mxu0 0.0
    %1207 = vmatprep.subr.mxu0 0.0
    %1208 = vmatpush1.xpose.msra.mxu0 0.0
    %1209 = vmatprep.subr.mxu0 0.0
    %1210 = vmatpush1.xpose.msra.mxu0 0.0
    %1211 = vmatprep.subr.mxu0 0.0
    %1212 = vmatpush1.xpose.msra.mxu0 0.0
    %1213 = vmatprep.subr.mxu0 0.0
    %1214 = vmatpush1.xpose.msra.mxu0 0.0
    %1215 = vmatprep.subr.mxu0 0.0
    %1216 = vmatpush1.xpose.msra.mxu0 0.0
    %1217 = vmatprep.subr.mxu0 0.0
    %1218 = vmatpush1.xpose.msra.mxu0 0.0
    %1219 = vmatprep.subr.mxu0 0.0
    %1220 = vmatpush1.xpose.msra.mxu0 0.0
    %1221 = vmatprep.subr.mxu0 0.0
    %1222 = vmatpush1.xpose.msra.mxu0 0.0
    %1223 = vmatprep.subr.mxu0 0.0
    %1224 = vmatpush1.xpose.msra.mxu0 0.0
    %1225 = vmatprep.subr.mxu0 0.0
    %1226 = vmatpush1.xpose.msra.mxu0 0.0
    %1227 = vmatprep.subr.mxu0 0.0
    %1228 = vmatpush1.xpose.msra.mxu0 0.0
    %1229 = vmatprep.mubr.f32.mxu0 0.0
    %1230 = vmatmul.mubr.f32.gmra.mrb[0].mxu0 %v1156
    %v1231 = vpop.f32.mrb[0].mxu0
    %v1232 = vadd.f32 0.0, %v1231
    %v1233 = vpop.f32.mrb[0].mxu0
    %1234 = vmatprep.mubr.f32.mxu0 0.0
    %1235 = vmatmul.mubr.f32.gmra.mrb[0].mxu0 %v1159
    %v1236 = vpop.f32.mrb[0].mxu0
    %v1237 = vadd.f32 0.0, %v1236
    %v1238 = vpop.f32.mrb[0].mxu0
    %1239 = vdwg.mxu0
    %1242 = vrot.lane.b32.xlu0 %v1134, 64
    %v1243 = vpop.permute.xlu0 %1242
    %1244 = vrot.lane.b32.xlu0 %v1140, 64
    %v1245 = vpop.permute.xlu0 %1244
    %v1247 = vsel %vm1154, %v1146, 0
    %v1250 = vsel %vm1154, %v1147, 0
    %v1252 = vsel %vm1154, %v1243, 0
    %v1254 = vsel %vm1154, %v1245, 0
    %1256 = vmatprep.subr.mxu0 0.0
    %1257 = vmatpush1.xpose.msra.mxu0 %v1252
    %1258 = vmatprep.subr.mxu0 0.0
    %1259 = vmatpush1.xpose.msra.mxu0 %v1254
    %1260 = vmatprep.subr.mxu0 0.0
    %1261 = vmatpush1.xpose.msra.mxu0 0.0
    %1262 = vmatprep.subr.mxu0 0.0
    %1263 = vmatpush1.xpose.msra.mxu0 0.0
    %1264 = vmatprep.subr.mxu0 0.0
    %1265 = vmatpush1.xpose.msra.mxu0 0.0
    %1266 = vmatprep.subr.mxu0 0.0
    %1267 = vmatpush1.xpose.msra.mxu0 0.0
    %1268 = vmatprep.subr.mxu0 0.0
    %1269 = vmatpush1.xpose.msra.mxu0 0.0
    %1270 = vmatprep.subr.mxu0 0.0
    %1271 = vmatpush1.xpose.msra.mxu0 0.0
    %1272 = vmatprep.subr.mxu0 0.0
    %1273 = vmatpush1.xpose.msra.mxu0 0.0
    %1274 = vmatprep.subr.mxu0 0.0
    %1275 = vmatpush1.xpose.msra.mxu0 0.0
    %1276 = vmatprep.subr.mxu0 0.0
    %1277 = vmatpush1.xpose.msra.mxu0 0.0
    %1278 = vmatprep.subr.mxu0 0.0
    %1279 = vmatpush1.xpose.msra.mxu0 0.0
    %1280 = vmatprep.subr.mxu0 0.0
    %1281 = vmatpush1.xpose.msra.mxu0 0.0
    %1282 = vmatprep.subr.mxu0 0.0
    %1283 = vmatpush1.xpose.msra.mxu0 0.0
    %1284 = vmatprep.subr.mxu0 0.0
    %1285 = vmatpush1.xpose.msra.mxu0 0.0
    %1286 = vmatprep.subr.mxu0 0.0
    %1287 = vmatpush1.xpose.msra.mxu0 0.0
    %1288 = vmatprep.subr.mxu0 0.0
    %1289 = vmatpush1.xpose.msra.mxu0 0.0
    %1290 = vmatprep.subr.mxu0 0.0
    %1291 = vmatpush1.xpose.msra.mxu0 0.0
    %1292 = vmatprep.subr.mxu0 0.0
    %1293 = vmatpush1.xpose.msra.mxu0 0.0
    %1294 = vmatprep.subr.mxu0 0.0
    %1295 = vmatpush1.xpose.msra.mxu0 0.0
    %1296 = vmatprep.subr.mxu0 0.0
    %1297 = vmatpush1.xpose.msra.mxu0 0.0
    %1298 = vmatprep.subr.mxu0 0.0
    %1299 = vmatpush1.xpose.msra.mxu0 0.0
    %1300 = vmatprep.subr.mxu0 0.0
    %1301 = vmatpush1.xpose.msra.mxu0 0.0
    %1302 = vmatprep.subr.mxu0 0.0
    %1303 = vmatpush1.xpose.msra.mxu0 0.0
    %1304 = vmatprep.subr.mxu0 0.0
    %1305 = vmatpush1.xpose.msra.mxu0 0.0
    %1306 = vmatprep.subr.mxu0 0.0
    %1307 = vmatpush1.xpose.msra.mxu0 0.0
    %1308 = vmatprep.subr.mxu0 0.0
    %1309 = vmatpush1.xpose.msra.mxu0 0.0
    %1310 = vmatprep.subr.mxu0 0.0
    %1311 = vmatpush1.xpose.msra.mxu0 0.0
    %1312 = vmatprep.subr.mxu0 0.0
    %1313 = vmatpush1.xpose.msra.mxu0 0.0
    %1314 = vmatprep.subr.mxu0 0.0
    %1315 = vmatpush1.xpose.msra.mxu0 0.0
    %1316 = vmatprep.subr.mxu0 0.0
    %1317 = vmatpush1.xpose.msra.mxu0 0.0
    %1318 = vmatprep.subr.mxu0 0.0
    %1319 = vmatpush1.xpose.msra.mxu0 0.0
    %1320 = vmatprep.mubr.f32.mxu0 0.0
    %1321 = vmatmul.mubr.f32.gmra.mrb[0].mxu0 %v1247
    %v1322 = vpop.f32.mrb[0].mxu0
    %v1323 = vadd.f32 0.0, %v1322
    %v1324 = vpop.f32.mrb[0].mxu0
    %1325 = vmatprep.mubr.f32.mxu0 0.0
    %1326 = vmatmul.mubr.f32.gmra.mrb[0].mxu0 %v1250
    %v1327 = vpop.f32.mrb[0].mxu0
    %v1328 = vadd.f32 0.0, %v1327
    %v1329 = vpop.f32.mrb[0].mxu0
    %1330 = vdwg.mxu0
    %v1331 = vsel %vm1154, %v1232, -inf
    %1332 = vmax.xlane.f32.xlu0 %v1331
    %v1333 = vpop.xlane.xlu0 %1332
    %v1334 = vsel %vm1154, %v1237, -inf
    %1335 = vmax.xlane.f32.xlu0 %v1334
    %v1336 = vpop.xlane.xlu0 %1335
    %v1337 = vsel %vm1154, %v1323, -inf
    %1338 = vmax.xlane.f32.xlu0 %v1337
    %v1339 = vpop.xlane.xlu0 %1338
    %v1340 = vsel %vm1154, %v1328, -inf
    %1341 = vmax.xlane.f32.xlu0 %v1340
    %v1342 = vpop.xlane.xlu0 %1341
    %v1343 = vsub.f32 %v1232, %v1333
    %v1344 = vsub.f32 %v1237, %v1336
    %v1345 = vsub.f32 %v1323, %v1339
    %v1346 = vsub.f32 %v1328, %v1342
    %v1347 = vmul.f32 %v1343, 1.442695
    %v1348 = vpow.pop %v1347
    %v1349 = vmul.f32 %v1344, 1.442695
    %v1350 = vpow.pop %v1349
    %v1351 = vmul.f32 %v1345, 1.442695
    %v1352 = vpow.pop %v1351
    %v1353 = vmul.f32 %v1346, 1.442695
    %v1354 = vpow.pop %v1353
    %v1355 = vsel %vm1154, %v1348, 0.0
    %1356 = vadd.xlane.f32.xlu0 %v1355
    %v1357 = vpop.xlane.xlu0 %1356
    %v1358 = vsel %vm1154, %v1350, 0.0
    %1359 = vadd.xlane.f32.xlu0 %v1358
    %v1360 = vpop.xlane.xlu0 %1359
    %v1361 = vsel %vm1154, %v1352, 0.0
    %1362 = vadd.xlane.f32.xlu0 %v1361
    %v1363 = vpop.xlane.xlu0 %1362
    %v1364 = vsel %vm1154, %v1354, 0.0
    %1365 = vadd.xlane.f32.xlu0 %v1364
    %v1366 = vpop.xlane.xlu0 %1365
    %v1367 = vrcp.pop %v1357
    %v1368 = vrcp.pop %v1360
    %v1369 = vrcp.pop %v1363
    %v1370 = vrcp.pop %v1366
    %v1371 = vmul.f32 %v1348, %v1367
    %v1372 = vmul.f32 %v1350, %v1368
    %v1373 = vmul.f32 %v1352, %v1369
    %v1374 = vmul.f32 %v1354, %v1370
    %v1376 = vsel %vm1154, %v1371, 0
    %v1379 = vsel %vm1154, %v1372, 0
    %1381 = vmatprep.subr.mxu0 0.0
    %1382 = vmatpush1.msra.mxu0 %v1124
    %1383 = vmatprep.subr.mxu0 0.0
    %1384 = vmatpush1.msra.mxu0 %v1130
    %1385 = vmatprep.subr.mxu0 0.0
    %1386 = vmatpush1.msra.mxu0 0.0
    %1387 = vmatprep.subr.mxu0 0.0
    %1388 = vmatpush1.msra.mxu0 0.0
    %1389 = vmatprep.subr.mxu0 0.0
    %1390 = vmatpush1.msra.mxu0 0.0
    %1391 = vmatprep.subr.mxu0 0.0
    %1392 = vmatpush1.msra.mxu0 0.0
    %1393 = vmatprep.subr.mxu0 0.0
    %1394 = vmatpush1.msra.mxu0 0.0
    %1395 = vmatprep.subr.mxu0 0.0
    %1396 = vmatpush1.msra.mxu0 0.0
    %1397 = vmatprep.subr.mxu0 0.0
    %1398 = vmatpush1.msra.mxu0 0.0
    %1399 = vmatprep.subr.mxu0 0.0
    %1400 = vmatpush1.msra.mxu0 0.0
    %1401 = vmatprep.subr.mxu0 0.0
    %1402 = vmatpush1.msra.mxu0 0.0
    %1403 = vmatprep.subr.mxu0 0.0
    %1404 = vmatpush1.msra.mxu0 0.0
    %1405 = vmatprep.subr.mxu0 0.0
    %1406 = vmatpush1.msra.mxu0 0.0
    %1407 = vmatprep.subr.mxu0 0.0
    %1408 = vmatpush1.msra.mxu0 0.0
    %1409 = vmatprep.subr.mxu0 0.0
    %1410 = vmatpush1.msra.mxu0 0.0
    %1411 = vmatprep.subr.mxu0 0.0
    %1412 = vmatpush1.msra.mxu0 0.0
    %1413 = vmatprep.subr.mxu0 0.0
    %1414 = vmatpush1.msra.mxu0 0.0
    %1415 = vmatprep.subr.mxu0 0.0
    %1416 = vmatpush1.msra.mxu0 0.0
    %1417 = vmatprep.subr.mxu0 0.0
    %1418 = vmatpush1.msra.mxu0 0.0
    %1419 = vmatprep.subr.mxu0 0.0
    %1420 = vmatpush1.msra.mxu0 0.0
    %1421 = vmatprep.subr.mxu0 0.0
    %1422 = vmatpush1.msra.mxu0 0.0
    %1423 = vmatprep.subr.mxu0 0.0
    %1424 = vmatpush1.msra.mxu0 0.0
    %1425 = vmatprep.subr.mxu0 0.0
    %1426 = vmatpush1.msra.mxu0 0.0
    %1427 = vmatprep.subr.mxu0 0.0
    %1428 = vmatpush1.msra.mxu0 0.0
    %1429 = vmatprep.subr.mxu0 0.0
    %1430 = vmatpush1.msra.mxu0 0.0
    %1431 = vmatprep.subr.mxu0 0.0
    %1432 = vmatpush1.msra.mxu0 0.0
    %1433 = vmatprep.subr.mxu0 0.0
    %1434 = vmatpush1.msra.mxu0 0.0
    %1435 = vmatprep.subr.mxu0 0.0
    %1436 = vmatpush1.msra.mxu0 0.0
    %1437 = vmatprep.subr.mxu0 0.0
    %1438 = vmatpush1.msra.mxu0 0.0
    %1439 = vmatprep.subr.mxu0 0.0
    %1440 = vmatpush1.msra.mxu0 0.0
    %1441 = vmatprep.subr.mxu0 0.0
    %1442 = vmatpush1.msra.mxu0 0.0
    %1443 = vmatprep.subr.mxu0 0.0
    %1444 = vmatpush1.msra.mxu0 0.0
    %1445 = vmatprep.mubr.f32.mxu0 0.0
    %1446 = vmatmul.mubr.f32.gmra.mrb[0].mxu0 %v1376
    %v1447 = vpop.f32.mrb[0].mxu0
    %v1448 = vadd.f32 0.0, %v1447
    %v1449 = vpop.f32.mrb[0].mxu0
    %1450 = vmatprep.mubr.f32.mxu0 0.0
    %1451 = vmatmul.mubr.f32.gmra.mrb[0].mxu0 %v1379
    %v1452 = vpop.f32.mrb[0].mxu0
    %v1453 = vadd.f32 0.0, %v1452
    %v1454 = vpop.f32.mrb[0].mxu0
    %1455 = vdwg.mxu0
    %v1457 = vsel %vm1154, %v1373, 0
    %v1460 = vsel %vm1154, %v1374, 0
    %1462 = vmatprep.subr.mxu0 0.0
    %1463 = vmatpush1.msra.mxu0 %v1136
    %1464 = vmatprep.subr.mxu0 0.0
    %1465 = vmatpush1.msra.mxu0 %v1142
    %1466 = vmatprep.subr.mxu0 0.0
    %1467 = vmatpush1.msra.mxu0 0.0
    %1468 = vmatprep.subr.mxu0 0.0
    %1469 = vmatpush1.msra.mxu0 0.0
    %1470 = vmatprep.subr.mxu0 0.0
    %1471 = vmatpush1.msra.mxu0 0.0
    %1472 = vmatprep.subr.mxu0 0.0
    %1473 = vmatpush1.msra.mxu0 0.0
    %1474 = vmatprep.subr.mxu0 0.0
    %1475 = vmatpush1.msra.mxu0 0.0
    %1476 = vmatprep.subr.mxu0 0.0
    %1477 = vmatpush1.msra.mxu0 0.0
    %1478 = vmatprep.subr.mxu0 0.0
    %1479 = vmatpush1.msra.mxu0 0.0
    %1480 = vmatprep.subr.mxu0 0.0
    %1481 = vmatpush1.msra.mxu0 0.0
    %1482 = vmatprep.subr.mxu0 0.0
    %1483 = vmatpush1.msra.mxu0 0.0
    %1484 = vmatprep.subr.mxu0 0.0
    %1485 = vmatpush1.msra.mxu0 0.0
    %1486 = vmatprep.subr.mxu0 0.0
    %1487 = vmatpush1.msra.mxu0 0.0
    %1488 = vmatprep.subr.mxu0 0.0
    %1489 = vmatpush1.msra.mxu0 0.0
    %1490 = vmatprep.subr.mxu0 0.0
    %1491 = vmatpush1.msra.mxu0 0.0
    %1492 = vmatprep.subr.mxu0 0.0
    %1493 = vmatpush1.msra.mxu0 0.0
    %1494 = vmatprep.subr.mxu0 0.0
    %1495 = vmatpush1.msra.mxu0 0.0
    %1496 = vmatprep.subr.mxu0 0.0
    %1497 = vmatpush1.msra.mxu0 0.0
    %1498 = vmatprep.subr.mxu0 0.0
    %1499 = vmatpush1.msra.mxu0 0.0
    %1500 = vmatprep.subr.mxu0 0.0
    %1501 = vmatpush1.msra.mxu0 0.0
    %1502 = vmatprep.subr.mxu0 0.0
    %1503 = vmatpush1.msra.mxu0 0.0
    %1504 = vmatprep.subr.mxu0 0.0
    %1505 = vmatpush1.msra.mxu0 0.0
    %1506 = vmatprep.subr.mxu0 0.0
    %1507 = vmatpush1.msra.mxu0 0.0
    %1508 = vmatprep.subr.mxu0 0.0
    %1509 = vmatpush1.msra.mxu0 0.0
    %1510 = vmatprep.subr.mxu0 0.0
    %1511 = vmatpush1.msra.mxu0 0.0
    %1512 = vmatprep.subr.mxu0 0.0
    %1513 = vmatpush1.msra.mxu0 0.0
    %1514 = vmatprep.subr.mxu0 0.0
    %1515 = vmatpush1.msra.mxu0 0.0
    %1516 = vmatprep.subr.mxu0 0.0
    %1517 = vmatpush1.msra.mxu0 0.0
    %1518 = vmatprep.subr.mxu0 0.0
    %1519 = vmatpush1.msra.mxu0 0.0
    %1520 = vmatprep.subr.mxu0 0.0
    %1521 = vmatpush1.msra.mxu0 0.0
    %1522 = vmatprep.subr.mxu0 0.0
    %1523 = vmatpush1.msra.mxu0 0.0
    %1524 = vmatprep.subr.mxu0 0.0
    %1525 = vmatpush1.msra.mxu0 0.0
    %1526 = vmatprep.mubr.f32.mxu0 0.0
    %1527 = vmatmul.mubr.f32.gmra.mrb[0].mxu0 %v1457
    %v1528 = vpop.f32.mrb[0].mxu0
    %v1529 = vadd.f32 0.0, %v1528
    %v1530 = vpop.f32.mrb[0].mxu0
    %1531 = vmatprep.mubr.f32.mxu0 0.0
    %1532 = vmatmul.mubr.f32.gmra.mrb[0].mxu0 %v1460
    %v1533 = vpop.f32.mrb[0].mxu0
    %v1534 = vadd.f32 0.0, %v1533
    %v1535 = vpop.f32.mrb[0].mxu0
    %1536 = vdwg.mxu0
    %1537 = vrot.lane.b32.xlu0 %v1144, 112
    %v1538 = vpop.permute.xlu0 %1537
    %1539 = vrot.lane.b32.xlu0 %v1145, 112
    %v1540 = vpop.permute.xlu0 %1539
    %1541 = vrot.lane.b32.xlu0 %v1122, 48
    %v1542 = vpop.permute.xlu0 %1541
    %1543 = vrot.lane.b32.xlu0 %v1128, 48
    %v1544 = vpop.permute.xlu0 %1543
    %v1545 = vsel %vm1154, %v1538, 0
    %v1547 = vsel %vm1154, %v1540, 0
    %v1549 = vsel %vm1154, %v1542, 0
    %v1551 = vsel %vm1154, %v1544, 0
    %1553 = vmatprep.subr.mxu0 0.0
    %1554 = vmatpush1.xpose.msra.mxu0 %v1549
    %1555 = vmatprep.subr.mxu0 0.0
    %1556 = vmatpush1.xpose.msra.mxu0 %v1551
    %1557 = vmatprep.subr.mxu0 0.0
    %1558 = vmatpush1.xpose.msra.mxu0 0.0
    %1559 = vmatprep.subr.mxu0 0.0
    %1560 = vmatpush1.xpose.msra.mxu0 0.0
    %1561 = vmatprep.subr.mxu0 0.0
    %1562 = vmatpush1.xpose.msra.mxu0 0.0
    %1563 = vmatprep.subr.mxu0 0.0
    %1564 = vmatpush1.xpose.msra.mxu0 0.0
    %1565 = vmatprep.subr.mxu0 0.0
    %1566 = vmatpush1.xpose.msra.mxu0 0.0
    %1567 = vmatprep.subr.mxu0 0.0
    %1568 = vmatpush1.xpose.msra.mxu0 0.0
    %1569 = vmatprep.subr.mxu0 0.0
    %1570 = vmatpush1.xpose.msra.mxu0 0.0
    %1571 = vmatprep.subr.mxu0 0.0
    %1572 = vmatpush1.xpose.msra.mxu0 0.0
    %1573 = vmatprep.subr.mxu0 0.0
    %1574 = vmatpush1.xpose.msra.mxu0 0.0
    %1575 = vmatprep.subr.mxu0 0.0
    %1576 = vmatpush1.xpose.msra.mxu0 0.0
    %1577 = vmatprep.subr.mxu0 0.0
    %1578 = vmatpush1.xpose.msra.mxu0 0.0
    %1579 = vmatprep.subr.mxu0 0.0
    %1580 = vmatpush1.xpose.msra.mxu0 0.0
    %1581 = vmatprep.subr.mxu0 0.0
    %1582 = vmatpush1.xpose.msra.mxu0 0.0
    %1583 = vmatprep.subr.mxu0 0.0
    %1584 = vmatpush1.xpose.msra.mxu0 0.0
    %1585 = vmatprep.subr.mxu0 0.0
    %1586 = vmatpush1.xpose.msra.mxu0 0.0
    %1587 = vmatprep.subr.mxu0 0.0
    %1588 = vmatpush1.xpose.msra.mxu0 0.0
    %1589 = vmatprep.subr.mxu0 0.0
    %1590 = vmatpush1.xpose.msra.mxu0 0.0
    %1591 = vmatprep.subr.mxu0 0.0
    %1592 = vmatpush1.xpose.msra.mxu0 0.0
    %1593 = vmatprep.subr.mxu0 0.0
    %1594 = vmatpush1.xpose.msra.mxu0 0.0
    %1595 = vmatprep.subr.mxu0 0.0
    %1596 = vmatpush1.xpose.msra.mxu0 0.0
    %1597 = vmatprep.subr.mxu0 0.0
    %1598 = vmatpush1.xpose.msra.mxu0 0.0
    %1599 = vmatprep.subr.mxu0 0.0
    %1600 = vmatpush1.xpose.msra.mxu0 0.0
    %1601 = vmatprep.subr.mxu0 0.0
    %1602 = vmatpush1.xpose.msra.mxu0 0.0
    %1603 = vmatprep.subr.mxu0 0.0
    %1604 = vmatpush1.xpose.msra.mxu0 0.0
    %1605 = vmatprep.subr.mxu0 0.0
    %1606 = vmatpush1.xpose.msra.mxu0 0.0
    %1607 = vmatprep.subr.mxu0 0.0
    %1608 = vmatpush1.xpose.msra.mxu0 0.0
    %1609 = vmatprep.subr.mxu0 0.0
    %1610 = vmatpush1.xpose.msra.mxu0 0.0
    %1611 = vmatprep.subr.mxu0 0.0
    %1612 = vmatpush1.xpose.msra.mxu0 0.0
    %1613 = vmatprep.subr.mxu0 0.0
    %1614 = vmatpush1.xpose.msra.mxu0 0.0
    %1615 = vmatprep.subr.mxu0 0.0
    %1616 = vmatpush1.xpose.msra.mxu0 0.0
    %1617 = vmatprep.mubr.f32.mxu0 0.0
    %1618 = vmatmul.mubr.f32.gmra.mrb[0].mxu0 %v1545
    %v1619 = vpop.f32.mrb[0].mxu0
    %v1620 = vadd.f32 0.0, %v1619
    %v1621 = vpop.f32.mrb[0].mxu0
    %1622 = vmatprep.mubr.f32.mxu0 0.0
    %1623 = vmatmul.mubr.f32.gmra.mrb[0].mxu0 %v1547
    %v1624 = vpop.f32.mrb[0].mxu0
    %v1625 = vadd.f32 0.0, %v1624
    %v1626 = vpop.f32.mrb[0].mxu0
    %1627 = vdwg.mxu0
    %1628 = vrot.lane.b32.xlu0 %v1146, 112
    %v1629 = vpop.permute.xlu0 %1628
    %1630 = vrot.lane.b32.xlu0 %v1147, 112
    %v1631 = vpop.permute.xlu0 %1630
    %1632 = vrot.lane.b32.xlu0 %v1134, 48
    %v1633 = vpop.permute.xlu0 %1632
    %1634 = vrot.lane.b32.xlu0 %v1140, 48
    %v1635 = vpop.permute.xlu0 %1634
    %v1636 = vsel %vm1154, %v1629, 0
    %v1638 = vsel %vm1154, %v1631, 0
    %v1640 = vsel %vm1154, %v1633, 0
    %v1642 = vsel %vm1154, %v1635, 0
    %1644 = vmatprep.subr.mxu0 0.0
    %1645 = vmatpush1.xpose.msra.mxu0 %v1640
    %1646 = vmatprep.subr.mxu0 0.0
    %1647 = vmatpush1.xpose.msra.mxu0 %v1642
    %1648 = vmatprep.subr.mxu0 0.0
    %1649 = vmatpush1.xpose.msra.mxu0 0.0
    %1650 = vmatprep.subr.mxu0 0.0
    %1651 = vmatpush1.xpose.msra.mxu0 0.0
    %1652 = vmatprep.subr.mxu0 0.0
    %1653 = vmatpush1.xpose.msra.mxu0 0.0
    %1654 = vmatprep.subr.mxu0 0.0
    %1655 = vmatpush1.xpose.msra.mxu0 0.0
    %1656 = vmatprep.subr.mxu0 0.0
    %1657 = vmatpush1.xpose.msra.mxu0 0.0
    %1658 = vmatprep.subr.mxu0 0.0
    %1659 = vmatpush1.xpose.msra.mxu0 0.0
    %1660 = vmatprep.subr.mxu0 0.0
    %1661 = vmatpush1.xpose.msra.mxu0 0.0
    %1662 = vmatprep.subr.mxu0 0.0
    %1663 = vmatpush1.xpose.msra.mxu0 0.0
    %1664 = vmatprep.subr.mxu0 0.0
    %1665 = vmatpush1.xpose.msra.mxu0 0.0
    %1666 = vmatprep.subr.mxu0 0.0
    %1667 = vmatpush1.xpose.msra.mxu0 0.0
    %1668 = vmatprep.subr.mxu0 0.0
    %1669 = vmatpush1.xpose.msra.mxu0 0.0
    %1670 = vmatprep.subr.mxu0 0.0
    %1671 = vmatpush1.xpose.msra.mxu0 0.0
    %1672 = vmatprep.subr.mxu0 0.0
    %1673 = vmatpush1.xpose.msra.mxu0 0.0
    %1674 = vmatprep.subr.mxu0 0.0
    %1675 = vmatpush1.xpose.msra.mxu0 0.0
    %1676 = vmatprep.subr.mxu0 0.0
    %1677 = vmatpush1.xpose.msra.mxu0 0.0
    %1678 = vmatprep.subr.mxu0 0.0
    %1679 = vmatpush1.xpose.msra.mxu0 0.0
    %1680 = vmatprep.subr.mxu0 0.0
    %1681 = vmatpush1.xpose.msra.mxu0 0.0
    %1682 = vmatprep.subr.mxu0 0.0
    %1683 = vmatpush1.xpose.msra.mxu0 0.0
    %1684 = vmatprep.subr.mxu0 0.0
    %1685 = vmatpush1.xpose.msra.mxu0 0.0
    %1686 = vmatprep.subr.mxu0 0.0
    %1687 = vmatpush1.xpose.msra.mxu0 0.0
    %1688 = vmatprep.subr.mxu0 0.0
    %1689 = vmatpush1.xpose.msra.mxu0 0.0
    %1690 = vmatprep.subr.mxu0 0.0
    %1691 = vmatpush1.xpose.msra.mxu0 0.0
    %1692 = vmatprep.subr.mxu0 0.0
    %1693 = vmatpush1.xpose.msra.mxu0 0.0
    %1694 = vmatprep.subr.mxu0 0.0
    %1695 = vmatpush1.xpose.msra.mxu0 0.0
    %1696 = vmatprep.subr.mxu0 0.0
    %1697 = vmatpush1.xpose.msra.mxu0 0.0
    %1698 = vmatprep.subr.mxu0 0.0
    %1699 = vmatpush1.xpose.msra.mxu0 0.0
    %1700 = vmatprep.subr.mxu0 0.0
    %1701 = vmatpush1.xpose.msra.mxu0 0.0
    %1702 = vmatprep.subr.mxu0 0.0
    %1703 = vmatpush1.xpose.msra.mxu0 0.0
    %1704 = vmatprep.subr.mxu0 0.0
    %1705 = vmatpush1.xpose.msra.mxu0 0.0
    %1706 = vmatprep.subr.mxu0 0.0
    %1707 = vmatpush1.xpose.msra.mxu0 0.0
    %1708 = vmatprep.mubr.f32.mxu0 0.0
    %1709 = vmatmul.mubr.f32.gmra.mrb[0].mxu0 %v1636
    %v1710 = vpop.f32.mrb[0].mxu0
    %v1711 = vadd.f32 0.0, %v1710
    %v1712 = vpop.f32.mrb[0].mxu0
    %1713 = vmatprep.mubr.f32.mxu0 0.0
    %1714 = vmatmul.mubr.f32.gmra.mrb[0].mxu0 %v1638
    %v1715 = vpop.f32.mrb[0].mxu0
    %v1716 = vadd.f32 0.0, %v1715
    %v1717 = vpop.f32.mrb[0].mxu0
    %1718 = vdwg.mxu0
    %v1719 = vsel %vm1154, %v1620, -inf
    %1720 = vmax.xlane.f32.xlu0 %v1719
    %v1721 = vpop.xlane.xlu0 %1720
    %v1722 = vsel %vm1154, %v1625, -inf
    %1723 = vmax.xlane.f32.xlu0 %v1722
    %v1724 = vpop.xlane.xlu0 %1723
    %v1725 = vsel %vm1154, %v1711, -inf
    %1726 = vmax.xlane.f32.xlu0 %v1725
    %v1727 = vpop.xlane.xlu0 %1726
    %v1728 = vsel %vm1154, %v1716, -inf
    %1729 = vmax.xlane.f32.xlu0 %v1728
    %v1730 = vpop.xlane.xlu0 %1729
    %v1731 = vsub.f32 %v1620, %v1721
    %v1732 = vsub.f32 %v1625, %v1724
    %v1733 = vsub.f32 %v1711, %v1727
    %v1734 = vsub.f32 %v1716, %v1730
    %v1735 = vmul.f32 %v1731, 1.442695
    %v1736 = vpow.pop %v1735
    %v1737 = vmul.f32 %v1732, 1.442695
    %v1738 = vpow.pop %v1737
    %v1739 = vmul.f32 %v1733, 1.442695
    %v1740 = vpow.pop %v1739
    %v1741 = vmul.f32 %v1734, 1.442695
    %v1742 = vpow.pop %v1741
    %v1743 = vsel %vm1154, %v1736, 0.0
    %1744 = vadd.xlane.f32.xlu0 %v1743
    %v1745 = vpop.xlane.xlu0 %1744
    %v1746 = vsel %vm1154, %v1738, 0.0
    %1747 = vadd.xlane.f32.xlu0 %v1746
    %v1748 = vpop.xlane.xlu0 %1747
    %v1749 = vsel %vm1154, %v1740, 0.0
    %1750 = vadd.xlane.f32.xlu0 %v1749
    %v1751 = vpop.xlane.xlu0 %1750
    %v1752 = vsel %vm1154, %v1742, 0.0
    %1753 = vadd.xlane.f32.xlu0 %v1752
    %v1754 = vpop.xlane.xlu0 %1753
    %v1755 = vrcp.pop %v1745
    %v1756 = vrcp.pop %v1748
    %v1757 = vrcp.pop %v1751
    %v1758 = vrcp.pop %v1754
    %v1759 = vmul.f32 %v1736, %v1755
    %v1760 = vmul.f32 %v1738, %v1756
    %v1761 = vmul.f32 %v1740, %v1757
    %v1762 = vmul.f32 %v1742, %v1758
    %1765 = vrot.lane.b32.xlu0 %v1124, 112
    %v1766 = vpop.permute.xlu0 %1765
    %1767 = vrot.lane.b32.xlu0 %v1130, 112
    %v1768 = vpop.permute.xlu0 %1767
    %v1772 = vsel %vm1154, %v1759, 0
    %v1775 = vsel %vm1154, %v1760, 0
    %1777 = vmatprep.subr.mxu0 0.0
    %1778 = vmatpush1.msra.mxu0 %v1766
    %1779 = vmatprep.subr.mxu0 0.0
    %1780 = vmatpush1.msra.mxu0 %v1768
    %1781 = vmatprep.subr.mxu0 0.0
    %1782 = vmatpush1.msra.mxu0 0.0
    %1783 = vmatprep.subr.mxu0 0.0
    %1784 = vmatpush1.msra.mxu0 0.0
    %1785 = vmatprep.subr.mxu0 0.0
    %1786 = vmatpush1.msra.mxu0 0.0
    %1787 = vmatprep.subr.mxu0 0.0
    %1788 = vmatpush1.msra.mxu0 0.0
    %1789 = vmatprep.subr.mxu0 0.0
    %1790 = vmatpush1.msra.mxu0 0.0
    %1791 = vmatprep.subr.mxu0 0.0
    %1792 = vmatpush1.msra.mxu0 0.0
    %1793 = vmatprep.subr.mxu0 0.0
    %1794 = vmatpush1.msra.mxu0 0.0
    %1795 = vmatprep.subr.mxu0 0.0
    %1796 = vmatpush1.msra.mxu0 0.0
    %1797 = vmatprep.subr.mxu0 0.0
    %1798 = vmatpush1.msra.mxu0 0.0
    %1799 = vmatprep.subr.mxu0 0.0
    %1800 = vmatpush1.msra.mxu0 0.0
    %1801 = vmatprep.subr.mxu0 0.0
    %1802 = vmatpush1.msra.mxu0 0.0
    %1803 = vmatprep.subr.mxu0 0.0
    %1804 = vmatpush1.msra.mxu0 0.0
    %1805 = vmatprep.subr.mxu0 0.0
    %1806 = vmatpush1.msra.mxu0 0.0
    %1807 = vmatprep.subr.mxu0 0.0
    %1808 = vmatpush1.msra.mxu0 0.0
    %1809 = vmatprep.subr.mxu0 0.0
    %1810 = vmatpush1.msra.mxu0 0.0
    %1811 = vmatprep.subr.mxu0 0.0
    %1812 = vmatpush1.msra.mxu0 0.0
    %1813 = vmatprep.subr.mxu0 0.0
    %1814 = vmatpush1.msra.mxu0 0.0
    %1815 = vmatprep.subr.mxu0 0.0
    %1816 = vmatpush1.msra.mxu0 0.0
    %1817 = vmatprep.subr.mxu0 0.0
    %1818 = vmatpush1.msra.mxu0 0.0
    %1819 = vmatprep.subr.mxu0 0.0
    %1820 = vmatpush1.msra.mxu0 0.0
    %1821 = vmatprep.subr.mxu0 0.0
    %1822 = vmatpush1.msra.mxu0 0.0
    %1823 = vmatprep.subr.mxu0 0.0
    %1824 = vmatpush1.msra.mxu0 0.0
    %1825 = vmatprep.subr.mxu0 0.0
    %1826 = vmatpush1.msra.mxu0 0.0
    %1827 = vmatprep.subr.mxu0 0.0
    %1828 = vmatpush1.msra.mxu0 0.0
    %1829 = vmatprep.subr.mxu0 0.0
    %1830 = vmatpush1.msra.mxu0 0.0
    %1831 = vmatprep.subr.mxu0 0.0
    %1832 = vmatpush1.msra.mxu0 0.0
    %1833 = vmatprep.subr.mxu0 0.0
    %1834 = vmatpush1.msra.mxu0 0.0
    %1835 = vmatprep.subr.mxu0 0.0
    %1836 = vmatpush1.msra.mxu0 0.0
    %1837 = vmatprep.subr.mxu0 0.0
    %1838 = vmatpush1.msra.mxu0 0.0
    %1839 = vmatprep.subr.mxu0 0.0
    %1840 = vmatpush1.msra.mxu0 0.0
    %1841 = vmatprep.mubr.f32.mxu0 0.0
    %1842 = vmatmul.mubr.f32.gmra.mrb[0].mxu0 %v1772
    %v1843 = vpop.f32.mrb[0].mxu0
    %v1844 = vadd.f32 0.0, %v1843
    %v1845 = vpop.f32.mrb[0].mxu0
    %1846 = vmatprep.mubr.f32.mxu0 0.0
    %1847 = vmatmul.mubr.f32.gmra.mrb[0].mxu0 %v1775
    %v1848 = vpop.f32.mrb[0].mxu0
    %v1849 = vadd.f32 0.0, %v1848
    %v1850 = vpop.f32.mrb[0].mxu0
    %1851 = vdwg.mxu0
    %1854 = vrot.lane.b32.xlu0 %v1136, 112
    %v1855 = vpop.permute.xlu0 %1854
    %1856 = vrot.lane.b32.xlu0 %v1142, 112
    %v1857 = vpop.permute.xlu0 %1856
    %v1861 = vsel %vm1154, %v1761, 0
    %v1864 = vsel %vm1154, %v1762, 0
    %1866 = vmatprep.subr.mxu0 0.0
    %1867 = vmatpush1.msra.mxu0 %v1855
    %1868 = vmatprep.subr.mxu0 0.0
    %1869 = vmatpush1.msra.mxu0 %v1857
    %1870 = vmatprep.subr.mxu0 0.0
    %1871 = vmatpush1.msra.mxu0 0.0
    %1872 = vmatprep.subr.mxu0 0.0
    %1873 = vmatpush1.msra.mxu0 0.0
    %1874 = vmatprep.subr.mxu0 0.0
    %1875 = vmatpush1.msra.mxu0 0.0
    %1876 = vmatprep.subr.mxu0 0.0
    %1877 = vmatpush1.msra.mxu0 0.0
    %1878 = vmatprep.subr.mxu0 0.0
    %1879 = vmatpush1.msra.mxu0 0.0
    %1880 = vmatprep.subr.mxu0 0.0
    %1881 = vmatpush1.msra.mxu0 0.0
    %1882 = vmatprep.subr.mxu0 0.0
    %1883 = vmatpush1.msra.mxu0 0.0
    %1884 = vmatprep.subr.mxu0 0.0
    %1885 = vmatpush1.msra.mxu0 0.0
    %1886 = vmatprep.subr.mxu0 0.0
    %1887 = vmatpush1.msra.mxu0 0.0
    %1888 = vmatprep.subr.mxu0 0.0
    %1889 = vmatpush1.msra.mxu0 0.0
    %1890 = vmatprep.subr.mxu0 0.0
    %1891 = vmatpush1.msra.mxu0 0.0
    %1892 = vmatprep.subr.mxu0 0.0
    %1893 = vmatpush1.msra.mxu0 0.0
    %1894 = vmatprep.subr.mxu0 0.0
    %1895 = vmatpush1.msra.mxu0 0.0
    %1896 = vmatprep.subr.mxu0 0.0
    %1897 = vmatpush1.msra.mxu0 0.0
    %1898 = vmatprep.subr.mxu0 0.0
    %1899 = vmatpush1.msra.mxu0 0.0
    %1900 = vmatprep.subr.mxu0 0.0
    %1901 = vmatpush1.msra.mxu0 0.0
    %1902 = vmatprep.subr.mxu0 0.0
    %1903 = vmatpush1.msra.mxu0 0.0
    %1904 = vmatprep.subr.mxu0 0.0
    %1905 = vmatpush1.msra.mxu0 0.0
    %1906 = vmatprep.subr.mxu0 0.0
    %1907 = vmatpush1.msra.mxu0 0.0
    %1908 = vmatprep.subr.mxu0 0.0
    %1909 = vmatpush1.msra.mxu0 0.0
    %1910 = vmatprep.subr.mxu0 0.0
    %1911 = vmatpush1.msra.mxu0 0.0
    %1912 = vmatprep.subr.mxu0 0.0
    %1913 = vmatpush1.msra.mxu0 0.0
    %1914 = vmatprep.subr.mxu0 0.0
    %1915 = vmatpush1.msra.mxu0 0.0
    %1916 = vmatprep.subr.mxu0 0.0
    %1917 = vmatpush1.msra.mxu0 0.0
    %1918 = vmatprep.subr.mxu0 0.0
    %1919 = vmatpush1.msra.mxu0 0.0
    %1920 = vmatprep.subr.mxu0 0.0
    %1921 = vmatpush1.msra.mxu0 0.0
    %1922 = vmatprep.subr.mxu0 0.0
    %1923 = vmatpush1.msra.mxu0 0.0
    %1924 = vmatprep.subr.mxu0 0.0
    %1925 = vmatpush1.msra.mxu0 0.0
    %1926 = vmatprep.subr.mxu0 0.0
    %1927 = vmatpush1.msra.mxu0 0.0
    %1928 = vmatprep.subr.mxu0 0.0
    %1929 = vmatpush1.msra.mxu0 0.0
    %1930 = vmatprep.mubr.f32.mxu0 0.0
    %1931 = vmatmul.mubr.f32.gmra.mrb[0].mxu0 %v1861
    %v1932 = vpop.f32.mrb[0].mxu0
    %v1933 = vadd.f32 0.0, %v1932
    %v1934 = vpop.f32.mrb[0].mxu0
    %1935 = vmatprep.mubr.f32.mxu0 0.0
    %1936 = vmatmul.mubr.f32.gmra.mrb[0].mxu0 %v1864
    %v1937 = vpop.f32.mrb[0].mxu0
    %v1938 = vadd.f32 0.0, %v1937
    %v1939 = vpop.f32.mrb[0].mxu0
    %1940 = vdwg.mxu0
    %v1942 = vsel %vm1154, %v1844, 0
    %v1945 = vsel %vm1154, %v1849, 0
    %v1948 = vsel %vm1154, %v1933, 0
    %v1951 = vsel %vm1154, %v1938, 0
    %1953 = vmatprep.subr.mxu0 0.0
    %1954 = vmatpush1.msra.mxu0 %v953
    %1955 = vmatprep.subr.mxu0 0.0
    %1956 = vmatpush1.msra.mxu0 %v954
    %1957 = vmatprep.subr.mxu0 0.0
    %1958 = vmatpush1.msra.mxu0 0.0
    %1959 = vmatprep.subr.mxu0 0.0
    %1960 = vmatpush1.msra.mxu0 0.0
    %1961 = vmatprep.subr.mxu0 0.0
    %1962 = vmatpush1.msra.mxu0 0.0
    %1963 = vmatprep.subr.mxu0 0.0
    %1964 = vmatpush1.msra.mxu0 0.0
    %1965 = vmatprep.subr.mxu0 0.0
    %1966 = vmatpush1.msra.mxu0 0.0
    %1967 = vmatprep.subr.mxu0 0.0
    %1968 = vmatpush1.msra.mxu0 0.0
    %1969 = vmatprep.subr.mxu0 0.0
    %1970 = vmatpush1.msra.mxu0 0.0
    %1971 = vmatprep.subr.mxu0 0.0
    %1972 = vmatpush1.msra.mxu0 0.0
    %1973 = vmatprep.subr.mxu0 0.0
    %1974 = vmatpush1.msra.mxu0 0.0
    %1975 = vmatprep.subr.mxu0 0.0
    %1976 = vmatpush1.msra.mxu0 0.0
    %1977 = vmatprep.subr.mxu0 0.0
    %1978 = vmatpush1.msra.mxu0 0.0
    %1979 = vmatprep.subr.mxu0 0.0
    %1980 = vmatpush1.msra.mxu0 0.0
    %1981 = vmatprep.subr.mxu0 0.0
    %1982 = vmatpush1.msra.mxu0 0.0
    %1983 = vmatprep.subr.mxu0 0.0
    %1984 = vmatpush1.msra.mxu0 0.0
    %1985 = vmatprep.subr.mxu0 0.0
    %1986 = vmatpush1.msra.mxu0 0.0
    %1987 = vmatprep.subr.mxu0 0.0
    %1988 = vmatpush1.msra.mxu0 0.0
    %1989 = vmatprep.subr.mxu0 0.0
    %1990 = vmatpush1.msra.mxu0 0.0
    %1991 = vmatprep.subr.mxu0 0.0
    %1992 = vmatpush1.msra.mxu0 0.0
    %1993 = vmatprep.subr.mxu0 0.0
    %1994 = vmatpush1.msra.mxu0 0.0
    %1995 = vmatprep.subr.mxu0 0.0
    %1996 = vmatpush1.msra.mxu0 0.0
    %1997 = vmatprep.subr.mxu0 0.0
    %1998 = vmatpush1.msra.mxu0 0.0
    %1999 = vmatprep.subr.mxu0 0.0
    %2000 = vmatpush1.msra.mxu0 0.0
    %2001 = vmatprep.subr.mxu0 0.0
    %2002 = vmatpush1.msra.mxu0 0.0
    %2003 = vmatprep.subr.mxu0 0.0
    %2004 = vmatpush1.msra.mxu0 0.0
    %2005 = vmatprep.subr.mxu0 0.0
    %2006 = vmatpush1.msra.mxu0 0.0
    %2007 = vmatprep.subr.mxu0 0.0
    %2008 = vmatpush1.msra.mxu0 0.0
    %2009 = vmatprep.subr.mxu0 0.0
    %2010 = vmatpush1.msra.mxu0 0.0
    %2011 = vmatprep.subr.mxu0 0.0
    %2012 = vmatpush1.msra.mxu0 0.0
    %2013 = vmatprep.subr.mxu0 0.0
    %2014 = vmatpush1.msra.mxu0 0.0
    %2015 = vmatprep.subr.mxu0 0.0
    %2016 = vmatpush1.msra.mxu0 0.0
    %2017 = vmatprep.mubr.f32.mxu0 0.0
    %2018 = vmatmul.mubr.f32.gmra.mrb[0].mxu0 %v1942
    %v2019 = vpop.f32.mrb[0].mxu0
    %v2020 = vadd.f32 0.0, %v2019
    %v2021 = vpop.f32.mrb[0].mxu0
    %2022 = vmatprep.mubr.f32.mxu0 0.0
    %2023 = vmatmul.mubr.f32.gmra.mrb[0].mxu0 %v1945
    %v2024 = vpop.f32.mrb[0].mxu0
    %v2025 = vadd.f32 0.0, %v2024
    %v2026 = vpop.f32.mrb[0].mxu0
    %2027 = vmatprep.mubr.f32.mxu0 0.0
    %2028 = vmatmul.mubr.f32.gmra.mrb[0].mxu0 %v1948
    %v2029 = vpop.f32.mrb[0].mxu0
    %v2030 = vadd.f32 0.0, %v2029
    %v2031 = vpop.f32.mrb[0].mxu0
    %2032 = vmatprep.mubr.f32.mxu0 0.0
    %2033 = vmatmul.mubr.f32.gmra.mrb[0].mxu0 %v1951
    %v2034 = vpop.f32.mrb[0].mxu0
    %v2035 = vadd.f32 0.0, %v2034
    %v2036 = vpop.f32.mrb[0].mxu0
    %2037 = vdwg.mxu0
    %v2039 = vsel %vm1154, %v1448, 0
    %v2042 = vsel %vm1154, %v1453, 0
    %v2045 = vsel %vm1154, %v1529, 0
    %v2048 = vsel %vm1154, %v1534, 0
    %2050 = vmatprep.subr.mxu0 0.0
    %2051 = vmatpush1.msra.mxu0 %v951
    %2052 = vmatprep.subr.mxu0 0.0
    %2053 = vmatpush1.msra.mxu0 %v952
    %2054 = vmatprep.subr.mxu0 0.0
    %2055 = vmatpush1.msra.mxu0 0.0
    %2056 = vmatprep.subr.mxu0 0.0
    %2057 = vmatpush1.msra.mxu0 0.0
    %2058 = vmatprep.subr.mxu0 0.0
    %2059 = vmatpush1.msra.mxu0 0.0
    %2060 = vmatprep.subr.mxu0 0.0
    %2061 = vmatpush1.msra.mxu0 0.0
    %2062 = vmatprep.subr.mxu0 0.0
    %2063 = vmatpush1.msra.mxu0 0.0
    %2064 = vmatprep.subr.mxu0 0.0
    %2065 = vmatpush1.msra.mxu0 0.0
    %2066 = vmatprep.subr.mxu0 0.0
    %2067 = vmatpush1.msra.mxu0 0.0
    %2068 = vmatprep.subr.mxu0 0.0
    %2069 = vmatpush1.msra.mxu0 0.0
    %2070 = vmatprep.subr.mxu0 0.0
    %2071 = vmatpush1.msra.mxu0 0.0
    %2072 = vmatprep.subr.mxu0 0.0
    %2073 = vmatpush1.msra.mxu0 0.0
    %2074 = vmatprep.subr.mxu0 0.0
    %2075 = vmatpush1.msra.mxu0 0.0
    %2076 = vmatprep.subr.mxu0 0.0
    %2077 = vmatpush1.msra.mxu0 0.0
    %2078 = vmatprep.subr.mxu0 0.0
    %2079 = vmatpush1.msra.mxu0 0.0
    %2080 = vmatprep.subr.mxu0 0.0
    %2081 = vmatpush1.msra.mxu0 0.0
    %2082 = vmatprep.subr.mxu0 0.0
    %2083 = vmatpush1.msra.mxu0 0.0
    %2084 = vmatprep.subr.mxu0 0.0
    %2085 = vmatpush1.msra.mxu0 0.0
    %2086 = vmatprep.subr.mxu0 0.0
    %2087 = vmatpush1.msra.mxu0 0.0
    %2088 = vmatprep.subr.mxu0 0.0
    %2089 = vmatpush1.msra.mxu0 0.0
    %2090 = vmatprep.subr.mxu0 0.0
    %2091 = vmatpush1.msra.mxu0 0.0
    %2092 = vmatprep.subr.mxu0 0.0
    %2093 = vmatpush1.msra.mxu0 0.0
    %2094 = vmatprep.subr.mxu0 0.0
    %2095 = vmatpush1.msra.mxu0 0.0
    %2096 = vmatprep.subr.mxu0 0.0
    %2097 = vmatpush1.msra.mxu0 0.0
    %2098 = vmatprep.subr.mxu0 0.0
    %2099 = vmatpush1.msra.mxu0 0.0
    %2100 = vmatprep.subr.mxu0 0.0
    %2101 = vmatpush1.msra.mxu0 0.0
    %2102 = vmatprep.subr.mxu0 0.0
    %2103 = vmatpush1.msra.mxu0 0.0
    %2104 = vmatprep.subr.mxu0 0.0
    %2105 = vmatpush1.msra.mxu0 0.0
    %2106 = vmatprep.subr.mxu0 0.0
    %2107 = vmatpush1.msra.mxu0 0.0
    %2108 = vmatprep.subr.mxu0 0.0
    %2109 = vmatpush1.msra.mxu0 0.0
    %2110 = vmatprep.subr.mxu0 0.0
    %2111 = vmatpush1.msra.mxu0 0.0
    %2112 = vmatprep.subr.mxu0 0.0
    %2113 = vmatpush1.msra.mxu0 0.0
    %2114 = vmatprep.mubr.f32.mxu0 0.0
    %2115 = vmatmul.mubr.f32.gmra.mrb[0].mxu0 %v2039
    %v2116 = vpop.f32.mrb[0].mxu0
    %v2117 = vadd.f32 %v2020, %v2116
    %v2118 = vpop.f32.mrb[0].mxu0
    %2119 = vmatprep.mubr.f32.mxu0 0.0
    %2120 = vmatmul.mubr.f32.gmra.mrb[0].mxu0 %v2042
    %v2121 = vpop.f32.mrb[0].mxu0
    %v2122 = vadd.f32 %v2025, %v2121
    %v2123 = vpop.f32.mrb[0].mxu0
    %2124 = vmatprep.mubr.f32.mxu0 0.0
    %2125 = vmatmul.mubr.f32.gmra.mrb[0].mxu0 %v2045
    %v2126 = vpop.f32.mrb[0].mxu0
    %v2127 = vadd.f32 %v2030, %v2126
    %v2128 = vpop.f32.mrb[0].mxu0
    %2129 = vmatprep.mubr.f32.mxu0 0.0
    %2130 = vmatmul.mubr.f32.gmra.mrb[0].mxu0 %v2048
    %v2131 = vpop.f32.mrb[0].mxu0
    %v2132 = vadd.f32 %v2035, %v2131
    %v2133 = vpop.f32.mrb[0].mxu0
    %2134 = vdwg.mxu0
    %2135 = vrot.lane.b32.xlu0 %v1144, 96
    %v2136 = vpop.permute.xlu0 %2135
    %2137 = vrot.lane.b32.xlu0 %v1145, 96
    %v2138 = vpop.permute.xlu0 %2137
    %2139 = vrot.lane.b32.xlu0 %v1122, 32
    %v2140 = vpop.permute.xlu0 %2139
    %2141 = vrot.lane.b32.xlu0 %v1128, 32
    %v2142 = vpop.permute.xlu0 %2141
    %v2143 = vsel %vm1154, %v2136, 0
    %v2145 = vsel %vm1154, %v2138, 0
    %v2147 = vsel %vm1154, %v2140, 0
    %v2149 = vsel %vm1154, %v2142, 0
    %2151 = vmatprep.subr.mxu0 0.0
    %2152 = vmatpush1.xpose.msra.mxu0 %v2147
    %2153 = vmatprep.subr.mxu0 0.0
    %2154 = vmatpush1.xpose.msra.mxu0 %v2149
    %2155 = vmatprep.subr.mxu0 0.0
    %2156 = vmatpush1.xpose.msra.mxu0 0.0
    %2157 = vmatprep.subr.mxu0 0.0
    %2158 = vmatpush1.xpose.msra.mxu0 0.0
    %2159 = vmatprep.subr.mxu0 0.0
    %2160 = vmatpush1.xpose.msra.mxu0 0.0
    %2161 = vmatprep.subr.mxu0 0.0
    %2162 = vmatpush1.xpose.msra.mxu0 0.0
    %2163 = vmatprep.subr.mxu0 0.0
    %2164 = vmatpush1.xpose.msra.mxu0 0.0
    %2165 = vmatprep.subr.mxu0 0.0
    %2166 = vmatpush1.xpose.msra.mxu0 0.0
    %2167 = vmatprep.subr.mxu0 0.0
    %2168 = vmatpush1.xpose.msra.mxu0 0.0
    %2169 = vmatprep.subr.mxu0 0.0
    %2170 = vmatpush1.xpose.msra.mxu0 0.0
    %2171 = vmatprep.subr.mxu0 0.0
    %2172 = vmatpush1.xpose.msra.mxu0 0.0
    %2173 = vmatprep.subr.mxu0 0.0
    %2174 = vmatpush1.xpose.msra.mxu0 0.0
    %2175 = vmatprep.subr.mxu0 0.0
    %2176 = vmatpush1.xpose.msra.mxu0 0.0
    %2177 = vmatprep.subr.mxu0 0.0
    %2178 = vmatpush1.xpose.msra.mxu0 0.0
    %2179 = vmatprep.subr.mxu0 0.0
    %2180 = vmatpush1.xpose.msra.mxu0 0.0
    %2181 = vmatprep.subr.mxu0 0.0
    %2182 = vmatpush1.xpose.msra.mxu0 0.0
    %2183 = vmatprep.subr.mxu0 0.0
    %2184 = vmatpush1.xpose.msra.mxu0 0.0
    %2185 = vmatprep.subr.mxu0 0.0
    %2186 = vmatpush1.xpose.msra.mxu0 0.0
    %2187 = vmatprep.subr.mxu0 0.0
    %2188 = vmatpush1.xpose.msra.mxu0 0.0
    %2189 = vmatprep.subr.mxu0 0.0
    %2190 = vmatpush1.xpose.msra.mxu0 0.0
    %2191 = vmatprep.subr.mxu0 0.0
    %2192 = vmatpush1.xpose.msra.mxu0 0.0
    %2193 = vmatprep.subr.mxu0 0.0
    %2194 = vmatpush1.xpose.msra.mxu0 0.0
    %2195 = vmatprep.subr.mxu0 0.0
    %2196 = vmatpush1.xpose.msra.mxu0 0.0
    %2197 = vmatprep.subr.mxu0 0.0
    %2198 = vmatpush1.xpose.msra.mxu0 0.0
    %2199 = vmatprep.subr.mxu0 0.0
    %2200 = vmatpush1.xpose.msra.mxu0 0.0
    %2201 = vmatprep.subr.mxu0 0.0
    %2202 = vmatpush1.xpose.msra.mxu0 0.0
    %2203 = vmatprep.subr.mxu0 0.0
    %2204 = vmatpush1.xpose.msra.mxu0 0.0
    %2205 = vmatprep.subr.mxu0 0.0
    %2206 = vmatpush1.xpose.msra.mxu0 0.0
    %2207 = vmatprep.subr.mxu0 0.0
    %2208 = vmatpush1.xpose.msra.mxu0 0.0
    %2209 = vmatprep.subr.mxu0 0.0
    %2210 = vmatpush1.xpose.msra.mxu0 0.0
    %2211 = vmatprep.subr.mxu0 0.0
    %2212 = vmatpush1.xpose.msra.mxu0 0.0
    %2213 = vmatprep.subr.mxu0 0.0
    %2214 = vmatpush1.xpose.msra.mxu0 0.0
    %2215 = vmatprep.mubr.f32.mxu0 0.0
    %2216 = vmatmul.mubr.f32.gmra.mrb[0].mxu0 %v2143
    %v2217 = vpop.f32.mrb[0].mxu0
    %v2218 = vadd.f32 0.0, %v2217
    %v2219 = vpop.f32.mrb[0].mxu0
    %2220 = vmatprep.mubr.f32.mxu0 0.0
    %2221 = vmatmul.mubr.f32.gmra.mrb[0].mxu0 %v2145
    %v2222 = vpop.f32.mrb[0].mxu0
    %v2223 = vadd.f32 0.0, %v2222
    %v2224 = vpop.f32.mrb[0].mxu0
    %2225 = vdwg.mxu0
    %2226 = vrot.lane.b32.xlu0 %v1146, 96
    %v2227 = vpop.permute.xlu0 %2226
    %2228 = vrot.lane.b32.xlu0 %v1147, 96
    %v2229 = vpop.permute.xlu0 %2228
    %2230 = vrot.lane.b32.xlu0 %v1134, 32
    %v2231 = vpop.permute.xlu0 %2230
    %2232 = vrot.lane.b32.xlu0 %v1140, 32
    %v2233 = vpop.permute.xlu0 %2232
    %v2234 = vsel %vm1154, %v2227, 0
    %v2236 = vsel %vm1154, %v2229, 0
    %v2238 = vsel %vm1154, %v2231, 0
    %v2240 = vsel %vm1154, %v2233, 0
    %2242 = vmatprep.subr.mxu0 0.0
    %2243 = vmatpush1.xpose.msra.mxu0 %v2238
    %2244 = vmatprep.subr.mxu0 0.0
    %2245 = vmatpush1.xpose.msra.mxu0 %v2240
    %2246 = vmatprep.subr.mxu0 0.0
    %2247 = vmatpush1.xpose.msra.mxu0 0.0
    %2248 = vmatprep.subr.mxu0 0.0
    %2249 = vmatpush1.xpose.msra.mxu0 0.0
    %2250 = vmatprep.subr.mxu0 0.0
    %2251 = vmatpush1.xpose.msra.mxu0 0.0
    %2252 = vmatprep.subr.mxu0 0.0
    %2253 = vmatpush1.xpose.msra.mxu0 0.0
    %2254 = vmatprep.subr.mxu0 0.0
    %2255 = vmatpush1.xpose.msra.mxu0 0.0
    %2256 = vmatprep.subr.mxu0 0.0
    %2257 = vmatpush1.xpose.msra.mxu0 0.0
    %2258 = vmatprep.subr.mxu0 0.0
    %2259 = vmatpush1.xpose.msra.mxu0 0.0
    %2260 = vmatprep.subr.mxu0 0.0
    %2261 = vmatpush1.xpose.msra.mxu0 0.0
    %2262 = vmatprep.subr.mxu0 0.0
    %2263 = vmatpush1.xpose.msra.mxu0 0.0
    %2264 = vmatprep.subr.mxu0 0.0
    %2265 = vmatpush1.xpose.msra.mxu0 0.0
    %2266 = vmatprep.subr.mxu0 0.0
    %2267 = vmatpush1.xpose.msra.mxu0 0.0
    %2268 = vmatprep.subr.mxu0 0.0
    %2269 = vmatpush1.xpose.msra.mxu0 0.0
    %2270 = vmatprep.subr.mxu0 0.0
    %2271 = vmatpush1.xpose.msra.mxu0 0.0
    %2272 = vmatprep.subr.mxu0 0.0
    %2273 = vmatpush1.xpose.msra.mxu0 0.0
    %2274 = vmatprep.subr.mxu0 0.0
    %2275 = vmatpush1.xpose.msra.mxu0 0.0
    %2276 = vmatprep.subr.mxu0 0.0
    %2277 = vmatpush1.xpose.msra.mxu0 0.0
    %2278 = vmatprep.subr.mxu0 0.0
    %2279 = vmatpush1.xpose.msra.mxu0 0.0
    %2280 = vmatprep.subr.mxu0 0.0
    %2281 = vmatpush1.xpose.msra.mxu0 0.0
    %2282 = vmatprep.subr.mxu0 0.0
    %2283 = vmatpush1.xpose.msra.mxu0 0.0
    %2284 = vmatprep.subr.mxu0 0.0
    %2285 = vmatpush1.xpose.msra.mxu0 0.0
    %2286 = vmatprep.subr.mxu0 0.0
    %2287 = vmatpush1.xpose.msra.mxu0 0.0
    %2288 = vmatprep.subr.mxu0 0.0
    %2289 = vmatpush1.xpose.msra.mxu0 0.0
    %2290 = vmatprep.subr.mxu0 0.0
    %2291 = vmatpush1.xpose.msra.mxu0 0.0
    %2292 = vmatprep.subr.mxu0 0.0
    %2293 = vmatpush1.xpose.msra.mxu0 0.0
    %2294 = vmatprep.subr.mxu0 0.0
    %2295 = vmatpush1.xpose.msra.mxu0 0.0
    %2296 = vmatprep.subr.mxu0 0.0
    %2297 = vmatpush1.xpose.msra.mxu0 0.0
    %2298 = vmatprep.subr.mxu0 0.0
    %2299 = vmatpush1.xpose.msra.mxu0 0.0
    %2300 = vmatprep.subr.mxu0 0.0
    %2301 = vmatpush1.xpose.msra.mxu0 0.0
    %2302 = vmatprep.subr.mxu0 0.0
    %2303 = vmatpush1.xpose.msra.mxu0 0.0
    %2304 = vmatprep.subr.mxu0 0.0
    %2305 = vmatpush1.xpose.msra.mxu0 0.0
    %2306 = vmatprep.mubr.f32.mxu0 0.0
    %2307 = vmatmul.mubr.f32.gmra.mrb[0].mxu0 %v2234
    %v2308 = vpop.f32.mrb[0].mxu0
    %v2309 = vadd.f32 0.0, %v2308
    %v2310 = vpop.f32.mrb[0].mxu0
    %2311 = vmatprep.mubr.f32.mxu0 0.0
    %2312 = vmatmul.mubr.f32.gmra.mrb[0].mxu0 %v2236
    %v2313 = vpop.f32.mrb[0].mxu0
    %v2314 = vadd.f32 0.0, %v2313
    %v2315 = vpop.f32.mrb[0].mxu0
    %2316 = vdwg.mxu0
    %v2317 = vsel %vm1154, %v2218, -inf
    %2318 = vmax.xlane.f32.xlu0 %v2317
    %v2319 = vpop.xlane.xlu0 %2318
    %v2320 = vsel %vm1154, %v2223, -inf
    %2321 = vmax.xlane.f32.xlu0 %v2320
    %v2322 = vpop.xlane.xlu0 %2321
    %v2323 = vsel %vm1154, %v2309, -inf
    %2324 = vmax.xlane.f32.xlu0 %v2323
    %v2325 = vpop.xlane.xlu0 %2324
    %v2326 = vsel %vm1154, %v2314, -inf
    %2327 = vmax.xlane.f32.xlu0 %v2326
    %v2328 = vpop.xlane.xlu0 %2327
    %v2329 = vsub.f32 %v2218, %v2319
    %v2330 = vsub.f32 %v2223, %v2322
    %v2331 = vsub.f32 %v2309, %v2325
    %v2332 = vsub.f32 %v2314, %v2328
    %v2333 = vmul.f32 %v2329, 1.442695
    %v2334 = vpow.pop %v2333
    %v2335 = vmul.f32 %v2330, 1.442695
    %v2336 = vpow.pop %v2335
    %v2337 = vmul.f32 %v2331, 1.442695
    %v2338 = vpow.pop %v2337
    %v2339 = vmul.f32 %v2332, 1.442695
    %v2340 = vpow.pop %v2339
    %v2341 = vsel %vm1154, %v2334, 0.0
    %2342 = vadd.xlane.f32.xlu0 %v2341
    %v2343 = vpop.xlane.xlu0 %2342
    %v2344 = vsel %vm1154, %v2336, 0.0
    %2345 = vadd.xlane.f32.xlu0 %v2344
    %v2346 = vpop.xlane.xlu0 %2345
    %v2347 = vsel %vm1154, %v2338, 0.0
    %2348 = vadd.xlane.f32.xlu0 %v2347
    %v2349 = vpop.xlane.xlu0 %2348
    %v2350 = vsel %vm1154, %v2340, 0.0
    %2351 = vadd.xlane.f32.xlu0 %v2350
    %v2352 = vpop.xlane.xlu0 %2351
    %v2353 = vrcp.pop %v2343
    %v2354 = vrcp.pop %v2346
    %v2355 = vrcp.pop %v2349
    %v2356 = vrcp.pop %v2352
    %v2357 = vmul.f32 %v2334, %v2353
    %v2358 = vmul.f32 %v2336, %v2354
    %v2359 = vmul.f32 %v2338, %v2355
    %v2360 = vmul.f32 %v2340, %v2356
    %2361 = vrot.lane.b32.xlu0 %v1124, 96
    %v2362 = vpop.permute.xlu0 %2361
    %2363 = vrot.lane.b32.xlu0 %v1130, 96
    %v2364 = vpop.permute.xlu0 %2363
    %v2368 = vsel %vm1154, %v2357, 0
    %v2371 = vsel %vm1154, %v2358, 0
    %2373 = vmatprep.subr.mxu0 0.0
    %2374 = vmatpush1.msra.mxu0 %v2362
    %2375 = vmatprep.subr.mxu0 0.0
    %2376 = vmatpush1.msra.mxu0 %v2364
    %2377 = vmatprep.subr.mxu0 0.0
    %2378 = vmatpush1.msra.mxu0 0.0
    %2379 = vmatprep.subr.mxu0 0.0
    %2380 = vmatpush1.msra.mxu0 0.0
    %2381 = vmatprep.subr.mxu0 0.0
    %2382 = vmatpush1.msra.mxu0 0.0
    %2383 = vmatprep.subr.mxu0 0.0
    %2384 = vmatpush1.msra.mxu0 0.0
    %2385 = vmatprep.subr.mxu0 0.0
    %2386 = vmatpush1.msra.mxu0 0.0
    %2387 = vmatprep.subr.mxu0 0.0
    %2388 = vmatpush1.msra.mxu0 0.0
    %2389 = vmatprep.subr.mxu0 0.0
    %2390 = vmatpush1.msra.mxu0 0.0
    %2391 = vmatprep.subr.mxu0 0.0
    %2392 = vmatpush1.msra.mxu0 0.0
    %2393 = vmatprep.subr.mxu0 0.0
    %2394 = vmatpush1.msra.mxu0 0.0
    %2395 = vmatprep.subr.mxu0 0.0
    %2396 = vmatpush1.msra.mxu0 0.0
    %2397 = vmatprep.subr.mxu0 0.0
    %2398 = vmatpush1.msra.mxu0 0.0
    %2399 = vmatprep.subr.mxu0 0.0
    %2400 = vmatpush1.msra.mxu0 0.0
    %2401 = vmatprep.subr.mxu0 0.0
    %2402 = vmatpush1.msra.mxu0 0.0
    %2403 = vmatprep.subr.mxu0 0.0
    %2404 = vmatpush1.msra.mxu0 0.0
    %2405 = vmatprep.subr.mxu0 0.0
    %2406 = vmatpush1.msra.mxu0 0.0
    %2407 = vmatprep.subr.mxu0 0.0
    %2408 = vmatpush1.msra.mxu0 0.0
    %2409 = vmatprep.subr.mxu0 0.0
    %2410 = vmatpush1.msra.mxu0 0.0
    %2411 = vmatprep.subr.mxu0 0.0
    %2412 = vmatpush1.msra.mxu0 0.0
    %2413 = vmatprep.subr.mxu0 0.0
    %2414 = vmatpush1.msra.mxu0 0.0
    %2415 = vmatprep.subr.mxu0 0.0
    %2416 = vmatpush1.msra.mxu0 0.0
    %2417 = vmatprep.subr.mxu0 0.0
    %2418 = vmatpush1.msra.mxu0 0.0
    %2419 = vmatprep.subr.mxu0 0.0
    %2420 = vmatpush1.msra.mxu0 0.0
    %2421 = vmatprep.subr.mxu0 0.0
    %2422 = vmatpush1.msra.mxu0 0.0
    %2423 = vmatprep.subr.mxu0 0.0
    %2424 = vmatpush1.msra.mxu0 0.0
    %2425 = vmatprep.subr.mxu0 0.0
    %2426 = vmatpush1.msra.mxu0 0.0
    %2427 = vmatprep.subr.mxu0 0.0
    %2428 = vmatpush1.msra.mxu0 0.0
    %2429 = vmatprep.subr.mxu0 0.0
    %2430 = vmatpush1.msra.mxu0 0.0
    %2431 = vmatprep.subr.mxu0 0.0
    %2432 = vmatpush1.msra.mxu0 0.0
    %2433 = vmatprep.subr.mxu0 0.0
    %2434 = vmatpush1.msra.mxu0 0.0
    %2435 = vmatprep.subr.mxu0 0.0
    %2436 = vmatpush1.msra.mxu0 0.0
    %2437 = vmatprep.mubr.f32.mxu0 0.0
    %2438 = vmatmul.mubr.f32.gmra.mrb[0].mxu0 %v2368
    %v2439 = vpop.f32.mrb[0].mxu0
    %v2440 = vadd.f32 0.0, %v2439
    %v2441 = vpop.f32.mrb[0].mxu0
    %2442 = vmatprep.mubr.f32.mxu0 0.0
    %2443 = vmatmul.mubr.f32.gmra.mrb[0].mxu0 %v2371
    %v2444 = vpop.f32.mrb[0].mxu0
    %v2445 = vadd.f32 0.0, %v2444
    %v2446 = vpop.f32.mrb[0].mxu0
    %2447 = vdwg.mxu0
    %2448 = vrot.lane.b32.xlu0 %v1136, 96
    %v2449 = vpop.permute.xlu0 %2448
    %2450 = vrot.lane.b32.xlu0 %v1142, 96
    %v2451 = vpop.permute.xlu0 %2450
    %v2455 = vsel %vm1154, %v2359, 0
    %v2458 = vsel %vm1154, %v2360, 0
    %2460 = vmatprep.subr.mxu0 0.0
    %2461 = vmatpush1.msra.mxu0 %v2449
    %2462 = vmatprep.subr.mxu0 0.0
    %2463 = vmatpush1.msra.mxu0 %v2451
    %2464 = vmatprep.subr.mxu0 0.0
    %2465 = vmatpush1.msra.mxu0 0.0
    %2466 = vmatprep.subr.mxu0 0.0
    %2467 = vmatpush1.msra.mxu0 0.0
    %2468 = vmatprep.subr.mxu0 0.0
    %2469 = vmatpush1.msra.mxu0 0.0
    %2470 = vmatprep.subr.mxu0 0.0
    %2471 = vmatpush1.msra.mxu0 0.0
    %2472 = vmatprep.subr.mxu0 0.0
    %2473 = vmatpush1.msra.mxu0 0.0
    %2474 = vmatprep.subr.mxu0 0.0
    %2475 = vmatpush1.msra.mxu0 0.0
    %2476 = vmatprep.subr.mxu0 0.0
    %2477 = vmatpush1.msra.mxu0 0.0
    %2478 = vmatprep.subr.mxu0 0.0
    %2479 = vmatpush1.msra.mxu0 0.0
    %2480 = vmatprep.subr.mxu0 0.0
    %2481 = vmatpush1.msra.mxu0 0.0
    %2482 = vmatprep.subr.mxu0 0.0
    %2483 = vmatpush1.msra.mxu0 0.0
    %2484 = vmatprep.subr.mxu0 0.0
    %2485 = vmatpush1.msra.mxu0 0.0
    %2486 = vmatprep.subr.mxu0 0.0
    %2487 = vmatpush1.msra.mxu0 0.0
    %2488 = vmatprep.subr.mxu0 0.0
    %2489 = vmatpush1.msra.mxu0 0.0
    %2490 = vmatprep.subr.mxu0 0.0
    %2491 = vmatpush1.msra.mxu0 0.0
    %2492 = vmatprep.subr.mxu0 0.0
    %2493 = vmatpush1.msra.mxu0 0.0
    %2494 = vmatprep.subr.mxu0 0.0
    %2495 = vmatpush1.msra.mxu0 0.0
    %2496 = vmatprep.subr.mxu0 0.0
    %2497 = vmatpush1.msra.mxu0 0.0
    %2498 = vmatprep.subr.mxu0 0.0
    %2499 = vmatpush1.msra.mxu0 0.0
    %2500 = vmatprep.subr.mxu0 0.0
    %2501 = vmatpush1.msra.mxu0 0.0
    %2502 = vmatprep.subr.mxu0 0.0
    %2503 = vmatpush1.msra.mxu0 0.0
    %2504 = vmatprep.subr.mxu0 0.0
    %2505 = vmatpush1.msra.mxu0 0.0
    %2506 = vmatprep.subr.mxu0 0.0
    %2507 = vmatpush1.msra.mxu0 0.0
    %2508 = vmatprep.subr.mxu0 0.0
    %2509 = vmatpush1.msra.mxu0 0.0
    %2510 = vmatprep.subr.mxu0 0.0
    %2511 = vmatpush1.msra.mxu0 0.0
    %2512 = vmatprep.subr.mxu0 0.0
    %2513 = vmatpush1.msra.mxu0 0.0
    %2514 = vmatprep.subr.mxu0 0.0
    %2515 = vmatpush1.msra.mxu0 0.0
    %2516 = vmatprep.subr.mxu0 0.0
    %2517 = vmatpush1.msra.mxu0 0.0
    %2518 = vmatprep.subr.mxu0 0.0
    %2519 = vmatpush1.msra.mxu0 0.0
    %2520 = vmatprep.subr.mxu0 0.0
    %2521 = vmatpush1.msra.mxu0 0.0
    %2522 = vmatprep.subr.mxu0 0.0
    %2523 = vmatpush1.msra.mxu0 0.0
    %2524 = vmatprep.mubr.f32.mxu0 0.0
    %2525 = vmatmul.mubr.f32.gmra.mrb[0].mxu0 %v2455
    %v2526 = vpop.f32.mrb[0].mxu0
    %v2527 = vadd.f32 0.0, %v2526
    %v2528 = vpop.f32.mrb[0].mxu0
    %2529 = vmatprep.mubr.f32.mxu0 0.0
    %2530 = vmatmul.mubr.f32.gmra.mrb[0].mxu0 %v2458
    %v2531 = vpop.f32.mrb[0].mxu0
    %v2532 = vadd.f32 0.0, %v2531
    %v2533 = vpop.f32.mrb[0].mxu0
    %2534 = vdwg.mxu0
    %v2536 = vsel %vm1154, %v2440, 0
    %v2539 = vsel %vm1154, %v2445, 0
    %v2542 = vsel %vm1154, %v2527, 0
    %v2545 = vsel %vm1154, %v2532, 0
    %2547 = vmatprep.subr.mxu0 0.0
    %2548 = vmatpush1.msra.mxu0 %v955
    %2549 = vmatprep.subr.mxu0 0.0
    %2550 = vmatpush1.msra.mxu0 %v956
    %2551 = vmatprep.subr.mxu0 0.0
    %2552 = vmatpush1.msra.mxu0 0.0
    %2553 = vmatprep.subr.mxu0 0.0
    %2554 = vmatpush1.msra.mxu0 0.0
    %2555 = vmatprep.subr.mxu0 0.0
    %2556 = vmatpush1.msra.mxu0 0.0
    %2557 = vmatprep.subr.mxu0 0.0
    %2558 = vmatpush1.msra.mxu0 0.0
    %2559 = vmatprep.subr.mxu0 0.0
    %2560 = vmatpush1.msra.mxu0 0.0
    %2561 = vmatprep.subr.mxu0 0.0
    %2562 = vmatpush1.msra.mxu0 0.0
    %2563 = vmatprep.subr.mxu0 0.0
    %2564 = vmatpush1.msra.mxu0 0.0
    %2565 = vmatprep.subr.mxu0 0.0
    %2566 = vmatpush1.msra.mxu0 0.0
    %2567 = vmatprep.subr.mxu0 0.0
    %2568 = vmatpush1.msra.mxu0 0.0
    %2569 = vmatprep.subr.mxu0 0.0
    %2570 = vmatpush1.msra.mxu0 0.0
    %2571 = vmatprep.subr.mxu0 0.0
    %2572 = vmatpush1.msra.mxu0 0.0
    %2573 = vmatprep.subr.mxu0 0.0
    %2574 = vmatpush1.msra.mxu0 0.0
    %2575 = vmatprep.subr.mxu0 0.0
    %2576 = vmatpush1.msra.mxu0 0.0
    %2577 = vmatprep.subr.mxu0 0.0
    %2578 = vmatpush1.msra.mxu0 0.0
    %2579 = vmatprep.subr.mxu0 0.0
    %2580 = vmatpush1.msra.mxu0 0.0
    %2581 = vmatprep.subr.mxu0 0.0
    %2582 = vmatpush1.msra.mxu0 0.0
    %2583 = vmatprep.subr.mxu0 0.0
    %2584 = vmatpush1.msra.mxu0 0.0
    %2585 = vmatprep.subr.mxu0 0.0
    %2586 = vmatpush1.msra.mxu0 0.0
    %2587 = vmatprep.subr.mxu0 0.0
    %2588 = vmatpush1.msra.mxu0 0.0
    %2589 = vmatprep.subr.mxu0 0.0
    %2590 = vmatpush1.msra.mxu0 0.0
    %2591 = vmatprep.subr.mxu0 0.0
    %2592 = vmatpush1.msra.mxu0 0.0
    %2593 = vmatprep.subr.mxu0 0.0
    %2594 = vmatpush1.msra.mxu0 0.0
    %2595 = vmatprep.subr.mxu0 0.0
    %2596 = vmatpush1.msra.mxu0 0.0
    %2597 = vmatprep.subr.mxu0 0.0
    %2598 = vmatpush1.msra.mxu0 0.0
    %2599 = vmatprep.subr.mxu0 0.0
    %2600 = vmatpush1.msra.mxu0 0.0
    %2601 = vmatprep.subr.mxu0 0.0
    %2602 = vmatpush1.msra.mxu0 0.0
    %2603 = vmatprep.subr.mxu0 0.0
    %2604 = vmatpush1.msra.mxu0 0.0
    %2605 = vmatprep.subr.mxu0 0.0
    %2606 = vmatpush1.msra.mxu0 0.0
    %2607 = vmatprep.subr.mxu0 0.0
    %2608 = vmatpush1.msra.mxu0 0.0
    %2609 = vmatprep.subr.mxu0 0.0
    %2610 = vmatpush1.msra.mxu0 0.0
    %2611 = vmatprep.mubr.f32.mxu0 0.0
    %2612 = vmatmul.mubr.f32.gmra.mrb[0].mxu0 %v2536
    %v2613 = vpop.f32.mrb[0].mxu0
    %v2614 = vadd.f32 0.0, %v2613
    %v2615 = vpop.f32.mrb[0].mxu0
    %2616 = vmatprep.mubr.f32.mxu0 0.0
    %2617 = vmatmul.mubr.f32.gmra.mrb[0].mxu0 %v2539
    %v2618 = vpop.f32.mrb[0].mxu0
    %v2619 = vadd.f32 0.0, %v2618
    %v2620 = vpop.f32.mrb[0].mxu0
    %2621 = vmatprep.mubr.f32.mxu0 0.0
    %2622 = vmatmul.mubr.f32.gmra.mrb[0].mxu0 %v2542
    %v2623 = vpop.f32.mrb[0].mxu0
    %v2624 = vadd.f32 0.0, %v2623
    %v2625 = vpop.f32.mrb[0].mxu0
    %2626 = vmatprep.mubr.f32.mxu0 0.0
    %2627 = vmatmul.mubr.f32.gmra.mrb[0].mxu0 %v2545
    %v2628 = vpop.f32.mrb[0].mxu0
    %v2629 = vadd.f32 0.0, %v2628
    %v2630 = vpop.f32.mrb[0].mxu0
    %2631 = vdwg.mxu0
    %v2632 = vadd.f32 %v2117, %v2614
    %v2633 = vadd.f32 %v2122, %v2619
    %v2634 = vadd.f32 %v2127, %v2624
    %v2635 = vadd.f32 %v2132, %v2629
    %2636 = vrot.lane.b32.xlu0 %v1144, 80
    %v2637 = vpop.permute.xlu0 %2636
    %2638 = vrot.lane.b32.xlu0 %v1145, 80
    %v2639 = vpop.permute.xlu0 %2638
    %2640 = vrot.lane.b32.xlu0 %v1122, 16
    %v2641 = vpop.permute.xlu0 %2640
    %2642 = vrot.lane.b32.xlu0 %v1128, 16
    %v2643 = vpop.permute.xlu0 %2642
    %v2644 = vsel %vm1154, %v2637, 0
    %v2646 = vsel %vm1154, %v2639, 0
    %v2648 = vsel %vm1154, %v2641, 0
    %v2650 = vsel %vm1154, %v2643, 0
    %2652 = vmatprep.subr.mxu0 0.0
    %2653 = vmatpush1.xpose.msra.mxu0 %v2648
    %2654 = vmatprep.subr.mxu0 0.0
    %2655 = vmatpush1.xpose.msra.mxu0 %v2650
    %2656 = vmatprep.subr.mxu0 0.0
    %2657 = vmatpush1.xpose.msra.mxu0 0.0
    %2658 = vmatprep.subr.mxu0 0.0
    %2659 = vmatpush1.xpose.msra.mxu0 0.0
    %2660 = vmatprep.subr.mxu0 0.0
    %2661 = vmatpush1.xpose.msra.mxu0 0.0
    %2662 = vmatprep.subr.mxu0 0.0
    %2663 = vmatpush1.xpose.msra.mxu0 0.0
    %2664 = vmatprep.subr.mxu0 0.0
    %2665 = vmatpush1.xpose.msra.mxu0 0.0
    %2666 = vmatprep.subr.mxu0 0.0
    %2667 = vmatpush1.xpose.msra.mxu0 0.0
    %2668 = vmatprep.subr.mxu0 0.0
    %2669 = vmatpush1.xpose.msra.mxu0 0.0
    %2670 = vmatprep.subr.mxu0 0.0
    %2671 = vmatpush1.xpose.msra.mxu0 0.0
    %2672 = vmatprep.subr.mxu0 0.0
    %2673 = vmatpush1.xpose.msra.mxu0 0.0
    %2674 = vmatprep.subr.mxu0 0.0
    %2675 = vmatpush1.xpose.msra.mxu0 0.0
    %2676 = vmatprep.subr.mxu0 0.0
    %2677 = vmatpush1.xpose.msra.mxu0 0.0
    %2678 = vmatprep.subr.mxu0 0.0
    %2679 = vmatpush1.xpose.msra.mxu0 0.0
    %2680 = vmatprep.subr.mxu0 0.0
    %2681 = vmatpush1.xpose.msra.mxu0 0.0
    %2682 = vmatprep.subr.mxu0 0.0
    %2683 = vmatpush1.xpose.msra.mxu0 0.0
    %2684 = vmatprep.subr.mxu0 0.0
    %2685 = vmatpush1.xpose.msra.mxu0 0.0
    %2686 = vmatprep.subr.mxu0 0.0
    %2687 = vmatpush1.xpose.msra.mxu0 0.0
    %2688 = vmatprep.subr.mxu0 0.0
    %2689 = vmatpush1.xpose.msra.mxu0 0.0
    %2690 = vmatprep.subr.mxu0 0.0
    %2691 = vmatpush1.xpose.msra.mxu0 0.0
    %2692 = vmatprep.subr.mxu0 0.0
    %2693 = vmatpush1.xpose.msra.mxu0 0.0
    %2694 = vmatprep.subr.mxu0 0.0
    %2695 = vmatpush1.xpose.msra.mxu0 0.0
    %2696 = vmatprep.subr.mxu0 0.0
    %2697 = vmatpush1.xpose.msra.mxu0 0.0
    %2698 = vmatprep.subr.mxu0 0.0
    %2699 = vmatpush1.xpose.msra.mxu0 0.0
    %2700 = vmatprep.subr.mxu0 0.0
    %2701 = vmatpush1.xpose.msra.mxu0 0.0
    %2702 = vmatprep.subr.mxu0 0.0
    %2703 = vmatpush1.xpose.msra.mxu0 0.0
    %2704 = vmatprep.subr.mxu0 0.0
    %2705 = vmatpush1.xpose.msra.mxu0 0.0
    %2706 = vmatprep.subr.mxu0 0.0
    %2707 = vmatpush1.xpose.msra.mxu0 0.0
    %2708 = vmatprep.subr.mxu0 0.0
    %2709 = vmatpush1.xpose.msra.mxu0 0.0
    %2710 = vmatprep.subr.mxu0 0.0
    %2711 = vmatpush1.xpose.msra.mxu0 0.0
    %2712 = vmatprep.subr.mxu0 0.0
    %2713 = vmatpush1.xpose.msra.mxu0 0.0
    %2714 = vmatprep.subr.mxu0 0.0
    %2715 = vmatpush1.xpose.msra.mxu0 0.0
    %2716 = vmatprep.mubr.f32.mxu0 0.0
    %2717 = vmatmul.mubr.f32.gmra.mrb[0].mxu0 %v2644
    %v2718 = vpop.f32.mrb[0].mxu0
    %v2719 = vadd.f32 0.0, %v2718
    %v2720 = vpop.f32.mrb[0].mxu0
    %2721 = vmatprep.mubr.f32.mxu0 0.0
    %2722 = vmatmul.mubr.f32.gmra.mrb[0].mxu0 %v2646
    %v2723 = vpop.f32.mrb[0].mxu0
    %v2724 = vadd.f32 0.0, %v2723
    %v2725 = vpop.f32.mrb[0].mxu0
    %2726 = vdwg.mxu0
    %2727 = vrot.lane.b32.xlu0 %v1146, 80
    %v2728 = vpop.permute.xlu0 %2727
    %2729 = vrot.lane.b32.xlu0 %v1147, 80
    %v2730 = vpop.permute.xlu0 %2729
    %2731 = vrot.lane.b32.xlu0 %v1134, 16
    %v2732 = vpop.permute.xlu0 %2731
    %2733 = vrot.lane.b32.xlu0 %v1140, 16
    %v2734 = vpop.permute.xlu0 %2733
    %v2735 = vsel %vm1154, %v2728, 0
    %v2737 = vsel %vm1154, %v2730, 0
    %v2739 = vsel %vm1154, %v2732, 0
    %v2741 = vsel %vm1154, %v2734, 0
    %2743 = vmatprep.subr.mxu0 0.0
    %2744 = vmatpush1.xpose.msra.mxu0 %v2739
    %2745 = vmatprep.subr.mxu0 0.0
    %2746 = vmatpush1.xpose.msra.mxu0 %v2741
    %2747 = vmatprep.subr.mxu0 0.0
    %2748 = vmatpush1.xpose.msra.mxu0 0.0
    %2749 = vmatprep.subr.mxu0 0.0
    %2750 = vmatpush1.xpose.msra.mxu0 0.0
    %2751 = vmatprep.subr.mxu0 0.0
    %2752 = vmatpush1.xpose.msra.mxu0 0.0
    %2753 = vmatprep.subr.mxu0 0.0
    %2754 = vmatpush1.xpose.msra.mxu0 0.0
    %2755 = vmatprep.subr.mxu0 0.0
    %2756 = vmatpush1.xpose.msra.mxu0 0.0
    %2757 = vmatprep.subr.mxu0 0.0
    %2758 = vmatpush1.xpose.msra.mxu0 0.0
    %2759 = vmatprep.subr.mxu0 0.0
    %2760 = vmatpush1.xpose.msra.mxu0 0.0
    %2761 = vmatprep.subr.mxu0 0.0
    %2762 = vmatpush1.xpose.msra.mxu0 0.0
    %2763 = vmatprep.subr.mxu0 0.0
    %2764 = vmatpush1.xpose.msra.mxu0 0.0
    %2765 = vmatprep.subr.mxu0 0.0
    %2766 = vmatpush1.xpose.msra.mxu0 0.0
    %2767 = vmatprep.subr.mxu0 0.0
    %2768 = vmatpush1.xpose.msra.mxu0 0.0
    %2769 = vmatprep.subr.mxu0 0.0
    %2770 = vmatpush1.xpose.msra.mxu0 0.0
    %2771 = vmatprep.subr.mxu0 0.0
    %2772 = vmatpush1.xpose.msra.mxu0 0.0
    %2773 = vmatprep.subr.mxu0 0.0
    %2774 = vmatpush1.xpose.msra.mxu0 0.0
    %2775 = vmatprep.subr.mxu0 0.0
    %2776 = vmatpush1.xpose.msra.mxu0 0.0
    %2777 = vmatprep.subr.mxu0 0.0
    %2778 = vmatpush1.xpose.msra.mxu0 0.0
    %2779 = vmatprep.subr.mxu0 0.0
    %2780 = vmatpush1.xpose.msra.mxu0 0.0
    %2781 = vmatprep.subr.mxu0 0.0
    %2782 = vmatpush1.xpose.msra.mxu0 0.0
    %2783 = vmatprep.subr.mxu0 0.0
    %2784 = vmatpush1.xpose.msra.mxu0 0.0
    %2785 = vmatprep.subr.mxu0 0.0
    %2786 = vmatpush1.xpose.msra.mxu0 0.0
    %2787 = vmatprep.subr.mxu0 0.0
    %2788 = vmatpush1.xpose.msra.mxu0 0.0
    %2789 = vmatprep.subr.mxu0 0.0
    %2790 = vmatpush1.xpose.msra.mxu0 0.0
    %2791 = vmatprep.subr.mxu0 0.0
    %2792 = vmatpush1.xpose.msra.mxu0 0.0
    %2793 = vmatprep.subr.mxu0 0.0
    %2794 = vmatpush1.xpose.msra.mxu0 0.0
    %2795 = vmatprep.subr.mxu0 0.0
    %2796 = vmatpush1.xpose.msra.mxu0 0.0
    %2797 = vmatprep.subr.mxu0 0.0
    %2798 = vmatpush1.xpose.msra.mxu0 0.0
    %2799 = vmatprep.subr.mxu0 0.0
    %2800 = vmatpush1.xpose.msra.mxu0 0.0
    %2801 = vmatprep.subr.mxu0 0.0
    %2802 = vmatpush1.xpose.msra.mxu0 0.0
    %2803 = vmatprep.subr.mxu0 0.0
    %2804 = vmatpush1.xpose.msra.mxu0 0.0
    %2805 = vmatprep.subr.mxu0 0.0
    %2806 = vmatpush1.xpose.msra.mxu0 0.0
    %2807 = vmatprep.mubr.f32.mxu0 0.0
    %2808 = vmatmul.mubr.f32.gmra.mrb[0].mxu0 %v2735
    %v2809 = vpop.f32.mrb[0].mxu0
    %v2810 = vadd.f32 0.0, %v2809
    %v2811 = vpop.f32.mrb[0].mxu0
    %2812 = vmatprep.mubr.f32.mxu0 0.0
    %2813 = vmatmul.mubr.f32.gmra.mrb[0].mxu0 %v2737
    %v2814 = vpop.f32.mrb[0].mxu0
    %v2815 = vadd.f32 0.0, %v2814
    %v2816 = vpop.f32.mrb[0].mxu0
    %2817 = vdwg.mxu0
    %v2818 = vsel %vm1154, %v2719, -inf
    %2819 = vmax.xlane.f32.xlu0 %v2818
    %v2820 = vpop.xlane.xlu0 %2819
    %v2821 = vsel %vm1154, %v2724, -inf
    %2822 = vmax.xlane.f32.xlu0 %v2821
    %v2823 = vpop.xlane.xlu0 %2822
    %v2824 = vsel %vm1154, %v2810, -inf
    %2825 = vmax.xlane.f32.xlu0 %v2824
    %v2826 = vpop.xlane.xlu0 %2825
    %v2827 = vsel %vm1154, %v2815, -inf
    %2828 = vmax.xlane.f32.xlu0 %v2827
    %v2829 = vpop.xlane.xlu0 %2828
    %v2830 = vsub.f32 %v2719, %v2820
    %v2831 = vsub.f32 %v2724, %v2823
    %v2832 = vsub.f32 %v2810, %v2826
    %v2833 = vsub.f32 %v2815, %v2829
    %v2834 = vmul.f32 %v2830, 1.442695
    %v2835 = vpow.pop %v2834
    %v2836 = vmul.f32 %v2831, 1.442695
    %v2837 = vpow.pop %v2836
    %v2838 = vmul.f32 %v2832, 1.442695
    %v2839 = vpow.pop %v2838
    %v2840 = vmul.f32 %v2833, 1.442695
    %v2841 = vpow.pop %v2840
    %v2842 = vsel %vm1154, %v2835, 0.0
    %2843 = vadd.xlane.f32.xlu0 %v2842
    %v2844 = vpop.xlane.xlu0 %2843
    %v2845 = vsel %vm1154, %v2837, 0.0
    %2846 = vadd.xlane.f32.xlu0 %v2845
    %v2847 = vpop.xlane.xlu0 %2846
    %v2848 = vsel %vm1154, %v2839, 0.0
    %2849 = vadd.xlane.f32.xlu0 %v2848
    %v2850 = vpop.xlane.xlu0 %2849
    %v2851 = vsel %vm1154, %v2841, 0.0
    %2852 = vadd.xlane.f32.xlu0 %v2851
    %v2853 = vpop.xlane.xlu0 %2852
    %v2854 = vrcp.pop %v2844
    %v2855 = vrcp.pop %v2847
    %v2856 = vrcp.pop %v2850
    %v2857 = vrcp.pop %v2853
    %v2858 = vmul.f32 %v2835, %v2854
    %v2859 = vmul.f32 %v2837, %v2855
    %v2860 = vmul.f32 %v2839, %v2856
    %v2861 = vmul.f32 %v2841, %v2857
    %2862 = vrot.lane.b32.xlu0 %v1124, 80
    %v2863 = vpop.permute.xlu0 %2862
    %2864 = vrot.lane.b32.xlu0 %v1130, 80
    %v2865 = vpop.permute.xlu0 %2864
    %v2869 = vsel %vm1154, %v2858, 0
    %v2872 = vsel %vm1154, %v2859, 0
    %2874 = vmatprep.subr.mxu0 0.0
    %2875 = vmatpush1.msra.mxu0 %v2863
    %2876 = vmatprep.subr.mxu0 0.0
    %2877 = vmatpush1.msra.mxu0 %v2865
    %2878 = vmatprep.subr.mxu0 0.0
    %2879 = vmatpush1.msra.mxu0 0.0
    %2880 = vmatprep.subr.mxu0 0.0
    %2881 = vmatpush1.msra.mxu0 0.0
    %2882 = vmatprep.subr.mxu0 0.0
    %2883 = vmatpush1.msra.mxu0 0.0
    %2884 = vmatprep.subr.mxu0 0.0
    %2885 = vmatpush1.msra.mxu0 0.0
    %2886 = vmatprep.subr.mxu0 0.0
    %2887 = vmatpush1.msra.mxu0 0.0
    %2888 = vmatprep.subr.mxu0 0.0
    %2889 = vmatpush1.msra.mxu0 0.0
    %2890 = vmatprep.subr.mxu0 0.0
    %2891 = vmatpush1.msra.mxu0 0.0
    %2892 = vmatprep.subr.mxu0 0.0
    %2893 = vmatpush1.msra.mxu0 0.0
    %2894 = vmatprep.subr.mxu0 0.0
    %2895 = vmatpush1.msra.mxu0 0.0
    %2896 = vmatprep.subr.mxu0 0.0
    %2897 = vmatpush1.msra.mxu0 0.0
    %2898 = vmatprep.subr.mxu0 0.0
    %2899 = vmatpush1.msra.mxu0 0.0
    %2900 = vmatprep.subr.mxu0 0.0
    %2901 = vmatpush1.msra.mxu0 0.0
    %2902 = vmatprep.subr.mxu0 0.0
    %2903 = vmatpush1.msra.mxu0 0.0
    %2904 = vmatprep.subr.mxu0 0.0
    %2905 = vmatpush1.msra.mxu0 0.0
    %2906 = vmatprep.subr.mxu0 0.0
    %2907 = vmatpush1.msra.mxu0 0.0
    %2908 = vmatprep.subr.mxu0 0.0
    %2909 = vmatpush1.msra.mxu0 0.0
    %2910 = vmatprep.subr.mxu0 0.0
    %2911 = vmatpush1.msra.mxu0 0.0
    %2912 = vmatprep.subr.mxu0 0.0
    %2913 = vmatpush1.msra.mxu0 0.0
    %2914 = vmatprep.subr.mxu0 0.0
    %2915 = vmatpush1.msra.mxu0 0.0
    %2916 = vmatprep.subr.mxu0 0.0
    %2917 = vmatpush1.msra.mxu0 0.0
    %2918 = vmatprep.subr.mxu0 0.0
    %2919 = vmatpush1.msra.mxu0 0.0
    %2920 = vmatprep.subr.mxu0 0.0
    %2921 = vmatpush1.msra.mxu0 0.0
    %2922 = vmatprep.subr.mxu0 0.0
    %2923 = vmatpush1.msra.mxu0 0.0
    %2924 = vmatprep.subr.mxu0 0.0
    %2925 = vmatpush1.msra.mxu0 0.0
    %2926 = vmatprep.subr.mxu0 0.0
    %2927 = vmatpush1.msra.mxu0 0.0
    %2928 = vmatprep.subr.mxu0 0.0
    %2929 = vmatpush1.msra.mxu0 0.0
    %2930 = vmatprep.subr.mxu0 0.0
    %2931 = vmatpush1.msra.mxu0 0.0
    %2932 = vmatprep.subr.mxu0 0.0
    %2933 = vmatpush1.msra.mxu0 0.0
    %2934 = vmatprep.subr.mxu0 0.0
    %2935 = vmatpush1.msra.mxu0 0.0
    %2936 = vmatprep.subr.mxu0 0.0
    %2937 = vmatpush1.msra.mxu0 0.0
    %2938 = vmatprep.mubr.f32.mxu0 0.0
    %2939 = vmatmul.mubr.f32.gmra.mrb[0].mxu0 %v2869
    %v2940 = vpop.f32.mrb[0].mxu0
    %v2941 = vadd.f32 0.0, %v2940
    %v2942 = vpop.f32.mrb[0].mxu0
    %2943 = vmatprep.mubr.f32.mxu0 0.0
    %2944 = vmatmul.mubr.f32.gmra.mrb[0].mxu0 %v2872
    %v2945 = vpop.f32.mrb[0].mxu0
    %v2946 = vadd.f32 0.0, %v2945
    %v2947 = vpop.f32.mrb[0].mxu0
    %2948 = vdwg.mxu0
    %2949 = vrot.lane.b32.xlu0 %v1136, 80
    %v2950 = vpop.permute.xlu0 %2949
    %2951 = vrot.lane.b32.xlu0 %v1142, 80
    %v2952 = vpop.permute.xlu0 %2951
    %v2956 = vsel %vm1154, %v2860, 0
    %v2959 = vsel %vm1154, %v2861, 0
    %2961 = vmatprep.subr.mxu0 0.0
    %2962 = vmatpush1.msra.mxu0 %v2950
    %2963 = vmatprep.subr.mxu0 0.0
    %2964 = vmatpush1.msra.mxu0 %v2952
    %2965 = vmatprep.subr.mxu0 0.0
    %2966 = vmatpush1.msra.mxu0 0.0
    %2967 = vmatprep.subr.mxu0 0.0
    %2968 = vmatpush1.msra.mxu0 0.0
    %2969 = vmatprep.subr.mxu0 0.0
    %2970 = vmatpush1.msra.mxu0 0.0
    %2971 = vmatprep.subr.mxu0 0.0
    %2972 = vmatpush1.msra.mxu0 0.0
    %2973 = vmatprep.subr.mxu0 0.0
    %2974 = vmatpush1.msra.mxu0 0.0
    %2975 = vmatprep.subr.mxu0 0.0
    %2976 = vmatpush1.msra.mxu0 0.0
    %2977 = vmatprep.subr.mxu0 0.0
    %2978 = vmatpush1.msra.mxu0 0.0
    %2979 = vmatprep.subr.mxu0 0.0
    %2980 = vmatpush1.msra.mxu0 0.0
    %2981 = vmatprep.subr.mxu0 0.0
    %2982 = vmatpush1.msra.mxu0 0.0
    %2983 = vmatprep.subr.mxu0 0.0
    %2984 = vmatpush1.msra.mxu0 0.0
    %2985 = vmatprep.subr.mxu0 0.0
    %2986 = vmatpush1.msra.mxu0 0.0
    %2987 = vmatprep.subr.mxu0 0.0
    %2988 = vmatpush1.msra.mxu0 0.0
    %2989 = vmatprep.subr.mxu0 0.0
    %2990 = vmatpush1.msra.mxu0 0.0
    %2991 = vmatprep.subr.mxu0 0.0
    %2992 = vmatpush1.msra.mxu0 0.0
    %2993 = vmatprep.subr.mxu0 0.0
    %2994 = vmatpush1.msra.mxu0 0.0
    %2995 = vmatprep.subr.mxu0 0.0
    %2996 = vmatpush1.msra.mxu0 0.0
    %2997 = vmatprep.subr.mxu0 0.0
    %2998 = vmatpush1.msra.mxu0 0.0
    %2999 = vmatprep.subr.mxu0 0.0
    %3000 = vmatpush1.msra.mxu0 0.0
    %3001 = vmatprep.subr.mxu0 0.0
    %3002 = vmatpush1.msra.mxu0 0.0
    %3003 = vmatprep.subr.mxu0 0.0
    %3004 = vmatpush1.msra.mxu0 0.0
    %3005 = vmatprep.subr.mxu0 0.0
    %3006 = vmatpush1.msra.mxu0 0.0
    %3007 = vmatprep.subr.mxu0 0.0
    %3008 = vmatpush1.msra.mxu0 0.0
    %3009 = vmatprep.subr.mxu0 0.0
    %3010 = vmatpush1.msra.mxu0 0.0
    %3011 = vmatprep.subr.mxu0 0.0
    %3012 = vmatpush1.msra.mxu0 0.0
    %3013 = vmatprep.subr.mxu0 0.0
    %3014 = vmatpush1.msra.mxu0 0.0
    %3015 = vmatprep.subr.mxu0 0.0
    %3016 = vmatpush1.msra.mxu0 0.0
    %3017 = vmatprep.subr.mxu0 0.0
    %3018 = vmatpush1.msra.mxu0 0.0
    %3019 = vmatprep.subr.mxu0 0.0
    %3020 = vmatpush1.msra.mxu0 0.0
    %3021 = vmatprep.subr.mxu0 0.0
    %3022 = vmatpush1.msra.mxu0 0.0
    %3023 = vmatprep.subr.mxu0 0.0
    %3024 = vmatpush1.msra.mxu0 0.0
    %3025 = vmatprep.mubr.f32.mxu0 0.0
    %3026 = vmatmul.mubr.f32.gmra.mrb[0].mxu0 %v2956
    %v3027 = vpop.f32.mrb[0].mxu0
    %v3028 = vadd.f32 0.0, %v3027
    %v3029 = vpop.f32.mrb[0].mxu0
    %3030 = vmatprep.mubr.f32.mxu0 0.0
    %3031 = vmatmul.mubr.f32.gmra.mrb[0].mxu0 %v2959
    %v3032 = vpop.f32.mrb[0].mxu0
    %v3033 = vadd.f32 0.0, %v3032
    %v3034 = vpop.f32.mrb[0].mxu0
    %3035 = vdwg.mxu0
    %v3037 = vsel %vm1154, %v2941, 0
    %v3040 = vsel %vm1154, %v2946, 0
    %v3043 = vsel %vm1154, %v3028, 0
    %v3046 = vsel %vm1154, %v3033, 0
    %3048 = vmatprep.subr.mxu0 0.0
    %3049 = vmatpush1.msra.mxu0 %v957
    %3050 = vmatprep.subr.mxu0 0.0
    %3051 = vmatpush1.msra.mxu0 %v958
    %3052 = vmatprep.subr.mxu0 0.0
    %3053 = vmatpush1.msra.mxu0 0.0
    %3054 = vmatprep.subr.mxu0 0.0
    %3055 = vmatpush1.msra.mxu0 0.0
    %3056 = vmatprep.subr.mxu0 0.0
    %3057 = vmatpush1.msra.mxu0 0.0
    %3058 = vmatprep.subr.mxu0 0.0
    %3059 = vmatpush1.msra.mxu0 0.0
    %3060 = vmatprep.subr.mxu0 0.0
    %3061 = vmatpush1.msra.mxu0 0.0
    %3062 = vmatprep.subr.mxu0 0.0
    %3063 = vmatpush1.msra.mxu0 0.0
    %3064 = vmatprep.subr.mxu0 0.0
    %3065 = vmatpush1.msra.mxu0 0.0
    %3066 = vmatprep.subr.mxu0 0.0
    %3067 = vmatpush1.msra.mxu0 0.0
    %3068 = vmatprep.subr.mxu0 0.0
    %3069 = vmatpush1.msra.mxu0 0.0
    %3070 = vmatprep.subr.mxu0 0.0
    %3071 = vmatpush1.msra.mxu0 0.0
    %3072 = vmatprep.subr.mxu0 0.0
    %3073 = vmatpush1.msra.mxu0 0.0
    %3074 = vmatprep.subr.mxu0 0.0
    %3075 = vmatpush1.msra.mxu0 0.0
    %3076 = vmatprep.subr.mxu0 0.0
    %3077 = vmatpush1.msra.mxu0 0.0
    %3078 = vmatprep.subr.mxu0 0.0
    %3079 = vmatpush1.msra.mxu0 0.0
    %3080 = vmatprep.subr.mxu0 0.0
    %3081 = vmatpush1.msra.mxu0 0.0
    %3082 = vmatprep.subr.mxu0 0.0
    %3083 = vmatpush1.msra.mxu0 0.0
    %3084 = vmatprep.subr.mxu0 0.0
    %3085 = vmatpush1.msra.mxu0 0.0
    %3086 = vmatprep.subr.mxu0 0.0
    %3087 = vmatpush1.msra.mxu0 0.0
    %3088 = vmatprep.subr.mxu0 0.0
    %3089 = vmatpush1.msra.mxu0 0.0
    %3090 = vmatprep.subr.mxu0 0.0
    %3091 = vmatpush1.msra.mxu0 0.0
    %3092 = vmatprep.subr.mxu0 0.0
    %3093 = vmatpush1.msra.mxu0 0.0
    %3094 = vmatprep.subr.mxu0 0.0
    %3095 = vmatpush1.msra.mxu0 0.0
    %3096 = vmatprep.subr.mxu0 0.0
    %3097 = vmatpush1.msra.mxu0 0.0
    %3098 = vmatprep.subr.mxu0 0.0
    %3099 = vmatpush1.msra.mxu0 0.0
    %3100 = vmatprep.subr.mxu0 0.0
    %3101 = vmatpush1.msra.mxu0 0.0
    %3102 = vmatprep.subr.mxu0 0.0
    %3103 = vmatpush1.msra.mxu0 0.0
    %3104 = vmatprep.subr.mxu0 0.0
    %3105 = vmatpush1.msra.mxu0 0.0
    %3106 = vmatprep.subr.mxu0 0.0
    %3107 = vmatpush1.msra.mxu0 0.0
    %3108 = vmatprep.subr.mxu0 0.0
    %3109 = vmatpush1.msra.mxu0 0.0
    %3110 = vmatprep.subr.mxu0 0.0
    %3111 = vmatpush1.msra.mxu0 0.0
    %3112 = vmatprep.mubr.f32.mxu0 0.0
    %3113 = vmatmul.mubr.f32.gmra.mrb[0].mxu0 %v3037
    %v3114 = vpop.f32.mrb[0].mxu0
    %v3115 = vadd.f32 0.0, %v3114
    %v3116 = vpop.f32.mrb[0].mxu0
    %3117 = vmatprep.mubr.f32.mxu0 0.0
    %3118 = vmatmul.mubr.f32.gmra.mrb[0].mxu0 %v3040
    %v3119 = vpop.f32.mrb[0].mxu0
    %v3120 = vadd.f32 0.0, %v3119
    %v3121 = vpop.f32.mrb[0].mxu0
    %3122 = vmatprep.mubr.f32.mxu0 0.0
    %3123 = vmatmul.mubr.f32.gmra.mrb[0].mxu0 %v3043
    %v3124 = vpop.f32.mrb[0].mxu0
    %v3125 = vadd.f32 0.0, %v3124
    %v3126 = vpop.f32.mrb[0].mxu0
    %3127 = vmatprep.mubr.f32.mxu0 0.0
    %3128 = vmatmul.mubr.f32.gmra.mrb[0].mxu0 %v3046
    %v3129 = vpop.f32.mrb[0].mxu0
    %v3130 = vadd.f32 0.0, %v3129
    %v3131 = vpop.f32.mrb[0].mxu0
    %3132 = vdwg.mxu0
    %v3133 = vadd.f32 %v2632, %v3115
    %v3134 = vadd.f32 %v2633, %v3120
    %v3135 = vadd.f32 %v2634, %v3125
    %v3136 = vadd.f32 %v2635, %v3130
    %v3138 = vlaneseq
    %v3139 = vshrl.u32 %v3138, 7
    %v3140 = vsub.s32 0, %v3139
    %v3141 = vrot.slane %v959, %v3140
    %v3143 = vadd.f32 %v3133, %v3141
    %v3144 = vadd.f32 %v3134, %v3141
    %v3145 = vadd.f32 %v3135, %v3141
    %v3146 = vadd.f32 %v3136, %v3141
    %v3147 = vadd.f32 %v928, %v3143
    %v3148 = vadd.f32 %v929, %v3144
    %v3149 = vadd.f32 %v930, %v3145
    %v3150 = vadd.f32 %v931, %v3146
    %v3151 = vld [vmem:[#allocation24] sm:$0x1]
    %v3152 = vld [vmem:[#allocation26] sm:$0x1]
    %v3153 = vld [vmem:[#allocation27] sm:$0xff]
    %v3154 = vld [vmem:[#allocation27 + $0x8] sm:$0xff]
    %v3155 = vld [vmem:[#allocation27 + $0x10] sm:$0xff]
    %v3156 = vld [vmem:[#allocation27 + $0x18] sm:$0xff]
    %v3157 = vld [vmem:[#allocation27 + $0x20] sm:$0xff]
    %v3158 = vld [vmem:[#allocation27 + $0x28] sm:$0xff]
    %v3159 = vld [vmem:[#allocation27 + $0x30] sm:$0xff]
    %v3160 = vld [vmem:[#allocation27 + $0x38] sm:$0xff]
    %v3161 = vld [vmem:[#allocation29] sm:$0x1]
    %v3162 = vld [vmem:[#allocation30] sm:$0xff]
    %v3163 = vld [vmem:[#allocation30 + $0x8] sm:$0xff]
    %v3164 = vld [vmem:[#allocation30 + $0x10] sm:$0xff]
    %v3165 = vld [vmem:[#allocation30 + $0x18] sm:$0x7f]
    %v3166 = vld [vmem:[#allocation32] sm:$0x1]
    %v3167 = vld [vmem:[#allocation33] sm:$0x1]
    %v3168 = vld [vmem:[#allocation35] sm:$0x1]
    %v3169 = vld [vmem:[#allocation36] sm:$0xff]
    %v3170 = vld [vmem:[#allocation36 + $0x8] sm:$0xff]
    %v3171 = vld [vmem:[#allocation36 + $0x10] sm:$0xff]
    %v3172 = vld [vmem:[#allocation36 + $0x18] sm:$0xff]
    %v3173 = vld [vmem:[#allocation36 + $0x20] sm:$0xff]
    %v3174 = vld [vmem:[#allocation36 + $0x28] sm:$0xff]
    %v3175 = vld [vmem:[#allocation36 + $0x30] sm:$0xff]
    %v3176 = vld [vmem:[#allocation36 + $0x38] sm:$0xff]
    %v3177 = vld [vmem:[#allocation38] sm:$0x1]
    %v3178 = vsel %vm583, %v3147, 0.0
    %3179 = vadd.xlane.f32.xlu0 %v3178
    %v3180 = vpop.xlane.xlu0 %3179
    %v3181 = vsel %vm583, %v3148, 0.0
    %3182 = vadd.xlane.f32.xlu0 %v3181
    %v3183 = vpop.xlane.xlu0 %3182
    %v3184 = vsel %vm583, %v3149, 0.0
    %3185 = vadd.xlane.f32.xlu0 %v3184
    %v3186 = vpop.xlane.xlu0 %3185
    %v3187 = vsel %vm583, %v3150, 0.0
    %3188 = vadd.xlane.f32.xlu0 %v3187
    %v3189 = vpop.xlane.xlu0 %3188
    %v3190 = vmul.f32 %v3180, %v641
    %v3191 = vmul.f32 %v3183, %v641
    %v3192 = vmul.f32 %v3186, %v641
    %v3193 = vmul.f32 %v3189, %v641
    %v3194 = vsub.f32 %v3147, %v3190
    %v3195 = vsub.f32 %v3148, %v3191
    %v3196 = vsub.f32 %v3149, %v3192
    %v3197 = vsub.f32 %v3150, %v3193
    %v3198 = vmul.f32 %v3194, %v3194
    %v3199 = vmul.f32 %v3195, %v3195
    %v3200 = vmul.f32 %v3196, %v3196
    %v3201 = vmul.f32 %v3197, %v3197
    %v3202 = vsel %vm583, %v3198, 0.0
    %3203 = vadd.xlane.f32.xlu0 %v3202
    %v3204 = vpop.xlane.xlu0 %3203
    %v3205 = vsel %vm583, %v3199, 0.0
    %3206 = vadd.xlane.f32.xlu0 %v3205
    %v3207 = vpop.xlane.xlu0 %3206
    %v3208 = vsel %vm583, %v3200, 0.0
    %3209 = vadd.xlane.f32.xlu0 %v3208
    %v3210 = vpop.xlane.xlu0 %3209
    %v3211 = vsel %vm583, %v3201, 0.0
    %3212 = vadd.xlane.f32.xlu0 %v3211
    %v3213 = vpop.xlane.xlu0 %3212
    %v3214 = vmul.f32 %v3204, %v641
    %v3215 = vmul.f32 %v3207, %v641
    %v3216 = vmul.f32 %v3210, %v641
    %v3217 = vmul.f32 %v3213, %v641
    %v3218 = vadd.f32 %v3214, 1e-05
    %v3219 = vadd.f32 %v3215, 1e-05
    %v3220 = vadd.f32 %v3216, 1e-05
    %v3221 = vadd.f32 %v3217, 1e-05
    %v3222 = vrsqrt.pop %v3218
    %v3223 = vrsqrt.pop %v3219
    %v3224 = vrsqrt.pop %v3220
    %v3225 = vrsqrt.pop %v3221
    %v3226 = vmul.f32 %v3194, %v3222
    %v3227 = vmul.f32 %v3195, %v3223
    %v3228 = vmul.f32 %v3196, %v3224
    %v3229 = vmul.f32 %v3197, %v3225
    %v3231 = vlaneseq
    %v3232 = vshrl.u32 %v3231, 7
    %v3233 = vsub.s32 0, %v3232
    %v3234 = vrot.slane %v3151, %v3233
    %v3236 = vmul.f32 %v3226, %v3234
    %v3237 = vmul.f32 %v3227, %v3234
    %v3238 = vmul.f32 %v3228, %v3234
    %v3239 = vmul.f32 %v3229, %v3234
    %v3241 = vlaneseq
    %v3242 = vshrl.u32 %v3241, 7
    %v3243 = vsub.s32 0, %v3242
    %v3244 = vrot.slane %v3152, %v3243
    %v3246 = vadd.f32 %v3236, %v3244
    %v3247 = vadd.f32 %v3237, %v3244
    %v3248 = vadd.f32 %v3238, %v3244
    %v3249 = vadd.f32 %v3239, %v3244
    %v3251 = vlaneseq
    %v3252 = vshrl.u32 %v3251, 7
    %v3253 = vsub.s32 0, %v3252
    %v3254 = vrot.slane %v3161, %v3253
    %v3257 = vsel %vm583, %v3246, 0
    %v3260 = vsel %vm583, %v3247, 0
    %v3263 = vsel %vm583, %v3248, 0
    %v3266 = vsel %vm583, %v3249, 0
    %3268 = vmatprep.subr.mxu0 0.0
    %3269 = vmatpush1.msra.mxu0 %v3153
    %3270 = vmatprep.subr.mxu0 0.0
    %3271 = vmatpush1.msra.mxu0 %v3154
    %3272 = vmatprep.subr.mxu0 0.0
    %3273 = vmatpush1.msra.mxu0 %v3155
    %3274 = vmatprep.subr.mxu0 0.0
    %3275 = vmatpush1.msra.mxu0 %v3156
    %3276 = vmatprep.subr.mxu0 0.0
    %3277 = vmatpush1.msra.mxu0 %v3157
    %3278 = vmatprep.subr.mxu0 0.0
    %3279 = vmatpush1.msra.mxu0 %v3158
    %3280 = vmatprep.subr.mxu0 0.0
    %3281 = vmatpush1.msra.mxu0 %v3159
    %3282 = vmatprep.subr.mxu0 0.0
    %3283 = vmatpush1.msra.mxu0 %v3160
    %3284 = vmatprep.subr.mxu0 0.0
    %3285 = vmatpush1.msra.mxu0 0.0
    %3286 = vmatprep.subr.mxu0 0.0
    %3287 = vmatpush1.msra.mxu0 0.0
    %3288 = vmatprep.subr.mxu0 0.0
    %3289 = vmatpush1.msra.mxu0 0.0
    %3290 = vmatprep.subr.mxu0 0.0
    %3291 = vmatpush1.msra.mxu0 0.0
    %3292 = vmatprep.subr.mxu0 0.0
    %3293 = vmatpush1.msra.mxu0 0.0
    %3294 = vmatprep.subr.mxu0 0.0
    %3295 = vmatpush1.msra.mxu0 0.0
    %3296 = vmatprep.subr.mxu0 0.0
    %3297 = vmatpush1.msra.mxu0 0.0
    %3298 = vmatprep.subr.mxu0 0.0
    %3299 = vmatpush1.msra.mxu0 0.0
    %3300 = vmatprep.subr.mxu0 0.0
    %3301 = vmatpush1.msra.mxu0 0.0
    %3302 = vmatprep.subr.mxu0 0.0
    %3303 = vmatpush1.msra.mxu0 0.0
    %3304 = vmatprep.subr.mxu0 0.0
    %3305 = vmatpush1.msra.mxu0 0.0
    %3306 = vmatprep.subr.mxu0 0.0
    %3307 = vmatpush1.msra.mxu0 0.0
    %3308 = vmatprep.subr.mxu0 0.0
    %3309 = vmatpush1.msra.mxu0 0.0
    %3310 = vmatprep.subr.mxu0 0.0
    %3311 = vmatpush1.msra.mxu0 0.0
    %3312 = vmatprep.subr.mxu0 0.0
    %3313 = vmatpush1.msra.mxu0 0.0
    %3314 = vmatprep.subr.mxu0 0.0
    %3315 = vmatpush1.msra.mxu0 0.0
    %3316 = vmatprep.subr.mxu0 0.0
    %3317 = vmatpush1.msra.mxu0 0.0
    %3318 = vmatprep.subr.mxu0 0.0
    %3319 = vmatpush1.msra.mxu0 0.0
    %3320 = vmatprep.subr.mxu0 0.0
    %3321 = vmatpush1.msra.mxu0 0.0
    %3322 = vmatprep.subr.mxu0 0.0
    %3323 = vmatpush1.msra.mxu0 0.0
    %3324 = vmatprep.subr.mxu0 0.0
    %3325 = vmatpush1.msra.mxu0 0.0
    %3326 = vmatprep.subr.mxu0 0.0
    %3327 = vmatpush1.msra.mxu0 0.0
    %3328 = vmatprep.subr.mxu0 0.0
    %3329 = vmatpush1.msra.mxu0 0.0
    %3330 = vmatprep.subr.mxu0 0.0
    %3331 = vmatpush1.msra.mxu0 0.0
    %3332 = vmatprep.mubr.f32.mxu0 0.0
    %3333 = vmatmul.mubr.f32.gmra.mrb[0].mxu0 %v3257
    %v3334 = vpop.f32.mrb[0].mxu0
    %v3335 = vadd.f32 %v3254, %v3334
    %v3336 = vpop.f32.mrb[0].mxu0
    %3337 = vmatprep.mubr.f32.mxu0 0.0
    %3338 = vmatmul.mubr.f32.gmra.mrb[0].mxu0 %v3260
    %v3339 = vpop.f32.mrb[0].mxu0
    %v3340 = vadd.f32 %v3254, %v3339
    %v3341 = vpop.f32.mrb[0].mxu0
    %3342 = vmatprep.mubr.f32.mxu0 0.0
    %3343 = vmatmul.mubr.f32.gmra.mrb[0].mxu0 %v3263
    %v3344 = vpop.f32.mrb[0].mxu0
    %v3345 = vadd.f32 %v3254, %v3344
    %v3346 = vpop.f32.mrb[0].mxu0
    %3347 = vmatprep.mubr.f32.mxu0 0.0
    %3348 = vmatmul.mubr.f32.gmra.mrb[0].mxu0 %v3266
    %v3349 = vpop.f32.mrb[0].mxu0
    %v3350 = vadd.f32 %v3254, %v3349
    %v3351 = vpop.f32.mrb[0].mxu0
    %3352 = vdwg.mxu0
    %v3353 = vxor.u32 %v3335, 2147483648
    %v3354 = vxor.u32 %v3340, 2147483648
    %v3355 = vxor.u32 %v3345, 2147483648
    %v3356 = vxor.u32 %v3350, 2147483648
    %v3357 = vmul.f32 %v3353, 1.442695
    %v3358 = vpow.pop %v3357
    %v3359 = vmul.f32 %v3354, 1.442695
    %v3360 = vpow.pop %v3359
    %v3361 = vmul.f32 %v3355, 1.442695
    %v3362 = vpow.pop %v3361
    %v3363 = vmul.f32 %v3356, 1.442695
    %v3364 = vpow.pop %v3363
    %v3365 = vadd.f32 %v3358, 1.0
    %v3366 = vadd.f32 %v3360, 1.0
    %v3367 = vadd.f32 %v3362, 1.0
    %v3368 = vadd.f32 %v3364, 1.0
    %v3369 = vrcp.pop %v3365
    %v3370 = vmul.f32 1.0, %v3369
    %v3371 = vrcp.pop %v3366
    %v3372 = vmul.f32 1.0, %v3371
    %v3373 = vrcp.pop %v3367
    %v3374 = vmul.f32 1.0, %v3373
    %v3375 = vrcp.pop %v3368
    %v3376 = vmul.f32 1.0, %v3375
    %3381 = vrot.lane.b32.xlu0 %v3370, 64
    %v3382 = vpop.permute.xlu0 %3381
    %3383 = vrot.lane.b32.xlu0 %v3372, 64
    %v3384 = vpop.permute.xlu0 %3383
    %3385 = vrot.lane.b32.xlu0 %v3374, 64
    %v3386 = vpop.permute.xlu0 %3385
    %3387 = vrot.lane.b32.xlu0 %v3376, 64
    %v3388 = vpop.permute.xlu0 %3387
    %v3393 = vmul.f32 %v3335, %v3382
    %v3394 = vmul.f32 %v3340, %v3384
    %v3395 = vmul.f32 %v3345, %v3386
    %v3396 = vmul.f32 %v3350, %v3388
    %3397 = vst.msk [vmem:[#allocation2 + $0xf] sm:$0xff] %vm583, %v3393
    %3398 = vst.msk [vmem:[#allocation2 + $0x17] sm:$0xff] %vm583, %v3394
    %3399 = vst.msk [vmem:[#allocation2 + $0x3f] sm:$0xff] %vm583, %v3395
    %3400 = vst.msk [vmem:[#allocation2 + $0x47] sm:$0xff] %vm583, %v3396
    %v3401 = vld [vmem:[#allocation2] sm:$0xff]
    %v3402 = vld [vmem:[#allocation2 + $0x8] sm:$0xff]
    %v3403 = vld [vmem:[#allocation2 + $0x30] sm:$0xff]
    %v3404 = vld [vmem:[#allocation2 + $0x38] sm:$0xff]
    %v3405 = vlaneseq
    %v3406 = vshrl.u32 %v3405, 7
    %v3407 = vsub.s32 0, %v3406
    %v3408 = vrot.slane %v3162, %v3407
    %v3409 = vmul.f32 %v3401, %v3408
    %v3410 = vmul.f32 %v3402, %v3408
    %v3411 = vmul.f32 %v3403, %v3408
    %v3412 = vmul.f32 %v3404, %v3408
    %v3413 = vadd.f32 %v3409, 0.0
    %v3414 = vadd.f32 %v3410, 0.0
    %v3415 = vadd.f32 %v3411, 0.0
    %v3416 = vadd.f32 %v3412, 0.0
    %v3417 = vld [vmem:[#allocation2 + $0x1] sm:$0xff]
    %v3418 = vld [vmem:[#allocation2 + $0x9] sm:$0xff]
    %v3419 = vld [vmem:[#allocation2 + $0x31] sm:$0xff]
    %v3420 = vld [vmem:[#allocation2 + $0x39] sm:$0xff]
    %v3421 = vlaneseq
    %v3422 = vshrl.u32 %v3421, 7
    %v3423 = vsub.s32 1, %v3422
    %v3424 = vrot.slane %v3162, %v3423
    %v3425 = vmul.f32 %v3417, %v3424
    %v3426 = vmul.f32 %v3418, %v3424
    %v3427 = vmul.f32 %v3419, %v3424
    %v3428 = vmul.f32 %v3420, %v3424
    %v3429 = vadd.f32 %v3413, %v3425
    %v3430 = vadd.f32 %v3414, %v3426
    %v3431 = vadd.f32 %v3415, %v3427
    %v3432 = vadd.f32 %v3416, %v3428
    %v3433 = vld [vmem:[#allocation2 + $0x2] sm:$0xff]
    %v3434 = vld [vmem:[#allocation2 + $0xa] sm:$0xff]
    %v3435 = vld [vmem:[#allocation2 + $0x32] sm:$0xff]
    %v3436 = vld [vmem:[#allocation2 + $0x3a] sm:$0xff]
    %v3437 = vlaneseq
    %v3438 = vshrl.u32 %v3437, 7
    %v3439 = vsub.s32 2, %v3438
    %v3440 = vrot.slane %v3162, %v3439
    %v3441 = vmul.f32 %v3433, %v3440
    %v3442 = vmul.f32 %v3434, %v3440
    %v3443 = vmul.f32 %v3435, %v3440
    %v3444 = vmul.f32 %v3436, %v3440
    %v3445 = vadd.f32 %v3429, %v3441
    %v3446 = vadd.f32 %v3430, %v3442
    %v3447 = vadd.f32 %v3431, %v3443
    %v3448 = vadd.f32 %v3432, %v3444
    %v3449 = vld [vmem:[#allocation2 + $0x3] sm:$0xff]
    %v3450 = vld [vmem:[#allocation2 + $0xb] sm:$0xff]
    %v3451 = vld [vmem:[#allocation2 + $0x33] sm:$0xff]
    %v3452 = vld [vmem:[#allocation2 + $0x3b] sm:$0xff]
    %v3453 = vlaneseq
    %v3454 = vshrl.u32 %v3453, 7
    %v3455 = vsub.s32 3, %v3454
    %v3456 = vrot.slane %v3162, %v3455
    %v3457 = vmul.f32 %v3449, %v3456
    %v3458 = vmul.f32 %v3450, %v3456
    %v3459 = vmul.f32 %v3451, %v3456
    %v3460 = vmul.f32 %v3452, %v3456
    %v3461 = vadd.f32 %v3445, %v3457
    %v3462 = vadd.f32 %v3446, %v3458
    %v3463 = vadd.f32 %v3447, %v3459
    %v3464 = vadd.f32 %v3448, %v3460
    %v3465 = vld [vmem:[#allocation2 + $0x4] sm:$0xff]
    %v3466 = vld [vmem:[#allocation2 + $0xc] sm:$0xff]
    %v3467 = vld [vmem:[#allocation2 + $0x34] sm:$0xff]
    %v3468 = vld [vmem:[#allocation2 + $0x3c] sm:$0xff]
    %v3469 = vlaneseq
    %v3470 = vshrl.u32 %v3469, 7
    %v3471 = vsub.s32 4, %v3470
    %v3472 = vrot.slane %v3162, %v3471
    %v3473 = vmul.f32 %v3465, %v3472
    %v3474 = vmul.f32 %v3466, %v3472
    %v3475 = vmul.f32 %v3467, %v3472
    %v3476 = vmul.f32 %v3468, %v3472
    %v3477 = vadd.f32 %v3461, %v3473
    %v3478 = vadd.f32 %v3462, %v3474
    %v3479 = vadd.f32 %v3463, %v3475
    %v3480 = vadd.f32 %v3464, %v3476
    %v3481 = vld [vmem:[#allocation2 + $0x5] sm:$0xff]
    %v3482 = vld [vmem:[#allocation2 + $0xd] sm:$0xff]
    %v3483 = vld [vmem:[#allocation2 + $0x35] sm:$0xff]
    %v3484 = vld [vmem:[#allocation2 + $0x3d] sm:$0xff]
    %v3485 = vlaneseq
    %v3486 = vshrl.u32 %v3485, 7
    %v3487 = vsub.s32 5, %v3486
    %v3488 = vrot.slane %v3162, %v3487
    %v3489 = vmul.f32 %v3481, %v3488
    %v3490 = vmul.f32 %v3482, %v3488
    %v3491 = vmul.f32 %v3483, %v3488
    %v3492 = vmul.f32 %v3484, %v3488
    %v3493 = vadd.f32 %v3477, %v3489
    %v3494 = vadd.f32 %v3478, %v3490
    %v3495 = vadd.f32 %v3479, %v3491
    %v3496 = vadd.f32 %v3480, %v3492
    %v3497 = vld [vmem:[#allocation2 + $0x6] sm:$0xff]
    %v3498 = vld [vmem:[#allocation2 + $0xe] sm:$0xff]
    %v3499 = vld [vmem:[#allocation2 + $0x36] sm:$0xff]
    %v3500 = vld [vmem:[#allocation2 + $0x3e] sm:$0xff]
    %v3501 = vlaneseq
    %v3502 = vshrl.u32 %v3501, 7
    %v3503 = vsub.s32 6, %v3502
    %v3504 = vrot.slane %v3162, %v3503
    %v3505 = vmul.f32 %v3497, %v3504
    %v3506 = vmul.f32 %v3498, %v3504
    %v3507 = vmul.f32 %v3499, %v3504
    %v3508 = vmul.f32 %v3500, %v3504
    %v3509 = vadd.f32 %v3493, %v3505
    %v3510 = vadd.f32 %v3494, %v3506
    %v3511 = vadd.f32 %v3495, %v3507
    %v3512 = vadd.f32 %v3496, %v3508
    %v3513 = vld [vmem:[#allocation2 + $0x7] sm:$0xff]
    %v3514 = vld [vmem:[#allocation2 + $0xf] sm:$0xff]
    %v3515 = vld [vmem:[#allocation2 + $0x37] sm:$0xff]
    %v3516 = vld [vmem:[#allocation2 + $0x3f] sm:$0xff]
    %v3517 = vlaneseq
    %v3518 = vshrl.u32 %v3517, 7
    %v3519 = vsub.s32 7, %v3518
    %v3520 = vrot.slane %v3162, %v3519
    %v3521 = vmul.f32 %v3513, %v3520
    %v3522 = vmul.f32 %v3514, %v3520
    %v3523 = vmul.f32 %v3515, %v3520
    %v3524 = vmul.f32 %v3516, %v3520
    %v3525 = vadd.f32 %v3509, %v3521
    %v3526 = vadd.f32 %v3510, %v3522
    %v3527 = vadd.f32 %v3511, %v3523
    %v3528 = vadd.f32 %v3512, %v3524
    %v3529 = vld [vmem:[#allocation2 + $0x10] sm:$0xff]
    %v3530 = vld [vmem:[#allocation2 + $0x40] sm:$0xff]
    %v3531 = vlaneseq
    %v3532 = vshrl.u32 %v3531, 7
    %v3533 = vsub.s32 0, %v3532
    %v3534 = vrot.slane %v3163, %v3533
    %v3535 = vmul.f32 %v3402, %v3534
    %v3536 = vmul.f32 %v3529, %v3534
    %v3537 = vmul.f32 %v3404, %v3534
    %v3538 = vmul.f32 %v3530, %v3534
    %v3539 = vadd.f32 %v3525, %v3535
    %v3540 = vadd.f32 %v3526, %v3536
    %v3541 = vadd.f32 %v3527, %v3537
    %v3542 = vadd.f32 %v3528, %v3538
    %v3543 = vld [vmem:[#allocation2 + $0x11] sm:$0xff]
    %v3544 = vld [vmem:[#allocation2 + $0x41] sm:$0xff]
    %v3545 = vlaneseq
    %v3546 = vshrl.u32 %v3545, 7
    %v3547 = vsub.s32 1, %v3546
    %v3548 = vrot.slane %v3163, %v3547
    %v3549 = vmul.f32 %v3418, %v3548
    %v3550 = vmul.f32 %v3543, %v3548
    %v3551 = vmul.f32 %v3420, %v3548
    %v3552 = vmul.f32 %v3544, %v3548
    %v3553 = vadd.f32 %v3539, %v3549
    %v3554 = vadd.f32 %v3540, %v3550
    %v3555 = vadd.f32 %v3541, %v3551
    %v3556 = vadd.f32 %v3542, %v3552
    %v3557 = vld [vmem:[#allocation2 + $0x12] sm:$0xff]
    %v3558 = vld [vmem:[#allocation2 + $0x42] sm:$0xff]
    %v3559 = vlaneseq
    %v3560 = vshrl.u32 %v3559, 7
    %v3561 = vsub.s32 2, %v3560
    %v3562 = vrot.slane %v3163, %v3561
    %v3563 = vmul.f32 %v3434, %v3562
    %v3564 = vmul.f32 %v3557, %v3562
    %v3565 = vmul.f32 %v3436, %v3562
    %v3566 = vmul.f32 %v3558, %v3562
    %v3567 = vadd.f32 %v3553, %v3563
    %v3568 = vadd.f32 %v3554, %v3564
    %v3569 = vadd.f32 %v3555, %v3565
    %v3570 = vadd.f32 %v3556, %v3566
    %v3571 = vld [vmem:[#allocation2 + $0x13] sm:$0xff]
    %v3572 = vld [vmem:[#allocation2 + $0x43] sm:$0xff]
    %v3573 = vlaneseq
    %v3574 = vshrl.u32 %v3573, 7
    %v3575 = vsub.s32 3, %v3574
    %v3576 = vrot.slane %v3163, %v3575
    %v3577 = vmul.f32 %v3450, %v3576
    %v3578 = vmul.f32 %v3571, %v3576
    %v3579 = vmul.f32 %v3452, %v3576
    %v3580 = vmul.f32 %v3572, %v3576
    %v3581 = vadd.f32 %v3567, %v3577
    %v3582 = vadd.f32 %v3568, %v3578
    %v3583 = vadd.f32 %v3569, %v3579
    %v3584 = vadd.f32 %v3570, %v3580
    %v3585 = vld [vmem:[#allocation2 + $0x14] sm:$0xff]
    %v3586 = vld [vmem:[#allocation2 + $0x44] sm:$0xff]
    %v3587 = vlaneseq
    %v3588 = vshrl.u32 %v3587, 7
    %v3589 = vsub.s32 4, %v3588
    %v3590 = vrot.slane %v3163, %v3589
    %v3591 = vmul.f32 %v3466, %v3590
    %v3592 = vmul.f32 %v3585, %v3590
    %v3593 = vmul.f32 %v3468, %v3590
    %v3594 = vmul.f32 %v3586, %v3590
    %v3595 = vadd.f32 %v3581, %v3591
    %v3596 = vadd.f32 %v3582, %v3592
    %v3597 = vadd.f32 %v3583, %v3593
    %v3598 = vadd.f32 %v3584, %v3594
    %v3599 = vld [vmem:[#allocation2 + $0x15] sm:$0xff]
    %v3600 = vld [vmem:[#allocation2 + $0x45] sm:$0xff]
    %v3601 = vlaneseq
    %v3602 = vshrl.u32 %v3601, 7
    %v3603 = vsub.s32 5, %v3602
    %v3604 = vrot.slane %v3163, %v3603
    %v3605 = vmul.f32 %v3482, %v3604
    %v3606 = vmul.f32 %v3599, %v3604
    %v3607 = vmul.f32 %v3484, %v3604
    %v3608 = vmul.f32 %v3600, %v3604
    %v3609 = vadd.f32 %v3595, %v3605
    %v3610 = vadd.f32 %v3596, %v3606
    %v3611 = vadd.f32 %v3597, %v3607
    %v3612 = vadd.f32 %v3598, %v3608
    %v3613 = vld [vmem:[#allocation2 + $0x16] sm:$0xff]
    %v3614 = vld [vmem:[#allocation2 + $0x46] sm:$0xff]
    %v3615 = vlaneseq
    %v3616 = vshrl.u32 %v3615, 7
    %v3617 = vsub.s32 6, %v3616
    %v3618 = vrot.slane %v3163, %v3617
    %v3619 = vmul.f32 %v3498, %v3618
    %v3620 = vmul.f32 %v3613, %v3618
    %v3621 = vmul.f32 %v3500, %v3618
    %v3622 = vmul.f32 %v3614, %v3618
    %v3623 = vadd.f32 %v3609, %v3619
    %v3624 = vadd.f32 %v3610, %v3620
    %v3625 = vadd.f32 %v3611, %v3621
    %v3626 = vadd.f32 %v3612, %v3622
    %v3627 = vld [vmem:[#allocation2 + $0x17] sm:$0xff]
    %v3628 = vld [vmem:[#allocation2 + $0x47] sm:$0xff]
    %v3629 = vlaneseq
    %v3630 = vshrl.u32 %v3629, 7
    %v3631 = vsub.s32 7, %v3630
    %v3632 = vrot.slane %v3163, %v3631
    %v3633 = vmul.f32 %v3514, %v3632
    %v3634 = vmul.f32 %v3627, %v3632
    %v3635 = vmul.f32 %v3516, %v3632
    %v3636 = vmul.f32 %v3628, %v3632
    %v3637 = vadd.f32 %v3623, %v3633
    %v3638 = vadd.f32 %v3624, %v3634
    %v3639 = vadd.f32 %v3625, %v3635
    %v3640 = vadd.f32 %v3626, %v3636
    %v3641 = vld [vmem:[#allocation2 + $0x18] sm:$0xff]
    %v3642 = vld [vmem:[#allocation2 + $0x48] sm:$0xff]
    %v3643 = vlaneseq
    %v3644 = vshrl.u32 %v3643, 7
    %v3645 = vsub.s32 0, %v3644
    %v3646 = vrot.slane %v3164, %v3645
    %v3647 = vmul.f32 %v3529, %v3646
    %v3648 = vmul.f32 %v3641, %v3646
    %v3649 = vmul.f32 %v3530, %v3646
    %v3650 = vmul.f32 %v3642, %v3646
    %v3651 = vadd.f32 %v3637, %v3647
    %v3652 = vadd.f32 %v3638, %v3648
    %v3653 = vadd.f32 %v3639, %v3649
    %v3654 = vadd.f32 %v3640, %v3650
    %v3655 = vld [vmem:[#allocation2 + $0x19] sm:$0xff]
    %v3656 = vld [vmem:[#allocation2 + $0x49] sm:$0xff]
    %v3657 = vlaneseq
    %v3658 = vshrl.u32 %v3657, 7
    %v3659 = vsub.s32 1, %v3658
    %v3660 = vrot.slane %v3164, %v3659
    %v3661 = vmul.f32 %v3543, %v3660
    %v3662 = vmul.f32 %v3655, %v3660
    %v3663 = vmul.f32 %v3544, %v3660
    %v3664 = vmul.f32 %v3656, %v3660
    %v3665 = vadd.f32 %v3651, %v3661
    %v3666 = vadd.f32 %v3652, %v3662
    %v3667 = vadd.f32 %v3653, %v3663
    %v3668 = vadd.f32 %v3654, %v3664
    %v3669 = vld [vmem:[#allocation2 + $0x1a] sm:$0xff]
    %v3670 = vld [vmem:[#allocation2 + $0x4a] sm:$0xff]
    %v3671 = vlaneseq
    %v3672 = vshrl.u32 %v3671, 7
    %v3673 = vsub.s32 2, %v3672
    %v3674 = vrot.slane %v3164, %v3673
    %v3675 = vmul.f32 %v3557, %v3674
    %v3676 = vmul.f32 %v3669, %v3674
    %v3677 = vmul.f32 %v3558, %v3674
    %v3678 = vmul.f32 %v3670, %v3674
    %v3679 = vadd.f32 %v3665, %v3675
    %v3680 = vadd.f32 %v3666, %v3676
    %v3681 = vadd.f32 %v3667, %v3677
    %v3682 = vadd.f32 %v3668, %v3678
    %v3683 = vld [vmem:[#allocation2 + $0x1b] sm:$0xff]
    %v3684 = vld [vmem:[#allocation2 + $0x4b] sm:$0xff]
    %v3685 = vlaneseq
    %v3686 = vshrl.u32 %v3685, 7
    %v3687 = vsub.s32 3, %v3686
    %v3688 = vrot.slane %v3164, %v3687
    %v3689 = vmul.f32 %v3571, %v3688
    %v3690 = vmul.f32 %v3683, %v3688
    %v3691 = vmul.f32 %v3572, %v3688
    %v3692 = vmul.f32 %v3684, %v3688
    %v3693 = vadd.f32 %v3679, %v3689
    %v3694 = vadd.f32 %v3680, %v3690
    %v3695 = vadd.f32 %v3681, %v3691
    %v3696 = vadd.f32 %v3682, %v3692
    %v3697 = vld [vmem:[#allocation2 + $0x1c] sm:$0xff]
    %v3698 = vld [vmem:[#allocation2 + $0x4c] sm:$0xff]
    %v3699 = vlaneseq
    %v3700 = vshrl.u32 %v3699, 7
    %v3701 = vsub.s32 4, %v3700
    %v3702 = vrot.slane %v3164, %v3701
    %v3703 = vmul.f32 %v3585, %v3702
    %v3704 = vmul.f32 %v3697, %v3702
    %v3705 = vmul.f32 %v3586, %v3702
    %v3706 = vmul.f32 %v3698, %v3702
    %v3707 = vadd.f32 %v3693, %v3703
    %v3708 = vadd.f32 %v3694, %v3704
    %v3709 = vadd.f32 %v3695, %v3705
    %v3710 = vadd.f32 %v3696, %v3706
    %v3711 = vld [vmem:[#allocation2 + $0x1d] sm:$0xff]
    %v3712 = vld [vmem:[#allocation2 + $0x4d] sm:$0xff]
    %v3713 = vlaneseq
    %v3714 = vshrl.u32 %v3713, 7
    %v3715 = vsub.s32 5, %v3714
    %v3716 = vrot.slane %v3164, %v3715
    %v3717 = vmul.f32 %v3599, %v3716
    %v3718 = vmul.f32 %v3711, %v3716
    %v3719 = vmul.f32 %v3600, %v3716
    %v3720 = vmul.f32 %v3712, %v3716
    %v3721 = vadd.f32 %v3707, %v3717
    %v3722 = vadd.f32 %v3708, %v3718
    %v3723 = vadd.f32 %v3709, %v3719
    %v3724 = vadd.f32 %v3710, %v3720
    %v3725 = vld [vmem:[#allocation2 + $0x1e] sm:$0xff]
    %v3726 = vld [vmem:[#allocation2 + $0x4e] sm:$0xff]
    %v3727 = vlaneseq
    %v3728 = vshrl.u32 %v3727, 7
    %v3729 = vsub.s32 6, %v3728
    %v3730 = vrot.slane %v3164, %v3729
    %v3731 = vmul.f32 %v3613, %v3730
    %v3732 = vmul.f32 %v3725, %v3730
    %v3733 = vmul.f32 %v3614, %v3730
    %v3734 = vmul.f32 %v3726, %v3730
    %v3735 = vadd.f32 %v3721, %v3731
    %v3736 = vadd.f32 %v3722, %v3732
    %v3737 = vadd.f32 %v3723, %v3733
    %v3738 = vadd.f32 %v3724, %v3734
    %v3739 = vld [vmem:[#allocation2 + $0x1f] sm:$0xff]
    %v3740 = vld [vmem:[#allocation2 + $0x4f] sm:$0xff]
    %v3741 = vlaneseq
    %v3742 = vshrl.u32 %v3741, 7
    %v3743 = vsub.s32 7, %v3742
    %v3744 = vrot.slane %v3164, %v3743
    %v3745 = vmul.f32 %v3627, %v3744
    %v3746 = vmul.f32 %v3739, %v3744
    %v3747 = vmul.f32 %v3628, %v3744
    %v3748 = vmul.f32 %v3740, %v3744
    %v3749 = vadd.f32 %v3735, %v3745
    %v3750 = vadd.f32 %v3736, %v3746
    %v3751 = vadd.f32 %v3737, %v3747
    %v3752 = vadd.f32 %v3738, %v3748
    %v3753 = vld [vmem:[#allocation2 + $0x20] sm:$0xff]
    %v3754 = vld [vmem:[#allocation2 + $0x50] sm:$0xff]
    %v3755 = vlaneseq
    %v3756 = vshrl.u32 %v3755, 7
    %v3757 = vsub.s32 0, %v3756
    %v3758 = vrot.slane %v3165, %v3757
    %v3759 = vmul.f32 %v3641, %v3758
    %v3760 = vmul.f32 %v3753, %v3758
    %v3761 = vmul.f32 %v3642, %v3758
    %v3762 = vmul.f32 %v3754, %v3758
    %v3763 = vadd.f32 %v3749, %v3759
    %v3764 = vadd.f32 %v3750, %v3760
    %v3765 = vadd.f32 %v3751, %v3761
    %v3766 = vadd.f32 %v3752, %v3762
    %v3767 = vld [vmem:[#allocation2 + $0x21] sm:$0xff]
    %v3768 = vld [vmem:[#allocation2 + $0x51] sm:$0xff]
    %v3769 = vlaneseq
    %v3770 = vshrl.u32 %v3769, 7
    %v3771 = vsub.s32 1, %v3770
    %v3772 = vrot.slane %v3165, %v3771
    %v3773 = vmul.f32 %v3655, %v3772
    %v3774 = vmul.f32 %v3767, %v3772
    %v3775 = vmul.f32 %v3656, %v3772
    %v3776 = vmul.f32 %v3768, %v3772
    %v3777 = vadd.f32 %v3763, %v3773
    %v3778 = vadd.f32 %v3764, %v3774
    %v3779 = vadd.f32 %v3765, %v3775
    %v3780 = vadd.f32 %v3766, %v3776
    %v3781 = vld [vmem:[#allocation2 + $0x22] sm:$0xff]
    %v3782 = vld [vmem:[#allocation2 + $0x52] sm:$0xff]
    %v3783 = vlaneseq
    %v3784 = vshrl.u32 %v3783, 7
    %v3785 = vsub.s32 2, %v3784
    %v3786 = vrot.slane %v3165, %v3785
    %v3787 = vmul.f32 %v3669, %v3786
    %v3788 = vmul.f32 %v3781, %v3786
    %v3789 = vmul.f32 %v3670, %v3786
    %v3790 = vmul.f32 %v3782, %v3786
    %v3791 = vadd.f32 %v3777, %v3787
    %v3792 = vadd.f32 %v3778, %v3788
    %v3793 = vadd.f32 %v3779, %v3789
    %v3794 = vadd.f32 %v3780, %v3790
    %v3795 = vld [vmem:[#allocation2 + $0x23] sm:$0xff]
    %v3796 = vld [vmem:[#allocation2 + $0x53] sm:$0xff]
    %v3797 = vlaneseq
    %v3798 = vshrl.u32 %v3797, 7
    %v3799 = vsub.s32 3, %v3798
    %v3800 = vrot.slane %v3165, %v3799
    %v3801 = vmul.f32 %v3683, %v3800
    %v3802 = vmul.f32 %v3795, %v3800
    %v3803 = vmul.f32 %v3684, %v3800
    %v3804 = vmul.f32 %v3796, %v3800
    %v3805 = vadd.f32 %v3791, %v3801
    %v3806 = vadd.f32 %v3792, %v3802
    %v3807 = vadd.f32 %v3793, %v3803
    %v3808 = vadd.f32 %v3794, %v3804
    %v3809 = vld [vmem:[#allocation2 + $0x24] sm:$0xff]
    %v3810 = vld [vmem:[#allocation2 + $0x54] sm:$0xff]
    %v3811 = vlaneseq
    %v3812 = vshrl.u32 %v3811, 7
    %v3813 = vsub.s32 4, %v3812
    %v3814 = vrot.slane %v3165, %v3813
    %v3815 = vmul.f32 %v3697, %v3814
    %v3816 = vmul.f32 %v3809, %v3814
    %v3817 = vmul.f32 %v3698, %v3814
    %v3818 = vmul.f32 %v3810, %v3814
    %v3819 = vadd.f32 %v3805, %v3815
    %v3820 = vadd.f32 %v3806, %v3816
    %v3821 = vadd.f32 %v3807, %v3817
    %v3822 = vadd.f32 %v3808, %v3818
    %v3823 = vld [vmem:[#allocation2 + $0x25] sm:$0xff]
    %v3824 = vld [vmem:[#allocation2 + $0x55] sm:$0xff]
    %v3825 = vlaneseq
    %v3826 = vshrl.u32 %v3825, 7
    %v3827 = vsub.s32 5, %v3826
    %v3828 = vrot.slane %v3165, %v3827
    %v3829 = vmul.f32 %v3711, %v3828
    %v3830 = vmul.f32 %v3823, %v3828
    %v3831 = vmul.f32 %v3712, %v3828
    %v3832 = vmul.f32 %v3824, %v3828
    %v3833 = vadd.f32 %v3819, %v3829
    %v3834 = vadd.f32 %v3820, %v3830
    %v3835 = vadd.f32 %v3821, %v3831
    %v3836 = vadd.f32 %v3822, %v3832
    %v3837 = vld [vmem:[#allocation2 + $0x26] sm:$0xff]
    %v3838 = vld [vmem:[#allocation2 + $0x56] sm:$0xff]
    %v3839 = vlaneseq
    %v3840 = vshrl.u32 %v3839, 7
    %v3841 = vsub.s32 6, %v3840
    %v3842 = vrot.slane %v3165, %v3841
    %v3843 = vmul.f32 %v3725, %v3842
    %v3844 = vmul.f32 %v3837, %v3842
    %v3845 = vmul.f32 %v3726, %v3842
    %v3846 = vmul.f32 %v3838, %v3842
    %v3847 = vadd.f32 %v3833, %v3843
    %v3848 = vadd.f32 %v3834, %v3844
    %v3849 = vadd.f32 %v3835, %v3845
    %v3850 = vadd.f32 %v3836, %v3846
    %v3852 = vlaneseq
    %v3853 = vshrl.u32 %v3852, 7
    %v3854 = vsub.s32 0, %v3853
    %v3855 = vrot.slane %v3166, %v3854
    %v3857 = vadd.f32 %v3847, %v3855
    %v3858 = vadd.f32 %v3848, %v3855
    %v3859 = vadd.f32 %v3849, %v3855
    %v3860 = vadd.f32 %v3850, %v3855
    %v3861 = vsel %vm583, %v3857, 0.0
    %v3862 = vsel %vm583, %v3858, 0.0
    %v3863 = vadd.f32 %v3861, %v3862
    %v3864 = vsel %vm583, %v3859, 0.0
    %v3865 = vadd.f32 %v3863, %v3864
    %v3866 = vsel %vm583, %v3860, 0.0
    %v3867 = vadd.f32 %v3865, %v3866
    %v3868 = vrot.slane %v3867, 4
    %v3869 = vadd.f32 %v3867, %v3868
    %v3870 = vrot.slane %v3869, 2
    %v3871 = vadd.f32 %v3869, %v3870
    %v3872 = vrot.slane %v3871, 1
    %v3873 = vadd.f32 %v3871, %v3872
    %v3874 = vrcp.pop 32.0
    %v3875 = vmul.f32 %v3873, %v3874
    %v3876 = vsub.f32 %v3857, %v3875
    %v3877 = vsub.f32 %v3858, %v3875
    %v3878 = vsub.f32 %v3859, %v3875
    %v3879 = vsub.f32 %v3860, %v3875
    %v3880 = vmul.f32 %v3876, %v3876
    %v3881 = vmul.f32 %v3877, %v3877
    %v3882 = vmul.f32 %v3878, %v3878
    %v3883 = vmul.f32 %v3879, %v3879
    %v3884 = vsel %vm583, %v3880, 0.0
    %v3885 = vsel %vm583, %v3881, 0.0
    %v3886 = vadd.f32 %v3884, %v3885
    %v3887 = vsel %vm583, %v3882, 0.0
    %v3888 = vadd.f32 %v3886, %v3887
    %v3889 = vsel %vm583, %v3883, 0.0
    %v3890 = vadd.f32 %v3888, %v3889
    %v3891 = vrot.slane %v3890, 4
    %v3892 = vadd.f32 %v3890, %v3891
    %v3893 = vrot.slane %v3892, 2
    %v3894 = vadd.f32 %v3892, %v3893
    %v3895 = vrot.slane %v3894, 1
    %v3896 = vadd.f32 %v3894, %v3895
    %v3897 = vmul.f32 %v3896, %v3874
    %v3898 = vadd.f32 %v3897, 1e-05
    %v3899 = vrsqrt.pop %v3898
    %v3900 = vmul.f32 %v3876, %v3899
    %v3901 = vmul.f32 %v3877, %v3899
    %v3902 = vmul.f32 %v3878, %v3899
    %v3903 = vmul.f32 %v3879, %v3899
    %v3905 = vlaneseq
    %v3906 = vshrl.u32 %v3905, 7
    %v3907 = vsub.s32 0, %v3906
    %v3908 = vrot.slane %v3167, %v3907
    %v3910 = vmul.f32 %v3900, %v3908
    %v3911 = vmul.f32 %v3901, %v3908
    %v3912 = vmul.f32 %v3902, %v3908
    %v3913 = vmul.f32 %v3903, %v3908
    %v3915 = vlaneseq
    %v3916 = vshrl.u32 %v3915, 7
    %v3917 = vsub.s32 0, %v3916
    %v3918 = vrot.slane %v3168, %v3917
    %v3920 = vadd.f32 %v3910, %v3918
    %v3921 = vadd.f32 %v3911, %v3918
    %v3922 = vadd.f32 %v3912, %v3918
    %v3923 = vadd.f32 %v3913, %v3918
    %v3924 = vxor.u32 %v3920, 2147483648
    %v3925 = vxor.u32 %v3921, 2147483648
    %v3926 = vxor.u32 %v3922, 2147483648
    %v3927 = vxor.u32 %v3923, 2147483648
    %v3928 = vmul.f32 %v3924, 1.442695
    %v3929 = vpow.pop %v3928
    %v3930 = vmul.f32 %v3925, 1.442695
    %v3931 = vpow.pop %v3930
    %v3932 = vmul.f32 %v3926, 1.442695
    %v3933 = vpow.pop %v3932
    %v3934 = vmul.f32 %v3927, 1.442695
    %v3935 = vpow.pop %v3934
    %v3936 = vadd.f32 %v3929, 1.0
    %v3937 = vadd.f32 %v3931, 1.0
    %v3938 = vadd.f32 %v3933, 1.0
    %v3939 = vadd.f32 %v3935, 1.0
    %v3940 = vrcp.pop %v3936
    %v3941 = vmul.f32 1.0, %v3940
    %v3942 = vrcp.pop %v3937
    %v3943 = vmul.f32 1.0, %v3942
    %v3944 = vrcp.pop %v3938
    %v3945 = vmul.f32 1.0, %v3944
    %v3946 = vrcp.pop %v3939
    %v3947 = vmul.f32 1.0, %v3946
    %v3948 = vmul.f32 %v3920, %v3941
    %v3949 = vmul.f32 %v3921, %v3943
    %v3950 = vmul.f32 %v3922, %v3945
    %v3951 = vmul.f32 %v3923, %v3947
    %v3953 = vlaneseq
    %v3954 = vshrl.u32 %v3953, 7
    %v3955 = vsub.s32 0, %v3954
    %v3956 = vrot.slane %v3177, %v3955
    %v3959 = vsel %vm583, %v3948, 0
    %v3962 = vsel %vm583, %v3949, 0
    %v3965 = vsel %vm583, %v3950, 0
    %v3968 = vsel %vm583, %v3951, 0
    %3970 = vmatprep.subr.mxu0 0.0
    %3971 = vmatpush1.msra.mxu0 %v3169
    %3972 = vmatprep.subr.mxu0 0.0
    %3973 = vmatpush1.msra.mxu0 %v3170
    %3974 = vmatprep.subr.mxu0 0.0
    %3975 = vmatpush1.msra.mxu0 %v3171
    %3976 = vmatprep.subr.mxu0 0.0
    %3977 = vmatpush1.msra.mxu0 %v3172
    %3978 = vmatprep.subr.mxu0 0.0
    %3979 = vmatpush1.msra.mxu0 %v3173
    %3980 = vmatprep.subr.mxu0 0.0
    %3981 = vmatpush1.msra.mxu0 %v3174
    %3982 = vmatprep.subr.mxu0 0.0
    %3983 = vmatpush1.msra.mxu0 %v3175
    %3984 = vmatprep.subr.mxu0 0.0
    %3985 = vmatpush1.msra.mxu0 %v3176
    %3986 = vmatprep.subr.mxu0 0.0
    %3987 = vmatpush1.msra.mxu0 0.0
    %3988 = vmatprep.subr.mxu0 0.0
    %3989 = vmatpush1.msra.mxu0 0.0
    %3990 = vmatprep.subr.mxu0 0.0
    %3991 = vmatpush1.msra.mxu0 0.0
    %3992 = vmatprep.subr.mxu0 0.0
    %3993 = vmatpush1.msra.mxu0 0.0
    %3994 = vmatprep.subr.mxu0 0.0
    %3995 = vmatpush1.msra.mxu0 0.0
    %3996 = vmatprep.subr.mxu0 0.0
    %3997 = vmatpush1.msra.mxu0 0.0
    %3998 = vmatprep.subr.mxu0 0.0
    %3999 = vmatpush1.msra.mxu0 0.0
    %4000 = vmatprep.subr.mxu0 0.0
    %4001 = vmatpush1.msra.mxu0 0.0
    %4002 = vmatprep.subr.mxu0 0.0
    %4003 = vmatpush1.msra.mxu0 0.0
    %4004 = vmatprep.subr.mxu0 0.0
    %4005 = vmatpush1.msra.mxu0 0.0
    %4006 = vmatprep.subr.mxu0 0.0
    %4007 = vmatpush1.msra.mxu0 0.0
    %4008 = vmatprep.subr.mxu0 0.0
    %4009 = vmatpush1.msra.mxu0 0.0
    %4010 = vmatprep.subr.mxu0 0.0
    %4011 = vmatpush1.msra.mxu0 0.0
    %4012 = vmatprep.subr.mxu0 0.0
    %4013 = vmatpush1.msra.mxu0 0.0
    %4014 = vmatprep.subr.mxu0 0.0
    %4015 = vmatpush1.msra.mxu0 0.0
    %4016 = vmatprep.subr.mxu0 0.0
    %4017 = vmatpush1.msra.mxu0 0.0
    %4018 = vmatprep.subr.mxu0 0.0
    %4019 = vmatpush1.msra.mxu0 0.0
    %4020 = vmatprep.subr.mxu0 0.0
    %4021 = vmatpush1.msra.mxu0 0.0
    %4022 = vmatprep.subr.mxu0 0.0
    %4023 = vmatpush1.msra.mxu0 0.0
    %4024 = vmatprep.subr.mxu0 0.0
    %4025 = vmatpush1.msra.mxu0 0.0
    %4026 = vmatprep.subr.mxu0 0.0
    %4027 = vmatpush1.msra.mxu0 0.0
    %4028 = vmatprep.subr.mxu0 0.0
    %4029 = vmatpush1.msra.mxu0 0.0
    %4030 = vmatprep.subr.mxu0 0.0
    %4031 = vmatpush1.msra.mxu0 0.0
    %4032 = vmatprep.subr.mxu0 0.0
    %4033 = vmatpush1.msra.mxu0 0.0
    %4034 = vmatprep.mubr.f32.mxu0 0.0
    %4035 = vmatmul.mubr.f32.gmra.mrb[0].mxu0 %v3959
    %v4036 = vpop.f32.mrb[0].mxu0
    %v4037 = vadd.f32 %v3956, %v4036
    %v4038 = vpop.f32.mrb[0].mxu0
    %4039 = vmatprep.mubr.f32.mxu0 0.0
    %4040 = vmatmul.mubr.f32.gmra.mrb[0].mxu0 %v3962
    %v4041 = vpop.f32.mrb[0].mxu0
    %v4042 = vadd.f32 %v3956, %v4041
    %v4043 = vpop.f32.mrb[0].mxu0
    %4044 = vmatprep.mubr.f32.mxu0 0.0
    %4045 = vmatmul.mubr.f32.gmra.mrb[0].mxu0 %v3965
    %v4046 = vpop.f32.mrb[0].mxu0
    %v4047 = vadd.f32 %v3956, %v4046
    %v4048 = vpop.f32.mrb[0].mxu0
    %4049 = vmatprep.mubr.f32.mxu0 0.0
    %4050 = vmatmul.mubr.f32.gmra.mrb[0].mxu0 %v3968
    %v4051 = vpop.f32.mrb[0].mxu0
    %v4052 = vadd.f32 %v3956, %v4051
    %v4053 = vpop.f32.mrb[0].mxu0
    %4054 = vdwg.mxu0
    %v4055 = vadd.f32 %v3147, %v4037
    %v4056 = vadd.f32 %v3148, %v4042
    %v4057 = vadd.f32 %v3149, %v4047
    %v4058 = vadd.f32 %v3150, %v4052
    %v4059 = vld [vmem:[#allocation39] sm:$0x1]
    %v4060 = vld [vmem:[#allocation41] sm:$0x1]
    %v4061 = vld [vmem:[#allocation42] sm:$0xff]
    %v4062 = vld [vmem:[#allocation42 + $0x8] sm:$0xff]
    %v4063 = vld [vmem:[#allocation42 + $0x10] sm:$0xff]
    %v4064 = vld [vmem:[#allocation42 + $0x18] sm:$0xff]
    %v4065 = vld [vmem:[#allocation42 + $0x20] sm:$0xff]
    %v4066 = vld [vmem:[#allocation42 + $0x28] sm:$0xff]
    %v4067 = vld [vmem:[#allocation42 + $0x30] sm:$0xff]
    %v4068 = vld [vmem:[#allocation42 + $0x38] sm:$0xff]
    %v4069 = vld [vmem:[#allocation44] sm:$0x1]
    %v4070 = vld [vmem:[#allocation45] sm:$0xff]
    %v4071 = vld [vmem:[#allocation45 + $0x8] sm:$0xff]
    %v4072 = vld [vmem:[#allocation45 + $0x10] sm:$0xff]
    %v4073 = vld [vmem:[#allocation45 + $0x18] sm:$0xff]
    %v4074 = vld [vmem:[#allocation45 + $0x20] sm:$0xff]
    %v4075 = vld [vmem:[#allocation45 + $0x28] sm:$0xff]
    %v4076 = vld [vmem:[#allocation45 + $0x30] sm:$0xff]
    %v4077 = vld [vmem:[#allocation45 + $0x38] sm:$0xff]
    %v4078 = vld [vmem:[#allocation45 + $0x40] sm:$0xff]
    %v4079 = vld [vmem:[#allocation45 + $0x48] sm:$0xff]
    %v4080 = vld [vmem:[#allocation45 + $0x50] sm:$0xff]
    %v4081 = vld [vmem:[#allocation45 + $0x58] sm:$0xff]
    %v4082 = vld [vmem:[#allocation45 + $0x60] sm:$0xff]
    %v4083 = vld [vmem:[#allocation45 + $0x68] sm:$0xff]
    %v4084 = vld [vmem:[#allocation45 + $0x70] sm:$0xff]
    %v4085 = vld [vmem:[#allocation45 + $0x78] sm:$0xff]
    %v4086 = vld [vmem:[#allocation47] sm:$0x1]
    %v4087 = vsel %vm583, %v4055, 0.0
    %4088 = vadd.xlane.f32.xlu0 %v4087
    %v4089 = vpop.xlane.xlu0 %4088
    %v4090 = vsel %vm583, %v4056, 0.0
    %4091 = vadd.xlane.f32.xlu0 %v4090
    %v4092 = vpop.xlane.xlu0 %4091
    %v4093 = vsel %vm583, %v4057, 0.0
    %4094 = vadd.xlane.f32.xlu0 %v4093
    %v4095 = vpop.xlane.xlu0 %4094
    %v4096 = vsel %vm583, %v4058, 0.0
    %4097 = vadd.xlane.f32.xlu0 %v4096
    %v4098 = vpop.xlane.xlu0 %4097
    %v4099 = vmul.f32 %v4089, %v641
    %v4100 = vmul.f32 %v4092, %v641
    %v4101 = vmul.f32 %v4095, %v641
    %v4102 = vmul.f32 %v4098, %v641
    %v4103 = vsub.f32 %v4055, %v4099
    %v4104 = vsub.f32 %v4056, %v4100
    %v4105 = vsub.f32 %v4057, %v4101
    %v4106 = vsub.f32 %v4058, %v4102
    %v4107 = vmul.f32 %v4103, %v4103
    %v4108 = vmul.f32 %v4104, %v4104
    %v4109 = vmul.f32 %v4105, %v4105
    %v4110 = vmul.f32 %v4106, %v4106
    %v4111 = vsel %vm583, %v4107, 0.0
    %4112 = vadd.xlane.f32.xlu0 %v4111
    %v4113 = vpop.xlane.xlu0 %4112
    %v4114 = vsel %vm583, %v4108, 0.0
    %4115 = vadd.xlane.f32.xlu0 %v4114
    %v4116 = vpop.xlane.xlu0 %4115
    %v4117 = vsel %vm583, %v4109, 0.0
    %4118 = vadd.xlane.f32.xlu0 %v4117
    %v4119 = vpop.xlane.xlu0 %4118
    %v4120 = vsel %vm583, %v4110, 0.0
    %4121 = vadd.xlane.f32.xlu0 %v4120
    %v4122 = vpop.xlane.xlu0 %4121
    %v4123 = vmul.f32 %v4113, %v641
    %v4124 = vmul.f32 %v4116, %v641
    %v4125 = vmul.f32 %v4119, %v641
    %v4126 = vmul.f32 %v4122, %v641
    %v4127 = vadd.f32 %v4123, 1e-05
    %v4128 = vadd.f32 %v4124, 1e-05
    %v4129 = vadd.f32 %v4125, 1e-05
    %v4130 = vadd.f32 %v4126, 1e-05
    %v4131 = vrsqrt.pop %v4127
    %v4132 = vrsqrt.pop %v4128
    %v4133 = vrsqrt.pop %v4129
    %v4134 = vrsqrt.pop %v4130
    %v4135 = vmul.f32 %v4103, %v4131
    %v4136 = vmul.f32 %v4104, %v4132
    %v4137 = vmul.f32 %v4105, %v4133
    %v4138 = vmul.f32 %v4106, %v4134
    %v4140 = vlaneseq
    %v4141 = vshrl.u32 %v4140, 7
    %v4142 = vsub.s32 0, %v4141
    %v4143 = vrot.slane %v4059, %v4142
    %v4145 = vmul.f32 %v4135, %v4143
    %v4146 = vmul.f32 %v4136, %v4143
    %v4147 = vmul.f32 %v4137, %v4143
    %v4148 = vmul.f32 %v4138, %v4143
    %v4150 = vlaneseq
    %v4151 = vshrl.u32 %v4150, 7
    %v4152 = vsub.s32 0, %v4151
    %v4153 = vrot.slane %v4060, %v4152
    %v4155 = vadd.f32 %v4145, %v4153
    %v4156 = vadd.f32 %v4146, %v4153
    %v4157 = vadd.f32 %v4147, %v4153
    %v4158 = vadd.f32 %v4148, %v4153
    %v4160 = vlaneseq
    %v4161 = vshrl.u32 %v4160, 7
    %v4162 = vsub.s32 0, %v4161
    %v4163 = vrot.slane %v4069, %v4162
    %v4166 = vsel %vm583, %v4155, 0
    %v4169 = vsel %vm583, %v4156, 0
    %v4172 = vsel %vm583, %v4157, 0
    %v4175 = vsel %vm583, %v4158, 0
    %4177 = vmatprep.subr.mxu0 0.0
    %4178 = vmatpush1.msra.mxu0 %v4061
    %4179 = vmatprep.subr.mxu0 0.0
    %4180 = vmatpush1.msra.mxu0 %v4062
    %4181 = vmatprep.subr.mxu0 0.0
    %4182 = vmatpush1.msra.mxu0 %v4063
    %4183 = vmatprep.subr.mxu0 0.0
    %4184 = vmatpush1.msra.mxu0 %v4064
    %4185 = vmatprep.subr.mxu0 0.0
    %4186 = vmatpush1.msra.mxu0 %v4065
    %4187 = vmatprep.subr.mxu0 0.0
    %4188 = vmatpush1.msra.mxu0 %v4066
    %4189 = vmatprep.subr.mxu0 0.0
    %4190 = vmatpush1.msra.mxu0 %v4067
    %4191 = vmatprep.subr.mxu0 0.0
    %4192 = vmatpush1.msra.mxu0 %v4068
    %4193 = vmatprep.subr.mxu0 0.0
    %4194 = vmatpush1.msra.mxu0 0.0
    %4195 = vmatprep.subr.mxu0 0.0
    %4196 = vmatpush1.msra.mxu0 0.0
    %4197 = vmatprep.subr.mxu0 0.0
    %4198 = vmatpush1.msra.mxu0 0.0
    %4199 = vmatprep.subr.mxu0 0.0
    %4200 = vmatpush1.msra.mxu0 0.0
    %4201 = vmatprep.subr.mxu0 0.0
    %4202 = vmatpush1.msra.mxu0 0.0
    %4203 = vmatprep.subr.mxu0 0.0
    %4204 = vmatpush1.msra.mxu0 0.0
    %4205 = vmatprep.subr.mxu0 0.0
    %4206 = vmatpush1.msra.mxu0 0.0
    %4207 = vmatprep.subr.mxu0 0.0
    %4208 = vmatpush1.msra.mxu0 0.0
    %4209 = vmatprep.subr.mxu0 0.0
    %4210 = vmatpush1.msra.mxu0 0.0
    %4211 = vmatprep.subr.mxu0 0.0
    %4212 = vmatpush1.msra.mxu0 0.0
    %4213 = vmatprep.subr.mxu0 0.0
    %4214 = vmatpush1.msra.mxu0 0.0
    %4215 = vmatprep.subr.mxu0 0.0
    %4216 = vmatpush1.msra.mxu0 0.0
    %4217 = vmatprep.subr.mxu0 0.0
    %4218 = vmatpush1.msra.mxu0 0.0
    %4219 = vmatprep.subr.mxu0 0.0
    %4220 = vmatpush1.msra.mxu0 0.0
    %4221 = vmatprep.subr.mxu0 0.0
    %4222 = vmatpush1.msra.mxu0 0.0
    %4223 = vmatprep.subr.mxu0 0.0
    %4224 = vmatpush1.msra.mxu0 0.0
    %4225 = vmatprep.subr.mxu0 0.0
    %4226 = vmatpush1.msra.mxu0 0.0
    %4227 = vmatprep.subr.mxu0 0.0
    %4228 = vmatpush1.msra.mxu0 0.0
    %4229 = vmatprep.subr.mxu0 0.0
    %4230 = vmatpush1.msra.mxu0 0.0
    %4231 = vmatprep.subr.mxu0 0.0
    %4232 = vmatpush1.msra.mxu0 0.0
    %4233 = vmatprep.subr.mxu0 0.0
    %4234 = vmatpush1.msra.mxu0 0.0
    %4235 = vmatprep.subr.mxu0 0.0
    %4236 = vmatpush1.msra.mxu0 0.0
    %4237 = vmatprep.subr.mxu0 0.0
    %4238 = vmatpush1.msra.mxu0 0.0
    %4239 = vmatprep.subr.mxu0 0.0
    %4240 = vmatpush1.msra.mxu0 0.0
    %4241 = vmatprep.mubr.f32.mxu0 0.0
    %4242 = vmatmul.mubr.f32.gmra.mrb[0].mxu0 %v4166
    %v4243 = vpop.f32.mrb[0].mxu0
    %v4244 = vadd.f32 %v4163, %v4243
    %v4245 = vpop.f32.mrb[0].mxu0
    %4246 = vmatprep.mubr.f32.mxu0 0.0
    %4247 = vmatmul.mubr.f32.gmra.mrb[0].mxu0 %v4169
    %v4248 = vpop.f32.mrb[0].mxu0
    %v4249 = vadd.f32 %v4163, %v4248
    %v4250 = vpop.f32.mrb[0].mxu0
    %4251 = vmatprep.mubr.f32.mxu0 0.0
    %4252 = vmatmul.mubr.f32.gmra.mrb[0].mxu0 %v4172
    %v4253 = vpop.f32.mrb[0].mxu0
    %v4254 = vadd.f32 %v4163, %v4253
    %v4255 = vpop.f32.mrb[0].mxu0
    %4256 = vmatprep.mubr.f32.mxu0 0.0
    %4257 = vmatmul.mubr.f32.gmra.mrb[0].mxu0 %v4175
    %v4258 = vpop.f32.mrb[0].mxu0
    %v4259 = vadd.f32 %v4163, %v4258
    %v4260 = vpop.f32.mrb[0].mxu0
    %4261 = vdwg.mxu0
    %v4262 = vxor.u32 %v4244, 2147483648
    %v4263 = vxor.u32 %v4249, 2147483648
    %v4264 = vxor.u32 %v4254, 2147483648
    %v4265 = vxor.u32 %v4259, 2147483648
    %v4266 = vmul.f32 %v4262, 1.442695
    %v4267 = vpow.pop %v4266
    %v4268 = vmul.f32 %v4263, 1.442695
    %v4269 = vpow.pop %v4268
    %v4270 = vmul.f32 %v4264, 1.442695
    %v4271 = vpow.pop %v4270
    %v4272 = vmul.f32 %v4265, 1.442695
    %v4273 = vpow.pop %v4272
    %v4274 = vadd.f32 %v4267, 1.0
    %v4275 = vadd.f32 %v4269, 1.0
    %v4276 = vadd.f32 %v4271, 1.0
    %v4277 = vadd.f32 %v4273, 1.0
    %v4278 = vrcp.pop %v4274
    %v4279 = vmul.f32 1.0, %v4278
    %v4280 = vrcp.pop %v4275
    %v4281 = vmul.f32 1.0, %v4280
    %v4282 = vrcp.pop %v4276
    %v4283 = vmul.f32 1.0, %v4282
    %v4284 = vrcp.pop %v4277
    %v4285 = vmul.f32 1.0, %v4284
    %v4286 = vmul.f32 %v4244, %v4279
    %v4287 = vmul.f32 %v4249, %v4281
    %v4288 = vmul.f32 %v4254, %v4283
    %v4289 = vmul.f32 %v4259, %v4285
    %v4291 = vlaneseq
    %v4292 = vshrl.u32 %v4291, 7
    %v4293 = vsub.s32 0, %v4292
    %v4294 = vrot.slane %v4086, %v4293
    %4296 = vmatprep.subr.mxu0 0.0
    %4297 = vmatpush1.msra.mxu0 %v4070
    %4298 = vmatprep.subr.mxu0 0.0
    %4299 = vmatpush1.msra.mxu0 %v4071
    %4300 = vmatprep.subr.mxu0 0.0
    %4301 = vmatpush1.msra.mxu0 %v4072
    %4302 = vmatprep.subr.mxu0 0.0
    %4303 = vmatpush1.msra.mxu0 %v4073
    %4304 = vmatprep.subr.mxu0 0.0
    %4305 = vmatpush1.msra.mxu0 %v4074
    %4306 = vmatprep.subr.mxu0 0.0
    %4307 = vmatpush1.msra.mxu0 %v4075
    %4308 = vmatprep.subr.mxu0 0.0
    %4309 = vmatpush1.msra.mxu0 %v4076
    %4310 = vmatprep.subr.mxu0 0.0
    %4311 = vmatpush1.msra.mxu0 %v4077
    %4312 = vmatprep.subr.mxu0 0.0
    %4313 = vmatpush1.msra.mxu0 %v4078
    %4314 = vmatprep.subr.mxu0 0.0
    %4315 = vmatpush1.msra.mxu0 %v4079
    %4316 = vmatprep.subr.mxu0 0.0
    %4317 = vmatpush1.msra.mxu0 %v4080
    %4318 = vmatprep.subr.mxu0 0.0
    %4319 = vmatpush1.msra.mxu0 %v4081
    %4320 = vmatprep.subr.mxu0 0.0
    %4321 = vmatpush1.msra.mxu0 %v4082
    %4322 = vmatprep.subr.mxu0 0.0
    %4323 = vmatpush1.msra.mxu0 %v4083
    %4324 = vmatprep.subr.mxu0 0.0
    %4325 = vmatpush1.msra.mxu0 %v4084
    %4326 = vmatprep.subr.mxu0 0.0
    %4327 = vmatpush1.msra.mxu0 %v4085
    %4328 = vmatprep.subr.mxu0 0.0
    %4329 = vmatpush1.msra.mxu0 0.0
    %4330 = vmatprep.subr.mxu0 0.0
    %4331 = vmatpush1.msra.mxu0 0.0
    %4332 = vmatprep.subr.mxu0 0.0
    %4333 = vmatpush1.msra.mxu0 0.0
    %4334 = vmatprep.subr.mxu0 0.0
    %4335 = vmatpush1.msra.mxu0 0.0
    %4336 = vmatprep.subr.mxu0 0.0
    %4337 = vmatpush1.msra.mxu0 0.0
    %4338 = vmatprep.subr.mxu0 0.0
    %4339 = vmatpush1.msra.mxu0 0.0
    %4340 = vmatprep.subr.mxu0 0.0
    %4341 = vmatpush1.msra.mxu0 0.0
    %4342 = vmatprep.subr.mxu0 0.0
    %4343 = vmatpush1.msra.mxu0 0.0
    %4344 = vmatprep.subr.mxu0 0.0
    %4345 = vmatpush1.msra.mxu0 0.0
    %4346 = vmatprep.subr.mxu0 0.0
    %4347 = vmatpush1.msra.mxu0 0.0
    %4348 = vmatprep.subr.mxu0 0.0
    %4349 = vmatpush1.msra.mxu0 0.0
    %4350 = vmatprep.subr.mxu0 0.0
    %4351 = vmatpush1.msra.mxu0 0.0
    %4352 = vmatprep.subr.mxu0 0.0
    %4353 = vmatpush1.msra.mxu0 0.0
    %4354 = vmatprep.subr.mxu0 0.0
    %4355 = vmatpush1.msra.mxu0 0.0
    %4356 = vmatprep.subr.mxu0 0.0
    %4357 = vmatpush1.msra.mxu0 0.0
    %4358 = vmatprep.subr.mxu0 0.0
    %4359 = vmatpush1.msra.mxu0 0.0
    %4360 = vmatprep.mubr.f32.mxu0 0.0
    %4361 = vmatmul.mubr.f32.gmra.mrb[0].mxu0 %v4286
    %v4362 = vpop.f32.mrb[0].mxu0
    %v4363 = vadd.f32 %v4294, %v4362
    %v4364 = vpop.f32.mrb[0].mxu0
    %4365 = vmatprep.mubr.f32.mxu0 0.0
    %4366 = vmatmul.mubr.f32.gmra.mrb[0].mxu0 %v4287
    %v4367 = vpop.f32.mrb[0].mxu0
    %v4368 = vadd.f32 %v4294, %v4367
    %v4369 = vpop.f32.mrb[0].mxu0
    %4370 = vmatprep.mubr.f32.mxu0 0.0
    %4371 = vmatmul.mubr.f32.gmra.mrb[0].mxu0 %v4288
    %v4372 = vpop.f32.mrb[0].mxu0
    %v4373 = vadd.f32 %v4294, %v4372
    %v4374 = vpop.f32.mrb[0].mxu0
    %4375 = vmatprep.mubr.f32.mxu0 0.0
    %4376 = vmatmul.mubr.f32.gmra.mrb[0].mxu0 %v4289
    %v4377 = vpop.f32.mrb[0].mxu0
    %v4378 = vadd.f32 %v4294, %v4377
    %v4379 = vpop.f32.mrb[0].mxu0
    %4380 = vdwg.mxu0
    %v4381 = vmul.f32 %v4363, 0.5
    %v4382 = vmul.f32 %v4368, 0.5
    %v4383 = vmul.f32 %v4373, 0.5
    %v4384 = vmul.f32 %v4378, 0.5
    %v4385 = vadd.f32 %v4055, %v4381
    %v4386 = vadd.f32 %v4056, %v4382
    %v4387 = vadd.f32 %v4057, %v4383
    %v4388 = vadd.f32 %v4058, %v4384
    %v4389 = vld [vmem:[#allocation48] sm:$0x1]
    %v4390 = vld [vmem:[#allocation50] sm:$0x1]
    %v4391 = vsel %vm583, %v4385, 0.0
    %4392 = vadd.xlane.f32.xlu0 %v4391
    %v4393 = vpop.xlane.xlu0 %4392
    %v4394 = vsel %vm583, %v4386, 0.0
    %4395 = vadd.xlane.f32.xlu0 %v4394
    %v4396 = vpop.xlane.xlu0 %4395
    %v4397 = vsel %vm583, %v4387, 0.0
    %4398 = vadd.xlane.f32.xlu0 %v4397
    %v4399 = vpop.xlane.xlu0 %4398
    %v4400 = vsel %vm583, %v4388, 0.0
    %4401 = vadd.xlane.f32.xlu0 %v4400
    %v4402 = vpop.xlane.xlu0 %4401
    %v4403 = vmul.f32 %v4393, %v641
    %v4404 = vmul.f32 %v4396, %v641
    %v4405 = vmul.f32 %v4399, %v641
    %v4406 = vmul.f32 %v4402, %v641
    %v4407 = vsub.f32 %v4385, %v4403
    %v4408 = vsub.f32 %v4386, %v4404
    %v4409 = vsub.f32 %v4387, %v4405
    %v4410 = vsub.f32 %v4388, %v4406
    %v4411 = vmul.f32 %v4407, %v4407
    %v4412 = vmul.f32 %v4408, %v4408
    %v4413 = vmul.f32 %v4409, %v4409
    %v4414 = vmul.f32 %v4410, %v4410
    %v4415 = vsel %vm583, %v4411, 0.0
    %4416 = vadd.xlane.f32.xlu0 %v4415
    %v4417 = vpop.xlane.xlu0 %4416
    %v4418 = vsel %vm583, %v4412, 0.0
    %4419 = vadd.xlane.f32.xlu0 %v4418
    %v4420 = vpop.xlane.xlu0 %4419
    %v4421 = vsel %vm583, %v4413, 0.0
    %4422 = vadd.xlane.f32.xlu0 %v4421
    %v4423 = vpop.xlane.xlu0 %4422
    %v4424 = vsel %vm583, %v4414, 0.0
    %4425 = vadd.xlane.f32.xlu0 %v4424
    %v4426 = vpop.xlane.xlu0 %4425
    %v4427 = vmul.f32 %v4417, %v641
    %v4428 = vmul.f32 %v4420, %v641
    %v4429 = vmul.f32 %v4423, %v641
    %v4430 = vmul.f32 %v4426, %v641
    %v4431 = vadd.f32 %v4427, 1e-05
    %v4432 = vadd.f32 %v4428, 1e-05
    %v4433 = vadd.f32 %v4429, 1e-05
    %v4434 = vadd.f32 %v4430, 1e-05
    %v4435 = vrsqrt.pop %v4431
    %v4436 = vrsqrt.pop %v4432
    %v4437 = vrsqrt.pop %v4433
    %v4438 = vrsqrt.pop %v4434
    %v4439 = vmul.f32 %v4407, %v4435
    %v4440 = vmul.f32 %v4408, %v4436
    %v4441 = vmul.f32 %v4409, %v4437
    %v4442 = vmul.f32 %v4410, %v4438
    %v4444 = vlaneseq
    %v4445 = vshrl.u32 %v4444, 7
    %v4446 = vsub.s32 0, %v4445
    %v4447 = vrot.slane %v4389, %v4446
    %v4449 = vmul.f32 %v4439, %v4447
    %v4450 = vmul.f32 %v4440, %v4447
    %v4451 = vmul.f32 %v4441, %v4447
    %v4452 = vmul.f32 %v4442, %v4447
    %v4454 = vlaneseq
    %v4455 = vshrl.u32 %v4454, 7
    %v4456 = vsub.s32 0, %v4455
    %v4457 = vrot.slane %v4390, %v4456
    %v4459 = vadd.f32 %v4449, %v4457
    %v4460 = vadd.f32 %v4450, %v4457
    %v4461 = vadd.f32 %v4451, %v4457
    %v4462 = vadd.f32 %v4452, %v4457
    %s4463 = scalar_lea.vmem [#allocation6], 1
    %v4464 = vld [vmem:[%s4463] sm:$0x1]
    %s4465 = scalar_lea.vmem [#allocation8], 1
    %v4466 = vld [vmem:[%s4465] sm:$0x1]
    %s4467 = scalar_lea.vmem [#allocation9], 64
    %v4468 = vld [vmem:[%s4467] sm:$0xff]
    %v4469 = vld [vmem:[%s4467 + $0x8] sm:$0xff]
    %v4470 = vld [vmem:[%s4467 + $0x10] sm:$0xff]
    %v4471 = vld [vmem:[%s4467 + $0x18] sm:$0xff]
    %v4472 = vld [vmem:[%s4467 + $0x20] sm:$0xff]
    %v4473 = vld [vmem:[%s4467 + $0x28] sm:$0xff]
    %v4474 = vld [vmem:[%s4467 + $0x30] sm:$0xff]
    %v4475 = vld [vmem:[%s4467 + $0x38] sm:$0xff]
    %s4476 = scalar_lea.vmem [#allocation11], 1
    %v4477 = vld [vmem:[%s4476] sm:$0x1]
    %s4478 = scalar_lea.vmem [#allocation12], 128
    %v4479 = vld [vmem:[%s4478] sm:$0xff]
    %v4480 = vld [vmem:[%s4478 + $0x8] sm:$0xff]
    %v4481 = vld [vmem:[%s4478 + $0x10] sm:$0xff]
    %v4482 = vld [vmem:[%s4478 + $0x18] sm:$0xff]
    %v4483 = vld [vmem:[%s4478 + $0x20] sm:$0xff]
    %v4484 = vld [vmem:[%s4478 + $0x28] sm:$0xff]
    %v4485 = vld [vmem:[%s4478 + $0x30] sm:$0xff]
    %v4486 = vld [vmem:[%s4478 + $0x38] sm:$0xff]
    %v4487 = vld [vmem:[%s4478 + $0x40] sm:$0xff]
    %v4488 = vld [vmem:[%s4478 + $0x48] sm:$0xff]
    %v4489 = vld [vmem:[%s4478 + $0x50] sm:$0xff]
    %v4490 = vld [vmem:[%s4478 + $0x58] sm:$0xff]
    %v4491 = vld [vmem:[%s4478 + $0x60] sm:$0xff]
    %v4492 = vld [vmem:[%s4478 + $0x68] sm:$0xff]
    %v4493 = vld [vmem:[%s4478 + $0x70] sm:$0xff]
    %v4494 = vld [vmem:[%s4478 + $0x78] sm:$0xff]
    %s4495 = scalar_lea.vmem [#allocation14], 1
    %v4496 = vld [vmem:[%s4495] sm:$0x1]
    %v4497 = vsel %vm583, %v4459, 0.0
    %4498 = vadd.xlane.f32.xlu0 %v4497
    %v4499 = vpop.xlane.xlu0 %4498
    %v4500 = vsel %vm583, %v4460, 0.0
    %4501 = vadd.xlane.f32.xlu0 %v4500
    %v4502 = vpop.xlane.xlu0 %4501
    %v4503 = vsel %vm583, %v4461, 0.0
    %4504 = vadd.xlane.f32.xlu0 %v4503
    %v4505 = vpop.xlane.xlu0 %4504
    %v4506 = vsel %vm583, %v4462, 0.0
    %4507 = vadd.xlane.f32.xlu0 %v4506
    %v4508 = vpop.xlane.xlu0 %4507
    %v4509 = vmul.f32 %v4499, %v641
    %v4510 = vmul.f32 %v4502, %v641
    %v4511 = vmul.f32 %v4505, %v641
    %v4512 = vmul.f32 %v4508, %v641
    %v4513 = vsub.f32 %v4459, %v4509
    %v4514 = vsub.f32 %v4460, %v4510
    %v4515 = vsub.f32 %v4461, %v4511
    %v4516 = vsub.f32 %v4462, %v4512
    %v4517 = vmul.f32 %v4513, %v4513
    %v4518 = vmul.f32 %v4514, %v4514
    %v4519 = vmul.f32 %v4515, %v4515
    %v4520 = vmul.f32 %v4516, %v4516
    %v4521 = vsel %vm583, %v4517, 0.0
    %4522 = vadd.xlane.f32.xlu0 %v4521
    %v4523 = vpop.xlane.xlu0 %4522
    %v4524 = vsel %vm583, %v4518, 0.0
    %4525 = vadd.xlane.f32.xlu0 %v4524
    %v4526 = vpop.xlane.xlu0 %4525
    %v4527 = vsel %vm583, %v4519, 0.0
    %4528 = vadd.xlane.f32.xlu0 %v4527
    %v4529 = vpop.xlane.xlu0 %4528
    %v4530 = vsel %vm583, %v4520, 0.0
    %4531 = vadd.xlane.f32.xlu0 %v4530
    %v4532 = vpop.xlane.xlu0 %4531
    %v4533 = vmul.f32 %v4523, %v641
    %v4534 = vmul.f32 %v4526, %v641
    %v4535 = vmul.f32 %v4529, %v641
    %v4536 = vmul.f32 %v4532, %v641
    %v4537 = vadd.f32 %v4533, 1e-05
    %v4538 = vadd.f32 %v4534, 1e-05
    %v4539 = vadd.f32 %v4535, 1e-05
    %v4540 = vadd.f32 %v4536, 1e-05
    %v4541 = vrsqrt.pop %v4537
    %v4542 = vrsqrt.pop %v4538
    %v4543 = vrsqrt.pop %v4539
    %v4544 = vrsqrt.pop %v4540
    %v4545 = vmul.f32 %v4513, %v4541
    %v4546 = vmul.f32 %v4514, %v4542
    %v4547 = vmul.f32 %v4515, %v4543
    %v4548 = vmul.f32 %v4516, %v4544
    %v4550 = vlaneseq
    %v4551 = vshrl.u32 %v4550, 7
    %v4552 = vsub.s32 0, %v4551
    %v4553 = vrot.slane %v4464, %v4552
    %v4555 = vmul.f32 %v4545, %v4553
    %v4556 = vmul.f32 %v4546, %v4553
    %v4557 = vmul.f32 %v4547, %v4553
    %v4558 = vmul.f32 %v4548, %v4553
    %v4560 = vlaneseq
    %v4561 = vshrl.u32 %v4560, 7
    %v4562 = vsub.s32 0, %v4561
    %v4563 = vrot.slane %v4466, %v4562
    %v4565 = vadd.f32 %v4555, %v4563
    %v4566 = vadd.f32 %v4556, %v4563
    %v4567 = vadd.f32 %v4557, %v4563
    %v4568 = vadd.f32 %v4558, %v4563
    %v4570 = vlaneseq
    %v4571 = vshrl.u32 %v4570, 7
    %v4572 = vsub.s32 0, %v4571
    %v4573 = vrot.slane %v4477, %v4572
    %v4576 = vsel %vm583, %v4565, 0
    %v4579 = vsel %vm583, %v4566, 0
    %v4582 = vsel %vm583, %v4567, 0
    %v4585 = vsel %vm583, %v4568, 0
    %4587 = vmatprep.subr.mxu0 0.0
    %4588 = vmatpush1.msra.mxu0 %v4468
    %4589 = vmatprep.subr.mxu0 0.0
    %4590 = vmatpush1.msra.mxu0 %v4469
    %4591 = vmatprep.subr.mxu0 0.0
    %4592 = vmatpush1.msra.mxu0 %v4470
    %4593 = vmatprep.subr.mxu0 0.0
    %4594 = vmatpush1.msra.mxu0 %v4471
    %4595 = vmatprep.subr.mxu0 0.0
    %4596 = vmatpush1.msra.mxu0 %v4472
    %4597 = vmatprep.subr.mxu0 0.0
    %4598 = vmatpush1.msra.mxu0 %v4473
    %4599 = vmatprep.subr.mxu0 0.0
    %4600 = vmatpush1.msra.mxu0 %v4474
    %4601 = vmatprep.subr.mxu0 0.0
    %4602 = vmatpush1.msra.mxu0 %v4475
    %4603 = vmatprep.subr.mxu0 0.0
    %4604 = vmatpush1.msra.mxu0 0.0
    %4605 = vmatprep.subr.mxu0 0.0
    %4606 = vmatpush1.msra.mxu0 0.0
    %4607 = vmatprep.subr.mxu0 0.0
    %4608 = vmatpush1.msra.mxu0 0.0
    %4609 = vmatprep.subr.mxu0 0.0
    %4610 = vmatpush1.msra.mxu0 0.0
    %4611 = vmatprep.subr.mxu0 0.0
    %4612 = vmatpush1.msra.mxu0 0.0
    %4613 = vmatprep.subr.mxu0 0.0
    %4614 = vmatpush1.msra.mxu0 0.0
    %4615 = vmatprep.subr.mxu0 0.0
    %4616 = vmatpush1.msra.mxu0 0.0
    %4617 = vmatprep.subr.mxu0 0.0
    %4618 = vmatpush1.msra.mxu0 0.0
    %4619 = vmatprep.subr.mxu0 0.0
    %4620 = vmatpush1.msra.mxu0 0.0
    %4621 = vmatprep.subr.mxu0 0.0
    %4622 = vmatpush1.msra.mxu0 0.0
    %4623 = vmatprep.subr.mxu0 0.0
    %4624 = vmatpush1.msra.mxu0 0.0
    %4625 = vmatprep.subr.mxu0 0.0
    %4626 = vmatpush1.msra.mxu0 0.0
    %4627 = vmatprep.subr.mxu0 0.0
    %4628 = vmatpush1.msra.mxu0 0.0
    %4629 = vmatprep.subr.mxu0 0.0
    %4630 = vmatpush1.msra.mxu0 0.0
    %4631 = vmatprep.subr.mxu0 0.0
    %4632 = vmatpush1.msra.mxu0 0.0
    %4633 = vmatprep.subr.mxu0 0.0
    %4634 = vmatpush1.msra.mxu0 0.0
    %4635 = vmatprep.subr.mxu0 0.0
    %4636 = vmatpush1.msra.mxu0 0.0
    %4637 = vmatprep.subr.mxu0 0.0
    %4638 = vmatpush1.msra.mxu0 0.0
    %4639 = vmatprep.subr.mxu0 0.0
    %4640 = vmatpush1.msra.mxu0 0.0
    %4641 = vmatprep.subr.mxu0 0.0
    %4642 = vmatpush1.msra.mxu0 0.0
    %4643 = vmatprep.subr.mxu0 0.0
    %4644 = vmatpush1.msra.mxu0 0.0
    %4645 = vmatprep.subr.mxu0 0.0
    %4646 = vmatpush1.msra.mxu0 0.0
    %4647 = vmatprep.subr.mxu0 0.0
    %4648 = vmatpush1.msra.mxu0 0.0
    %4649 = vmatprep.subr.mxu0 0.0
    %4650 = vmatpush1.msra.mxu0 0.0
    %4651 = vmatprep.mubr.f32.mxu0 0.0
    %4652 = vmatmul.mubr.f32.gmra.mrb[0].mxu0 %v4576
    %v4653 = vpop.f32.mrb[0].mxu0
    %v4654 = vadd.f32 %v4573, %v4653
    %v4655 = vpop.f32.mrb[0].mxu0
    %4656 = vmatprep.mubr.f32.mxu0 0.0
    %4657 = vmatmul.mubr.f32.gmra.mrb[0].mxu0 %v4579
    %v4658 = vpop.f32.mrb[0].mxu0
    %v4659 = vadd.f32 %v4573, %v4658
    %v4660 = vpop.f32.mrb[0].mxu0
    %4661 = vmatprep.mubr.f32.mxu0 0.0
    %4662 = vmatmul.mubr.f32.gmra.mrb[0].mxu0 %v4582
    %v4663 = vpop.f32.mrb[0].mxu0
    %v4664 = vadd.f32 %v4573, %v4663
    %v4665 = vpop.f32.mrb[0].mxu0
    %4666 = vmatprep.mubr.f32.mxu0 0.0
    %4667 = vmatmul.mubr.f32.gmra.mrb[0].mxu0 %v4585
    %v4668 = vpop.f32.mrb[0].mxu0
    %v4669 = vadd.f32 %v4573, %v4668
    %v4670 = vpop.f32.mrb[0].mxu0
    %4671 = vdwg.mxu0
    %v4672 = vxor.u32 %v4654, 2147483648
    %v4673 = vxor.u32 %v4659, 2147483648
    %v4674 = vxor.u32 %v4664, 2147483648
    %v4675 = vxor.u32 %v4669, 2147483648
    %v4676 = vmul.f32 %v4672, 1.442695
    %v4677 = vpow.pop %v4676
    %v4678 = vmul.f32 %v4673, 1.442695
    %v4679 = vpow.pop %v4678
    %v4680 = vmul.f32 %v4674, 1.442695
    %v4681 = vpow.pop %v4680
    %v4682 = vmul.f32 %v4675, 1.442695
    %v4683 = vpow.pop %v4682
    %v4684 = vadd.f32 %v4677, 1.0
    %v4685 = vadd.f32 %v4679, 1.0
    %v4686 = vadd.f32 %v4681, 1.0
    %v4687 = vadd.f32 %v4683, 1.0
    %v4688 = vrcp.pop %v4684
    %v4689 = vmul.f32 1.0, %v4688
    %v4690 = vrcp.pop %v4685
    %v4691 = vmul.f32 1.0, %v4690
    %v4692 = vrcp.pop %v4686
    %v4693 = vmul.f32 1.0, %v4692
    %v4694 = vrcp.pop %v4687
    %v4695 = vmul.f32 1.0, %v4694
    %v4696 = vmul.f32 %v4654, %v4689
    %v4697 = vmul.f32 %v4659, %v4691
    %v4698 = vmul.f32 %v4664, %v4693
    %v4699 = vmul.f32 %v4669, %v4695
    %v4701 = vlaneseq
    %v4702 = vshrl.u32 %v4701, 7
    %v4703 = vsub.s32 0, %v4702
    %v4704 = vrot.slane %v4496, %v4703
    %4706 = vmatprep.subr.mxu0 0.0
    %4707 = vmatpush1.msra.mxu0 %v4479
    %4708 = vmatprep.subr.mxu0 0.0
    %4709 = vmatpush1.msra.mxu0 %v4480
    %4710 = vmatprep.subr.mxu0 0.0
    %4711 = vmatpush1.msra.mxu0 %v4481
    %4712 = vmatprep.subr.mxu0 0.0
    %4713 = vmatpush1.msra.mxu0 %v4482
    %4714 = vmatprep.subr.mxu0 0.0
    %4715 = vmatpush1.msra.mxu0 %v4483
    %4716 = vmatprep.subr.mxu0 0.0
    %4717 = vmatpush1.msra.mxu0 %v4484
    %4718 = vmatprep.subr.mxu0 0.0
    %4719 = vmatpush1.msra.mxu0 %v4485
    %4720 = vmatprep.subr.mxu0 0.0
    %4721 = vmatpush1.msra.mxu0 %v4486
    %4722 = vmatprep.subr.mxu0 0.0
    %4723 = vmatpush1.msra.mxu0 %v4487
    %4724 = vmatprep.subr.mxu0 0.0
    %4725 = vmatpush1.msra.mxu0 %v4488
    %4726 = vmatprep.subr.mxu0 0.0
    %4727 = vmatpush1.msra.mxu0 %v4489
    %4728 = vmatprep.subr.mxu0 0.0
    %4729 = vmatpush1.msra.mxu0 %v4490
    %4730 = vmatprep.subr.mxu0 0.0
    %4731 = vmatpush1.msra.mxu0 %v4491
    %4732 = vmatprep.subr.mxu0 0.0
    %4733 = vmatpush1.msra.mxu0 %v4492
    %4734 = vmatprep.subr.mxu0 0.0
    %4735 = vmatpush1.msra.mxu0 %v4493
    %4736 = vmatprep.subr.mxu0 0.0
    %4737 = vmatpush1.msra.mxu0 %v4494
    %4738 = vmatprep.subr.mxu0 0.0
    %4739 = vmatpush1.msra.mxu0 0.0
    %4740 = vmatprep.subr.mxu0 0.0
    %4741 = vmatpush1.msra.mxu0 0.0
    %4742 = vmatprep.subr.mxu0 0.0
    %4743 = vmatpush1.msra.mxu0 0.0
    %4744 = vmatprep.subr.mxu0 0.0
    %4745 = vmatpush1.msra.mxu0 0.0
    %4746 = vmatprep.subr.mxu0 0.0
    %4747 = vmatpush1.msra.mxu0 0.0
    %4748 = vmatprep.subr.mxu0 0.0
    %4749 = vmatpush1.msra.mxu0 0.0
    %4750 = vmatprep.subr.mxu0 0.0
    %4751 = vmatpush1.msra.mxu0 0.0
    %4752 = vmatprep.subr.mxu0 0.0
    %4753 = vmatpush1.msra.mxu0 0.0
    %4754 = vmatprep.subr.mxu0 0.0
    %4755 = vmatpush1.msra.mxu0 0.0
    %4756 = vmatprep.subr.mxu0 0.0
    %4757 = vmatpush1.msra.mxu0 0.0
    %4758 = vmatprep.subr.mxu0 0.0
    %4759 = vmatpush1.msra.mxu0 0.0
    %4760 = vmatprep.subr.mxu0 0.0
    %4761 = vmatpush1.msra.mxu0 0.0
    %4762 = vmatprep.subr.mxu0 0.0
    %4763 = vmatpush1.msra.mxu0 0.0
    %4764 = vmatprep.subr.mxu0 0.0
    %4765 = vmatpush1.msra.mxu0 0.0
    %4766 = vmatprep.subr.mxu0 0.0
    %4767 = vmatpush1.msra.mxu0 0.0
    %4768 = vmatprep.subr.mxu0 0.0
    %4769 = vmatpush1.msra.mxu0 0.0
    %4770 = vmatprep.mubr.f32.mxu0 0.0
    %4771 = vmatmul.mubr.f32.gmra.mrb[0].mxu0 %v4696
    %v4772 = vpop.f32.mrb[0].mxu0
    %v4773 = vadd.f32 %v4704, %v4772
    %v4774 = vpop.f32.mrb[0].mxu0
    %4775 = vmatprep.mubr.f32.mxu0 0.0
    %4776 = vmatmul.mubr.f32.gmra.mrb[0].mxu0 %v4697
    %v4777 = vpop.f32.mrb[0].mxu0
    %v4778 = vadd.f32 %v4704, %v4777
    %v4779 = vpop.f32.mrb[0].mxu0
    %4780 = vmatprep.mubr.f32.mxu0 0.0
    %4781 = vmatmul.mubr.f32.gmra.mrb[0].mxu0 %v4698
    %v4782 = vpop.f32.mrb[0].mxu0
    %v4783 = vadd.f32 %v4704, %v4782
    %v4784 = vpop.f32.mrb[0].mxu0
    %4785 = vmatprep.mubr.f32.mxu0 0.0
    %4786 = vmatmul.mubr.f32.gmra.mrb[0].mxu0 %v4699
    %v4787 = vpop.f32.mrb[0].mxu0
    %v4788 = vadd.f32 %v4704, %v4787
    %v4789 = vpop.f32.mrb[0].mxu0
    %4790 = vdwg.mxu0
    %v4791 = vmul.f32 %v4773, 0.5
    %v4792 = vmul.f32 %v4778, 0.5
    %v4793 = vmul.f32 %v4783, 0.5
    %v4794 = vmul.f32 %v4788, 0.5
    %v4795 = vadd.f32 %v4459, %v4791
    %v4796 = vadd.f32 %v4460, %v4792
    %v4797 = vadd.f32 %v4461, %v4793
    %v4798 = vadd.f32 %v4462, %v4794
    %s4799 = scalar_lea.vmem [#allocation15], 1
    %v4800 = vld [vmem:[%s4799] sm:$0x1]
    %s4801 = scalar_lea.vmem [#allocation17], 1
    %v4802 = vld [vmem:[%s4801] sm:$0x1]
    %s4803 = scalar_lea.vmem [#allocation18], 128
    %v4804 = vld [vmem:[%s4803] sm:$0xff]
    %v4805 = vld [vmem:[%s4803 + $0x8] sm:$0xff]
    %v4806 = vld [vmem:[%s4803 + $0x10] sm:$0xff]
    %v4807 = vld [vmem:[%s4803 + $0x18] sm:$0xff]
    %v4808 = vld [vmem:[%s4803 + $0x20] sm:$0xff]
    %v4809 = vld [vmem:[%s4803 + $0x28] sm:$0xff]
    %v4810 = vld [vmem:[%s4803 + $0x30] sm:$0xff]
    %v4811 = vld [vmem:[%s4803 + $0x38] sm:$0xff]
    %v4812 = vld [vmem:[%s4803 + $0x40] sm:$0xff]
    %v4813 = vld [vmem:[%s4803 + $0x48] sm:$0xff]
    %v4814 = vld [vmem:[%s4803 + $0x50] sm:$0xff]
    %v4815 = vld [vmem:[%s4803 + $0x58] sm:$0xff]
    %v4816 = vld [vmem:[%s4803 + $0x60] sm:$0xff]
    %v4817 = vld [vmem:[%s4803 + $0x68] sm:$0xff]
    %v4818 = vld [vmem:[%s4803 + $0x70] sm:$0xff]
    %v4819 = vld [vmem:[%s4803 + $0x78] sm:$0xff]
    %s4820 = scalar_lea.vmem [#allocation20], 2
    %v4821 = vld [vmem:[%s4820] sm:$0x3]
    %s4822 = scalar_lea.vmem [#allocation21], 64
    %v4823 = vld [vmem:[%s4822] sm:$0xff]
    %v4824 = vld [vmem:[%s4822 + $0x8] sm:$0xff]
    %v4825 = vld [vmem:[%s4822 + $0x10] sm:$0xff]
    %v4826 = vld [vmem:[%s4822 + $0x18] sm:$0xff]
    %v4827 = vld [vmem:[%s4822 + $0x20] sm:$0xff]
    %v4828 = vld [vmem:[%s4822 + $0x28] sm:$0xff]
    %v4829 = vld [vmem:[%s4822 + $0x30] sm:$0xff]
    %v4830 = vld [vmem:[%s4822 + $0x38] sm:$0xff]
    %s4831 = scalar_lea.vmem [#allocation23], 1
    %v4832 = vld [vmem:[%s4831] sm:$0x1]
    %v4833 = vsel %vm583, %v4795, 0.0
    %4834 = vadd.xlane.f32.xlu0 %v4833
    %v4835 = vpop.xlane.xlu0 %4834
    %v4836 = vsel %vm583, %v4796, 0.0
    %4837 = vadd.xlane.f32.xlu0 %v4836
    %v4838 = vpop.xlane.xlu0 %4837
    %v4839 = vsel %vm583, %v4797, 0.0
    %4840 = vadd.xlane.f32.xlu0 %v4839
    %v4841 = vpop.xlane.xlu0 %4840
    %v4842 = vsel %vm583, %v4798, 0.0
    %4843 = vadd.xlane.f32.xlu0 %v4842
    %v4844 = vpop.xlane.xlu0 %4843
    %v4845 = vmul.f32 %v4835, %v641
    %v4846 = vmul.f32 %v4838, %v641
    %v4847 = vmul.f32 %v4841, %v641
    %v4848 = vmul.f32 %v4844, %v641
    %v4849 = vsub.f32 %v4795, %v4845
    %v4850 = vsub.f32 %v4796, %v4846
    %v4851 = vsub.f32 %v4797, %v4847
    %v4852 = vsub.f32 %v4798, %v4848
    %v4853 = vmul.f32 %v4849, %v4849
    %v4854 = vmul.f32 %v4850, %v4850
    %v4855 = vmul.f32 %v4851, %v4851
    %v4856 = vmul.f32 %v4852, %v4852
    %v4857 = vsel %vm583, %v4853, 0.0
    %4858 = vadd.xlane.f32.xlu0 %v4857
    %v4859 = vpop.xlane.xlu0 %4858
    %v4860 = vsel %vm583, %v4854, 0.0
    %4861 = vadd.xlane.f32.xlu0 %v4860
    %v4862 = vpop.xlane.xlu0 %4861
    %v4863 = vsel %vm583, %v4855, 0.0
    %4864 = vadd.xlane.f32.xlu0 %v4863
    %v4865 = vpop.xlane.xlu0 %4864
    %v4866 = vsel %vm583, %v4856, 0.0
    %4867 = vadd.xlane.f32.xlu0 %v4866
    %v4868 = vpop.xlane.xlu0 %4867
    %v4869 = vmul.f32 %v4859, %v641
    %v4870 = vmul.f32 %v4862, %v641
    %v4871 = vmul.f32 %v4865, %v641
    %v4872 = vmul.f32 %v4868, %v641
    %v4873 = vadd.f32 %v4869, 1e-05
    %v4874 = vadd.f32 %v4870, 1e-05
    %v4875 = vadd.f32 %v4871, 1e-05
    %v4876 = vadd.f32 %v4872, 1e-05
    %v4877 = vrsqrt.pop %v4873
    %v4878 = vrsqrt.pop %v4874
    %v4879 = vrsqrt.pop %v4875
    %v4880 = vrsqrt.pop %v4876
    %v4881 = vmul.f32 %v4849, %v4877
    %v4882 = vmul.f32 %v4850, %v4878
    %v4883 = vmul.f32 %v4851, %v4879
    %v4884 = vmul.f32 %v4852, %v4880
    %v4886 = vlaneseq
    %v4887 = vshrl.u32 %v4886, 7
    %v4888 = vsub.s32 0, %v4887
    %v4889 = vrot.slane %v4800, %v4888
    %v4891 = vmul.f32 %v4881, %v4889
    %v4892 = vmul.f32 %v4882, %v4889
    %v4893 = vmul.f32 %v4883, %v4889
    %v4894 = vmul.f32 %v4884, %v4889
    %v4896 = vlaneseq
    %v4897 = vshrl.u32 %v4896, 7
    %v4898 = vsub.s32 0, %v4897
    %v4899 = vrot.slane %v4802, %v4898
    %v4901 = vadd.f32 %v4891, %v4899
    %v4902 = vadd.f32 %v4892, %v4899
    %v4903 = vadd.f32 %v4893, %v4899
    %v4904 = vadd.f32 %v4894, %v4899
    %v4906 = vlaneseq
    %v4907 = vshrl.u32 %v4906, 7
    %v4908 = vsub.s32 0, %v4907
    %v4909 = vrot.slane %v4821, %v4908
    %v4910 = vlaneseq
    %v4911 = vshrl.u32 %v4910, 7
    %v4912 = vsub.s32 1, %v4911
    %v4913 = vrot.slane %v4821, %v4912
    %v4917 = vsel %vm583, %v4901, 0
    %v4920 = vsel %vm583, %v4902, 0
    %v4923 = vsel %vm583, %v4903, 0
    %v4926 = vsel %vm583, %v4904, 0
    %4928 = vmatprep.subr.mxu0 %v4805
    %4929 = vmatpush1.msra.mxu0 %v4804
    %4930 = vmatprep.subr.mxu0 %v4807
    %4931 = vmatpush1.msra.mxu0 %v4806
    %4932 = vmatprep.subr.mxu0 %v4809
    %4933 = vmatpush1.msra.mxu0 %v4808
    %4934 = vmatprep.subr.mxu0 %v4811
    %4935 = vmatpush1.msra.mxu0 %v4810
    %4936 = vmatprep.subr.mxu0 %v4813
    %4937 = vmatpush1.msra.mxu0 %v4812
    %4938 = vmatprep.subr.mxu0 %v4815
    %4939 = vmatpush1.msra.mxu0 %v4814
    %4940 = vmatprep.subr.mxu0 %v4817
    %4941 = vmatpush1.msra.mxu0 %v4816
    %4942 = vmatprep.subr.mxu0 %v4819
    %4943 = vmatpush1.msra.mxu0 %v4818
    %4944 = vmatprep.subr.mxu0 0.0
    %4945 = vmatpush1.msra.mxu0 0.0
    %4946 = vmatprep.subr.mxu0 0.0
    %4947 = vmatpush1.msra.mxu0 0.0
    %4948 = vmatprep.subr.mxu0 0.0
    %4949 = vmatpush1.msra.mxu0 0.0
    %4950 = vmatprep.subr.mxu0 0.0
    %4951 = vmatpush1.msra.mxu0 0.0
    %4952 = vmatprep.subr.mxu0 0.0
    %4953 = vmatpush1.msra.mxu0 0.0
    %4954 = vmatprep.subr.mxu0 0.0
    %4955 = vmatpush1.msra.mxu0 0.0
    %4956 = vmatprep.subr.mxu0 0.0
    %4957 = vmatpush1.msra.mxu0 0.0
    %4958 = vmatprep.subr.mxu0 0.0
    %4959 = vmatpush1.msra.mxu0 0.0
    %4960 = vmatprep.subr.mxu0 0.0
    %4961 = vmatpush1.msra.mxu0 0.0
    %4962 = vmatprep.subr.mxu0 0.0
    %4963 = vmatpush1.msra.mxu0 0.0
    %4964 = vmatprep.subr.mxu0 0.0
    %4965 = vmatpush1.msra.mxu0 0.0
    %4966 = vmatprep.subr.mxu0 0.0
    %4967 = vmatpush1.msra.mxu0 0.0
    %4968 = vmatprep.subr.mxu0 0.0
    %4969 = vmatpush1.msra.mxu0 0.0
    %4970 = vmatprep.subr.mxu0 0.0
    %4971 = vmatpush1.msra.mxu0 0.0
    %4972 = vmatprep.subr.mxu0 0.0
    %4973 = vmatpush1.msra.mxu0 0.0
    %4974 = vmatprep.subr.mxu0 0.0
    %4975 = vmatpush1.msra.mxu0 0.0
    %4976 = vmatprep.subr.mxu0 0.0
    %4977 = vmatpush1.msra.mxu0 0.0
    %4978 = vmatprep.subr.mxu0 0.0
    %4979 = vmatpush1.msra.mxu0 0.0
    %4980 = vmatprep.subr.mxu0 0.0
    %4981 = vmatpush1.msra.mxu0 0.0
    %4982 = vmatprep.subr.mxu0 0.0
    %4983 = vmatpush1.msra.mxu0 0.0
    %4984 = vmatprep.subr.mxu0 0.0
    %4985 = vmatpush1.msra.mxu0 0.0
    %4986 = vmatprep.subr.mxu0 0.0
    %4987 = vmatpush1.msra.mxu0 0.0
    %4988 = vmatprep.subr.mxu0 0.0
    %4989 = vmatpush1.msra.mxu0 0.0
    %4990 = vmatprep.subr.mxu0 0.0
    %4991 = vmatpush1.msra.mxu0 0.0
    %4992 = vmatprep.mubr.f32.mxu0 0.0
    %4993 = vmatmul.mubr.f32.gmra.mrb[0].mxu0 %v4917
    %v4994 = vpop.f32.mrb[0].mxu0
    %v4995 = vadd.f32 %v4909, %v4994
    %v4996 = vpop.f32.mrb[0].mxu0
    %v4997 = vadd.f32 %v4913, %v4996
    %4998 = vmatprep.mubr.f32.mxu0 0.0
    %4999 = vmatmul.mubr.f32.gmra.mrb[0].mxu0 %v4920
    %v5000 = vpop.f32.mrb[0].mxu0
    %v5001 = vadd.f32 %v4909, %v5000
    %v5002 = vpop.f32.mrb[0].mxu0
    %v5003 = vadd.f32 %v4913, %v5002
    %5004 = vmatprep.mubr.f32.mxu0 0.0
    %5005 = vmatmul.mubr.f32.gmra.mrb[0].mxu0 %v4923
    %v5006 = vpop.f32.mrb[0].mxu0
    %v5007 = vadd.f32 %v4909, %v5006
    %v5008 = vpop.f32.mrb[0].mxu0
    %v5009 = vadd.f32 %v4913, %v5008
    %5010 = vmatprep.mubr.f32.mxu0 0.0
    %5011 = vmatmul.mubr.f32.gmra.mrb[0].mxu0 %v4926
    %v5012 = vpop.f32.mrb[0].mxu0
    %v5013 = vadd.f32 %v4909, %v5012
    %v5014 = vpop.f32.mrb[0].mxu0
    %v5015 = vadd.f32 %v4913, %v5014
    %5016 = vdwg.mxu0
    %v5017 = vmul.f32 %v4995, 0.25
    %v5018 = vmul.f32 %v5001, 0.25
    %v5019 = vmul.f32 %v5007, 0.25
    %v5020 = vmul.f32 %v5013, 0.25
    %5023 = vrot.lane.b32.xlu0 %v4995, 64
    %v5024 = vpop.permute.xlu0 %5023
    %5025 = vrot.lane.b32.xlu0 %v5001, 64
    %v5026 = vpop.permute.xlu0 %5025
    %v5028 = vsel %vm1154, %v5017, 0
    %v5031 = vsel %vm1154, %v5018, 0
    %v5033 = vsel %vm1154, %v5024, 0
    %v5035 = vsel %vm1154, %v5026, 0
    %5037 = vmatprep.subr.mxu0 0.0
    %5038 = vmatpush1.xpose.msra.mxu0 %v5033
    %5039 = vmatprep.subr.mxu0 0.0
    %5040 = vmatpush1.xpose.msra.mxu0 %v5035
    %5041 = vmatprep.subr.mxu0 0.0
    %5042 = vmatpush1.xpose.msra.mxu0 0.0
    %5043 = vmatprep.subr.mxu0 0.0
    %5044 = vmatpush1.xpose.msra.mxu0 0.0
    %5045 = vmatprep.subr.mxu0 0.0
    %5046 = vmatpush1.xpose.msra.mxu0 0.0
    %5047 = vmatprep.subr.mxu0 0.0
    %5048 = vmatpush1.xpose.msra.mxu0 0.0
    %5049 = vmatprep.subr.mxu0 0.0
    %5050 = vmatpush1.xpose.msra.mxu0 0.0
    %5051 = vmatprep.subr.mxu0 0.0
    %5052 = vmatpush1.xpose.msra.mxu0 0.0
    %5053 = vmatprep.subr.mxu0 0.0
    %5054 = vmatpush1.xpose.msra.mxu0 0.0
    %5055 = vmatprep.subr.mxu0 0.0
    %5056 = vmatpush1.xpose.msra.mxu0 0.0
    %5057 = vmatprep.subr.mxu0 0.0
    %5058 = vmatpush1.xpose.msra.mxu0 0.0
    %5059 = vmatprep.subr.mxu0 0.0
    %5060 = vmatpush1.xpose.msra.mxu0 0.0
    %5061 = vmatprep.subr.mxu0 0.0
    %5062 = vmatpush1.xpose.msra.mxu0 0.0
    %5063 = vmatprep.subr.mxu0 0.0
    %5064 = vmatpush1.xpose.msra.mxu0 0.0
    %5065 = vmatprep.subr.mxu0 0.0
    %5066 = vmatpush1.xpose.msra.mxu0 0.0
    %5067 = vmatprep.subr.mxu0 0.0
    %5068 = vmatpush1.xpose.msra.mxu0 0.0
    %5069 = vmatprep.subr.mxu0 0.0
    %5070 = vmatpush1.xpose.msra.mxu0 0.0
    %5071 = vmatprep.subr.mxu0 0.0
    %5072 = vmatpush1.xpose.msra.mxu0 0.0
    %5073 = vmatprep.subr.mxu0 0.0
    %5074 = vmatpush1.xpose.msra.mxu0 0.0
    %5075 = vmatprep.subr.mxu0 0.0
    %5076 = vmatpush1.xpose.msra.mxu0 0.0
    %5077 = vmatprep.subr.mxu0 0.0
    %5078 = vmatpush1.xpose.msra.mxu0 0.0
    %5079 = vmatprep.subr.mxu0 0.0
    %5080 = vmatpush1.xpose.msra.mxu0 0.0
    %5081 = vmatprep.subr.mxu0 0.0
    %5082 = vmatpush1.xpose.msra.mxu0 0.0
    %5083 = vmatprep.subr.mxu0 0.0
    %5084 = vmatpush1.xpose.msra.mxu0 0.0
    %5085 = vmatprep.subr.mxu0 0.0
    %5086 = vmatpush1.xpose.msra.mxu0 0.0
    %5087 = vmatprep.subr.mxu0 0.0
    %5088 = vmatpush1.xpose.msra.mxu0 0.0
    %5089 = vmatprep.subr.mxu0 0.0
    %5090 = vmatpush1.xpose.msra.mxu0 0.0
    %5091 = vmatprep.subr.mxu0 0.0
    %5092 = vmatpush1.xpose.msra.mxu0 0.0
    %5093 = vmatprep.subr.mxu0 0.0
    %5094 = vmatpush1.xpose.msra.mxu0 0.0
    %5095 = vmatprep.subr.mxu0 0.0
    %5096 = vmatpush1.xpose.msra.mxu0 0.0
    %5097 = vmatprep.subr.mxu0 0.0
    %5098 = vmatpush1.xpose.msra.mxu0 0.0
    %5099 = vmatprep.subr.mxu0 0.0
    %5100 = vmatpush1.xpose.msra.mxu0 0.0
    %5101 = vmatprep.mubr.f32.mxu0 0.0
    %5102 = vmatmul.mubr.f32.gmra.mrb[0].mxu0 %v5028
    %v5103 = vpop.f32.mrb[0].mxu0
    %v5104 = vadd.f32 0.0, %v5103
    %v5105 = vpop.f32.mrb[0].mxu0
    %5106 = vmatprep.mubr.f32.mxu0 0.0
    %5107 = vmatmul.mubr.f32.gmra.mrb[0].mxu0 %v5031
    %v5108 = vpop.f32.mrb[0].mxu0
    %v5109 = vadd.f32 0.0, %v5108
    %v5110 = vpop.f32.mrb[0].mxu0
    %5111 = vdwg.mxu0
    %5114 = vrot.lane.b32.xlu0 %v5007, 64
    %v5115 = vpop.permute.xlu0 %5114
    %5116 = vrot.lane.b32.xlu0 %v5013, 64
    %v5117 = vpop.permute.xlu0 %5116
    %v5119 = vsel %vm1154, %v5019, 0
    %v5122 = vsel %vm1154, %v5020, 0
    %v5124 = vsel %vm1154, %v5115, 0
    %v5126 = vsel %vm1154, %v5117, 0
    %5128 = vmatprep.subr.mxu0 0.0
    %5129 = vmatpush1.xpose.msra.mxu0 %v5124
    %5130 = vmatprep.subr.mxu0 0.0
    %5131 = vmatpush1.xpose.msra.mxu0 %v5126
    %5132 = vmatprep.subr.mxu0 0.0
    %5133 = vmatpush1.xpose.msra.mxu0 0.0
    %5134 = vmatprep.subr.mxu0 0.0
    %5135 = vmatpush1.xpose.msra.mxu0 0.0
    %5136 = vmatprep.subr.mxu0 0.0
    %5137 = vmatpush1.xpose.msra.mxu0 0.0
    %5138 = vmatprep.subr.mxu0 0.0
    %5139 = vmatpush1.xpose.msra.mxu0 0.0
    %5140 = vmatprep.subr.mxu0 0.0
    %5141 = vmatpush1.xpose.msra.mxu0 0.0
    %5142 = vmatprep.subr.mxu0 0.0
    %5143 = vmatpush1.xpose.msra.mxu0 0.0
    %5144 = vmatprep.subr.mxu0 0.0
    %5145 = vmatpush1.xpose.msra.mxu0 0.0
    %5146 = vmatprep.subr.mxu0 0.0
    %5147 = vmatpush1.xpose.msra.mxu0 0.0
    %5148 = vmatprep.subr.mxu0 0.0
    %5149 = vmatpush1.xpose.msra.mxu0 0.0
    %5150 = vmatprep.subr.mxu0 0.0
    %5151 = vmatpush1.xpose.msra.mxu0 0.0
    %5152 = vmatprep.subr.mxu0 0.0
    %5153 = vmatpush1.xpose.msra.mxu0 0.0
    %5154 = vmatprep.subr.mxu0 0.0
    %5155 = vmatpush1.xpose.msra.mxu0 0.0
    %5156 = vmatprep.subr.mxu0 0.0
    %5157 = vmatpush1.xpose.msra.mxu0 0.0
    %5158 = vmatprep.subr.mxu0 0.0
    %5159 = vmatpush1.xpose.msra.mxu0 0.0
    %5160 = vmatprep.subr.mxu0 0.0
    %5161 = vmatpush1.xpose.msra.mxu0 0.0
    %5162 = vmatprep.subr.mxu0 0.0
    %5163 = vmatpush1.xpose.msra.mxu0 0.0
    %5164 = vmatprep.subr.mxu0 0.0
    %5165 = vmatpush1.xpose.msra.mxu0 0.0
    %5166 = vmatprep.subr.mxu0 0.0
    %5167 = vmatpush1.xpose.msra.mxu0 0.0
    %5168 = vmatprep.subr.mxu0 0.0
    %5169 = vmatpush1.xpose.msra.mxu0 0.0
    %5170 = vmatprep.subr.mxu0 0.0
    %5171 = vmatpush1.xpose.msra.mxu0 0.0
    %5172 = vmatprep.subr.mxu0 0.0
    %5173 = vmatpush1.xpose.msra.mxu0 0.0
    %5174 = vmatprep.subr.mxu0 0.0
    %5175 = vmatpush1.xpose.msra.mxu0 0.0
    %5176 = vmatprep.subr.mxu0 0.0
    %5177 = vmatpush1.xpose.msra.mxu0 0.0
    %5178 = vmatprep.subr.mxu0 0.0
    %5179 = vmatpush1.xpose.msra.mxu0 0.0
    %5180 = vmatprep.subr.mxu0 0.0
    %5181 = vmatpush1.xpose.msra.mxu0 0.0
    %5182 = vmatprep.subr.mxu0 0.0
    %5183 = vmatpush1.xpose.msra.mxu0 0.0
    %5184 = vmatprep.subr.mxu0 0.0
    %5185 = vmatpush1.xpose.msra.mxu0 0.0
    %5186 = vmatprep.subr.mxu0 0.0
    %5187 = vmatpush1.xpose.msra.mxu0 0.0
    %5188 = vmatprep.subr.mxu0 0.0
    %5189 = vmatpush1.xpose.msra.mxu0 0.0
    %5190 = vmatprep.subr.mxu0 0.0
    %5191 = vmatpush1.xpose.msra.mxu0 0.0
    %5192 = vmatprep.mubr.f32.mxu0 0.0
    %5193 = vmatmul.mubr.f32.gmra.mrb[0].mxu0 %v5119
    %v5194 = vpop.f32.mrb[0].mxu0
    %v5195 = vadd.f32 0.0, %v5194
    %v5196 = vpop.f32.mrb[0].mxu0
    %5197 = vmatprep.mubr.f32.mxu0 0.0
    %5198 = vmatmul.mubr.f32.gmra.mrb[0].mxu0 %v5122
    %v5199 = vpop.f32.mrb[0].mxu0
    %v5200 = vadd.f32 0.0, %v5199
    %v5201 = vpop.f32.mrb[0].mxu0
    %5202 = vdwg.mxu0
    %v5203 = vsel %vm1154, %v5104, -inf
    %5204 = vmax.xlane.f32.xlu0 %v5203
    %v5205 = vpop.xlane.xlu0 %5204
    %v5206 = vsel %vm1154, %v5109, -inf
    %5207 = vmax.xlane.f32.xlu0 %v5206
    %v5208 = vpop.xlane.xlu0 %5207
    %v5209 = vsel %vm1154, %v5195, -inf
    %5210 = vmax.xlane.f32.xlu0 %v5209
    %v5211 = vpop.xlane.xlu0 %5210
    %v5212 = vsel %vm1154, %v5200, -inf
    %5213 = vmax.xlane.f32.xlu0 %v5212
    %v5214 = vpop.xlane.xlu0 %5213
    %v5215 = vsub.f32 %v5104, %v5205
    %v5216 = vsub.f32 %v5109, %v5208
    %v5217 = vsub.f32 %v5195, %v5211
    %v5218 = vsub.f32 %v5200, %v5214
    %v5219 = vmul.f32 %v5215, 1.442695
    %v5220 = vpow.pop %v5219
    %v5221 = vmul.f32 %v5216, 1.442695
    %v5222 = vpow.pop %v5221
    %v5223 = vmul.f32 %v5217, 1.442695
    %v5224 = vpow.pop %v5223
    %v5225 = vmul.f32 %v5218, 1.442695
    %v5226 = vpow.pop %v5225
    %v5227 = vsel %vm1154, %v5220, 0.0
    %5228 = vadd.xlane.f32.xlu0 %v5227
    %v5229 = vpop.xlane.xlu0 %5228
    %v5230 = vsel %vm1154, %v5222, 0.0
    %5231 = vadd.xlane.f32.xlu0 %v5230
    %v5232 = vpop.xlane.xlu0 %5231
    %v5233 = vsel %vm1154, %v5224, 0.0
    %5234 = vadd.xlane.f32.xlu0 %v5233
    %v5235 = vpop.xlane.xlu0 %5234
    %v5236 = vsel %vm1154, %v5226, 0.0
    %5237 = vadd.xlane.f32.xlu0 %v5236
    %v5238 = vpop.xlane.xlu0 %5237
    %v5239 = vrcp.pop %v5229
    %v5240 = vrcp.pop %v5232
    %v5241 = vrcp.pop %v5235
    %v5242 = vrcp.pop %v5238
    %v5243 = vmul.f32 %v5220, %v5239
    %v5244 = vmul.f32 %v5222, %v5240
    %v5245 = vmul.f32 %v5224, %v5241
    %v5246 = vmul.f32 %v5226, %v5242
    %v5248 = vsel %vm1154, %v5243, 0
    %v5251 = vsel %vm1154, %v5244, 0
    %5253 = vmatprep.subr.mxu0 0.0
    %5254 = vmatpush1.msra.mxu0 %v4997
    %5255 = vmatprep.subr.mxu0 0.0
    %5256 = vmatpush1.msra.mxu0 %v5003
    %5257 = vmatprep.subr.mxu0 0.0
    %5258 = vmatpush1.msra.mxu0 0.0
    %5259 = vmatprep.subr.mxu0 0.0
    %5260 = vmatpush1.msra.mxu0 0.0
    %5261 = vmatprep.subr.mxu0 0.0
    %5262 = vmatpush1.msra.mxu0 0.0
    %5263 = vmatprep.subr.mxu0 0.0
    %5264 = vmatpush1.msra.mxu0 0.0
    %5265 = vmatprep.subr.mxu0 0.0
    %5266 = vmatpush1.msra.mxu0 0.0
    %5267 = vmatprep.subr.mxu0 0.0
    %5268 = vmatpush1.msra.mxu0 0.0
    %5269 = vmatprep.subr.mxu0 0.0
    %5270 = vmatpush1.msra.mxu0 0.0
    %5271 = vmatprep.subr.mxu0 0.0
    %5272 = vmatpush1.msra.mxu0 0.0
    %5273 = vmatprep.subr.mxu0 0.0
    %5274 = vmatpush1.msra.mxu0 0.0
    %5275 = vmatprep.subr.mxu0 0.0
    %5276 = vmatpush1.msra.mxu0 0.0
    %5277 = vmatprep.subr.mxu0 0.0
    %5278 = vmatpush1.msra.mxu0 0.0
    %5279 = vmatprep.subr.mxu0 0.0
    %5280 = vmatpush1.msra.mxu0 0.0
    %5281 = vmatprep.subr.mxu0 0.0
    %5282 = vmatpush1.msra.mxu0 0.0
    %5283 = vmatprep.subr.mxu0 0.0
    %5284 = vmatpush1.msra.mxu0 0.0
    %5285 = vmatprep.subr.mxu0 0.0
    %5286 = vmatpush1.msra.mxu0 0.0
    %5287 = vmatprep.subr.mxu0 0.0
    %5288 = vmatpush1.msra.mxu0 0.0
    %5289 = vmatprep.subr.mxu0 0.0
    %5290 = vmatpush1.msra.mxu0 0.0
    %5291 = vmatprep.subr.mxu0 0.0
    %5292 = vmatpush1.msra.mxu0 0.0
    %5293 = vmatprep.subr.mxu0 0.0
    %5294 = vmatpush1.msra.mxu0 0.0
    %5295 = vmatprep.subr.mxu0 0.0
    %5296 = vmatpush1.msra.mxu0 0.0
    %5297 = vmatprep.subr.mxu0 0.0
    %5298 = vmatpush1.msra.mxu0 0.0
    %5299 = vmatprep.subr.mxu0 0.0
    %5300 = vmatpush1.msra.mxu0 0.0
    %5301 = vmatprep.subr.mxu0 0.0
    %5302 = vmatpush1.msra.mxu0 0.0
    %5303 = vmatprep.subr.mxu0 0.0
    %5304 = vmatpush1.msra.mxu0 0.0
    %5305 = vmatprep.subr.mxu0 0.0
    %5306 = vmatpush1.msra.mxu0 0.0
    %5307 = vmatprep.subr.mxu0 0.0
    %5308 = vmatpush1.msra.mxu0 0.0
    %5309 = vmatprep.subr.mxu0 0.0
    %5310 = vmatpush1.msra.mxu0 0.0
    %5311 = vmatprep.subr.mxu0 0.0
    %5312 = vmatpush1.msra.mxu0 0.0
    %5313 = vmatprep.subr.mxu0 0.0
    %5314 = vmatpush1.msra.mxu0 0.0
    %5315 = vmatprep.subr.mxu0 0.0
    %5316 = vmatpush1.msra.mxu0 0.0
    %5317 = vmatprep.mubr.f32.mxu0 0.0
    %5318 = vmatmul.mubr.f32.gmra.mrb[0].mxu0 %v5248
    %v5319 = vpop.f32.mrb[0].mxu0
    %v5320 = vadd.f32 0.0, %v5319
    %v5321 = vpop.f32.mrb[0].mxu0
    %5322 = vmatprep.mubr.f32.mxu0 0.0
    %5323 = vmatmul.mubr.f32.gmra.mrb[0].mxu0 %v5251
    %v5324 = vpop.f32.mrb[0].mxu0
    %v5325 = vadd.f32 0.0, %v5324
    %v5326 = vpop.f32.mrb[0].mxu0
    %5327 = vdwg.mxu0
    %v5329 = vsel %vm1154, %v5245, 0
    %v5332 = vsel %vm1154, %v5246, 0
    %5334 = vmatprep.subr.mxu0 0.0
    %5335 = vmatpush1.msra.mxu0 %v5009
    %5336 = vmatprep.subr.mxu0 0.0
    %5337 = vmatpush1.msra.mxu0 %v5015
    %5338 = vmatprep.subr.mxu0 0.0
    %5339 = vmatpush1.msra.mxu0 0.0
    %5340 = vmatprep.subr.mxu0 0.0
    %5341 = vmatpush1.msra.mxu0 0.0
    %5342 = vmatprep.subr.mxu0 0.0
    %5343 = vmatpush1.msra.mxu0 0.0
    %5344 = vmatprep.subr.mxu0 0.0
    %5345 = vmatpush1.msra.mxu0 0.0
    %5346 = vmatprep.subr.mxu0 0.0
    %5347 = vmatpush1.msra.mxu0 0.0
    %5348 = vmatprep.subr.mxu0 0.0
    %5349 = vmatpush1.msra.mxu0 0.0
    %5350 = vmatprep.subr.mxu0 0.0
    %5351 = vmatpush1.msra.mxu0 0.0
    %5352 = vmatprep.subr.mxu0 0.0
    %5353 = vmatpush1.msra.mxu0 0.0
    %5354 = vmatprep.subr.mxu0 0.0
    %5355 = vmatpush1.msra.mxu0 0.0
    %5356 = vmatprep.subr.mxu0 0.0
    %5357 = vmatpush1.msra.mxu0 0.0
    %5358 = vmatprep.subr.mxu0 0.0
    %5359 = vmatpush1.msra.mxu0 0.0
    %5360 = vmatprep.subr.mxu0 0.0
    %5361 = vmatpush1.msra.mxu0 0.0
    %5362 = vmatprep.subr.mxu0 0.0
    %5363 = vmatpush1.msra.mxu0 0.0
    %5364 = vmatprep.subr.mxu0 0.0
    %5365 = vmatpush1.msra.mxu0 0.0
    %5366 = vmatprep.subr.mxu0 0.0
    %5367 = vmatpush1.msra.mxu0 0.0
    %5368 = vmatprep.subr.mxu0 0.0
    %5369 = vmatpush1.msra.mxu0 0.0
    %5370 = vmatprep.subr.mxu0 0.0
    %5371 = vmatpush1.msra.mxu0 0.0
    %5372 = vmatprep.subr.mxu0 0.0
    %5373 = vmatpush1.msra.mxu0 0.0
    %5374 = vmatprep.subr.mxu0 0.0
    %5375 = vmatpush1.msra.mxu0 0.0
    %5376 = vmatprep.subr.mxu0 0.0
    %5377 = vmatpush1.msra.mxu0 0.0
    %5378 = vmatprep.subr.mxu0 0.0
    %5379 = vmatpush1.msra.mxu0 0.0
    %5380 = vmatprep.subr.mxu0 0.0
    %5381 = vmatpush1.msra.mxu0 0.0
    %5382 = vmatprep.subr.mxu0 0.0
    %5383 = vmatpush1.msra.mxu0 0.0
    %5384 = vmatprep.subr.mxu0 0.0
    %5385 = vmatpush1.msra.mxu0 0.0
    %5386 = vmatprep.subr.mxu0 0.0
    %5387 = vmatpush1.msra.mxu0 0.0
    %5388 = vmatprep.subr.mxu0 0.0
    %5389 = vmatpush1.msra.mxu0 0.0
    %5390 = vmatprep.subr.mxu0 0.0
    %5391 = vmatpush1.msra.mxu0 0.0
    %5392 = vmatprep.subr.mxu0 0.0
    %5393 = vmatpush1.msra.mxu0 0.0
    %5394 = vmatprep.subr.mxu0 0.0
    %5395 = vmatpush1.msra.mxu0 0.0
    %5396 = vmatprep.subr.mxu0 0.0
    %5397 = vmatpush1.msra.mxu0 0.0
    %5398 = vmatprep.mubr.f32.mxu0 0.0
    %5399 = vmatmul.mubr.f32.gmra.mrb[0].mxu0 %v5329
    %v5400 = vpop.f32.mrb[0].mxu0
    %v5401 = vadd.f32 0.0, %v5400
    %v5402 = vpop.f32.mrb[0].mxu0
    %5403 = vmatprep.mubr.f32.mxu0 0.0
    %5404 = vmatmul.mubr.f32.gmra.mrb[0].mxu0 %v5332
    %v5405 = vpop.f32.mrb[0].mxu0
    %v5406 = vadd.f32 0.0, %v5405
    %v5407 = vpop.f32.mrb[0].mxu0
    %5408 = vdwg.mxu0
    %5409 = vrot.lane.b32.xlu0 %v5017, 112
    %v5410 = vpop.permute.xlu0 %5409
    %5411 = vrot.lane.b32.xlu0 %v5018, 112
    %v5412 = vpop.permute.xlu0 %5411
    %5413 = vrot.lane.b32.xlu0 %v4995, 48
    %v5414 = vpop.permute.xlu0 %5413
    %5415 = vrot.lane.b32.xlu0 %v5001, 48
    %v5416 = vpop.permute.xlu0 %5415
    %v5417 = vsel %vm1154, %v5410, 0
    %v5419 = vsel %vm1154, %v5412, 0
    %v5421 = vsel %vm1154, %v5414, 0
    %v5423 = vsel %vm1154, %v5416, 0
    %5425 = vmatprep.subr.mxu0 0.0
    %5426 = vmatpush1.xpose.msra.mxu0 %v5421
    %5427 = vmatprep.subr.mxu0 0.0
    %5428 = vmatpush1.xpose.msra.mxu0 %v5423
    %5429 = vmatprep.subr.mxu0 0.0
    %5430 = vmatpush1.xpose.msra.mxu0 0.0
    %5431 = vmatprep.subr.mxu0 0.0
    %5432 = vmatpush1.xpose.msra.mxu0 0.0
    %5433 = vmatprep.subr.mxu0 0.0
    %5434 = vmatpush1.xpose.msra.mxu0 0.0
    %5435 = vmatprep.subr.mxu0 0.0
    %5436 = vmatpush1.xpose.msra.mxu0 0.0
    %5437 = vmatprep.subr.mxu0 0.0
    %5438 = vmatpush1.xpose.msra.mxu0 0.0
    %5439 = vmatprep.subr.mxu0 0.0
    %5440 = vmatpush1.xpose.msra.mxu0 0.0
    %5441 = vmatprep.subr.mxu0 0.0
    %5442 = vmatpush1.xpose.msra.mxu0 0.0
    %5443 = vmatprep.subr.mxu0 0.0
    %5444 = vmatpush1.xpose.msra.mxu0 0.0
    %5445 = vmatprep.subr.mxu0 0.0
    %5446 = vmatpush1.xpose.msra.mxu0 0.0
    %5447 = vmatprep.subr.mxu0 0.0
    %5448 = vmatpush1.xpose.msra.mxu0 0.0
    %5449 = vmatprep.subr.mxu0 0.0
    %5450 = vmatpush1.xpose.msra.mxu0 0.0
    %5451 = vmatprep.subr.mxu0 0.0
    %5452 = vmatpush1.xpose.msra.mxu0 0.0
    %5453 = vmatprep.subr.mxu0 0.0
    %5454 = vmatpush1.xpose.msra.mxu0 0.0
    %5455 = vmatprep.subr.mxu0 0.0
    %5456 = vmatpush1.xpose.msra.mxu0 0.0
    %5457 = vmatprep.subr.mxu0 0.0
    %5458 = vmatpush1.xpose.msra.mxu0 0.0
    %5459 = vmatprep.subr.mxu0 0.0
    %5460 = vmatpush1.xpose.msra.mxu0 0.0
    %5461 = vmatprep.subr.mxu0 0.0
    %5462 = vmatpush1.xpose.msra.mxu0 0.0
    %5463 = vmatprep.subr.mxu0 0.0
    %5464 = vmatpush1.xpose.msra.mxu0 0.0
    %5465 = vmatprep.subr.mxu0 0.0
    %5466 = vmatpush1.xpose.msra.mxu0 0.0
    %5467 = vmatprep.subr.mxu0 0.0
    %5468 = vmatpush1.xpose.msra.mxu0 0.0
    %5469 = vmatprep.subr.mxu0 0.0
    %5470 = vmatpush1.xpose.msra.mxu0 0.0
    %5471 = vmatprep.subr.mxu0 0.0
    %5472 = vmatpush1.xpose.msra.mxu0 0.0
    %5473 = vmatprep.subr.mxu0 0.0
    %5474 = vmatpush1.xpose.msra.mxu0 0.0
    %5475 = vmatprep.subr.mxu0 0.0
    %5476 = vmatpush1.xpose.msra.mxu0 0.0
    %5477 = vmatprep.subr.mxu0 0.0
    %5478 = vmatpush1.xpose.msra.mxu0 0.0
    %5479 = vmatprep.subr.mxu0 0.0
    %5480 = vmatpush1.xpose.msra.mxu0 0.0
    %5481 = vmatprep.subr.mxu0 0.0
    %5482 = vmatpush1.xpose.msra.mxu0 0.0
    %5483 = vmatprep.subr.mxu0 0.0
    %5484 = vmatpush1.xpose.msra.mxu0 0.0
    %5485 = vmatprep.subr.mxu0 0.0
    %5486 = vmatpush1.xpose.msra.mxu0 0.0
    %5487 = vmatprep.subr.mxu0 0.0
    %5488 = vmatpush1.xpose.msra.mxu0 0.0
    %5489 = vmatprep.mubr.f32.mxu0 0.0
    %5490 = vmatmul.mubr.f32.gmra.mrb[0].mxu0 %v5417
    %v5491 = vpop.f32.mrb[0].mxu0
    %v5492 = vadd.f32 0.0, %v5491
    %v5493 = vpop.f32.mrb[0].mxu0
    %5494 = vmatprep.mubr.f32.mxu0 0.0
    %5495 = vmatmul.mubr.f32.gmra.mrb[0].mxu0 %v5419
    %v5496 = vpop.f32.mrb[0].mxu0
    %v5497 = vadd.f32 0.0, %v5496
    %v5498 = vpop.f32.mrb[0].mxu0
    %5499 = vdwg.mxu0
    %5500 = vrot.lane.b32.xlu0 %v5019, 112
    %v5501 = vpop.permute.xlu0 %5500
    %5502 = vrot.lane.b32.xlu0 %v5020, 112
    %v5503 = vpop.permute.xlu0 %5502
    %5504 = vrot.lane.b32.xlu0 %v5007, 48
    %v5505 = vpop.permute.xlu0 %5504
    %5506 = vrot.lane.b32.xlu0 %v5013, 48
    %v5507 = vpop.permute.xlu0 %5506
    %v5508 = vsel %vm1154, %v5501, 0
    %v5510 = vsel %vm1154, %v5503, 0
    %v5512 = vsel %vm1154, %v5505, 0
    %v5514 = vsel %vm1154, %v5507, 0
    %5516 = vmatprep.subr.mxu0 0.0
    %5517 = vmatpush1.xpose.msra.mxu0 %v5512
    %5518 = vmatprep.subr.mxu0 0.0
    %5519 = vmatpush1.xpose.msra.mxu0 %v5514
    %5520 = vmatprep.subr.mxu0 0.0
    %5521 = vmatpush1.xpose.msra.mxu0 0.0
    %5522 = vmatprep.subr.mxu0 0.0
    %5523 = vmatpush1.xpose.msra.mxu0 0.0
    %5524 = vmatprep.subr.mxu0 0.0
    %5525 = vmatpush1.xpose.msra.mxu0 0.0
    %5526 = vmatprep.subr.mxu0 0.0
    %5527 = vmatpush1.xpose.msra.mxu0 0.0
    %5528 = vmatprep.subr.mxu0 0.0
    %5529 = vmatpush1.xpose.msra.mxu0 0.0
    %5530 = vmatprep.subr.mxu0 0.0
    %5531 = vmatpush1.xpose.msra.mxu0 0.0
    %5532 = vmatprep.subr.mxu0 0.0
    %5533 = vmatpush1.xpose.msra.mxu0 0.0
    %5534 = vmatprep.subr.mxu0 0.0
    %5535 = vmatpush1.xpose.msra.mxu0 0.0
    %5536 = vmatprep.subr.mxu0 0.0
    %5537 = vmatpush1.xpose.msra.mxu0 0.0
    %5538 = vmatprep.subr.mxu0 0.0
    %5539 = vmatpush1.xpose.msra.mxu0 0.0
    %5540 = vmatprep.subr.mxu0 0.0
    %5541 = vmatpush1.xpose.msra.mxu0 0.0
    %5542 = vmatprep.subr.mxu0 0.0
    %5543 = vmatpush1.xpose.msra.mxu0 0.0
    %5544 = vmatprep.subr.mxu0 0.0
    %5545 = vmatpush1.xpose.msra.mxu0 0.0
    %5546 = vmatprep.subr.mxu0 0.0
    %5547 = vmatpush1.xpose.msra.mxu0 0.0
    %5548 = vmatprep.subr.mxu0 0.0
    %5549 = vmatpush1.xpose.msra.mxu0 0.0
    %5550 = vmatprep.subr.mxu0 0.0
    %5551 = vmatpush1.xpose.msra.mxu0 0.0
    %5552 = vmatprep.subr.mxu0 0.0
    %5553 = vmatpush1.xpose.msra.mxu0 0.0
    %5554 = vmatprep.subr.mxu0 0.0
    %5555 = vmatpush1.xpose.msra.mxu0 0.0
    %5556 = vmatprep.subr.mxu0 0.0
    %5557 = vmatpush1.xpose.msra.mxu0 0.0
    %5558 = vmatprep.subr.mxu0 0.0
    %5559 = vmatpush1.xpose.msra.mxu0 0.0
    %5560 = vmatprep.subr.mxu0 0.0
    %5561 = vmatpush1.xpose.msra.mxu0 0.0
    %5562 = vmatprep.subr.mxu0 0.0
    %5563 = vmatpush1.xpose.msra.mxu0 0.0
    %5564 = vmatprep.subr.mxu0 0.0
    %5565 = vmatpush1.xpose.msra.mxu0 0.0
    %5566 = vmatprep.subr.mxu0 0.0
    %5567 = vmatpush1.xpose.msra.mxu0 0.0
    %5568 = vmatprep.subr.mxu0 0.0
    %5569 = vmatpush1.xpose.msra.mxu0 0.0
    %5570 = vmatprep.subr.mxu0 0.0
    %5571 = vmatpush1.xpose.msra.mxu0 0.0
    %5572 = vmatprep.subr.mxu0 0.0
    %5573 = vmatpush1.xpose.msra.mxu0 0.0
    %5574 = vmatprep.subr.mxu0 0.0
    %5575 = vmatpush1.xpose.msra.mxu0 0.0
    %5576 = vmatprep.subr.mxu0 0.0
    %5577 = vmatpush1.xpose.msra.mxu0 0.0
    %5578 = vmatprep.subr.mxu0 0.0
    %5579 = vmatpush1.xpose.msra.mxu0 0.0
    %5580 = vmatprep.mubr.f32.mxu0 0.0
    %5581 = vmatmul.mubr.f32.gmra.mrb[0].mxu0 %v5508
    %v5582 = vpop.f32.mrb[0].mxu0
    %v5583 = vadd.f32 0.0, %v5582
    %v5584 = vpop.f32.mrb[0].mxu0
    %5585 = vmatprep.mubr.f32.mxu0 0.0
    %5586 = vmatmul.mubr.f32.gmra.mrb[0].mxu0 %v5510
    %v5587 = vpop.f32.mrb[0].mxu0
    %v5588 = vadd.f32 0.0, %v5587
    %v5589 = vpop.f32.mrb[0].mxu0
    %5590 = vdwg.mxu0
    %v5591 = vsel %vm1154, %v5492, -inf
    %5592 = vmax.xlane.f32.xlu0 %v5591
    %v5593 = vpop.xlane.xlu0 %5592
    %v5594 = vsel %vm1154, %v5497, -inf
    %5595 = vmax.xlane.f32.xlu0 %v5594
    %v5596 = vpop.xlane.xlu0 %5595
    %v5597 = vsel %vm1154, %v5583, -inf
    %5598 = vmax.xlane.f32.xlu0 %v5597
    %v5599 = vpop.xlane.xlu0 %5598
    %v5600 = vsel %vm1154, %v5588, -inf
    %5601 = vmax.xlane.f32.xlu0 %v5600
    %v5602 = vpop.xlane.xlu0 %5601
    %v5603 = vsub.f32 %v5492, %v5593
    %v5604 = vsub.f32 %v5497, %v5596
    %v5605 = vsub.f32 %v5583, %v5599
    %v5606 = vsub.f32 %v5588, %v5602
    %v5607 = vmul.f32 %v5603, 1.442695
    %v5608 = vpow.pop %v5607
    %v5609 = vmul.f32 %v5604, 1.442695
    %v5610 = vpow.pop %v5609
    %v5611 = vmul.f32 %v5605, 1.442695
    %v5612 = vpow.pop %v5611
    %v5613 = vmul.f32 %v5606, 1.442695
    %v5614 = vpow.pop %v5613
    %v5615 = vsel %vm1154, %v5608, 0.0
    %5616 = vadd.xlane.f32.xlu0 %v5615
    %v5617 = vpop.xlane.xlu0 %5616
    %v5618 = vsel %vm1154, %v5610, 0.0
    %5619 = vadd.xlane.f32.xlu0 %v5618
    %v5620 = vpop.xlane.xlu0 %5619
    %v5621 = vsel %vm1154, %v5612, 0.0
    %5622 = vadd.xlane.f32.xlu0 %v5621
    %v5623 = vpop.xlane.xlu0 %5622
    %v5624 = vsel %vm1154, %v5614, 0.0
    %5625 = vadd.xlane.f32.xlu0 %v5624
    %v5626 = vpop.xlane.xlu0 %5625
    %v5627 = vrcp.pop %v5617
    %v5628 = vrcp.pop %v5620
    %v5629 = vrcp.pop %v5623
    %v5630 = vrcp.pop %v5626
    %v5631 = vmul.f32 %v5608, %v5627
    %v5632 = vmul.f32 %v5610, %v5628
    %v5633 = vmul.f32 %v5612, %v5629
    %v5634 = vmul.f32 %v5614, %v5630
    %5637 = vrot.lane.b32.xlu0 %v4997, 112
    %v5638 = vpop.permute.xlu0 %5637
    %5639 = vrot.lane.b32.xlu0 %v5003, 112
    %v5640 = vpop.permute.xlu0 %5639
    %v5644 = vsel %vm1154, %v5631, 0
    %v5647 = vsel %vm1154, %v5632, 0
    %5649 = vmatprep.subr.mxu0 0.0
    %5650 = vmatpush1.msra.mxu0 %v5638
    %5651 = vmatprep.subr.mxu0 0.0
    %5652 = vmatpush1.msra.mxu0 %v5640
    %5653 = vmatprep.subr.mxu0 0.0
    %5654 = vmatpush1.msra.mxu0 0.0
    %5655 = vmatprep.subr.mxu0 0.0
    %5656 = vmatpush1.msra.mxu0 0.0
    %5657 = vmatprep.subr.mxu0 0.0
    %5658 = vmatpush1.msra.mxu0 0.0
    %5659 = vmatprep.subr.mxu0 0.0
    %5660 = vmatpush1.msra.mxu0 0.0
    %5661 = vmatprep.subr.mxu0 0.0
    %5662 = vmatpush1.msra.mxu0 0.0
    %5663 = vmatprep.subr.mxu0 0.0
    %5664 = vmatpush1.msra.mxu0 0.0
    %5665 = vmatprep.subr.mxu0 0.0
    %5666 = vmatpush1.msra.mxu0 0.0
    %5667 = vmatprep.subr.mxu0 0.0
    %5668 = vmatpush1.msra.mxu0 0.0
    %5669 = vmatprep.subr.mxu0 0.0
    %5670 = vmatpush1.msra.mxu0 0.0
    %5671 = vmatprep.subr.mxu0 0.0
    %5672 = vmatpush1.msra.mxu0 0.0
    %5673 = vmatprep.subr.mxu0 0.0
    %5674 = vmatpush1.msra.mxu0 0.0
    %5675 = vmatprep.subr.mxu0 0.0
    %5676 = vmatpush1.msra.mxu0 0.0
    %5677 = vmatprep.subr.mxu0 0.0
    %5678 = vmatpush1.msra.mxu0 0.0
    %5679 = vmatprep.subr.mxu0 0.0
    %5680 = vmatpush1.msra.mxu0 0.0
    %5681 = vmatprep.subr.mxu0 0.0
    %5682 = vmatpush1.msra.mxu0 0.0
    %5683 = vmatprep.subr.mxu0 0.0
    %5684 = vmatpush1.msra.mxu0 0.0
    %5685 = vmatprep.subr.mxu0 0.0
    %5686 = vmatpush1.msra.mxu0 0.0
    %5687 = vmatprep.subr.mxu0 0.0
    %5688 = vmatpush1.msra.mxu0 0.0
    %5689 = vmatprep.subr.mxu0 0.0
    %5690 = vmatpush1.msra.mxu0 0.0
    %5691 = vmatprep.subr.mxu0 0.0
    %5692 = vmatpush1.msra.mxu0 0.0
    %5693 = vmatprep.subr.mxu0 0.0
    %5694 = vmatpush1.msra.mxu0 0.0
    %5695 = vmatprep.subr.mxu0 0.0
    %5696 = vmatpush1.msra.mxu0 0.0
    %5697 = vmatprep.subr.mxu0 0.0
    %5698 = vmatpush1.msra.mxu0 0.0
    %5699 = vmatprep.subr.mxu0 0.0
    %5700 = vmatpush1.msra.mxu0 0.0
    %5701 = vmatprep.subr.mxu0 0.0
    %5702 = vmatpush1.msra.mxu0 0.0
    %5703 = vmatprep.subr.mxu0 0.0
    %5704 = vmatpush1.msra.mxu0 0.0
    %5705 = vmatprep.subr.mxu0 0.0
    %5706 = vmatpush1.msra.mxu0 0.0
    %5707 = vmatprep.subr.mxu0 0.0
    %5708 = vmatpush1.msra.mxu0 0.0
    %5709 = vmatprep.subr.mxu0 0.0
    %5710 = vmatpush1.msra.mxu0 0.0
    %5711 = vmatprep.subr.mxu0 0.0
    %5712 = vmatpush1.msra.mxu0 0.0
    %5713 = vmatprep.mubr.f32.mxu0 0.0
    %5714 = vmatmul.mubr.f32.gmra.mrb[0].mxu0 %v5644
    %v5715 = vpop.f32.mrb[0].mxu0
    %v5716 = vadd.f32 0.0, %v5715
    %v5717 = vpop.f32.mrb[0].mxu0
    %5718 = vmatprep.mubr.f32.mxu0 0.0
    %5719 = vmatmul.mubr.f32.gmra.mrb[0].mxu0 %v5647
    %v5720 = vpop.f32.mrb[0].mxu0
    %v5721 = vadd.f32 0.0, %v5720
    %v5722 = vpop.f32.mrb[0].mxu0
    %5723 = vdwg.mxu0
    %5726 = vrot.lane.b32.xlu0 %v5009, 112
    %v5727 = vpop.permute.xlu0 %5726
    %5728 = vrot.lane.b32.xlu0 %v5015, 112
    %v5729 = vpop.permute.xlu0 %5728
    %v5733 = vsel %vm1154, %v5633, 0
    %v5736 = vsel %vm1154, %v5634, 0
    %5738 = vmatprep.subr.mxu0 0.0
    %5739 = vmatpush1.msra.mxu0 %v5727
    %5740 = vmatprep.subr.mxu0 0.0
    %5741 = vmatpush1.msra.mxu0 %v5729
    %5742 = vmatprep.subr.mxu0 0.0
    %5743 = vmatpush1.msra.mxu0 0.0
    %5744 = vmatprep.subr.mxu0 0.0
    %5745 = vmatpush1.msra.mxu0 0.0
    %5746 = vmatprep.subr.mxu0 0.0
    %5747 = vmatpush1.msra.mxu0 0.0
    %5748 = vmatprep.subr.mxu0 0.0
    %5749 = vmatpush1.msra.mxu0 0.0
    %5750 = vmatprep.subr.mxu0 0.0
    %5751 = vmatpush1.msra.mxu0 0.0
    %5752 = vmatprep.subr.mxu0 0.0
    %5753 = vmatpush1.msra.mxu0 0.0
    %5754 = vmatprep.subr.mxu0 0.0
    %5755 = vmatpush1.msra.mxu0 0.0
    %5756 = vmatprep.subr.mxu0 0.0
    %5757 = vmatpush1.msra.mxu0 0.0
    %5758 = vmatprep.subr.mxu0 0.0
    %5759 = vmatpush1.msra.mxu0 0.0
    %5760 = vmatprep.subr.mxu0 0.0
    %5761 = vmatpush1.msra.mxu0 0.0
    %5762 = vmatprep.subr.mxu0 0.0
    %5763 = vmatpush1.msra.mxu0 0.0
    %5764 = vmatprep.subr.mxu0 0.0
    %5765 = vmatpush1.msra.mxu0 0.0
    %5766 = vmatprep.subr.mxu0 0.0
    %5767 = vmatpush1.msra.mxu0 0.0
    %5768 = vmatprep.subr.mxu0 0.0
    %5769 = vmatpush1.msra.mxu0 0.0
    %5770 = vmatprep.subr.mxu0 0.0
    %5771 = vmatpush1.msra.mxu0 0.0
    %5772 = vmatprep.subr.mxu0 0.0
    %5773 = vmatpush1.msra.mxu0 0.0
    %5774 = vmatprep.subr.mxu0 0.0
    %5775 = vmatpush1.msra.mxu0 0.0
    %5776 = vmatprep.subr.mxu0 0.0
    %5777 = vmatpush1.msra.mxu0 0.0
    %5778 = vmatprep.subr.mxu0 0.0
    %5779 = vmatpush1.msra.mxu0 0.0
    %5780 = vmatprep.subr.mxu0 0.0
    %5781 = vmatpush1.msra.mxu0 0.0
    %5782 = vmatprep.subr.mxu0 0.0
    %5783 = vmatpush1.msra.mxu0 0.0
    %5784 = vmatprep.subr.mxu0 0.0
    %5785 = vmatpush1.msra.mxu0 0.0
    %5786 = vmatprep.subr.mxu0 0.0
    %5787 = vmatpush1.msra.mxu0 0.0
    %5788 = vmatprep.subr.mxu0 0.0
    %5789 = vmatpush1.msra.mxu0 0.0
    %5790 = vmatprep.subr.mxu0 0.0
    %5791 = vmatpush1.msra.mxu0 0.0
    %5792 = vmatprep.subr.mxu0 0.0
    %5793 = vmatpush1.msra.mxu0 0.0
    %5794 = vmatprep.subr.mxu0 0.0
    %5795 = vmatpush1.msra.mxu0 0.0
    %5796 = vmatprep.subr.mxu0 0.0
    %5797 = vmatpush1.msra.mxu0 0.0
    %5798 = vmatprep.subr.mxu0 0.0
    %5799 = vmatpush1.msra.mxu0 0.0
    %5800 = vmatprep.subr.mxu0 0.0
    %5801 = vmatpush1.msra.mxu0 0.0
    %5802 = vmatprep.mubr.f32.mxu0 0.0
    %5803 = vmatmul.mubr.f32.gmra.mrb[0].mxu0 %v5733
    %v5804 = vpop.f32.mrb[0].mxu0
    %v5805 = vadd.f32 0.0, %v5804
    %v5806 = vpop.f32.mrb[0].mxu0
    %5807 = vmatprep.mubr.f32.mxu0 0.0
    %5808 = vmatmul.mubr.f32.gmra.mrb[0].mxu0 %v5736
    %v5809 = vpop.f32.mrb[0].mxu0
    %v5810 = vadd.f32 0.0, %v5809
    %v5811 = vpop.f32.mrb[0].mxu0
    %5812 = vdwg.mxu0
    %v5814 = vsel %vm1154, %v5716, 0
    %v5817 = vsel %vm1154, %v5721, 0
    %v5820 = vsel %vm1154, %v5805, 0
    %v5823 = vsel %vm1154, %v5810, 0
    %5825 = vmatprep.subr.mxu0 0.0
    %5826 = vmatpush1.msra.mxu0 %v4825
    %5827 = vmatprep.subr.mxu0 0.0
    %5828 = vmatpush1.msra.mxu0 %v4826
    %5829 = vmatprep.subr.mxu0 0.0
    %5830 = vmatpush1.msra.mxu0 0.0
    %5831 = vmatprep.subr.mxu0 0.0
    %5832 = vmatpush1.msra.mxu0 0.0
    %5833 = vmatprep.subr.mxu0 0.0
    %5834 = vmatpush1.msra.mxu0 0.0
    %5835 = vmatprep.subr.mxu0 0.0
    %5836 = vmatpush1.msra.mxu0 0.0
    %5837 = vmatprep.subr.mxu0 0.0
    %5838 = vmatpush1.msra.mxu0 0.0
    %5839 = vmatprep.subr.mxu0 0.0
    %5840 = vmatpush1.msra.mxu0 0.0
    %5841 = vmatprep.subr.mxu0 0.0
    %5842 = vmatpush1.msra.mxu0 0.0
    %5843 = vmatprep.subr.mxu0 0.0
    %5844 = vmatpush1.msra.mxu0 0.0
    %5845 = vmatprep.subr.mxu0 0.0
    %5846 = vmatpush1.msra.mxu0 0.0
    %5847 = vmatprep.subr.mxu0 0.0
    %5848 = vmatpush1.msra.mxu0 0.0
    %5849 = vmatprep.subr.mxu0 0.0
    %5850 = vmatpush1.msra.mxu0 0.0
    %5851 = vmatprep.subr.mxu0 0.0
    %5852 = vmatpush1.msra.mxu0 0.0
    %5853 = vmatprep.subr.mxu0 0.0
    %5854 = vmatpush1.msra.mxu0 0.0
    %5855 = vmatprep.subr.mxu0 0.0
    %5856 = vmatpush1.msra.mxu0 0.0
    %5857 = vmatprep.subr.mxu0 0.0
    %5858 = vmatpush1.msra.mxu0 0.0
    %5859 = vmatprep.subr.mxu0 0.0
    %5860 = vmatpush1.msra.mxu0 0.0
    %5861 = vmatprep.subr.mxu0 0.0
    %5862 = vmatpush1.msra.mxu0 0.0
    %5863 = vmatprep.subr.mxu0 0.0
    %5864 = vmatpush1.msra.mxu0 0.0
    %5865 = vmatprep.subr.mxu0 0.0
    %5866 = vmatpush1.msra.mxu0 0.0
    %5867 = vmatprep.subr.mxu0 0.0
    %5868 = vmatpush1.msra.mxu0 0.0
    %5869 = vmatprep.subr.mxu0 0.0
    %5870 = vmatpush1.msra.mxu0 0.0
    %5871 = vmatprep.subr.mxu0 0.0
    %5872 = vmatpush1.msra.mxu0 0.0
    %5873 = vmatprep.subr.mxu0 0.0
    %5874 = vmatpush1.msra.mxu0 0.0
    %5875 = vmatprep.subr.mxu0 0.0
    %5876 = vmatpush1.msra.mxu0 0.0
    %5877 = vmatprep.subr.mxu0 0.0
    %5878 = vmatpush1.msra.mxu0 0.0
    %5879 = vmatprep.subr.mxu0 0.0
    %5880 = vmatpush1.msra.mxu0 0.0
    %5881 = vmatprep.subr.mxu0 0.0
    %5882 = vmatpush1.msra.mxu0 0.0
    %5883 = vmatprep.subr.mxu0 0.0
    %5884 = vmatpush1.msra.mxu0 0.0
    %5885 = vmatprep.subr.mxu0 0.0
    %5886 = vmatpush1.msra.mxu0 0.0
    %5887 = vmatprep.subr.mxu0 0.0
    %5888 = vmatpush1.msra.mxu0 0.0
    %5889 = vmatprep.mubr.f32.mxu0 0.0
    %5890 = vmatmul.mubr.f32.gmra.mrb[0].mxu0 %v5814
    %v5891 = vpop.f32.mrb[0].mxu0
    %v5892 = vadd.f32 0.0, %v5891
    %v5893 = vpop.f32.mrb[0].mxu0
    %5894 = vmatprep.mubr.f32.mxu0 0.0
    %5895 = vmatmul.mubr.f32.gmra.mrb[0].mxu0 %v5817
    %v5896 = vpop.f32.mrb[0].mxu0
    %v5897 = vadd.f32 0.0, %v5896
    %v5898 = vpop.f32.mrb[0].mxu0
    %5899 = vmatprep.mubr.f32.mxu0 0.0
    %5900 = vmatmul.mubr.f32.gmra.mrb[0].mxu0 %v5820
    %v5901 = vpop.f32.mrb[0].mxu0
    %v5902 = vadd.f32 0.0, %v5901
    %v5903 = vpop.f32.mrb[0].mxu0
    %5904 = vmatprep.mubr.f32.mxu0 0.0
    %5905 = vmatmul.mubr.f32.gmra.mrb[0].mxu0 %v5823
    %v5906 = vpop.f32.mrb[0].mxu0
    %v5907 = vadd.f32 0.0, %v5906
    %v5908 = vpop.f32.mrb[0].mxu0
    %5909 = vdwg.mxu0
    %v5911 = vsel %vm1154, %v5320, 0
    %v5914 = vsel %vm1154, %v5325, 0
    %v5917 = vsel %vm1154, %v5401, 0
    %v5920 = vsel %vm1154, %v5406, 0
    %5922 = vmatprep.subr.mxu0 0.0
    %5923 = vmatpush1.msra.mxu0 %v4823
    %5924 = vmatprep.subr.mxu0 0.0
    %5925 = vmatpush1.msra.mxu0 %v4824
    %5926 = vmatprep.subr.mxu0 0.0
    %5927 = vmatpush1.msra.mxu0 0.0
    %5928 = vmatprep.subr.mxu0 0.0
    %5929 = vmatpush1.msra.mxu0 0.0
    %5930 = vmatprep.subr.mxu0 0.0
    %5931 = vmatpush1.msra.mxu0 0.0
    %5932 = vmatprep.subr.mxu0 0.0
    %5933 = vmatpush1.msra.mxu0 0.0
    %5934 = vmatprep.subr.mxu0 0.0
    %5935 = vmatpush1.msra.mxu0 0.0
    %5936 = vmatprep.subr.mxu0 0.0
    %5937 = vmatpush1.msra.mxu0 0.0
    %5938 = vmatprep.subr.mxu0 0.0
    %5939 = vmatpush1.msra.mxu0 0.0
    %5940 = vmatprep.subr.mxu0 0.0
    %5941 = vmatpush1.msra.mxu0 0.0
    %5942 = vmatprep.subr.mxu0 0.0
    %5943 = vmatpush1.msra.mxu0 0.0
    %5944 = vmatprep.subr.mxu0 0.0
    %5945 = vmatpush1.msra.mxu0 0.0
    %5946 = vmatprep.subr.mxu0 0.0
    %5947 = vmatpush1.msra.mxu0 0.0
    %5948 = vmatprep.subr.mxu0 0.0
    %5949 = vmatpush1.msra.mxu0 0.0
    %5950 = vmatprep.subr.mxu0 0.0
    %5951 = vmatpush1.msra.mxu0 0.0
    %5952 = vmatprep.subr.mxu0 0.0
    %5953 = vmatpush1.msra.mxu0 0.0
    %5954 = vmatprep.subr.mxu0 0.0
    %5955 = vmatpush1.msra.mxu0 0.0
    %5956 = vmatprep.subr.mxu0 0.0
    %5957 = vmatpush1.msra.mxu0 0.0
    %5958 = vmatprep.subr.mxu0 0.0
    %5959 = vmatpush1.msra.mxu0 0.0
    %5960 = vmatprep.subr.mxu0 0.0
    %5961 = vmatpush1.msra.mxu0 0.0
    %5962 = vmatprep.subr.mxu0 0.0
    %5963 = vmatpush1.msra.mxu0 0.0
    %5964 = vmatprep.subr.mxu0 0.0
    %5965 = vmatpush1.msra.mxu0 0.0
    %5966 = vmatprep.subr.mxu0 0.0
    %5967 = vmatpush1.msra.mxu0 0.0
    %5968 = vmatprep.subr.mxu0 0.0
    %5969 = vmatpush1.msra.mxu0 0.0
    %5970 = vmatprep.subr.mxu0 0.0
    %5971 = vmatpush1.msra.mxu0 0.0
    %5972 = vmatprep.subr.mxu0 0.0
    %5973 = vmatpush1.msra.mxu0 0.0
    %5974 = vmatprep.subr.mxu0 0.0
    %5975 = vmatpush1.msra.mxu0 0.0
    %5976 = vmatprep.subr.mxu0 0.0
    %5977 = vmatpush1.msra.mxu0 0.0
    %5978 = vmatprep.subr.mxu0 0.0
    %5979 = vmatpush1.msra.mxu0 0.0
    %5980 = vmatprep.subr.mxu0 0.0
    %5981 = vmatpush1.msra.mxu0 0.0
    %5982 = vmatprep.subr.mxu0 0.0
    %5983 = vmatpush1.msra.mxu0 0.0
    %5984 = vmatprep.subr.mxu0 0.0
    %5985 = vmatpush1.msra.mxu0 0.0
    %5986 = vmatprep.mubr.f32.mxu0 0.0
    %5987 = vmatmul.mubr.f32.gmra.mrb[0].mxu0 %v5911
    %v5988 = vpop.f32.mrb[0].mxu0
    %v5989 = vadd.f32 %v5892, %v5988
    %v5990 = vpop.f32.mrb[0].mxu0
    %5991 = vmatprep.mubr.f32.mxu0 0.0
    %5992 = vmatmul.mubr.f32.gmra.mrb[0].mxu0 %v5914
    %v5993 = vpop.f32.mrb[0].mxu0
    %v5994 = vadd.f32 %v5897, %v5993
    %v5995 = vpop.f32.mrb[0].mxu0
    %5996 = vmatprep.mubr.f32.mxu0 0.0
    %5997 = vmatmul.mubr.f32.gmra.mrb[0].mxu0 %v5917
    %v5998 = vpop.f32.mrb[0].mxu0
    %v5999 = vadd.f32 %v5902, %v5998
    %v6000 = vpop.f32.mrb[0].mxu0
    %6001 = vmatprep.mubr.f32.mxu0 0.0
    %6002 = vmatmul.mubr.f32.gmra.mrb[0].mxu0 %v5920
    %v6003 = vpop.f32.mrb[0].mxu0
    %v6004 = vadd.f32 %v5907, %v6003
    %v6005 = vpop.f32.mrb[0].mxu0
    %6006 = vdwg.mxu0
    %6007 = vrot.lane.b32.xlu0 %v5017, 96
    %v6008 = vpop.permute.xlu0 %6007
    %6009 = vrot.lane.b32.xlu0 %v5018, 96
    %v6010 = vpop.permute.xlu0 %6009
    %6011 = vrot.lane.b32.xlu0 %v4995, 32
    %v6012 = vpop.permute.xlu0 %6011
    %6013 = vrot.lane.b32.xlu0 %v5001, 32
    %v6014 = vpop.permute.xlu0 %6013
    %v6015 = vsel %vm1154, %v6008, 0
    %v6017 = vsel %vm1154, %v6010, 0
    %v6019 = vsel %vm1154, %v6012, 0
    %v6021 = vsel %vm1154, %v6014, 0
    %6023 = vmatprep.subr.mxu0 0.0
    %6024 = vmatpush1.xpose.msra.mxu0 %v6019
    %6025 = vmatprep.subr.mxu0 0.0
    %6026 = vmatpush1.xpose.msra.mxu0 %v6021
    %6027 = vmatprep.subr.mxu0 0.0
    %6028 = vmatpush1.xpose.msra.mxu0 0.0
    %6029 = vmatprep.subr.mxu0 0.0
    %6030 = vmatpush1.xpose.msra.mxu0 0.0
    %6031 = vmatprep.subr.mxu0 0.0
    %6032 = vmatpush1.xpose.msra.mxu0 0.0
    %6033 = vmatprep.subr.mxu0 0.0
    %6034 = vmatpush1.xpose.msra.mxu0 0.0
    %6035 = vmatprep.subr.mxu0 0.0
    %6036 = vmatpush1.xpose.msra.mxu0 0.0
    %6037 = vmatprep.subr.mxu0 0.0
    %6038 = vmatpush1.xpose.msra.mxu0 0.0
    %6039 = vmatprep.subr.mxu0 0.0
    %6040 = vmatpush1.xpose.msra.mxu0 0.0
    %6041 = vmatprep.subr.mxu0 0.0
    %6042 = vmatpush1.xpose.msra.mxu0 0.0
    %6043 = vmatprep.subr.mxu0 0.0
    %6044 = vmatpush1.xpose.msra.mxu0 0.0
    %6045 = vmatprep.subr.mxu0 0.0
    %6046 = vmatpush1.xpose.msra.mxu0 0.0
    %6047 = vmatprep.subr.mxu0 0.0
    %6048 = vmatpush1.xpose.msra.mxu0 0.0
    %6049 = vmatprep.subr.mxu0 0.0
    %6050 = vmatpush1.xpose.msra.mxu0 0.0
    %6051 = vmatprep.subr.mxu0 0.0
    %6052 = vmatpush1.xpose.msra.mxu0 0.0
    %6053 = vmatprep.subr.mxu0 0.0
    %6054 = vmatpush1.xpose.msra.mxu0 0.0
    %6055 = vmatprep.subr.mxu0 0.0
    %6056 = vmatpush1.xpose.msra.mxu0 0.0
    %6057 = vmatprep.subr.mxu0 0.0
    %6058 = vmatpush1.xpose.msra.mxu0 0.0
    %6059 = vmatprep.subr.mxu0 0.0
    %6060 = vmatpush1.xpose.msra.mxu0 0.0
    %6061 = vmatprep.subr.mxu0 0.0
    %6062 = vmatpush1.xpose.msra.mxu0 0.0
    %6063 = vmatprep.subr.mxu0 0.0
    %6064 = vmatpush1.xpose.msra.mxu0 0.0
    %6065 = vmatprep.subr.mxu0 0.0
    %6066 = vmatpush1.xpose.msra.mxu0 0.0
    %6067 = vmatprep.subr.mxu0 0.0
    %6068 = vmatpush1.xpose.msra.mxu0 0.0
    %6069 = vmatprep.subr.mxu0 0.0
    %6070 = vmatpush1.xpose.msra.mxu0 0.0
    %6071 = vmatprep.subr.mxu0 0.0
    %6072 = vmatpush1.xpose.msra.mxu0 0.0
    %6073 = vmatprep.subr.mxu0 0.0
    %6074 = vmatpush1.xpose.msra.mxu0 0.0
    %6075 = vmatprep.subr.mxu0 0.0
    %6076 = vmatpush1.xpose.msra.mxu0 0.0
    %6077 = vmatprep.subr.mxu0 0.0
    %6078 = vmatpush1.xpose.msra.mxu0 0.0
    %6079 = vmatprep.subr.mxu0 0.0
    %6080 = vmatpush1.xpose.msra.mxu0 0.0
    %6081 = vmatprep.subr.mxu0 0.0
    %6082 = vmatpush1.xpose.msra.mxu0 0.0
    %6083 = vmatprep.subr.mxu0 0.0
    %6084 = vmatpush1.xpose.msra.mxu0 0.0
    %6085 = vmatprep.subr.mxu0 0.0
    %6086 = vmatpush1.xpose.msra.mxu0 0.0
    %6087 = vmatprep.mubr.f32.mxu0 0.0
    %6088 = vmatmul.mubr.f32.gmra.mrb[0].mxu0 %v6015
    %v6089 = vpop.f32.mrb[0].mxu0
    %v6090 = vadd.f32 0.0, %v6089
    %v6091 = vpop.f32.mrb[0].mxu0
    %6092 = vmatprep.mubr.f32.mxu0 0.0
    %6093 = vmatmul.mubr.f32.gmra.mrb[0].mxu0 %v6017
    %v6094 = vpop.f32.mrb[0].mxu0
    %v6095 = vadd.f32 0.0, %v6094
    %v6096 = vpop.f32.mrb[0].mxu0
    %6097 = vdwg.mxu0
    %6098 = vrot.lane.b32.xlu0 %v5019, 96
    %v6099 = vpop.permute.xlu0 %6098
    %6100 = vrot.lane.b32.xlu0 %v5020, 96
    %v6101 = vpop.permute.xlu0 %6100
    %6102 = vrot.lane.b32.xlu0 %v5007, 32
    %v6103 = vpop.permute.xlu0 %6102
    %6104 = vrot.lane.b32.xlu0 %v5013, 32
    %v6105 = vpop.permute.xlu0 %6104
    %v6106 = vsel %vm1154, %v6099, 0
    %v6108 = vsel %vm1154, %v6101, 0
    %v6110 = vsel %vm1154, %v6103, 0
    %v6112 = vsel %vm1154, %v6105, 0
    %6114 = vmatprep.subr.mxu0 0.0
    %6115 = vmatpush1.xpose.msra.mxu0 %v6110
    %6116 = vmatprep.subr.mxu0 0.0
    %6117 = vmatpush1.xpose.msra.mxu0 %v6112
    %6118 = vmatprep.subr.mxu0 0.0
    %6119 = vmatpush1.xpose.msra.mxu0 0.0
    %6120 = vmatprep.subr.mxu0 0.0
    %6121 = vmatpush1.xpose.msra.mxu0 0.0
    %6122 = vmatprep.subr.mxu0 0.0
    %6123 = vmatpush1.xpose.msra.mxu0 0.0
    %6124 = vmatprep.subr.mxu0 0.0
    %6125 = vmatpush1.xpose.msra.mxu0 0.0
    %6126 = vmatprep.subr.mxu0 0.0
    %6127 = vmatpush1.xpose.msra.mxu0 0.0
    %6128 = vmatprep.subr.mxu0 0.0
    %6129 = vmatpush1.xpose.msra.mxu0 0.0
    %6130 = vmatprep.subr.mxu0 0.0
    %6131 = vmatpush1.xpose.msra.mxu0 0.0
    %6132 = vmatprep.subr.mxu0 0.0
    %6133 = vmatpush1.xpose.msra.mxu0 0.0
    %6134 = vmatprep.subr.mxu0 0.0
    %6135 = vmatpush1.xpose.msra.mxu0 0.0
    %6136 = vmatprep.subr.mxu0 0.0
    %6137 = vmatpush1.xpose.msra.mxu0 0.0
    %6138 = vmatprep.subr.mxu0 0.0
    %6139 = vmatpush1.xpose.msra.mxu0 0.0
    %6140 = vmatprep.subr.mxu0 0.0
    %6141 = vmatpush1.xpose.msra.mxu0 0.0
    %6142 = vmatprep.subr.mxu0 0.0
    %6143 = vmatpush1.xpose.msra.mxu0 0.0
    %6144 = vmatprep.subr.mxu0 0.0
    %6145 = vmatpush1.xpose.msra.mxu0 0.0
    %6146 = vmatprep.subr.mxu0 0.0
    %6147 = vmatpush1.xpose.msra.mxu0 0.0
    %6148 = vmatprep.subr.mxu0 0.0
    %6149 = vmatpush1.xpose.msra.mxu0 0.0
    %6150 = vmatprep.subr.mxu0 0.0
    %6151 = vmatpush1.xpose.msra.mxu0 0.0
    %6152 = vmatprep.subr.mxu0 0.0
    %6153 = vmatpush1.xpose.msra.mxu0 0.0
    %6154 = vmatprep.subr.mxu0 0.0
    %6155 = vmatpush1.xpose.msra.mxu0 0.0
    %6156 = vmatprep.subr.mxu0 0.0
    %6157 = vmatpush1.xpose.msra.mxu0 0.0
    %6158 = vmatprep.subr.mxu0 0.0
    %6159 = vmatpush1.xpose.msra.mxu0 0.0
    %6160 = vmatprep.subr.mxu0 0.0
    %6161 = vmatpush1.xpose.msra.mxu0 0.0
    %6162 = vmatprep.subr.mxu0 0.0
    %6163 = vmatpush1.xpose.msra.mxu0 0.0
    %6164 = vmatprep.subr.mxu0 0.0
    %6165 = vmatpush1.xpose.msra.mxu0 0.0
    %6166 = vmatprep.subr.mxu0 0.0
    %6167 = vmatpush1.xpose.msra.mxu0 0.0
    %6168 = vmatprep.subr.mxu0 0.0
    %6169 = vmatpush1.xpose.msra.mxu0 0.0
    %6170 = vmatprep.subr.mxu0 0.0
    %6171 = vmatpush1.xpose.msra.mxu0 0.0
    %6172 = vmatprep.subr.mxu0 0.0
    %6173 = vmatpush1.xpose.msra.mxu0 0.0
    %6174 = vmatprep.subr.mxu0 0.0
    %6175 = vmatpush1.xpose.msra.mxu0 0.0
    %6176 = vmatprep.subr.mxu0 0.0
    %6177 = vmatpush1.xpose.msra.mxu0 0.0
    %6178 = vmatprep.mubr.f32.mxu0 0.0
    %6179 = vmatmul.mubr.f32.gmra.mrb[0].mxu0 %v6106
    %v6180 = vpop.f32.mrb[0].mxu0
    %v6181 = vadd.f32 0.0, %v6180
    %v6182 = vpop.f32.mrb[0].mxu0
    %6183 = vmatprep.mubr.f32.mxu0 0.0
    %6184 = vmatmul.mubr.f32.gmra.mrb[0].mxu0 %v6108
    %v6185 = vpop.f32.mrb[0].mxu0
    %v6186 = vadd.f32 0.0, %v6185
    %v6187 = vpop.f32.mrb[0].mxu0
    %6188 = vdwg.mxu0
    %v6189 = vsel %vm1154, %v6090, -inf
    %6190 = vmax.xlane.f32.xlu0 %v6189
    %v6191 = vpop.xlane.xlu0 %6190
    %v6192 = vsel %vm1154, %v6095, -inf
    %6193 = vmax.xlane.f32.xlu0 %v6192
    %v6194 = vpop.xlane.xlu0 %6193
    %v6195 = vsel %vm1154, %v6181, -inf
    %6196 = vmax.xlane.f32.xlu0 %v6195
    %v6197 = vpop.xlane.xlu0 %6196
    %v6198 = vsel %vm1154, %v6186, -inf
    %6199 = vmax.xlane.f32.xlu0 %v6198
    %v6200 = vpop.xlane.xlu0 %6199
    %v6201 = vsub.f32 %v6090, %v6191
    %v6202 = vsub.f32 %v6095, %v6194
    %v6203 = vsub.f32 %v6181, %v6197
    %v6204 = vsub.f32 %v6186, %v6200
    %v6205 = vmul.f32 %v6201, 1.442695
    %v6206 = vpow.pop %v6205
    %v6207 = vmul.f32 %v6202, 1.442695
    %v6208 = vpow.pop %v6207
    %v6209 = vmul.f32 %v6203, 1.442695
    %v6210 = vpow.pop %v6209
    %v6211 = vmul.f32 %v6204, 1.442695
    %v6212 = vpow.pop %v6211
    %v6213 = vsel %vm1154, %v6206, 0.0
    %6214 = vadd.xlane.f32.xlu0 %v6213
    %v6215 = vpop.xlane.xlu0 %6214
    %v6216 = vsel %vm1154, %v6208, 0.0
    %6217 = vadd.xlane.f32.xlu0 %v6216
    %v6218 = vpop.xlane.xlu0 %6217
    %v6219 = vsel %vm1154, %v6210, 0.0
    %6220 = vadd.xlane.f32.xlu0 %v6219
    %v6221 = vpop.xlane.xlu0 %6220
    %v6222 = vsel %vm1154, %v6212, 0.0
    %6223 = vadd.xlane.f32.xlu0 %v6222
    %v6224 = vpop.xlane.xlu0 %6223
    %v6225 = vrcp.pop %v6215
    %v6226 = vrcp.pop %v6218
    %v6227 = vrcp.pop %v6221
    %v6228 = vrcp.pop %v6224
    %v6229 = vmul.f32 %v6206, %v6225
    %v6230 = vmul.f32 %v6208, %v6226
    %v6231 = vmul.f32 %v6210, %v6227
    %v6232 = vmul.f32 %v6212, %v6228
    %6233 = vrot.lane.b32.xlu0 %v4997, 96
    %v6234 = vpop.permute.xlu0 %6233
    %6235 = vrot.lane.b32.xlu0 %v5003, 96
    %v6236 = vpop.permute.xlu0 %6235
    %v6240 = vsel %vm1154, %v6229, 0
    %v6243 = vsel %vm1154, %v6230, 0
    %6245 = vmatprep.subr.mxu0 0.0
    %6246 = vmatpush1.msra.mxu0 %v6234
    %6247 = vmatprep.subr.mxu0 0.0
    %6248 = vmatpush1.msra.mxu0 %v6236
    %6249 = vmatprep.subr.mxu0 0.0
    %6250 = vmatpush1.msra.mxu0 0.0
    %6251 = vmatprep.subr.mxu0 0.0
    %6252 = vmatpush1.msra.mxu0 0.0
    %6253 = vmatprep.subr.mxu0 0.0
    %6254 = vmatpush1.msra.mxu0 0.0
    %6255 = vmatprep.subr.mxu0 0.0
    %6256 = vmatpush1.msra.mxu0 0.0
    %6257 = vmatprep.subr.mxu0 0.0
    %6258 = vmatpush1.msra.mxu0 0.0
    %6259 = vmatprep.subr.mxu0 0.0
    %6260 = vmatpush1.msra.mxu0 0.0
    %6261 = vmatprep.subr.mxu0 0.0
    %6262 = vmatpush1.msra.mxu0 0.0
    %6263 = vmatprep.subr.mxu0 0.0
    %6264 = vmatpush1.msra.mxu0 0.0
    %6265 = vmatprep.subr.mxu0 0.0
    %6266 = vmatpush1.msra.mxu0 0.0
    %6267 = vmatprep.subr.mxu0 0.0
    %6268 = vmatpush1.msra.mxu0 0.0
    %6269 = vmatprep.subr.mxu0 0.0
    %6270 = vmatpush1.msra.mxu0 0.0
    %6271 = vmatprep.subr.mxu0 0.0
    %6272 = vmatpush1.msra.mxu0 0.0
    %6273 = vmatprep.subr.mxu0 0.0
    %6274 = vmatpush1.msra.mxu0 0.0
    %6275 = vmatprep.subr.mxu0 0.0
    %6276 = vmatpush1.msra.mxu0 0.0
    %6277 = vmatprep.subr.mxu0 0.0
    %6278 = vmatpush1.msra.mxu0 0.0
    %6279 = vmatprep.subr.mxu0 0.0
    %6280 = vmatpush1.msra.mxu0 0.0
    %6281 = vmatprep.subr.mxu0 0.0
    %6282 = vmatpush1.msra.mxu0 0.0
    %6283 = vmatprep.subr.mxu0 0.0
    %6284 = vmatpush1.msra.mxu0 0.0
    %6285 = vmatprep.subr.mxu0 0.0
    %6286 = vmatpush1.msra.mxu0 0.0
    %6287 = vmatprep.subr.mxu0 0.0
    %6288 = vmatpush1.msra.mxu0 0.0
    %6289 = vmatprep.subr.mxu0 0.0
    %6290 = vmatpush1.msra.mxu0 0.0
    %6291 = vmatprep.subr.mxu0 0.0
    %6292 = vmatpush1.msra.mxu0 0.0
    %6293 = vmatprep.subr.mxu0 0.0
    %6294 = vmatpush1.msra.mxu0 0.0
    %6295 = vmatprep.subr.mxu0 0.0
    %6296 = vmatpush1.msra.mxu0 0.0
    %6297 = vmatprep.subr.mxu0 0.0
    %6298 = vmatpush1.msra.mxu0 0.0
    %6299 = vmatprep.subr.mxu0 0.0
    %6300 = vmatpush1.msra.mxu0 0.0
    %6301 = vmatprep.subr.mxu0 0.0
    %6302 = vmatpush1.msra.mxu0 0.0
    %6303 = vmatprep.subr.mxu0 0.0
    %6304 = vmatpush1.msra.mxu0 0.0
    %6305 = vmatprep.subr.mxu0 0.0
    %6306 = vmatpush1.msra.mxu0 0.0
    %6307 = vmatprep.subr.mxu0 0.0
    %6308 = vmatpush1.msra.mxu0 0.0
    %6309 = vmatprep.mubr.f32.mxu0 0.0
    %6310 = vmatmul.mubr.f32.gmra.mrb[0].mxu0 %v6240
    %v6311 = vpop.f32.mrb[0].mxu0
    %v6312 = vadd.f32 0.0, %v6311
    %v6313 = vpop.f32.mrb[0].mxu0
    %6314 = vmatprep.mubr.f32.mxu0 0.0
    %6315 = vmatmul.mubr.f32.gmra.mrb[0].mxu0 %v6243
    %v6316 = vpop.f32.mrb[0].mxu0
    %v6317 = vadd.f32 0.0, %v6316
    %v6318 = vpop.f32.mrb[0].mxu0
    %6319 = vdwg.mxu0
    %6320 = vrot.lane.b32.xlu0 %v5009, 96
    %v6321 = vpop.permute.xlu0 %6320
    %6322 = vrot.lane.b32.xlu0 %v5015, 96
    %v6323 = vpop.permute.xlu0 %6322
    %v6327 = vsel %vm1154, %v6231, 0
    %v6330 = vsel %vm1154, %v6232, 0
    %6332 = vmatprep.subr.mxu0 0.0
    %6333 = vmatpush1.msra.mxu0 %v6321
    %6334 = vmatprep.subr.mxu0 0.0
    %6335 = vmatpush1.msra.mxu0 %v6323
    %6336 = vmatprep.subr.mxu0 0.0
    %6337 = vmatpush1.msra.mxu0 0.0
    %6338 = vmatprep.subr.mxu0 0.0
    %6339 = vmatpush1.msra.mxu0 0.0
    %6340 = vmatprep.subr.mxu0 0.0
    %6341 = vmatpush1.msra.mxu0 0.0
    %6342 = vmatprep.subr.mxu0 0.0
    %6343 = vmatpush1.msra.mxu0 0.0
    %6344 = vmatprep.subr.mxu0 0.0
    %6345 = vmatpush1.msra.mxu0 0.0
    %6346 = vmatprep.subr.mxu0 0.0
    %6347 = vmatpush1.msra.mxu0 0.0
    %6348 = vmatprep.subr.mxu0 0.0
    %6349 = vmatpush1.msra.mxu0 0.0
    %6350 = vmatprep.subr.mxu0 0.0
    %6351 = vmatpush1.msra.mxu0 0.0
    %6352 = vmatprep.subr.mxu0 0.0
    %6353 = vmatpush1.msra.mxu0 0.0
    %6354 = vmatprep.subr.mxu0 0.0
    %6355 = vmatpush1.msra.mxu0 0.0
    %6356 = vmatprep.subr.mxu0 0.0
    %6357 = vmatpush1.msra.mxu0 0.0
    %6358 = vmatprep.subr.mxu0 0.0
    %6359 = vmatpush1.msra.mxu0 0.0
    %6360 = vmatprep.subr.mxu0 0.0
    %6361 = vmatpush1.msra.mxu0 0.0
    %6362 = vmatprep.subr.mxu0 0.0
    %6363 = vmatpush1.msra.mxu0 0.0
    %6364 = vmatprep.subr.mxu0 0.0
    %6365 = vmatpush1.msra.mxu0 0.0
    %6366 = vmatprep.subr.mxu0 0.0
    %6367 = vmatpush1.msra.mxu0 0.0
    %6368 = vmatprep.subr.mxu0 0.0
    %6369 = vmatpush1.msra.mxu0 0.0
    %6370 = vmatprep.subr.mxu0 0.0
    %6371 = vmatpush1.msra.mxu0 0.0
    %6372 = vmatprep.subr.mxu0 0.0
    %6373 = vmatpush1.msra.mxu0 0.0
    %6374 = vmatprep.subr.mxu0 0.0
    %6375 = vmatpush1.msra.mxu0 0.0
    %6376 = vmatprep.subr.mxu0 0.0
    %6377 = vmatpush1.msra.mxu0 0.0
    %6378 = vmatprep.subr.mxu0 0.0
    %6379 = vmatpush1.msra.mxu0 0.0
    %6380 = vmatprep.subr.mxu0 0.0
    %6381 = vmatpush1.msra.mxu0 0.0
    %6382 = vmatprep.subr.mxu0 0.0
    %6383 = vmatpush1.msra.mxu0 0.0
    %6384 = vmatprep.subr.mxu0 0.0
    %6385 = vmatpush1.msra.mxu0 0.0
    %6386 = vmatprep.subr.mxu0 0.0
    %6387 = vmatpush1.msra.mxu0 0.0
    %6388 = vmatprep.subr.mxu0 0.0
    %6389 = vmatpush1.msra.mxu0 0.0
    %6390 = vmatprep.subr.mxu0 0.0
    %6391 = vmatpush1.msra.mxu0 0.0
    %6392 = vmatprep.subr.mxu0 0.0
    %6393 = vmatpush1.msra.mxu0 0.0
    %6394 = vmatprep.subr.mxu0 0.0
    %6395 = vmatpush1.msra.mxu0 0.0
    %6396 = vmatprep.mubr.f32.mxu0 0.0
    %6397 = vmatmul.mubr.f32.gmra.mrb[0].mxu0 %v6327
    %v6398 = vpop.f32.mrb[0].mxu0
    %v6399 = vadd.f32 0.0, %v6398
    %v6400 = vpop.f32.mrb[0].mxu0
    %6401 = vmatprep.mubr.f32.mxu0 0.0
    %6402 = vmatmul.mubr.f32.gmra.mrb[0].mxu0 %v6330
    %v6403 = vpop.f32.mrb[0].mxu0
    %v6404 = vadd.f32 0.0, %v6403
    %v6405 = vpop.f32.mrb[0].mxu0
    %6406 = vdwg.mxu0
    %v6408 = vsel %vm1154, %v6312, 0
    %v6411 = vsel %vm1154, %v6317, 0
    %v6414 = vsel %vm1154, %v6399, 0
    %v6417 = vsel %vm1154, %v6404, 0
    %6419 = vmatprep.subr.mxu0 0.0
    %6420 = vmatpush1.msra.mxu0 %v4827
    %6421 = vmatprep.subr.mxu0 0.0
    %6422 = vmatpush1.msra.mxu0 %v4828
    %6423 = vmatprep.subr.mxu0 0.0
    %6424 = vmatpush1.msra.mxu0 0.0
    %6425 = vmatprep.subr.mxu0 0.0
    %6426 = vmatpush1.msra.mxu0 0.0
    %6427 = vmatprep.subr.mxu0 0.0
    %6428 = vmatpush1.msra.mxu0 0.0
    %6429 = vmatprep.subr.mxu0 0.0
    %6430 = vmatpush1.msra.mxu0 0.0
    %6431 = vmatprep.subr.mxu0 0.0
    %6432 = vmatpush1.msra.mxu0 0.0
    %6433 = vmatprep.subr.mxu0 0.0
    %6434 = vmatpush1.msra.mxu0 0.0
    %6435 = vmatprep.subr.mxu0 0.0
    %6436 = vmatpush1.msra.mxu0 0.0
    %6437 = vmatprep.subr.mxu0 0.0
    %6438 = vmatpush1.msra.mxu0 0.0
    %6439 = vmatprep.subr.mxu0 0.0
    %6440 = vmatpush1.msra.mxu0 0.0
    %6441 = vmatprep.subr.mxu0 0.0
    %6442 = vmatpush1.msra.mxu0 0.0
    %6443 = vmatprep.subr.mxu0 0.0
    %6444 = vmatpush1.msra.mxu0 0.0
    %6445 = vmatprep.subr.mxu0 0.0
    %6446 = vmatpush1.msra.mxu0 0.0
    %6447 = vmatprep.subr.mxu0 0.0
    %6448 = vmatpush1.msra.mxu0 0.0
    %6449 = vmatprep.subr.mxu0 0.0
    %6450 = vmatpush1.msra.mxu0 0.0
    %6451 = vmatprep.subr.mxu0 0.0
    %6452 = vmatpush1.msra.mxu0 0.0
    %6453 = vmatprep.subr.mxu0 0.0
    %6454 = vmatpush1.msra.mxu0 0.0
    %6455 = vmatprep.subr.mxu0 0.0
    %6456 = vmatpush1.msra.mxu0 0.0
    %6457 = vmatprep.subr.mxu0 0.0
    %6458 = vmatpush1.msra.mxu0 0.0
    %6459 = vmatprep.subr.mxu0 0.0
    %6460 = vmatpush1.msra.mxu0 0.0
    %6461 = vmatprep.subr.mxu0 0.0
    %6462 = vmatpush1.msra.mxu0 0.0
    %6463 = vmatprep.subr.mxu0 0.0
    %6464 = vmatpush1.msra.mxu0 0.0
    %6465 = vmatprep.subr.mxu0 0.0
    %6466 = vmatpush1.msra.mxu0 0.0
    %6467 = vmatprep.subr.mxu0 0.0
    %6468 = vmatpush1.msra.mxu0 0.0
    %6469 = vmatprep.subr.mxu0 0.0
    %6470 = vmatpush1.msra.mxu0 0.0
    %6471 = vmatprep.subr.mxu0 0.0
    %6472 = vmatpush1.msra.mxu0 0.0
    %6473 = vmatprep.subr.mxu0 0.0
    %6474 = vmatpush1.msra.mxu0 0.0
    %6475 = vmatprep.subr.mxu0 0.0
    %6476 = vmatpush1.msra.mxu0 0.0
    %6477 = vmatprep.subr.mxu0 0.0
    %6478 = vmatpush1.msra.mxu0 0.0
    %6479 = vmatprep.subr.mxu0 0.0
    %6480 = vmatpush1.msra.mxu0 0.0
    %6481 = vmatprep.subr.mxu0 0.0
    %6482 = vmatpush1.msra.mxu0 0.0
    %6483 = vmatprep.mubr.f32.mxu0 0.0
    %6484 = vmatmul.mubr.f32.gmra.mrb[0].mxu0 %v6408
    %v6485 = vpop.f32.mrb[0].mxu0
    %v6486 = vadd.f32 0.0, %v6485
    %v6487 = vpop.f32.mrb[0].mxu0
    %6488 = vmatprep.mubr.f32.mxu0 0.0
    %6489 = vmatmul.mubr.f32.gmra.mrb[0].mxu0 %v6411
    %v6490 = vpop.f32.mrb[0].mxu0
    %v6491 = vadd.f32 0.0, %v6490
    %v6492 = vpop.f32.mrb[0].mxu0
    %6493 = vmatprep.mubr.f32.mxu0 0.0
    %6494 = vmatmul.mubr.f32.gmra.mrb[0].mxu0 %v6414
    %v6495 = vpop.f32.mrb[0].mxu0
    %v6496 = vadd.f32 0.0, %v6495
    %v6497 = vpop.f32.mrb[0].mxu0
    %6498 = vmatprep.mubr.f32.mxu0 0.0
    %6499 = vmatmul.mubr.f32.gmra.mrb[0].mxu0 %v6417
    %v6500 = vpop.f32.mrb[0].mxu0
    %v6501 = vadd.f32 0.0, %v6500
    %v6502 = vpop.f32.mrb[0].mxu0
    %6503 = vdwg.mxu0
    %v6504 = vadd.f32 %v5989, %v6486
    %v6505 = vadd.f32 %v5994, %v6491
    %v6506 = vadd.f32 %v5999, %v6496
    %v6507 = vadd.f32 %v6004, %v6501
    %6508 = vrot.lane.b32.xlu0 %v5017, 80
    %v6509 = vpop.permute.xlu0 %6508
    %6510 = vrot.lane.b32.xlu0 %v5018, 80
    %v6511 = vpop.permute.xlu0 %6510
    %6512 = vrot.lane.b32.xlu0 %v4995, 16
    %v6513 = vpop.permute.xlu0 %6512
    %6514 = vrot.lane.b32.xlu0 %v5001, 16
    %v6515 = vpop.permute.xlu0 %6514
    %v6516 = vsel %vm1154, %v6509, 0
    %v6518 = vsel %vm1154, %v6511, 0
    %v6520 = vsel %vm1154, %v6513, 0
    %v6522 = vsel %vm1154, %v6515, 0
    %6524 = vmatprep.subr.mxu0 0.0
    %6525 = vmatpush1.xpose.msra.mxu0 %v6520
    %6526 = vmatprep.subr.mxu0 0.0
    %6527 = vmatpush1.xpose.msra.mxu0 %v6522
    %6528 = vmatprep.subr.mxu0 0.0
    %6529 = vmatpush1.xpose.msra.mxu0 0.0
    %6530 = vmatprep.subr.mxu0 0.0
    %6531 = vmatpush1.xpose.msra.mxu0 0.0
    %6532 = vmatprep.subr.mxu0 0.0
    %6533 = vmatpush1.xpose.msra.mxu0 0.0
    %6534 = vmatprep.subr.mxu0 0.0
    %6535 = vmatpush1.xpose.msra.mxu0 0.0
    %6536 = vmatprep.subr.mxu0 0.0
    %6537 = vmatpush1.xpose.msra.mxu0 0.0
    %6538 = vmatprep.subr.mxu0 0.0
    %6539 = vmatpush1.xpose.msra.mxu0 0.0
    %6540 = vmatprep.subr.mxu0 0.0
    %6541 = vmatpush1.xpose.msra.mxu0 0.0
    %6542 = vmatprep.subr.mxu0 0.0
    %6543 = vmatpush1.xpose.msra.mxu0 0.0
    %6544 = vmatprep.subr.mxu0 0.0
    %6545 = vmatpush1.xpose.msra.mxu0 0.0
    %6546 = vmatprep.subr.mxu0 0.0
    %6547 = vmatpush1.xpose.msra.mxu0 0.0
    %6548 = vmatprep.subr.mxu0 0.0
    %6549 = vmatpush1.xpose.msra.mxu0 0.0
    %6550 = vmatprep.subr.mxu0 0.0
    %6551 = vmatpush1.xpose.msra.mxu0 0.0
    %6552 = vmatprep.subr.mxu0 0.0
    %6553 = vmatpush1.xpose.msra.mxu0 0.0
    %6554 = vmatprep.subr.mxu0 0.0
    %6555 = vmatpush1.xpose.msra.mxu0 0.0
    %6556 = vmatprep.subr.mxu0 0.0
    %6557 = vmatpush1.xpose.msra.mxu0 0.0
    %6558 = vmatprep.subr.mxu0 0.0
    %6559 = vmatpush1.xpose.msra.mxu0 0.0
    %6560 = vmatprep.subr.mxu0 0.0
    %6561 = vmatpush1.xpose.msra.mxu0 0.0
    %6562 = vmatprep.subr.mxu0 0.0
    %6563 = vmatpush1.xpose.msra.mxu0 0.0
    %6564 = vmatprep.subr.mxu0 0.0
    %6565 = vmatpush1.xpose.msra.mxu0 0.0
    %6566 = vmatprep.subr.mxu0 0.0
    %6567 = vmatpush1.xpose.msra.mxu0 0.0
    %6568 = vmatprep.subr.mxu0 0.0
    %6569 = vmatpush1.xpose.msra.mxu0 0.0
    %6570 = vmatprep.subr.mxu0 0.0
    %6571 = vmatpush1.xpose.msra.mxu0 0.0
    %6572 = vmatprep.subr.mxu0 0.0
    %6573 = vmatpush1.xpose.msra.mxu0 0.0
    %6574 = vmatprep.subr.mxu0 0.0
    %6575 = vmatpush1.xpose.msra.mxu0 0.0
    %6576 = vmatprep.subr.mxu0 0.0
    %6577 = vmatpush1.xpose.msra.mxu0 0.0
    %6578 = vmatprep.subr.mxu0 0.0
    %6579 = vmatpush1.xpose.msra.mxu0 0.0
    %6580 = vmatprep.subr.mxu0 0.0
    %6581 = vmatpush1.xpose.msra.mxu0 0.0
    %6582 = vmatprep.subr.mxu0 0.0
    %6583 = vmatpush1.xpose.msra.mxu0 0.0
    %6584 = vmatprep.subr.mxu0 0.0
    %6585 = vmatpush1.xpose.msra.mxu0 0.0
    %6586 = vmatprep.subr.mxu0 0.0
    %6587 = vmatpush1.xpose.msra.mxu0 0.0
    %6588 = vmatprep.mubr.f32.mxu0 0.0
    %6589 = vmatmul.mubr.f32.gmra.mrb[0].mxu0 %v6516
    %v6590 = vpop.f32.mrb[0].mxu0
    %v6591 = vadd.f32 0.0, %v6590
    %v6592 = vpop.f32.mrb[0].mxu0
    %6593 = vmatprep.mubr.f32.mxu0 0.0
    %6594 = vmatmul.mubr.f32.gmra.mrb[0].mxu0 %v6518
    %v6595 = vpop.f32.mrb[0].mxu0
    %v6596 = vadd.f32 0.0, %v6595
    %v6597 = vpop.f32.mrb[0].mxu0
    %6598 = vdwg.mxu0
    %6599 = vrot.lane.b32.xlu0 %v5019, 80
    %v6600 = vpop.permute.xlu0 %6599
    %6601 = vrot.lane.b32.xlu0 %v5020, 80
    %v6602 = vpop.permute.xlu0 %6601
    %6603 = vrot.lane.b32.xlu0 %v5007, 16
    %v6604 = vpop.permute.xlu0 %6603
    %6605 = vrot.lane.b32.xlu0 %v5013, 16
    %v6606 = vpop.permute.xlu0 %6605
    %v6607 = vsel %vm1154, %v6600, 0
    %v6609 = vsel %vm1154, %v6602, 0
    %v6611 = vsel %vm1154, %v6604, 0
    %v6613 = vsel %vm1154, %v6606, 0
    %6615 = vmatprep.subr.mxu0 0.0
    %6616 = vmatpush1.xpose.msra.mxu0 %v6611
    %6617 = vmatprep.subr.mxu0 0.0
    %6618 = vmatpush1.xpose.msra.mxu0 %v6613
    %6619 = vmatprep.subr.mxu0 0.0
    %6620 = vmatpush1.xpose.msra.mxu0 0.0
    %6621 = vmatprep.subr.mxu0 0.0
    %6622 = vmatpush1.xpose.msra.mxu0 0.0
    %6623 = vmatprep.subr.mxu0 0.0
    %6624 = vmatpush1.xpose.msra.mxu0 0.0
    %6625 = vmatprep.subr.mxu0 0.0
    %6626 = vmatpush1.xpose.msra.mxu0 0.0
    %6627 = vmatprep.subr.mxu0 0.0
    %6628 = vmatpush1.xpose.msra.mxu0 0.0
    %6629 = vmatprep.subr.mxu0 0.0
    %6630 = vmatpush1.xpose.msra.mxu0 0.0
    %6631 = vmatprep.subr.mxu0 0.0
    %6632 = vmatpush1.xpose.msra.mxu0 0.0
    %6633 = vmatprep.subr.mxu0 0.0
    %6634 = vmatpush1.xpose.msra.mxu0 0.0
    %6635 = vmatprep.subr.mxu0 0.0
    %6636 = vmatpush1.xpose.msra.mxu0 0.0
    %6637 = vmatprep.subr.mxu0 0.0
    %6638 = vmatpush1.xpose.msra.mxu0 0.0
    %6639 = vmatprep.subr.mxu0 0.0
    %6640 = vmatpush1.xpose.msra.mxu0 0.0
    %6641 = vmatprep.subr.mxu0 0.0
    %6642 = vmatpush1.xpose.msra.mxu0 0.0
    %6643 = vmatprep.subr.mxu0 0.0
    %6644 = vmatpush1.xpose.msra.mxu0 0.0
    %6645 = vmatprep.subr.mxu0 0.0
    %6646 = vmatpush1.xpose.msra.mxu0 0.0
    %6647 = vmatprep.subr.mxu0 0.0
    %6648 = vmatpush1.xpose.msra.mxu0 0.0
    %6649 = vmatprep.subr.mxu0 0.0
    %6650 = vmatpush1.xpose.msra.mxu0 0.0
    %6651 = vmatprep.subr.mxu0 0.0
    %6652 = vmatpush1.xpose.msra.mxu0 0.0
    %6653 = vmatprep.subr.mxu0 0.0
    %6654 = vmatpush1.xpose.msra.mxu0 0.0
    %6655 = vmatprep.subr.mxu0 0.0
    %6656 = vmatpush1.xpose.msra.mxu0 0.0
    %6657 = vmatprep.subr.mxu0 0.0
    %6658 = vmatpush1.xpose.msra.mxu0 0.0
    %6659 = vmatprep.subr.mxu0 0.0
    %6660 = vmatpush1.xpose.msra.mxu0 0.0
    %6661 = vmatprep.subr.mxu0 0.0
    %6662 = vmatpush1.xpose.msra.mxu0 0.0
    %6663 = vmatprep.subr.mxu0 0.0
    %6664 = vmatpush1.xpose.msra.mxu0 0.0
    %6665 = vmatprep.subr.mxu0 0.0
    %6666 = vmatpush1.xpose.msra.mxu0 0.0
    %6667 = vmatprep.subr.mxu0 0.0
    %6668 = vmatpush1.xpose.msra.mxu0 0.0
    %6669 = vmatprep.subr.mxu0 0.0
    %6670 = vmatpush1.xpose.msra.mxu0 0.0
    %6671 = vmatprep.subr.mxu0 0.0
    %6672 = vmatpush1.xpose.msra.mxu0 0.0
    %6673 = vmatprep.subr.mxu0 0.0
    %6674 = vmatpush1.xpose.msra.mxu0 0.0
    %6675 = vmatprep.subr.mxu0 0.0
    %6676 = vmatpush1.xpose.msra.mxu0 0.0
    %6677 = vmatprep.subr.mxu0 0.0
    %6678 = vmatpush1.xpose.msra.mxu0 0.0
    %6679 = vmatprep.mubr.f32.mxu0 0.0
    %6680 = vmatmul.mubr.f32.gmra.mrb[0].mxu0 %v6607
    %v6681 = vpop.f32.mrb[0].mxu0
    %v6682 = vadd.f32 0.0, %v6681
    %v6683 = vpop.f32.mrb[0].mxu0
    %6684 = vmatprep.mubr.f32.mxu0 0.0
    %6685 = vmatmul.mubr.f32.gmra.mrb[0].mxu0 %v6609
    %v6686 = vpop.f32.mrb[0].mxu0
    %v6687 = vadd.f32 0.0, %v6686
    %v6688 = vpop.f32.mrb[0].mxu0
    %6689 = vdwg.mxu0
    %v6690 = vsel %vm1154, %v6591, -inf
    %6691 = vmax.xlane.f32.xlu0 %v6690
    %v6692 = vpop.xlane.xlu0 %6691
    %v6693 = vsel %vm1154, %v6596, -inf
    %6694 = vmax.xlane.f32.xlu0 %v6693
    %v6695 = vpop.xlane.xlu0 %6694
    %v6696 = vsel %vm1154, %v6682, -inf
    %6697 = vmax.xlane.f32.xlu0 %v6696
    %v6698 = vpop.xlane.xlu0 %6697
    %v6699 = vsel %vm1154, %v6687, -inf
    %6700 = vmax.xlane.f32.xlu0 %v6699
    %v6701 = vpop.xlane.xlu0 %6700
    %v6702 = vsub.f32 %v6591, %v6692
    %v6703 = vsub.f32 %v6596, %v6695
    %v6704 = vsub.f32 %v6682, %v6698
    %v6705 = vsub.f32 %v6687, %v6701
    %v6706 = vmul.f32 %v6702, 1.442695
    %v6707 = vpow.pop %v6706
    %v6708 = vmul.f32 %v6703, 1.442695
    %v6709 = vpow.pop %v6708
    %v6710 = vmul.f32 %v6704, 1.442695
    %v6711 = vpow.pop %v6710
    %v6712 = vmul.f32 %v6705, 1.442695
    %v6713 = vpow.pop %v6712
    %v6714 = vsel %vm1154, %v6707, 0.0
    %6715 = vadd.xlane.f32.xlu0 %v6714
    %v6716 = vpop.xlane.xlu0 %6715
    %v6717 = vsel %vm1154, %v6709, 0.0
    %6718 = vadd.xlane.f32.xlu0 %v6717
    %v6719 = vpop.xlane.xlu0 %6718
    %v6720 = vsel %vm1154, %v6711, 0.0
    %6721 = vadd.xlane.f32.xlu0 %v6720
    %v6722 = vpop.xlane.xlu0 %6721
    %v6723 = vsel %vm1154, %v6713, 0.0
    %6724 = vadd.xlane.f32.xlu0 %v6723
    %v6725 = vpop.xlane.xlu0 %6724
    %v6726 = vrcp.pop %v6716
    %v6727 = vrcp.pop %v6719
    %v6728 = vrcp.pop %v6722
    %v6729 = vrcp.pop %v6725
    %v6730 = vmul.f32 %v6707, %v6726
    %v6731 = vmul.f32 %v6709, %v6727
    %v6732 = vmul.f32 %v6711, %v6728
    %v6733 = vmul.f32 %v6713, %v6729
    %6734 = vrot.lane.b32.xlu0 %v4997, 80
    %v6735 = vpop.permute.xlu0 %6734
    %6736 = vrot.lane.b32.xlu0 %v5003, 80
    %v6737 = vpop.permute.xlu0 %6736
    %v6741 = vsel %vm1154, %v6730, 0
    %v6744 = vsel %vm1154, %v6731, 0
    %6746 = vmatprep.subr.mxu0 0.0
    %6747 = vmatpush1.msra.mxu0 %v6735
    %6748 = vmatprep.subr.mxu0 0.0
    %6749 = vmatpush1.msra.mxu0 %v6737
    %6750 = vmatprep.subr.mxu0 0.0
    %6751 = vmatpush1.msra.mxu0 0.0
    %6752 = vmatprep.subr.mxu0 0.0
    %6753 = vmatpush1.msra.mxu0 0.0
    %6754 = vmatprep.subr.mxu0 0.0
    %6755 = vmatpush1.msra.mxu0 0.0
    %6756 = vmatprep.subr.mxu0 0.0
    %6757 = vmatpush1.msra.mxu0 0.0
    %6758 = vmatprep.subr.mxu0 0.0
    %6759 = vmatpush1.msra.mxu0 0.0
    %6760 = vmatprep.subr.mxu0 0.0
    %6761 = vmatpush1.msra.mxu0 0.0
    %6762 = vmatprep.subr.mxu0 0.0
    %6763 = vmatpush1.msra.mxu0 0.0
    %6764 = vmatprep.subr.mxu0 0.0
    %6765 = vmatpush1.msra.mxu0 0.0
    %6766 = vmatprep.subr.mxu0 0.0
    %6767 = vmatpush1.msra.mxu0 0.0
    %6768 = vmatprep.subr.mxu0 0.0
    %6769 = vmatpush1.msra.mxu0 0.0
    %6770 = vmatprep.subr.mxu0 0.0
    %6771 = vmatpush1.msra.mxu0 0.0
    %6772 = vmatprep.subr.mxu0 0.0
    %6773 = vmatpush1.msra.mxu0 0.0
    %6774 = vmatprep.subr.mxu0 0.0
    %6775 = vmatpush1.msra.mxu0 0.0
    %6776 = vmatprep.subr.mxu0 0.0
    %6777 = vmatpush1.msra.mxu0 0.0
    %6778 = vmatprep.subr.mxu0 0.0
    %6779 = vmatpush1.msra.mxu0 0.0
    %6780 = vmatprep.subr.mxu0 0.0
    %6781 = vmatpush1.msra.mxu0 0.0
    %6782 = vmatprep.subr.mxu0 0.0
    %6783 = vmatpush1.msra.mxu0 0.0
    %6784 = vmatprep.subr.mxu0 0.0
    %6785 = vmatpush1.msra.mxu0 0.0
    %6786 = vmatprep.subr.mxu0 0.0
    %6787 = vmatpush1.msra.mxu0 0.0
    %6788 = vmatprep.subr.mxu0 0.0
    %6789 = vmatpush1.msra.mxu0 0.0
    %6790 = vmatprep.subr.mxu0 0.0
    %6791 = vmatpush1.msra.mxu0 0.0
    %6792 = vmatprep.subr.mxu0 0.0
    %6793 = vmatpush1.msra.mxu0 0.0
    %6794 = vmatprep.subr.mxu0 0.0
    %6795 = vmatpush1.msra.mxu0 0.0
    %6796 = vmatprep.subr.mxu0 0.0
    %6797 = vmatpush1.msra.mxu0 0.0
    %6798 = vmatprep.subr.mxu0 0.0
    %6799 = vmatpush1.msra.mxu0 0.0
    %6800 = vmatprep.subr.mxu0 0.0
    %6801 = vmatpush1.msra.mxu0 0.0
    %6802 = vmatprep.subr.mxu0 0.0
    %6803 = vmatpush1.msra.mxu0 0.0
    %6804 = vmatprep.subr.mxu0 0.0
    %6805 = vmatpush1.msra.mxu0 0.0
    %6806 = vmatprep.subr.mxu0 0.0
    %6807 = vmatpush1.msra.mxu0 0.0
    %6808 = vmatprep.subr.mxu0 0.0
    %6809 = vmatpush1.msra.mxu0 0.0
    %6810 = vmatprep.mubr.f32.mxu0 0.0
    %6811 = vmatmul.mubr.f32.gmra.mrb[0].mxu0 %v6741
    %v6812 = vpop.f32.mrb[0].mxu0
    %v6813 = vadd.f32 0.0, %v6812
    %v6814 = vpop.f32.mrb[0].mxu0
    %6815 = vmatprep.mubr.f32.mxu0 0.0
    %6816 = vmatmul.mubr.f32.gmra.mrb[0].mxu0 %v6744
    %v6817 = vpop.f32.mrb[0].mxu0
    %v6818 = vadd.f32 0.0, %v6817
    %v6819 = vpop.f32.mrb[0].mxu0
    %6820 = vdwg.mxu0
    %6821 = vrot.lane.b32.xlu0 %v5009, 80
    %v6822 = vpop.permute.xlu0 %6821
    %6823 = vrot.lane.b32.xlu0 %v5015, 80
    %v6824 = vpop.permute.xlu0 %6823
    %v6828 = vsel %vm1154, %v6732, 0
    %v6831 = vsel %vm1154, %v6733, 0
    %6833 = vmatprep.subr.mxu0 0.0
    %6834 = vmatpush1.msra.mxu0 %v6822
    %6835 = vmatprep.subr.mxu0 0.0
    %6836 = vmatpush1.msra.mxu0 %v6824
    %6837 = vmatprep.subr.mxu0 0.0
    %6838 = vmatpush1.msra.mxu0 0.0
    %6839 = vmatprep.subr.mxu0 0.0
    %6840 = vmatpush1.msra.mxu0 0.0
    %6841 = vmatprep.subr.mxu0 0.0
    %6842 = vmatpush1.msra.mxu0 0.0
    %6843 = vmatprep.subr.mxu0 0.0
    %6844 = vmatpush1.msra.mxu0 0.0
    %6845 = vmatprep.subr.mxu0 0.0
    %6846 = vmatpush1.msra.mxu0 0.0
    %6847 = vmatprep.subr.mxu0 0.0
    %6848 = vmatpush1.msra.mxu0 0.0
    %6849 = vmatprep.subr.mxu0 0.0
    %6850 = vmatpush1.msra.mxu0 0.0
    %6851 = vmatprep.subr.mxu0 0.0
    %6852 = vmatpush1.msra.mxu0 0.0
    %6853 = vmatprep.subr.mxu0 0.0
    %6854 = vmatpush1.msra.mxu0 0.0
    %6855 = vmatprep.subr.mxu0 0.0
    %6856 = vmatpush1.msra.mxu0 0.0
    %6857 = vmatprep.subr.mxu0 0.0
    %6858 = vmatpush1.msra.mxu0 0.0
    %6859 = vmatprep.subr.mxu0 0.0
    %6860 = vmatpush1.msra.mxu0 0.0
    %6861 = vmatprep.subr.mxu0 0.0
    %6862 = vmatpush1.msra.mxu0 0.0
    %6863 = vmatprep.subr.mxu0 0.0
    %6864 = vmatpush1.msra.mxu0 0.0
    %6865 = vmatprep.subr.mxu0 0.0
    %6866 = vmatpush1.msra.mxu0 0.0
    %6867 = vmatprep.subr.mxu0 0.0
    %6868 = vmatpush1.msra.mxu0 0.0
    %6869 = vmatprep.subr.mxu0 0.0
    %6870 = vmatpush1.msra.mxu0 0.0
    %6871 = vmatprep.subr.mxu0 0.0
    %6872 = vmatpush1.msra.mxu0 0.0
    %6873 = vmatprep.subr.mxu0 0.0
    %6874 = vmatpush1.msra.mxu0 0.0
    %6875 = vmatprep.subr.mxu0 0.0
    %6876 = vmatpush1.msra.mxu0 0.0
    %6877 = vmatprep.subr.mxu0 0.0
    %6878 = vmatpush1.msra.mxu0 0.0
    %6879 = vmatprep.subr.mxu0 0.0
    %6880 = vmatpush1.msra.mxu0 0.0
    %6881 = vmatprep.subr.mxu0 0.0
    %6882 = vmatpush1.msra.mxu0 0.0
    %6883 = vmatprep.subr.mxu0 0.0
    %6884 = vmatpush1.msra.mxu0 0.0
    %6885 = vmatprep.subr.mxu0 0.0
    %6886 = vmatpush1.msra.mxu0 0.0
    %6887 = vmatprep.subr.mxu0 0.0
    %6888 = vmatpush1.msra.mxu0 0.0
    %6889 = vmatprep.subr.mxu0 0.0
    %6890 = vmatpush1.msra.mxu0 0.0
    %6891 = vmatprep.subr.mxu0 0.0
    %6892 = vmatpush1.msra.mxu0 0.0
    %6893 = vmatprep.subr.mxu0 0.0
    %6894 = vmatpush1.msra.mxu0 0.0
    %6895 = vmatprep.subr.mxu0 0.0
    %6896 = vmatpush1.msra.mxu0 0.0
    %6897 = vmatprep.mubr.f32.mxu0 0.0
    %6898 = vmatmul.mubr.f32.gmra.mrb[0].mxu0 %v6828
    %v6899 = vpop.f32.mrb[0].mxu0
    %v6900 = vadd.f32 0.0, %v6899
    %v6901 = vpop.f32.mrb[0].mxu0
    %6902 = vmatprep.mubr.f32.mxu0 0.0
    %6903 = vmatmul.mubr.f32.gmra.mrb[0].mxu0 %v6831
    %v6904 = vpop.f32.mrb[0].mxu0
    %v6905 = vadd.f32 0.0, %v6904
    %v6906 = vpop.f32.mrb[0].mxu0
    %6907 = vdwg.mxu0
    %v6909 = vsel %vm1154, %v6813, 0
    %v6912 = vsel %vm1154, %v6818, 0
    %v6915 = vsel %vm1154, %v6900, 0
    %v6918 = vsel %vm1154, %v6905, 0
    %6920 = vmatprep.subr.mxu0 0.0
    %6921 = vmatpush1.msra.mxu0 %v4829
    %6922 = vmatprep.subr.mxu0 0.0
    %6923 = vmatpush1.msra.mxu0 %v4830
    %6924 = vmatprep.subr.mxu0 0.0
    %6925 = vmatpush1.msra.mxu0 0.0
    %6926 = vmatprep.subr.mxu0 0.0
    %6927 = vmatpush1.msra.mxu0 0.0
    %6928 = vmatprep.subr.mxu0 0.0
    %6929 = vmatpush1.msra.mxu0 0.0
    %6930 = vmatprep.subr.mxu0 0.0
    %6931 = vmatpush1.msra.mxu0 0.0
    %6932 = vmatprep.subr.mxu0 0.0
    %6933 = vmatpush1.msra.mxu0 0.0
    %6934 = vmatprep.subr.mxu0 0.0
    %6935 = vmatpush1.msra.mxu0 0.0
    %6936 = vmatprep.subr.mxu0 0.0
    %6937 = vmatpush1.msra.mxu0 0.0
    %6938 = vmatprep.subr.mxu0 0.0
    %6939 = vmatpush1.msra.mxu0 0.0
    %6940 = vmatprep.subr.mxu0 0.0
    %6941 = vmatpush1.msra.mxu0 0.0
    %6942 = vmatprep.subr.mxu0 0.0
    %6943 = vmatpush1.msra.mxu0 0.0
    %6944 = vmatprep.subr.mxu0 0.0
    %6945 = vmatpush1.msra.mxu0 0.0
    %6946 = vmatprep.subr.mxu0 0.0
    %6947 = vmatpush1.msra.mxu0 0.0
    %6948 = vmatprep.subr.mxu0 0.0
    %6949 = vmatpush1.msra.mxu0 0.0
    %6950 = vmatprep.subr.mxu0 0.0
    %6951 = vmatpush1.msra.mxu0 0.0
    %6952 = vmatprep.subr.mxu0 0.0
    %6953 = vmatpush1.msra.mxu0 0.0
    %6954 = vmatprep.subr.mxu0 0.0
    %6955 = vmatpush1.msra.mxu0 0.0
    %6956 = vmatprep.subr.mxu0 0.0
    %6957 = vmatpush1.msra.mxu0 0.0
    %6958 = vmatprep.subr.mxu0 0.0
    %6959 = vmatpush1.msra.mxu0 0.0
    %6960 = vmatprep.subr.mxu0 0.0
    %6961 = vmatpush1.msra.mxu0 0.0
    %6962 = vmatprep.subr.mxu0 0.0
    %6963 = vmatpush1.msra.mxu0 0.0
    %6964 = vmatprep.subr.mxu0 0.0
    %6965 = vmatpush1.msra.mxu0 0.0
    %6966 = vmatprep.subr.mxu0 0.0
    %6967 = vmatpush1.msra.mxu0 0.0
    %6968 = vmatprep.subr.mxu0 0.0
    %6969 = vmatpush1.msra.mxu0 0.0
    %6970 = vmatprep.subr.mxu0 0.0
    %6971 = vmatpush1.msra.mxu0 0.0
    %6972 = vmatprep.subr.mxu0 0.0
    %6973 = vmatpush1.msra.mxu0 0.0
    %6974 = vmatprep.subr.mxu0 0.0
    %6975 = vmatpush1.msra.mxu0 0.0
    %6976 = vmatprep.subr.mxu0 0.0
    %6977 = vmatpush1.msra.mxu0 0.0
    %6978 = vmatprep.subr.mxu0 0.0
    %6979 = vmatpush1.msra.mxu0 0.0
    %6980 = vmatprep.subr.mxu0 0.0
    %6981 = vmatpush1.msra.mxu0 0.0
    %6982 = vmatprep.subr.mxu0 0.0
    %6983 = vmatpush1.msra.mxu0 0.0
    %6984 = vmatprep.mubr.f32.mxu0 0.0
    %6985 = vmatmul.mubr.f32.gmra.mrb[0].mxu0 %v6909
    %v6986 = vpop.f32.mrb[0].mxu0
    %v6987 = vadd.f32 0.0, %v6986
    %v6988 = vpop.f32.mrb[0].mxu0
    %6989 = vmatprep.mubr.f32.mxu0 0.0
    %6990 = vmatmul.mubr.f32.gmra.mrb[0].mxu0 %v6912
    %v6991 = vpop.f32.mrb[0].mxu0
    %v6992 = vadd.f32 0.0, %v6991
    %v6993 = vpop.f32.mrb[0].mxu0
    %6994 = vmatprep.mubr.f32.mxu0 0.0
    %6995 = vmatmul.mubr.f32.gmra.mrb[0].mxu0 %v6915
    %v6996 = vpop.f32.mrb[0].mxu0
    %v6997 = vadd.f32 0.0, %v6996
    %v6998 = vpop.f32.mrb[0].mxu0
    %6999 = vmatprep.mubr.f32.mxu0 0.0
    %7000 = vmatmul.mubr.f32.gmra.mrb[0].mxu0 %v6918
    %v7001 = vpop.f32.mrb[0].mxu0
    %v7002 = vadd.f32 0.0, %v7001
    %v7003 = vpop.f32.mrb[0].mxu0
    %7004 = vdwg.mxu0
    %v7005 = vadd.f32 %v6504, %v6987
    %v7006 = vadd.f32 %v6505, %v6992
    %v7007 = vadd.f32 %v6506, %v6997
    %v7008 = vadd.f32 %v6507, %v7002
    %v7010 = vlaneseq
    %v7011 = vshrl.u32 %v7010, 7
    %v7012 = vsub.s32 0, %v7011
    %v7013 = vrot.slane %v4832, %v7012
    %v7015 = vadd.f32 %v7005, %v7013
    %v7016 = vadd.f32 %v7006, %v7013
    %v7017 = vadd.f32 %v7007, %v7013
    %v7018 = vadd.f32 %v7008, %v7013
    %v7019 = vadd.f32 %v4795, %v7015
    %v7020 = vadd.f32 %v4796, %v7016
    %v7021 = vadd.f32 %v4797, %v7017
    %v7022 = vadd.f32 %v4798, %v7018
    %s7023 = scalar_lea.vmem [#allocation24], 1
    %v7024 = vld [vmem:[%s7023] sm:$0x1]
    %s7025 = scalar_lea.vmem [#allocation26], 1
    %v7026 = vld [vmem:[%s7025] sm:$0x1]
    %s7027 = scalar_lea.vmem [#allocation27], 64
    %v7028 = vld [vmem:[%s7027] sm:$0xff]
    %v7029 = vld [vmem:[%s7027 + $0x8] sm:$0xff]
    %v7030 = vld [vmem:[%s7027 + $0x10] sm:$0xff]
    %v7031 = vld [vmem:[%s7027 + $0x18] sm:$0xff]
    %v7032 = vld [vmem:[%s7027 + $0x20] sm:$0xff]
    %v7033 = vld [vmem:[%s7027 + $0x28] sm:$0xff]
    %v7034 = vld [vmem:[%s7027 + $0x30] sm:$0xff]
    %v7035 = vld [vmem:[%s7027 + $0x38] sm:$0xff]
    %s7036 = scalar_lea.vmem [#allocation29], 1
    %v7037 = vld [vmem:[%s7036] sm:$0x1]
    %s7038 = scalar_lea.vmem [#allocation30], 32
    %v7039 = vld [vmem:[%s7038] sm:$0xff]
    %v7040 = vld [vmem:[%s7038 + $0x8] sm:$0xff]
    %v7041 = vld [vmem:[%s7038 + $0x10] sm:$0xff]
    %v7042 = vld [vmem:[%s7038 + $0x18] sm:$0x7f]
    %s7043 = scalar_lea.vmem [#allocation32], 1
    %v7044 = vld [vmem:[%s7043] sm:$0x1]
    %s7045 = scalar_lea.vmem [#allocation33], 1
    %v7046 = vld [vmem:[%s7045] sm:$0x1]
    %s7047 = scalar_lea.vmem [#allocation35], 1
    %v7048 = vld [vmem:[%s7047] sm:$0x1]
    %s7049 = scalar_lea.vmem [#allocation36], 64
    %v7050 = vld [vmem:[%s7049] sm:$0xff]
    %v7051 = vld [vmem:[%s7049 + $0x8] sm:$0xff]
    %v7052 = vld [vmem:[%s7049 + $0x10] sm:$0xff]
    %v7053 = vld [vmem:[%s7049 + $0x18] sm:$0xff]
    %v7054 = vld [vmem:[%s7049 + $0x20] sm:$0xff]
    %v7055 = vld [vmem:[%s7049 + $0x28] sm:$0xff]
    %v7056 = vld [vmem:[%s7049 + $0x30] sm:$0xff]
    %v7057 = vld [vmem:[%s7049 + $0x38] sm:$0xff]
    %s7058 = scalar_lea.vmem [#allocation38], 1
    %v7059 = vld [vmem:[%s7058] sm:$0x1]
    %v7060 = vsel %vm583, %v7019, 0.0
    %7061 = vadd.xlane.f32.xlu0 %v7060
    %v7062 = vpop.xlane.xlu0 %7061
    %v7063 = vsel %vm583, %v7020, 0.0
    %7064 = vadd.xlane.f32.xlu0 %v7063
    %v7065 = vpop.xlane.xlu0 %7064
    %v7066 = vsel %vm583, %v7021, 0.0
    %7067 = vadd.xlane.f32.xlu0 %v7066
    %v7068 = vpop.xlane.xlu0 %7067
    %v7069 = vsel %vm583, %v7022, 0.0
    %7070 = vadd.xlane.f32.xlu0 %v7069
    %v7071 = vpop.xlane.xlu0 %7070
    %v7072 = vmul.f32 %v7062, %v641
    %v7073 = vmul.f32 %v7065, %v641
    %v7074 = vmul.f32 %v7068, %v641
    %v7075 = vmul.f32 %v7071, %v641
    %v7076 = vsub.f32 %v7019, %v7072
    %v7077 = vsub.f32 %v7020, %v7073
    %v7078 = vsub.f32 %v7021, %v7074
    %v7079 = vsub.f32 %v7022, %v7075
    %v7080 = vmul.f32 %v7076, %v7076
    %v7081 = vmul.f32 %v7077, %v7077
    %v7082 = vmul.f32 %v7078, %v7078
    %v7083 = vmul.f32 %v7079, %v7079
    %v7084 = vsel %vm583, %v7080, 0.0
    %7085 = vadd.xlane.f32.xlu0 %v7084
    %v7086 = vpop.xlane.xlu0 %7085
    %v7087 = vsel %vm583, %v7081, 0.0
    %7088 = vadd.xlane.f32.xlu0 %v7087
    %v7089 = vpop.xlane.xlu0 %7088
    %v7090 = vsel %vm583, %v7082, 0.0
    %7091 = vadd.xlane.f32.xlu0 %v7090
    %v7092 = vpop.xlane.xlu0 %7091
    %v7093 = vsel %vm583, %v7083, 0.0
    %7094 = vadd.xlane.f32.xlu0 %v7093
    %v7095 = vpop.xlane.xlu0 %7094
    %v7096 = vmul.f32 %v7086, %v641
    %v7097 = vmul.f32 %v7089, %v641
    %v7098 = vmul.f32 %v7092, %v641
    %v7099 = vmul.f32 %v7095, %v641
    %v7100 = vadd.f32 %v7096, 1e-05
    %v7101 = vadd.f32 %v7097, 1e-05
    %v7102 = vadd.f32 %v7098, 1e-05
    %v7103 = vadd.f32 %v7099, 1e-05
    %v7104 = vrsqrt.pop %v7100
    %v7105 = vrsqrt.pop %v7101
    %v7106 = vrsqrt.pop %v7102
    %v7107 = vrsqrt.pop %v7103
    %v7108 = vmul.f32 %v7076, %v7104
    %v7109 = vmul.f32 %v7077, %v7105
    %v7110 = vmul.f32 %v7078, %v7106
    %v7111 = vmul.f32 %v7079, %v7107
    %v7113 = vlaneseq
    %v7114 = vshrl.u32 %v7113, 7
    %v7115 = vsub.s32 0, %v7114
    %v7116 = vrot.slane %v7024, %v7115
    %v7118 = vmul.f32 %v7108, %v7116
    %v7119 = vmul.f32 %v7109, %v7116
    %v7120 = vmul.f32 %v7110, %v7116
    %v7121 = vmul.f32 %v7111, %v7116
    %v7123 = vlaneseq
    %v7124 = vshrl.u32 %v7123, 7
    %v7125 = vsub.s32 0, %v7124
    %v7126 = vrot.slane %v7026, %v7125
    %v7128 = vadd.f32 %v7118, %v7126
    %v7129 = vadd.f32 %v7119, %v7126
    %v7130 = vadd.f32 %v7120, %v7126
    %v7131 = vadd.f32 %v7121, %v7126
    %v7133 = vlaneseq
    %v7134 = vshrl.u32 %v7133, 7
    %v7135 = vsub.s32 0, %v7134
    %v7136 = vrot.slane %v7037, %v7135
    %v7139 = vsel %vm583, %v7128, 0
    %v7142 = vsel %vm583, %v7129, 0
    %v7145 = vsel %vm583, %v7130, 0
    %v7148 = vsel %vm583, %v7131, 0
    %7150 = vmatprep.subr.mxu0 0.0
    %7151 = vmatpush1.msra.mxu0 %v7028
    %7152 = vmatprep.subr.mxu0 0.0
    %7153 = vmatpush1.msra.mxu0 %v7029
    %7154 = vmatprep.subr.mxu0 0.0
    %7155 = vmatpush1.msra.mxu0 %v7030
    %7156 = vmatprep.subr.mxu0 0.0
    %7157 = vmatpush1.msra.mxu0 %v7031
    %7158 = vmatprep.subr.mxu0 0.0
    %7159 = vmatpush1.msra.mxu0 %v7032
    %7160 = vmatprep.subr.mxu0 0.0
    %7161 = vmatpush1.msra.mxu0 %v7033
    %7162 = vmatprep.subr.mxu0 0.0
    %7163 = vmatpush1.msra.mxu0 %v7034
    %7164 = vmatprep.subr.mxu0 0.0
    %7165 = vmatpush1.msra.mxu0 %v7035
    %7166 = vmatprep.subr.mxu0 0.0
    %7167 = vmatpush1.msra.mxu0 0.0
    %7168 = vmatprep.subr.mxu0 0.0
    %7169 = vmatpush1.msra.mxu0 0.0
    %7170 = vmatprep.subr.mxu0 0.0
    %7171 = vmatpush1.msra.mxu0 0.0
    %7172 = vmatprep.subr.mxu0 0.0
    %7173 = vmatpush1.msra.mxu0 0.0
    %7174 = vmatprep.subr.mxu0 0.0
    %7175 = vmatpush1.msra.mxu0 0.0
    %7176 = vmatprep.subr.mxu0 0.0
    %7177 = vmatpush1.msra.mxu0 0.0
    %7178 = vmatprep.subr.mxu0 0.0
    %7179 = vmatpush1.msra.mxu0 0.0
    %7180 = vmatprep.subr.mxu0 0.0
    %7181 = vmatpush1.msra.mxu0 0.0
    %7182 = vmatprep.subr.mxu0 0.0
    %7183 = vmatpush1.msra.mxu0 0.0
    %7184 = vmatprep.subr.mxu0 0.0
    %7185 = vmatpush1.msra.mxu0 0.0
    %7186 = vmatprep.subr.mxu0 0.0
    %7187 = vmatpush1.msra.mxu0 0.0
    %7188 = vmatprep.subr.mxu0 0.0
    %7189 = vmatpush1.msra.mxu0 0.0
    %7190 = vmatprep.subr.mxu0 0.0
    %7191 = vmatpush1.msra.mxu0 0.0
    %7192 = vmatprep.subr.mxu0 0.0
    %7193 = vmatpush1.msra.mxu0 0.0
    %7194 = vmatprep.subr.mxu0 0.0
    %7195 = vmatpush1.msra.mxu0 0.0
    %7196 = vmatprep.subr.mxu0 0.0
    %7197 = vmatpush1.msra.mxu0 0.0
    %7198 = vmatprep.subr.mxu0 0.0
    %7199 = vmatpush1.msra.mxu0 0.0
    %7200 = vmatprep.subr.mxu0 0.0
    %7201 = vmatpush1.msra.mxu0 0.0
    %7202 = vmatprep.subr.mxu0 0.0
    %7203 = vmatpush1.msra.mxu0 0.0
    %7204 = vmatprep.subr.mxu0 0.0
    %7205 = vmatpush1.msra.mxu0 0.0
    %7206 = vmatprep.subr.mxu0 0.0
    %7207 = vmatpush1.msra.mxu0 0.0
    %7208 = vmatprep.subr.mxu0 0.0
    %7209 = vmatpush1.msra.mxu0 0.0
    %7210 = vmatprep.subr.mxu0 0.0
    %7211 = vmatpush1.msra.mxu0 0.0
    %7212 = vmatprep.subr.mxu0 0.0
    %7213 = vmatpush1.msra.mxu0 0.0
    %7214 = vmatprep.mubr.f32.mxu0 0.0
    %7215 = vmatmul.mubr.f32.gmra.mrb[0].mxu0 %v7139
    %v7216 = vpop.f32.mrb[0].mxu0
    %v7217 = vadd.f32 %v7136, %v7216
    %v7218 = vpop.f32.mrb[0].mxu0
    %7219 = vmatprep.mubr.f32.mxu0 0.0
    %7220 = vmatmul.mubr.f32.gmra.mrb[0].mxu0 %v7142
    %v7221 = vpop.f32.mrb[0].mxu0
    %v7222 = vadd.f32 %v7136, %v7221
    %v7223 = vpop.f32.mrb[0].mxu0
    %7224 = vmatprep.mubr.f32.mxu0 0.0
    %7225 = vmatmul.mubr.f32.gmra.mrb[0].mxu0 %v7145
    %v7226 = vpop.f32.mrb[0].mxu0
    %v7227 = vadd.f32 %v7136, %v7226
    %v7228 = vpop.f32.mrb[0].mxu0
    %7229 = vmatprep.mubr.f32.mxu0 0.0
    %7230 = vmatmul.mubr.f32.gmra.mrb[0].mxu0 %v7148
    %v7231 = vpop.f32.mrb[0].mxu0
    %v7232 = vadd.f32 %v7136, %v7231
    %v7233 = vpop.f32.mrb[0].mxu0
    %7234 = vdwg.mxu0
    %v7235 = vxor.u32 %v7217, 2147483648
    %v7236 = vxor.u32 %v7222, 2147483648
    %v7237 = vxor.u32 %v7227, 2147483648
    %v7238 = vxor.u32 %v7232, 2147483648
    %v7239 = vmul.f32 %v7235, 1.442695
    %v7240 = vpow.pop %v7239
    %v7241 = vmul.f32 %v7236, 1.442695
    %v7242 = vpow.pop %v7241
    %v7243 = vmul.f32 %v7237, 1.442695
    %v7244 = vpow.pop %v7243
    %v7245 = vmul.f32 %v7238, 1.442695
    %v7246 = vpow.pop %v7245
    %v7247 = vadd.f32 %v7240, 1.0
    %v7248 = vadd.f32 %v7242, 1.0
    %v7249 = vadd.f32 %v7244, 1.0
    %v7250 = vadd.f32 %v7246, 1.0
    %v7251 = vrcp.pop %v7247
    %v7252 = vmul.f32 1.0, %v7251
    %v7253 = vrcp.pop %v7248
    %v7254 = vmul.f32 1.0, %v7253
    %v7255 = vrcp.pop %v7249
    %v7256 = vmul.f32 1.0, %v7255
    %v7257 = vrcp.pop %v7250
    %v7258 = vmul.f32 1.0, %v7257
    %7263 = vrot.lane.b32.xlu0 %v7252, 64
    %v7264 = vpop.permute.xlu0 %7263
    %7265 = vrot.lane.b32.xlu0 %v7254, 64
    %v7266 = vpop.permute.xlu0 %7265
    %7267 = vrot.lane.b32.xlu0 %v7256, 64
    %v7268 = vpop.permute.xlu0 %7267
    %7269 = vrot.lane.b32.xlu0 %v7258, 64
    %v7270 = vpop.permute.xlu0 %7269
    %v7275 = vmul.f32 %v7217, %v7264
    %v7276 = vmul.f32 %v7222, %v7266
    %v7277 = vmul.f32 %v7227, %v7268
    %v7278 = vmul.f32 %v7232, %v7270
    %7279 = vst.msk [vmem:[#allocation2 + $0xf] sm:$0xff] %vm583, %v7275
    %7280 = vst.msk [vmem:[#allocation2 + $0x17] sm:$0xff] %vm583, %v7276
    %7281 = vst.msk [vmem:[#allocation2 + $0x3f] sm:$0xff] %vm583, %v7277
    %7282 = vst.msk [vmem:[#allocation2 + $0x47] sm:$0xff] %vm583, %v7278
    %v7283 = vld [vmem:[#allocation2] sm:$0xff]
    %v7284 = vld [vmem:[#allocation2 + $0x8] sm:$0xff]
    %v7285 = vld [vmem:[#allocation2 + $0x30] sm:$0xff]
    %v7286 = vld [vmem:[#allocation2 + $0x38] sm:$0xff]
    %v7287 = vlaneseq
    %v7288 = vshrl.u32 %v7287, 7
    %v7289 = vsub.s32 0, %v7288
    %v7290 = vrot.slane %v7039, %v7289
    %v7291 = vmul.f32 %v7283, %v7290
    %v7292 = vmul.f32 %v7284, %v7290
    %v7293 = vmul.f32 %v7285, %v7290
    %v7294 = vmul.f32 %v7286, %v7290
    %v7295 = vadd.f32 %v7291, 0.0
    %v7296 = vadd.f32 %v7292, 0.0
    %v7297 = vadd.f32 %v7293, 0.0
    %v7298 = vadd.f32 %v7294, 0.0
    %v7299 = vld [vmem:[#allocation2 + $0x1] sm:$0xff]
    %v7300 = vld [vmem:[#allocation2 + $0x9] sm:$0xff]
    %v7301 = vld [vmem:[#allocation2 + $0x31] sm:$0xff]
    %v7302 = vld [vmem:[#allocation2 + $0x39] sm:$0xff]
    %v7303 = vlaneseq
    %v7304 = vshrl.u32 %v7303, 7
    %v7305 = vsub.s32 1, %v7304
    %v7306 = vrot.slane %v7039, %v7305
    %v7307 = vmul.f32 %v7299, %v7306
    %v7308 = vmul.f32 %v7300, %v7306
    %v7309 = vmul.f32 %v7301, %v7306
    %v7310 = vmul.f32 %v7302, %v7306
    %v7311 = vadd.f32 %v7295, %v7307
    %v7312 = vadd.f32 %v7296, %v7308
    %v7313 = vadd.f32 %v7297, %v7309
    %v7314 = vadd.f32 %v7298, %v7310
    %v7315 = vld [vmem:[#allocation2 + $0x2] sm:$0xff]
    %v7316 = vld [vmem:[#allocation2 + $0xa] sm:$0xff]
    %v7317 = vld [vmem:[#allocation2 + $0x32] sm:$0xff]
    %v7318 = vld [vmem:[#allocation2 + $0x3a] sm:$0xff]
    %v7319 = vlaneseq
    %v7320 = vshrl.u32 %v7319, 7
    %v7321 = vsub.s32 2, %v7320
    %v7322 = vrot.slane %v7039, %v7321
    %v7323 = vmul.f32 %v7315, %v7322
    %v7324 = vmul.f32 %v7316, %v7322
    %v7325 = vmul.f32 %v7317, %v7322
    %v7326 = vmul.f32 %v7318, %v7322
    %v7327 = vadd.f32 %v7311, %v7323
    %v7328 = vadd.f32 %v7312, %v7324
    %v7329 = vadd.f32 %v7313, %v7325
    %v7330 = vadd.f32 %v7314, %v7326
    %v7331 = vld [vmem:[#allocation2 + $0x3] sm:$0xff]
    %v7332 = vld [vmem:[#allocation2 + $0xb] sm:$0xff]
    %v7333 = vld [vmem:[#allocation2 + $0x33] sm:$0xff]
    %v7334 = vld [vmem:[#allocation2 + $0x3b] sm:$0xff]
    %v7335 = vlaneseq
    %v7336 = vshrl.u32 %v7335, 7
    %v7337 = vsub.s32 3, %v7336
    %v7338 = vrot.slane %v7039, %v7337
    %v7339 = vmul.f32 %v7331, %v7338
    %v7340 = vmul.f32 %v7332, %v7338
    %v7341 = vmul.f32 %v7333, %v7338
    %v7342 = vmul.f32 %v7334, %v7338
    %v7343 = vadd.f32 %v7327, %v7339
    %v7344 = vadd.f32 %v7328, %v7340
    %v7345 = vadd.f32 %v7329, %v7341
    %v7346 = vadd.f32 %v7330, %v7342
    %v7347 = vld [vmem:[#allocation2 + $0x4] sm:$0xff]
    %v7348 = vld [vmem:[#allocation2 + $0xc] sm:$0xff]
    %v7349 = vld [vmem:[#allocation2 + $0x34] sm:$0xff]
    %v7350 = vld [vmem:[#allocation2 + $0x3c] sm:$0xff]
    %v7351 = vlaneseq
    %v7352 = vshrl.u32 %v7351, 7
    %v7353 = vsub.s32 4, %v7352
    %v7354 = vrot.slane %v7039, %v7353
    %v7355 = vmul.f32 %v7347, %v7354
    %v7356 = vmul.f32 %v7348, %v7354
    %v7357 = vmul.f32 %v7349, %v7354
    %v7358 = vmul.f32 %v7350, %v7354
    %v7359 = vadd.f32 %v7343, %v7355
    %v7360 = vadd.f32 %v7344, %v7356
    %v7361 = vadd.f32 %v7345, %v7357
    %v7362 = vadd.f32 %v7346, %v7358
    %v7363 = vld [vmem:[#allocation2 + $0x5] sm:$0xff]
    %v7364 = vld [vmem:[#allocation2 + $0xd] sm:$0xff]
    %v7365 = vld [vmem:[#allocation2 + $0x35] sm:$0xff]
    %v7366 = vld [vmem:[#allocation2 + $0x3d] sm:$0xff]
    %v7367 = vlaneseq
    %v7368 = vshrl.u32 %v7367, 7
    %v7369 = vsub.s32 5, %v7368
    %v7370 = vrot.slane %v7039, %v7369
    %v7371 = vmul.f32 %v7363, %v7370
    %v7372 = vmul.f32 %v7364, %v7370
    %v7373 = vmul.f32 %v7365, %v7370
    %v7374 = vmul.f32 %v7366, %v7370
    %v7375 = vadd.f32 %v7359, %v7371
    %v7376 = vadd.f32 %v7360, %v7372
    %v7377 = vadd.f32 %v7361, %v7373
    %v7378 = vadd.f32 %v7362, %v7374
    %v7379 = vld [vmem:[#allocation2 + $0x6] sm:$0xff]
    %v7380 = vld [vmem:[#allocation2 + $0xe] sm:$0xff]
    %v7381 = vld [vmem:[#allocation2 + $0x36] sm:$0xff]
    %v7382 = vld [vmem:[#allocation2 + $0x3e] sm:$0xff]
    %v7383 = vlaneseq
    %v7384 = vshrl.u32 %v7383, 7
    %v7385 = vsub.s32 6, %v7384
    %v7386 = vrot.slane %v7039, %v7385
    %v7387 = vmul.f32 %v7379, %v7386
    %v7388 = vmul.f32 %v7380, %v7386
    %v7389 = vmul.f32 %v7381, %v7386
    %v7390 = vmul.f32 %v7382, %v7386
    %v7391 = vadd.f32 %v7375, %v7387
    %v7392 = vadd.f32 %v7376, %v7388
    %v7393 = vadd.f32 %v7377, %v7389
    %v7394 = vadd.f32 %v7378, %v7390
    %v7395 = vld [vmem:[#allocation2 + $0x7] sm:$0xff]
    %v7396 = vld [vmem:[#allocation2 + $0xf] sm:$0xff]
    %v7397 = vld [vmem:[#allocation2 + $0x37] sm:$0xff]
    %v7398 = vld [vmem:[#allocation2 + $0x3f] sm:$0xff]
    %v7399 = vlaneseq
    %v7400 = vshrl.u32 %v7399, 7
    %v7401 = vsub.s32 7, %v7400
    %v7402 = vrot.slane %v7039, %v7401
    %v7403 = vmul.f32 %v7395, %v7402
    %v7404 = vmul.f32 %v7396, %v7402
    %v7405 = vmul.f32 %v7397, %v7402
    %v7406 = vmul.f32 %v7398, %v7402
    %v7407 = vadd.f32 %v7391, %v7403
    %v7408 = vadd.f32 %v7392, %v7404
    %v7409 = vadd.f32 %v7393, %v7405
    %v7410 = vadd.f32 %v7394, %v7406
    %v7411 = vld [vmem:[#allocation2 + $0x10] sm:$0xff]
    %v7412 = vld [vmem:[#allocation2 + $0x40] sm:$0xff]
    %v7413 = vlaneseq
    %v7414 = vshrl.u32 %v7413, 7
    %v7415 = vsub.s32 0, %v7414
    %v7416 = vrot.slane %v7040, %v7415
    %v7417 = vmul.f32 %v7284, %v7416
    %v7418 = vmul.f32 %v7411, %v7416
    %v7419 = vmul.f32 %v7286, %v7416
    %v7420 = vmul.f32 %v7412, %v7416
    %v7421 = vadd.f32 %v7407, %v7417
    %v7422 = vadd.f32 %v7408, %v7418
    %v7423 = vadd.f32 %v7409, %v7419
    %v7424 = vadd.f32 %v7410, %v7420
    %v7425 = vld [vmem:[#allocation2 + $0x11] sm:$0xff]
    %v7426 = vld [vmem:[#allocation2 + $0x41] sm:$0xff]
    %v7427 = vlaneseq
    %v7428 = vshrl.u32 %v7427, 7
    %v7429 = vsub.s32 1, %v7428
    %v7430 = vrot.slane %v7040, %v7429
    %v7431 = vmul.f32 %v7300, %v7430
    %v7432 = vmul.f32 %v7425, %v7430
    %v7433 = vmul.f32 %v7302, %v7430
    %v7434 = vmul.f32 %v7426, %v7430
    %v7435 = vadd.f32 %v7421, %v7431
    %v7436 = vadd.f32 %v7422, %v7432
    %v7437 = vadd.f32 %v7423, %v7433
    %v7438 = vadd.f32 %v7424, %v7434
    %v7439 = vld [vmem:[#allocation2 + $0x12] sm:$0xff]
    %v7440 = vld [vmem:[#allocation2 + $0x42] sm:$0xff]
    %v7441 = vlaneseq
    %v7442 = vshrl.u32 %v7441, 7
    %v7443 = vsub.s32 2, %v7442
    %v7444 = vrot.slane %v7040, %v7443
    %v7445 = vmul.f32 %v7316, %v7444
    %v7446 = vmul.f32 %v7439, %v7444
    %v7447 = vmul.f32 %v7318, %v7444
    %v7448 = vmul.f32 %v7440, %v7444
    %v7449 = vadd.f32 %v7435, %v7445
    %v7450 = vadd.f32 %v7436, %v7446
    %v7451 = vadd.f32 %v7437, %v7447
    %v7452 = vadd.f32 %v7438, %v7448
    %v7453 = vld [vmem:[#allocation2 + $0x13] sm:$0xff]
    %v7454 = vld [vmem:[#allocation2 + $0x43] sm:$0xff]
    %v7455 = vlaneseq
    %v7456 = vshrl.u32 %v7455, 7
    %v7457 = vsub.s32 3, %v7456
    %v7458 = vrot.slane %v7040, %v7457
    %v7459 = vmul.f32 %v7332, %v7458
    %v7460 = vmul.f32 %v7453, %v7458
    %v7461 = vmul.f32 %v7334, %v7458
    %v7462 = vmul.f32 %v7454, %v7458
    %v7463 = vadd.f32 %v7449, %v7459
    %v7464 = vadd.f32 %v7450, %v7460
    %v7465 = vadd.f32 %v7451, %v7461
    %v7466 = vadd.f32 %v7452, %v7462
    %v7467 = vld [vmem:[#allocation2 + $0x14] sm:$0xff]
    %v7468 = vld [vmem:[#allocation2 + $0x44] sm:$0xff]
    %v7469 = vlaneseq
    %v7470 = vshrl.u32 %v7469, 7
    %v7471 = vsub.s32 4, %v7470
    %v7472 = vrot.slane %v7040, %v7471
    %v7473 = vmul.f32 %v7348, %v7472
    %v7474 = vmul.f32 %v7467, %v7472
    %v7475 = vmul.f32 %v7350, %v7472
    %v7476 = vmul.f32 %v7468, %v7472
    %v7477 = vadd.f32 %v7463, %v7473
    %v7478 = vadd.f32 %v7464, %v7474
    %v7479 = vadd.f32 %v7465, %v7475
    %v7480 = vadd.f32 %v7466, %v7476
    %v7481 = vld [vmem:[#allocation2 + $0x15] sm:$0xff]
    %v7482 = vld [vmem:[#allocation2 + $0x45] sm:$0xff]
    %v7483 = vlaneseq
    %v7484 = vshrl.u32 %v7483, 7
    %v7485 = vsub.s32 5, %v7484
    %v7486 = vrot.slane %v7040, %v7485
    %v7487 = vmul.f32 %v7364, %v7486
    %v7488 = vmul.f32 %v7481, %v7486
    %v7489 = vmul.f32 %v7366, %v7486
    %v7490 = vmul.f32 %v7482, %v7486
    %v7491 = vadd.f32 %v7477, %v7487
    %v7492 = vadd.f32 %v7478, %v7488
    %v7493 = vadd.f32 %v7479, %v7489
    %v7494 = vadd.f32 %v7480, %v7490
    %v7495 = vld [vmem:[#allocation2 + $0x16] sm:$0xff]
    %v7496 = vld [vmem:[#allocation2 + $0x46] sm:$0xff]
    %v7497 = vlaneseq
    %v7498 = vshrl.u32 %v7497, 7
    %v7499 = vsub.s32 6, %v7498
    %v7500 = vrot.slane %v7040, %v7499
    %v7501 = vmul.f32 %v7380, %v7500
    %v7502 = vmul.f32 %v7495, %v7500
    %v7503 = vmul.f32 %v7382, %v7500
    %v7504 = vmul.f32 %v7496, %v7500
    %v7505 = vadd.f32 %v7491, %v7501
    %v7506 = vadd.f32 %v7492, %v7502
    %v7507 = vadd.f32 %v7493, %v7503
    %v7508 = vadd.f32 %v7494, %v7504
    %v7509 = vld [vmem:[#allocation2 + $0x17] sm:$0xff]
    %v7510 = vld [vmem:[#allocation2 + $0x47] sm:$0xff]
    %v7511 = vlaneseq
    %v7512 = vshrl.u32 %v7511, 7
    %v7513 = vsub.s32 7, %v7512
    %v7514 = vrot.slane %v7040, %v7513
    %v7515 = vmul.f32 %v7396, %v7514
    %v7516 = vmul.f32 %v7509, %v7514
    %v7517 = vmul.f32 %v7398, %v7514
    %v7518 = vmul.f32 %v7510, %v7514
    %v7519 = vadd.f32 %v7505, %v7515
    %v7520 = vadd.f32 %v7506, %v7516
    %v7521 = vadd.f32 %v7507, %v7517
    %v7522 = vadd.f32 %v7508, %v7518
    %v7523 = vld [vmem:[#allocation2 + $0x18] sm:$0xff]
    %v7524 = vld [vmem:[#allocation2 + $0x48] sm:$0xff]
    %v7525 = vlaneseq
    %v7526 = vshrl.u32 %v7525, 7
    %v7527 = vsub.s32 0, %v7526
    %v7528 = vrot.slane %v7041, %v7527
    %v7529 = vmul.f32 %v7411, %v7528
    %v7530 = vmul.f32 %v7523, %v7528
    %v7531 = vmul.f32 %v7412, %v7528
    %v7532 = vmul.f32 %v7524, %v7528
    %v7533 = vadd.f32 %v7519, %v7529
    %v7534 = vadd.f32 %v7520, %v7530
    %v7535 = vadd.f32 %v7521, %v7531
    %v7536 = vadd.f32 %v7522, %v7532
    %v7537 = vld [vmem:[#allocation2 + $0x19] sm:$0xff]
    %v7538 = vld [vmem:[#allocation2 + $0x49] sm:$0xff]
    %v7539 = vlaneseq
    %v7540 = vshrl.u32 %v7539, 7
    %v7541 = vsub.s32 1, %v7540
    %v7542 = vrot.slane %v7041, %v7541
    %v7543 = vmul.f32 %v7425, %v7542
    %v7544 = vmul.f32 %v7537, %v7542
    %v7545 = vmul.f32 %v7426, %v7542
    %v7546 = vmul.f32 %v7538, %v7542
    %v7547 = vadd.f32 %v7533, %v7543
    %v7548 = vadd.f32 %v7534, %v7544
    %v7549 = vadd.f32 %v7535, %v7545
    %v7550 = vadd.f32 %v7536, %v7546
    %v7551 = vld [vmem:[#allocation2 + $0x1a] sm:$0xff]
    %v7552 = vld [vmem:[#allocation2 + $0x4a] sm:$0xff]
    %v7553 = vlaneseq
    %v7554 = vshrl.u32 %v7553, 7
    %v7555 = vsub.s32 2, %v7554
    %v7556 = vrot.slane %v7041, %v7555
    %v7557 = vmul.f32 %v7439, %v7556
    %v7558 = vmul.f32 %v7551, %v7556
    %v7559 = vmul.f32 %v7440, %v7556
    %v7560 = vmul.f32 %v7552, %v7556
    %v7561 = vadd.f32 %v7547, %v7557
    %v7562 = vadd.f32 %v7548, %v7558
    %v7563 = vadd.f32 %v7549, %v7559
    %v7564 = vadd.f32 %v7550, %v7560
    %v7565 = vld [vmem:[#allocation2 + $0x1b] sm:$0xff]
    %v7566 = vld [vmem:[#allocation2 + $0x4b] sm:$0xff]
    %v7567 = vlaneseq
    %v7568 = vshrl.u32 %v7567, 7
    %v7569 = vsub.s32 3, %v7568
    %v7570 = vrot.slane %v7041, %v7569
    %v7571 = vmul.f32 %v7453, %v7570
    %v7572 = vmul.f32 %v7565, %v7570
    %v7573 = vmul.f32 %v7454, %v7570
    %v7574 = vmul.f32 %v7566, %v7570
    %v7575 = vadd.f32 %v7561, %v7571
    %v7576 = vadd.f32 %v7562, %v7572
    %v7577 = vadd.f32 %v7563, %v7573
    %v7578 = vadd.f32 %v7564, %v7574
    %v7579 = vld [vmem:[#allocation2 + $0x1c] sm:$0xff]
    %v7580 = vld [vmem:[#allocation2 + $0x4c] sm:$0xff]
    %v7581 = vlaneseq
    %v7582 = vshrl.u32 %v7581, 7
    %v7583 = vsub.s32 4, %v7582
    %v7584 = vrot.slane %v7041, %v7583
    %v7585 = vmul.f32 %v7467, %v7584
    %v7586 = vmul.f32 %v7579, %v7584
    %v7587 = vmul.f32 %v7468, %v7584
    %v7588 = vmul.f32 %v7580, %v7584
    %v7589 = vadd.f32 %v7575, %v7585
    %v7590 = vadd.f32 %v7576, %v7586
    %v7591 = vadd.f32 %v7577, %v7587
    %v7592 = vadd.f32 %v7578, %v7588
    %v7593 = vld [vmem:[#allocation2 + $0x1d] sm:$0xff]
    %v7594 = vld [vmem:[#allocation2 + $0x4d] sm:$0xff]
    %v7595 = vlaneseq
    %v7596 = vshrl.u32 %v7595, 7
    %v7597 = vsub.s32 5, %v7596
    %v7598 = vrot.slane %v7041, %v7597
    %v7599 = vmul.f32 %v7481, %v7598
    %v7600 = vmul.f32 %v7593, %v7598
    %v7601 = vmul.f32 %v7482, %v7598
    %v7602 = vmul.f32 %v7594, %v7598
    %v7603 = vadd.f32 %v7589, %v7599
    %v7604 = vadd.f32 %v7590, %v7600
    %v7605 = vadd.f32 %v7591, %v7601
    %v7606 = vadd.f32 %v7592, %v7602
    %v7607 = vld [vmem:[#allocation2 + $0x1e] sm:$0xff]
    %v7608 = vld [vmem:[#allocation2 + $0x4e] sm:$0xff]
    %v7609 = vlaneseq
    %v7610 = vshrl.u32 %v7609, 7
    %v7611 = vsub.s32 6, %v7610
    %v7612 = vrot.slane %v7041, %v7611
    %v7613 = vmul.f32 %v7495, %v7612
    %v7614 = vmul.f32 %v7607, %v7612
    %v7615 = vmul.f32 %v7496, %v7612
    %v7616 = vmul.f32 %v7608, %v7612
    %v7617 = vadd.f32 %v7603, %v7613
    %v7618 = vadd.f32 %v7604, %v7614
    %v7619 = vadd.f32 %v7605, %v7615
    %v7620 = vadd.f32 %v7606, %v7616
    %v7621 = vld [vmem:[#allocation2 + $0x1f] sm:$0xff]
    %v7622 = vld [vmem:[#allocation2 + $0x4f] sm:$0xff]
    %v7623 = vlaneseq
    %v7624 = vshrl.u32 %v7623, 7
    %v7625 = vsub.s32 7, %v7624
    %v7626 = vrot.slane %v7041, %v7625
    %v7627 = vmul.f32 %v7509, %v7626
    %v7628 = vmul.f32 %v7621, %v7626
    %v7629 = vmul.f32 %v7510, %v7626
    %v7630 = vmul.f32 %v7622, %v7626
    %v7631 = vadd.f32 %v7617, %v7627
    %v7632 = vadd.f32 %v7618, %v7628
    %v7633 = vadd.f32 %v7619, %v7629
    %v7634 = vadd.f32 %v7620, %v7630
    %v7635 = vld [vmem:[#allocation2 + $0x20] sm:$0xff]
    %v7636 = vld [vmem:[#allocation2 + $0x50] sm:$0xff]
    %v7637 = vlaneseq
    %v7638 = vshrl.u32 %v7637, 7
    %v7639 = vsub.s32 0, %v7638
    %v7640 = vrot.slane %v7042, %v7639
    %v7641 = vmul.f32 %v7523, %v7640
    %v7642 = vmul.f32 %v7635, %v7640
    %v7643 = vmul.f32 %v7524, %v7640
    %v7644 = vmul.f32 %v7636, %v7640
    %v7645 = vadd.f32 %v7631, %v7641
    %v7646 = vadd.f32 %v7632, %v7642
    %v7647 = vadd.f32 %v7633, %v7643
    %v7648 = vadd.f32 %v7634, %v7644
    %v7649 = vld [vmem:[#allocation2 + $0x21] sm:$0xff]
    %v7650 = vld [vmem:[#allocation2 + $0x51] sm:$0xff]
    %v7651 = vlaneseq
    %v7652 = vshrl.u32 %v7651, 7
    %v7653 = vsub.s32 1, %v7652
    %v7654 = vrot.slane %v7042, %v7653
    %v7655 = vmul.f32 %v7537, %v7654
    %v7656 = vmul.f32 %v7649, %v7654
    %v7657 = vmul.f32 %v7538, %v7654
    %v7658 = vmul.f32 %v7650, %v7654
    %v7659 = vadd.f32 %v7645, %v7655
    %v7660 = vadd.f32 %v7646, %v7656
    %v7661 = vadd.f32 %v7647, %v7657
    %v7662 = vadd.f32 %v7648, %v7658
    %v7663 = vld [vmem:[#allocation2 + $0x22] sm:$0xff]
    %v7664 = vld [vmem:[#allocation2 + $0x52] sm:$0xff]
    %v7665 = vlaneseq
    %v7666 = vshrl.u32 %v7665, 7
    %v7667 = vsub.s32 2, %v7666
    %v7668 = vrot.slane %v7042, %v7667
    %v7669 = vmul.f32 %v7551, %v7668
    %v7670 = vmul.f32 %v7663, %v7668
    %v7671 = vmul.f32 %v7552, %v7668
    %v7672 = vmul.f32 %v7664, %v7668
    %v7673 = vadd.f32 %v7659, %v7669
    %v7674 = vadd.f32 %v7660, %v7670
    %v7675 = vadd.f32 %v7661, %v7671
    %v7676 = vadd.f32 %v7662, %v7672
    %v7677 = vld [vmem:[#allocation2 + $0x23] sm:$0xff]
    %v7678 = vld [vmem:[#allocation2 + $0x53] sm:$0xff]
    %v7679 = vlaneseq
    %v7680 = vshrl.u32 %v7679, 7
    %v7681 = vsub.s32 3, %v7680
    %v7682 = vrot.slane %v7042, %v7681
    %v7683 = vmul.f32 %v7565, %v7682
    %v7684 = vmul.f32 %v7677, %v7682
    %v7685 = vmul.f32 %v7566, %v7682
    %v7686 = vmul.f32 %v7678, %v7682
    %v7687 = vadd.f32 %v7673, %v7683
    %v7688 = vadd.f32 %v7674, %v7684
    %v7689 = vadd.f32 %v7675, %v7685
    %v7690 = vadd.f32 %v7676, %v7686
    %v7691 = vld [vmem:[#allocation2 + $0x24] sm:$0xff]
    %v7692 = vld [vmem:[#allocation2 + $0x54] sm:$0xff]
    %v7693 = vlaneseq
    %v7694 = vshrl.u32 %v7693, 7
    %v7695 = vsub.s32 4, %v7694
    %v7696 = vrot.slane %v7042, %v7695
    %v7697 = vmul.f32 %v7579, %v7696
    %v7698 = vmul.f32 %v7691, %v7696
    %v7699 = vmul.f32 %v7580, %v7696
    %v7700 = vmul.f32 %v7692, %v7696
    %v7701 = vadd.f32 %v7687, %v7697
    %v7702 = vadd.f32 %v7688, %v7698
    %v7703 = vadd.f32 %v7689, %v7699
    %v7704 = vadd.f32 %v7690, %v7700
    %v7705 = vld [vmem:[#allocation2 + $0x25] sm:$0xff]
    %v7706 = vld [vmem:[#allocation2 + $0x55] sm:$0xff]
    %v7707 = vlaneseq
    %v7708 = vshrl.u32 %v7707, 7
    %v7709 = vsub.s32 5, %v7708
    %v7710 = vrot.slane %v7042, %v7709
    %v7711 = vmul.f32 %v7593, %v7710
    %v7712 = vmul.f32 %v7705, %v7710
    %v7713 = vmul.f32 %v7594, %v7710
    %v7714 = vmul.f32 %v7706, %v7710
    %v7715 = vadd.f32 %v7701, %v7711
    %v7716 = vadd.f32 %v7702, %v7712
    %v7717 = vadd.f32 %v7703, %v7713
    %v7718 = vadd.f32 %v7704, %v7714
    %v7719 = vld [vmem:[#allocation2 + $0x26] sm:$0xff]
    %v7720 = vld [vmem:[#allocation2 + $0x56] sm:$0xff]
    %v7721 = vlaneseq
    %v7722 = vshrl.u32 %v7721, 7
    %v7723 = vsub.s32 6, %v7722
    %v7724 = vrot.slane %v7042, %v7723
    %v7725 = vmul.f32 %v7607, %v7724
    %v7726 = vmul.f32 %v7719, %v7724
    %v7727 = vmul.f32 %v7608, %v7724
    %v7728 = vmul.f32 %v7720, %v7724
    %v7729 = vadd.f32 %v7715, %v7725
    %v7730 = vadd.f32 %v7716, %v7726
    %v7731 = vadd.f32 %v7717, %v7727
    %v7732 = vadd.f32 %v7718, %v7728
    %v7734 = vlaneseq
    %v7735 = vshrl.u32 %v7734, 7
    %v7736 = vsub.s32 0, %v7735
    %v7737 = vrot.slane %v7044, %v7736
    %v7739 = vadd.f32 %v7729, %v7737
    %v7740 = vadd.f32 %v7730, %v7737
    %v7741 = vadd.f32 %v7731, %v7737
    %v7742 = vadd.f32 %v7732, %v7737
    %v7743 = vsel %vm583, %v7739, 0.0
    %v7744 = vsel %vm583, %v7740, 0.0
    %v7745 = vadd.f32 %v7743, %v7744
    %v7746 = vsel %vm583, %v7741, 0.0
    %v7747 = vadd.f32 %v7745, %v7746
    %v7748 = vsel %vm583, %v7742, 0.0
    %v7749 = vadd.f32 %v7747, %v7748
    %v7750 = vrot.slane %v7749, 4
    %v7751 = vadd.f32 %v7749, %v7750
    %v7752 = vrot.slane %v7751, 2
    %v7753 = vadd.f32 %v7751, %v7752
    %v7754 = vrot.slane %v7753, 1
    %v7755 = vadd.f32 %v7753, %v7754
    %v7756 = vmul.f32 %v7755, %v3874
    %v7757 = vsub.f32 %v7739, %v7756
    %v7758 = vsub.f32 %v7740, %v7756
    %v7759 = vsub.f32 %v7741, %v7756
    %v7760 = vsub.f32 %v7742, %v7756
    %v7761 = vmul.f32 %v7757, %v7757
    %v7762 = vmul.f32 %v7758, %v7758
    %v7763 = vmul.f32 %v7759, %v7759
    %v7764 = vmul.f32 %v7760, %v7760
    %v7765 = vsel %vm583, %v7761, 0.0
    %v7766 = vsel %vm583, %v7762, 0.0
    %v7767 = vadd.f32 %v7765, %v7766
    %v7768 = vsel %vm583, %v7763, 0.0
    %v7769 = vadd.f32 %v7767, %v7768
    %v7770 = vsel %vm583, %v7764, 0.0
    %v7771 = vadd.f32 %v7769, %v7770
    %v7772 = vrot.slane %v7771, 4
    %v7773 = vadd.f32 %v7771, %v7772
    %v7774 = vrot.slane %v7773, 2
    %v7775 = vadd.f32 %v7773, %v7774
    %v7776 = vrot.slane %v7775, 1
    %v7777 = vadd.f32 %v7775, %v7776
    %v7778 = vmul.f32 %v7777, %v3874
    %v7779 = vadd.f32 %v7778, 1e-05
    %v7780 = vrsqrt.pop %v7779
    %v7781 = vmul.f32 %v7757, %v7780
    %v7782 = vmul.f32 %v7758, %v7780
    %v7783 = vmul.f32 %v7759, %v7780
    %v7784 = vmul.f32 %v7760, %v7780
    %v7786 = vlaneseq
    %v7787 = vshrl.u32 %v7786, 7
    %v7788 = vsub.s32 0, %v7787
    %v7789 = vrot.slane %v7046, %v7788
    %v7791 = vmul.f32 %v7781, %v7789
    %v7792 = vmul.f32 %v7782, %v7789
    %v7793 = vmul.f32 %v7783, %v7789
    %v7794 = vmul.f32 %v7784, %v7789
    %v7796 = vlaneseq
    %v7797 = vshrl.u32 %v7796, 7
    %v7798 = vsub.s32 0, %v7797
    %v7799 = vrot.slane %v7048, %v7798
    %v7801 = vadd.f32 %v7791, %v7799
    %v7802 = vadd.f32 %v7792, %v7799
    %v7803 = vadd.f32 %v7793, %v7799
    %v7804 = vadd.f32 %v7794, %v7799
    %v7805 = vxor.u32 %v7801, 2147483648
    %v7806 = vxor.u32 %v7802, 2147483648
    %v7807 = vxor.u32 %v7803, 2147483648
    %v7808 = vxor.u32 %v7804, 2147483648
    %v7809 = vmul.f32 %v7805, 1.442695
    %v7810 = vpow.pop %v7809
    %v7811 = vmul.f32 %v7806, 1.442695
    %v7812 = vpow.pop %v7811
    %v7813 = vmul.f32 %v7807, 1.442695
    %v7814 = vpow.pop %v7813
    %v7815 = vmul.f32 %v7808, 1.442695
    %v7816 = vpow.pop %v7815
    %v7817 = vadd.f32 %v7810, 1.0
    %v7818 = vadd.f32 %v7812, 1.0
    %v7819 = vadd.f32 %v7814, 1.0
    %v7820 = vadd.f32 %v7816, 1.0
    %v7821 = vrcp.pop %v7817
    %v7822 = vmul.f32 1.0, %v7821
    %v7823 = vrcp.pop %v7818
    %v7824 = vmul.f32 1.0, %v7823
    %v7825 = vrcp.pop %v7819
    %v7826 = vmul.f32 1.0, %v7825
    %v7827 = vrcp.pop %v7820
    %v7828 = vmul.f32 1.0, %v7827
    %v7829 = vmul.f32 %v7801, %v7822
    %v7830 = vmul.f32 %v7802, %v7824
    %v7831 = vmul.f32 %v7803, %v7826
    %v7832 = vmul.f32 %v7804, %v7828
    %v7834 = vlaneseq
    %v7835 = vshrl.u32 %v7834, 7
    %v7836 = vsub.s32 0, %v7835
    %v7837 = vrot.slane %v7059, %v7836
    %v7840 = vsel %vm583, %v7829, 0
    %v7843 = vsel %vm583, %v7830, 0
    %v7846 = vsel %vm583, %v7831, 0
    %v7849 = vsel %vm583, %v7832, 0
    %7851 = vmatprep.subr.mxu0 0.0
    %7852 = vmatpush1.msra.mxu0 %v7050
    %7853 = vmatprep.subr.mxu0 0.0
    %7854 = vmatpush1.msra.mxu0 %v7051
    %7855 = vmatprep.subr.mxu0 0.0
    %7856 = vmatpush1.msra.mxu0 %v7052
    %7857 = vmatprep.subr.mxu0 0.0
    %7858 = vmatpush1.msra.mxu0 %v7053
    %7859 = vmatprep.subr.mxu0 0.0
    %7860 = vmatpush1.msra.mxu0 %v7054
    %7861 = vmatprep.subr.mxu0 0.0
    %7862 = vmatpush1.msra.mxu0 %v7055
    %7863 = vmatprep.subr.mxu0 0.0
    %7864 = vmatpush1.msra.mxu0 %v7056
    %7865 = vmatprep.subr.mxu0 0.0
    %7866 = vmatpush1.msra.mxu0 %v7057
    %7867 = vmatprep.subr.mxu0 0.0
    %7868 = vmatpush1.msra.mxu0 0.0
    %7869 = vmatprep.subr.mxu0 0.0
    %7870 = vmatpush1.msra.mxu0 0.0
    %7871 = vmatprep.subr.mxu0 0.0
    %7872 = vmatpush1.msra.mxu0 0.0
    %7873 = vmatprep.subr.mxu0 0.0
    %7874 = vmatpush1.msra.mxu0 0.0
    %7875 = vmatprep.subr.mxu0 0.0
    %7876 = vmatpush1.msra.mxu0 0.0
    %7877 = vmatprep.subr.mxu0 0.0
    %7878 = vmatpush1.msra.mxu0 0.0
    %7879 = vmatprep.subr.mxu0 0.0
    %7880 = vmatpush1.msra.mxu0 0.0
    %7881 = vmatprep.subr.mxu0 0.0
    %7882 = vmatpush1.msra.mxu0 0.0
    %7883 = vmatprep.subr.mxu0 0.0
    %7884 = vmatpush1.msra.mxu0 0.0
    %7885 = vmatprep.subr.mxu0 0.0
    %7886 = vmatpush1.msra.mxu0 0.0
    %7887 = vmatprep.subr.mxu0 0.0
    %7888 = vmatpush1.msra.mxu0 0.0
    %7889 = vmatprep.subr.mxu0 0.0
    %7890 = vmatpush1.msra.mxu0 0.0
    %7891 = vmatprep.subr.mxu0 0.0
    %7892 = vmatpush1.msra.mxu0 0.0
    %7893 = vmatprep.subr.mxu0 0.0
    %7894 = vmatpush1.msra.mxu0 0.0
    %7895 = vmatprep.subr.mxu0 0.0
    %7896 = vmatpush1.msra.mxu0 0.0
    %7897 = vmatprep.subr.mxu0 0.0
    %7898 = vmatpush1.msra.mxu0 0.0
    %7899 = vmatprep.subr.mxu0 0.0
    %7900 = vmatpush1.msra.mxu0 0.0
    %7901 = vmatprep.subr.mxu0 0.0
    %7902 = vmatpush1.msra.mxu0 0.0
    %7903 = vmatprep.subr.mxu0 0.0
    %7904 = vmatpush1.msra.mxu0 0.0
    %7905 = vmatprep.subr.mxu0 0.0
    %7906 = vmatpush1.msra.mxu0 0.0
    %7907 = vmatprep.subr.mxu0 0.0
    %7908 = vmatpush1.msra.mxu0 0.0
    %7909 = vmatprep.subr.mxu0 0.0
    %7910 = vmatpush1.msra.mxu0 0.0
    %7911 = vmatprep.subr.mxu0 0.0
    %7912 = vmatpush1.msra.mxu0 0.0
    %7913 = vmatprep.subr.mxu0 0.0
    %7914 = vmatpush1.msra.mxu0 0.0
    %7915 = vmatprep.mubr.f32.mxu0 0.0
    %7916 = vmatmul.mubr.f32.gmra.mrb[0].mxu0 %v7840
    %v7917 = vpop.f32.mrb[0].mxu0
    %v7918 = vadd.f32 %v7837, %v7917
    %v7919 = vpop.f32.mrb[0].mxu0
    %7920 = vmatprep.mubr.f32.mxu0 0.0
    %7921 = vmatmul.mubr.f32.gmra.mrb[0].mxu0 %v7843
    %v7922 = vpop.f32.mrb[0].mxu0
    %v7923 = vadd.f32 %v7837, %v7922
    %v7924 = vpop.f32.mrb[0].mxu0
    %7925 = vmatprep.mubr.f32.mxu0 0.0
    %7926 = vmatmul.mubr.f32.gmra.mrb[0].mxu0 %v7846
    %v7927 = vpop.f32.mrb[0].mxu0
    %v7928 = vadd.f32 %v7837, %v7927
    %v7929 = vpop.f32.mrb[0].mxu0
    %7930 = vmatprep.mubr.f32.mxu0 0.0
    %7931 = vmatmul.mubr.f32.gmra.mrb[0].mxu0 %v7849
    %v7932 = vpop.f32.mrb[0].mxu0
    %v7933 = vadd.f32 %v7837, %v7932
    %v7934 = vpop.f32.mrb[0].mxu0
    %7935 = vdwg.mxu0
    %v7936 = vadd.f32 %v7019, %v7918
    %v7937 = vadd.f32 %v7020, %v7923
    %v7938 = vadd.f32 %v7021, %v7928
    %v7939 = vadd.f32 %v7022, %v7933
    %s7940 = scalar_lea.vmem [#allocation39], 1
    %v7941 = vld [vmem:[%s7940] sm:$0x1]
    %s7942 = scalar_lea.vmem [#allocation41], 1
    %v7943 = vld [vmem:[%s7942] sm:$0x1]
    %s7944 = scalar_lea.vmem [#allocation42], 64
    %v7945 = vld [vmem:[%s7944] sm:$0xff]
    %v7946 = vld [vmem:[%s7944 + $0x8] sm:$0xff]
    %v7947 = vld [vmem:[%s7944 + $0x10] sm:$0xff]
    %v7948 = vld [vmem:[%s7944 + $0x18] sm:$0xff]
    %v7949 = vld [vmem:[%s7944 + $0x20] sm:$0xff]
    %v7950 = vld [vmem:[%s7944 + $0x28] sm:$0xff]
    %v7951 = vld [vmem:[%s7944 + $0x30] sm:$0xff]
    %v7952 = vld [vmem:[%s7944 + $0x38] sm:$0xff]
    %s7953 = scalar_lea.vmem [#allocation44], 1
    %v7954 = vld [vmem:[%s7953] sm:$0x1]
    %s7955 = scalar_lea.vmem [#allocation45], 128
    %v7956 = vld [vmem:[%s7955] sm:$0xff]
    %v7957 = vld [vmem:[%s7955 + $0x8] sm:$0xff]
    %v7958 = vld [vmem:[%s7955 + $0x10] sm:$0xff]
    %v7959 = vld [vmem:[%s7955 + $0x18] sm:$0xff]
    %v7960 = vld [vmem:[%s7955 + $0x20] sm:$0xff]
    %v7961 = vld [vmem:[%s7955 + $0x28] sm:$0xff]
    %v7962 = vld [vmem:[%s7955 + $0x30] sm:$0xff]
    %v7963 = vld [vmem:[%s7955 + $0x38] sm:$0xff]
    %v7964 = vld [vmem:[%s7955 + $0x40] sm:$0xff]
    %v7965 = vld [vmem:[%s7955 + $0x48] sm:$0xff]
    %v7966 = vld [vmem:[%s7955 + $0x50] sm:$0xff]
    %v7967 = vld [vmem:[%s7955 + $0x58] sm:$0xff]
    %v7968 = vld [vmem:[%s7955 + $0x60] sm:$0xff]
    %v7969 = vld [vmem:[%s7955 + $0x68] sm:$0xff]
    %v7970 = vld [vmem:[%s7955 + $0x70] sm:$0xff]
    %v7971 = vld [vmem:[%s7955 + $0x78] sm:$0xff]
    %s7972 = scalar_lea.vmem [#allocation47], 1
    %v7973 = vld [vmem:[%s7972] sm:$0x1]
    %v7974 = vsel %vm583, %v7936, 0.0
    %7975 = vadd.xlane.f32.xlu0 %v7974
    %v7976 = vpop.xlane.xlu0 %7975
    %v7977 = vsel %vm583, %v7937, 0.0
    %7978 = vadd.xlane.f32.xlu0 %v7977
    %v7979 = vpop.xlane.xlu0 %7978
    %v7980 = vsel %vm583, %v7938, 0.0
    %7981 = vadd.xlane.f32.xlu0 %v7980
    %v7982 = vpop.xlane.xlu0 %7981
    %v7983 = vsel %vm583, %v7939, 0.0
    %7984 = vadd.xlane.f32.xlu0 %v7983
    %v7985 = vpop.xlane.xlu0 %7984
    %v7986 = vmul.f32 %v7976, %v641
    %v7987 = vmul.f32 %v7979, %v641
    %v7988 = vmul.f32 %v7982, %v641
    %v7989 = vmul.f32 %v7985, %v641
    %v7990 = vsub.f32 %v7936, %v7986
    %v7991 = vsub.f32 %v7937, %v7987
    %v7992 = vsub.f32 %v7938, %v7988
    %v7993 = vsub.f32 %v7939, %v7989
    %v7994 = vmul.f32 %v7990, %v7990
    %v7995 = vmul.f32 %v7991, %v7991
    %v7996 = vmul.f32 %v7992, %v7992
    %v7997 = vmul.f32 %v7993, %v7993
    %v7998 = vsel %vm583, %v7994, 0.0
    %7999 = vadd.xlane.f32.xlu0 %v7998
    %v8000 = vpop.xlane.xlu0 %7999
    %v8001 = vsel %vm583, %v7995, 0.0
    %8002 = vadd.xlane.f32.xlu0 %v8001
    %v8003 = vpop.xlane.xlu0 %8002
    %v8004 = vsel %vm583, %v7996, 0.0
    %8005 = vadd.xlane.f32.xlu0 %v8004
    %v8006 = vpop.xlane.xlu0 %8005
    %v8007 = vsel %vm583, %v7997, 0.0
    %8008 = vadd.xlane.f32.xlu0 %v8007
    %v8009 = vpop.xlane.xlu0 %8008
    %v8010 = vmul.f32 %v8000, %v641
    %v8011 = vmul.f32 %v8003, %v641
    %v8012 = vmul.f32 %v8006, %v641
    %v8013 = vmul.f32 %v8009, %v641
    %v8014 = vadd.f32 %v8010, 1e-05
    %v8015 = vadd.f32 %v8011, 1e-05
    %v8016 = vadd.f32 %v8012, 1e-05
    %v8017 = vadd.f32 %v8013, 1e-05
    %v8018 = vrsqrt.pop %v8014
    %v8019 = vrsqrt.pop %v8015
    %v8020 = vrsqrt.pop %v8016
    %v8021 = vrsqrt.pop %v8017
    %v8022 = vmul.f32 %v7990, %v8018
    %v8023 = vmul.f32 %v7991, %v8019
    %v8024 = vmul.f32 %v7992, %v8020
    %v8025 = vmul.f32 %v7993, %v8021
    %v8027 = vlaneseq
    %v8028 = vshrl.u32 %v8027, 7
    %v8029 = vsub.s32 0, %v8028
    %v8030 = vrot.slane %v7941, %v8029
    %v8032 = vmul.f32 %v8022, %v8030
    %v8033 = vmul.f32 %v8023, %v8030
    %v8034 = vmul.f32 %v8024, %v8030
    %v8035 = vmul.f32 %v8025, %v8030
    %v8037 = vlaneseq
    %v8038 = vshrl.u32 %v8037, 7
    %v8039 = vsub.s32 0, %v8038
    %v8040 = vrot.slane %v7943, %v8039
    %v8042 = vadd.f32 %v8032, %v8040
    %v8043 = vadd.f32 %v8033, %v8040
    %v8044 = vadd.f32 %v8034, %v8040
    %v8045 = vadd.f32 %v8035, %v8040
    %v8047 = vlaneseq
    %v8048 = vshrl.u32 %v8047, 7
    %v8049 = vsub.s32 0, %v8048
    %v8050 = vrot.slane %v7954, %v8049
    %v8053 = vsel %vm583, %v8042, 0
    %v8056 = vsel %vm583, %v8043, 0
    %v8059 = vsel %vm583, %v8044, 0
    %v8062 = vsel %vm583, %v8045, 0
    %8064 = vmatprep.subr.mxu0 0.0
    %8065 = vmatpush1.msra.mxu0 %v7945
    %8066 = vmatprep.subr.mxu0 0.0
    %8067 = vmatpush1.msra.mxu0 %v7946
    %8068 = vmatprep.subr.mxu0 0.0
    %8069 = vmatpush1.msra.mxu0 %v7947
    %8070 = vmatprep.subr.mxu0 0.0
    %8071 = vmatpush1.msra.mxu0 %v7948
    %8072 = vmatprep.subr.mxu0 0.0
    %8073 = vmatpush1.msra.mxu0 %v7949
    %8074 = vmatprep.subr.mxu0 0.0
    %8075 = vmatpush1.msra.mxu0 %v7950
    %8076 = vmatprep.subr.mxu0 0.0
    %8077 = vmatpush1.msra.mxu0 %v7951
    %8078 = vmatprep.subr.mxu0 0.0
    %8079 = vmatpush1.msra.mxu0 %v7952
    %8080 = vmatprep.subr.mxu0 0.0
    %8081 = vmatpush1.msra.mxu0 0.0
    %8082 = vmatprep.subr.mxu0 0.0
    %8083 = vmatpush1.msra.mxu0 0.0
    %8084 = vmatprep.subr.mxu0 0.0
    %8085 = vmatpush1.msra.mxu0 0.0
    %8086 = vmatprep.subr.mxu0 0.0
    %8087 = vmatpush1.msra.mxu0 0.0
    %8088 = vmatprep.subr.mxu0 0.0
    %8089 = vmatpush1.msra.mxu0 0.0
    %8090 = vmatprep.subr.mxu0 0.0
    %8091 = vmatpush1.msra.mxu0 0.0
    %8092 = vmatprep.subr.mxu0 0.0
    %8093 = vmatpush1.msra.mxu0 0.0
    %8094 = vmatprep.subr.mxu0 0.0
    %8095 = vmatpush1.msra.mxu0 0.0
    %8096 = vmatprep.subr.mxu0 0.0
    %8097 = vmatpush1.msra.mxu0 0.0
    %8098 = vmatprep.subr.mxu0 0.0
    %8099 = vmatpush1.msra.mxu0 0.0
    %8100 = vmatprep.subr.mxu0 0.0
    %8101 = vmatpush1.msra.mxu0 0.0
    %8102 = vmatprep.subr.mxu0 0.0
    %8103 = vmatpush1.msra.mxu0 0.0
    %8104 = vmatprep.subr.mxu0 0.0
    %8105 = vmatpush1.msra.mxu0 0.0
    %8106 = vmatprep.subr.mxu0 0.0
    %8107 = vmatpush1.msra.mxu0 0.0
    %8108 = vmatprep.subr.mxu0 0.0
    %8109 = vmatpush1.msra.mxu0 0.0
    %8110 = vmatprep.subr.mxu0 0.0
    %8111 = vmatpush1.msra.mxu0 0.0
    %8112 = vmatprep.subr.mxu0 0.0
    %8113 = vmatpush1.msra.mxu0 0.0
    %8114 = vmatprep.subr.mxu0 0.0
    %8115 = vmatpush1.msra.mxu0 0.0
    %8116 = vmatprep.subr.mxu0 0.0
    %8117 = vmatpush1.msra.mxu0 0.0
    %8118 = vmatprep.subr.mxu0 0.0
    %8119 = vmatpush1.msra.mxu0 0.0
    %8120 = vmatprep.subr.mxu0 0.0
    %8121 = vmatpush1.msra.mxu0 0.0
    %8122 = vmatprep.subr.mxu0 0.0
    %8123 = vmatpush1.msra.mxu0 0.0
    %8124 = vmatprep.subr.mxu0 0.0
    %8125 = vmatpush1.msra.mxu0 0.0
    %8126 = vmatprep.subr.mxu0 0.0
    %8127 = vmatpush1.msra.mxu0 0.0
    %8128 = vmatprep.mubr.f32.mxu0 0.0
    %8129 = vmatmul.mubr.f32.gmra.mrb[0].mxu0 %v8053
    %v8130 = vpop.f32.mrb[0].mxu0
    %v8131 = vadd.f32 %v8050, %v8130
    %v8132 = vpop.f32.mrb[0].mxu0
    %8133 = vmatprep.mubr.f32.mxu0 0.0
    %8134 = vmatmul.mubr.f32.gmra.mrb[0].mxu0 %v8056
    %v8135 = vpop.f32.mrb[0].mxu0
    %v8136 = vadd.f32 %v8050, %v8135
    %v8137 = vpop.f32.mrb[0].mxu0
    %8138 = vmatprep.mubr.f32.mxu0 0.0
    %8139 = vmatmul.mubr.f32.gmra.mrb[0].mxu0 %v8059
    %v8140 = vpop.f32.mrb[0].mxu0
    %v8141 = vadd.f32 %v8050, %v8140
    %v8142 = vpop.f32.mrb[0].mxu0
    %8143 = vmatprep.mubr.f32.mxu0 0.0
    %8144 = vmatmul.mubr.f32.gmra.mrb[0].mxu0 %v8062
    %v8145 = vpop.f32.mrb[0].mxu0
    %v8146 = vadd.f32 %v8050, %v8145
    %v8147 = vpop.f32.mrb[0].mxu0
    %8148 = vdwg.mxu0
    %v8149 = vxor.u32 %v8131, 2147483648
    %v8150 = vxor.u32 %v8136, 2147483648
    %v8151 = vxor.u32 %v8141, 2147483648
    %v8152 = vxor.u32 %v8146, 2147483648
    %v8153 = vmul.f32 %v8149, 1.442695
    %v8154 = vpow.pop %v8153
    %v8155 = vmul.f32 %v8150, 1.442695
    %v8156 = vpow.pop %v8155
    %v8157 = vmul.f32 %v8151, 1.442695
    %v8158 = vpow.pop %v8157
    %v8159 = vmul.f32 %v8152, 1.442695
    %v8160 = vpow.pop %v8159
    %v8161 = vadd.f32 %v8154, 1.0
    %v8162 = vadd.f32 %v8156, 1.0
    %v8163 = vadd.f32 %v8158, 1.0
    %v8164 = vadd.f32 %v8160, 1.0
    %v8165 = vrcp.pop %v8161
    %v8166 = vmul.f32 1.0, %v8165
    %v8167 = vrcp.pop %v8162
    %v8168 = vmul.f32 1.0, %v8167
    %v8169 = vrcp.pop %v8163
    %v8170 = vmul.f32 1.0, %v8169
    %v8171 = vrcp.pop %v8164
    %v8172 = vmul.f32 1.0, %v8171
    %v8173 = vmul.f32 %v8131, %v8166
    %v8174 = vmul.f32 %v8136, %v8168
    %v8175 = vmul.f32 %v8141, %v8170
    %v8176 = vmul.f32 %v8146, %v8172
    %v8178 = vlaneseq
    %v8179 = vshrl.u32 %v8178, 7
    %v8180 = vsub.s32 0, %v8179
    %v8181 = vrot.slane %v7973, %v8180
    %8183 = vmatprep.subr.mxu0 0.0
    %8184 = vmatpush1.msra.mxu0 %v7956
    %8185 = vmatprep.subr.mxu0 0.0
    %8186 = vmatpush1.msra.mxu0 %v7957
    %8187 = vmatprep.subr.mxu0 0.0
    %8188 = vmatpush1.msra.mxu0 %v7958
    %8189 = vmatprep.subr.mxu0 0.0
    %8190 = vmatpush1.msra.mxu0 %v7959
    %8191 = vmatprep.subr.mxu0 0.0
    %8192 = vmatpush1.msra.mxu0 %v7960
    %8193 = vmatprep.subr.mxu0 0.0
    %8194 = vmatpush1.msra.mxu0 %v7961
    %8195 = vmatprep.subr.mxu0 0.0
    %8196 = vmatpush1.msra.mxu0 %v7962
    %8197 = vmatprep.subr.mxu0 0.0
    %8198 = vmatpush1.msra.mxu0 %v7963
    %8199 = vmatprep.subr.mxu0 0.0
    %8200 = vmatpush1.msra.mxu0 %v7964
    %8201 = vmatprep.subr.mxu0 0.0
    %8202 = vmatpush1.msra.mxu0 %v7965
    %8203 = vmatprep.subr.mxu0 0.0
    %8204 = vmatpush1.msra.mxu0 %v7966
    %8205 = vmatprep.subr.mxu0 0.0
    %8206 = vmatpush1.msra.mxu0 %v7967
    %8207 = vmatprep.subr.mxu0 0.0
    %8208 = vmatpush1.msra.mxu0 %v7968
    %8209 = vmatprep.subr.mxu0 0.0
    %8210 = vmatpush1.msra.mxu0 %v7969
    %8211 = vmatprep.subr.mxu0 0.0
    %8212 = vmatpush1.msra.mxu0 %v7970
    %8213 = vmatprep.subr.mxu0 0.0
    %8214 = vmatpush1.msra.mxu0 %v7971
    %8215 = vmatprep.subr.mxu0 0.0
    %8216 = vmatpush1.msra.mxu0 0.0
    %8217 = vmatprep.subr.mxu0 0.0
    %8218 = vmatpush1.msra.mxu0 0.0
    %8219 = vmatprep.subr.mxu0 0.0
    %8220 = vmatpush1.msra.mxu0 0.0
    %8221 = vmatprep.subr.mxu0 0.0
    %8222 = vmatpush1.msra.mxu0 0.0
    %8223 = vmatprep.subr.mxu0 0.0
    %8224 = vmatpush1.msra.mxu0 0.0
    %8225 = vmatprep.subr.mxu0 0.0
    %8226 = vmatpush1.msra.mxu0 0.0
    %8227 = vmatprep.subr.mxu0 0.0
    %8228 = vmatpush1.msra.mxu0 0.0
    %8229 = vmatprep.subr.mxu0 0.0
    %8230 = vmatpush1.msra.mxu0 0.0
    %8231 = vmatprep.subr.mxu0 0.0
    %8232 = vmatpush1.msra.mxu0 0.0
    %8233 = vmatprep.subr.mxu0 0.0
    %8234 = vmatpush1.msra.mxu0 0.0
    %8235 = vmatprep.subr.mxu0 0.0
    %8236 = vmatpush1.msra.mxu0 0.0
    %8237 = vmatprep.subr.mxu0 0.0
    %8238 = vmatpush1.msra.mxu0 0.0
    %8239 = vmatprep.subr.mxu0 0.0
    %8240 = vmatpush1.msra.mxu0 0.0
    %8241 = vmatprep.subr.mxu0 0.0
    %8242 = vmatpush1.msra.mxu0 0.0
    %8243 = vmatprep.subr.mxu0 0.0
    %8244 = vmatpush1.msra.mxu0 0.0
    %8245 = vmatprep.subr.mxu0 0.0
    %8246 = vmatpush1.msra.mxu0 0.0
    %8247 = vmatprep.mubr.f32.mxu0 0.0
    %8248 = vmatmul.mubr.f32.gmra.mrb[0].mxu0 %v8173
    %v8249 = vpop.f32.mrb[0].mxu0
    %v8250 = vadd.f32 %v8181, %v8249
    %v8251 = vpop.f32.mrb[0].mxu0
    %8252 = vmatprep.mubr.f32.mxu0 0.0
    %8253 = vmatmul.mubr.f32.gmra.mrb[0].mxu0 %v8174
    %v8254 = vpop.f32.mrb[0].mxu0
    %v8255 = vadd.f32 %v8181, %v8254
    %v8256 = vpop.f32.mrb[0].mxu0
    %8257 = vmatprep.mubr.f32.mxu0 0.0
    %8258 = vmatmul.mubr.f32.gmra.mrb[0].mxu0 %v8175
    %v8259 = vpop.f32.mrb[0].mxu0
    %v8260 = vadd.f32 %v8181, %v8259
    %v8261 = vpop.f32.mrb[0].mxu0
    %8262 = vmatprep.mubr.f32.mxu0 0.0
    %8263 = vmatmul.mubr.f32.gmra.mrb[0].mxu0 %v8176
    %v8264 = vpop.f32.mrb[0].mxu0
    %v8265 = vadd.f32 %v8181, %v8264
    %v8266 = vpop.f32.mrb[0].mxu0
    %8267 = vdwg.mxu0
    %v8268 = vmul.f32 %v8250, 0.5
    %v8269 = vmul.f32 %v8255, 0.5
    %v8270 = vmul.f32 %v8260, 0.5
    %v8271 = vmul.f32 %v8265, 0.5
    %v8272 = vadd.f32 %v7936, %v8268
    %v8273 = vadd.f32 %v7937, %v8269
    %v8274 = vadd.f32 %v7938, %v8270
    %v8275 = vadd.f32 %v7939, %v8271
    %s8276 = scalar_lea.vmem [#allocation48], 1
    %v8277 = vld [vmem:[%s8276] sm:$0x1]
    %s8278 = scalar_lea.vmem [#allocation50], 1
    %v8279 = vld [vmem:[%s8278] sm:$0x1]
    %v8280 = vsel %vm583, %v8272, 0.0
    %8281 = vadd.xlane.f32.xlu0 %v8280
    %v8282 = vpop.xlane.xlu0 %8281
    %v8283 = vsel %vm583, %v8273, 0.0
    %8284 = vadd.xlane.f32.xlu0 %v8283
    %v8285 = vpop.xlane.xlu0 %8284
    %v8286 = vsel %vm583, %v8274, 0.0
    %8287 = vadd.xlane.f32.xlu0 %v8286
    %v8288 = vpop.xlane.xlu0 %8287
    %v8289 = vsel %vm583, %v8275, 0.0
    %8290 = vadd.xlane.f32.xlu0 %v8289
    %v8291 = vpop.xlane.xlu0 %8290
    %v8292 = vmul.f32 %v8282, %v641
    %v8293 = vmul.f32 %v8285, %v641
    %v8294 = vmul.f32 %v8288, %v641
    %v8295 = vmul.f32 %v8291, %v641
    %v8296 = vsub.f32 %v8272, %v8292
    %v8297 = vsub.f32 %v8273, %v8293
    %v8298 = vsub.f32 %v8274, %v8294
    %v8299 = vsub.f32 %v8275, %v8295
    %v8300 = vmul.f32 %v8296, %v8296
    %v8301 = vmul.f32 %v8297, %v8297
    %v8302 = vmul.f32 %v8298, %v8298
    %v8303 = vmul.f32 %v8299, %v8299
    %v8304 = vsel %vm583, %v8300, 0.0
    %8305 = vadd.xlane.f32.xlu0 %v8304
    %v8306 = vpop.xlane.xlu0 %8305
    %v8307 = vsel %vm583, %v8301, 0.0
    %8308 = vadd.xlane.f32.xlu0 %v8307
    %v8309 = vpop.xlane.xlu0 %8308
    %v8310 = vsel %vm583, %v8302, 0.0
    %8311 = vadd.xlane.f32.xlu0 %v8310
    %v8312 = vpop.xlane.xlu0 %8311
    %v8313 = vsel %vm583, %v8303, 0.0
    %8314 = vadd.xlane.f32.xlu0 %v8313
    %v8315 = vpop.xlane.xlu0 %8314
    %v8316 = vmul.f32 %v8306, %v641
    %v8317 = vmul.f32 %v8309, %v641
    %v8318 = vmul.f32 %v8312, %v641
    %v8319 = vmul.f32 %v8315, %v641
    %v8320 = vadd.f32 %v8316, 1e-05
    %v8321 = vadd.f32 %v8317, 1e-05
    %v8322 = vadd.f32 %v8318, 1e-05
    %v8323 = vadd.f32 %v8319, 1e-05
    %v8324 = vrsqrt.pop %v8320
    %v8325 = vrsqrt.pop %v8321
    %v8326 = vrsqrt.pop %v8322
    %v8327 = vrsqrt.pop %v8323
    %v8328 = vmul.f32 %v8296, %v8324
    %v8329 = vmul.f32 %v8297, %v8325
    %v8330 = vmul.f32 %v8298, %v8326
    %v8331 = vmul.f32 %v8299, %v8327
    %v8333 = vlaneseq
    %v8334 = vshrl.u32 %v8333, 7
    %v8335 = vsub.s32 0, %v8334
    %v8336 = vrot.slane %v8277, %v8335
    %v8338 = vmul.f32 %v8328, %v8336
    %v8339 = vmul.f32 %v8329, %v8336
    %v8340 = vmul.f32 %v8330, %v8336
    %v8341 = vmul.f32 %v8331, %v8336
    %v8343 = vlaneseq
    %v8344 = vshrl.u32 %v8343, 7
    %v8345 = vsub.s32 0, %v8344
    %v8346 = vrot.slane %v8279, %v8345
    %v8348 = vadd.f32 %v8338, %v8346
    %v8349 = vadd.f32 %v8339, %v8346
    %v8350 = vadd.f32 %v8340, %v8346
    %v8351 = vadd.f32 %v8341, %v8346
    %v8352 = vsel %vm583, %v8348, 0.0
    %v8353 = vsel %vm583, %v8349, 0.0
    %v8354 = vadd.f32 %v8352, %v8353
    %v8355 = vrot.slane %v8354, 4
    %v8356 = vadd.f32 %v8354, %v8355
    %v8357 = vrot.slane %v8356, 2
    %v8358 = vadd.f32 %v8356, %v8357
    %v8359 = vrot.slane %v8358, 1
    %v8360 = vadd.f32 %v8358, %v8359
    %v8361 = vsel %vm583, %v8350, 0.0
    %v8362 = vsel %vm583, %v8351, 0.0
    %v8363 = vadd.f32 %v8361, %v8362
    %v8364 = vrot.slane %v8363, 4
    %v8365 = vadd.f32 %v8363, %v8364
    %v8366 = vrot.slane %v8365, 2
    %v8367 = vadd.f32 %v8365, %v8366
    %v8368 = vrot.slane %v8367, 1
    %v8369 = vadd.f32 %v8367, %v8368
    %v8370 = vrcp.pop 16.0
    %v8371 = vmul.f32 %v8360, %v8370
    %v8372 = vmul.f32 %v8369, %v8370
    %v8373 = vld [vmem:[#allocation51] sm:$0xff]
    %v8374 = vld [vmem:[#allocation51 + $0x8] sm:$0xff]
    %v8375 = vld [vmem:[#allocation51 + $0x10] sm:$0xff]
    %v8376 = vld [vmem:[#allocation51 + $0x18] sm:$0xff]
    %v8377 = vld [vmem:[#allocation51 + $0x20] sm:$0xff]
    %v8378 = vld [vmem:[#allocation51 + $0x28] sm:$0xff]
    %v8379 = vld [vmem:[#allocation51 + $0x30] sm:$0xff]
    %v8380 = vld [vmem:[#allocation51 + $0x38] sm:$0xff]
    %v8381 = vld [vmem:[#allocation53] sm:$0x1]
    %v8383 = vlaneseq
    %v8384 = vshrl.u32 %v8383, 7
    %v8385 = vsub.s32 0, %v8384
    %v8386 = vrot.slane %v8381, %v8385
    %vm8390 = vcmask 1041409
    %v8391 = vsel %vm8390, %v8372, %v8371
    %v8392 = vsel %vm583, %v8391, 0
    %8394 = vmatprep.subr.mxu0 0.0
    %8395 = vmatpush1.msra.mxu0 %v8373
    %8396 = vmatprep.subr.mxu0 0.0
    %8397 = vmatpush1.msra.mxu0 %v8374
    %8398 = vmatprep.subr.mxu0 0.0
    %8399 = vmatpush1.msra.mxu0 %v8375
    %8400 = vmatprep.subr.mxu0 0.0
    %8401 = vmatpush1.msra.mxu0 %v8376
    %8402 = vmatprep.subr.mxu0 0.0
    %8403 = vmatpush1.msra.mxu0 %v8377
    %8404 = vmatprep.subr.mxu0 0.0
    %8405 = vmatpush1.msra.mxu0 %v8378
    %8406 = vmatprep.subr.mxu0 0.0
    %8407 = vmatpush1.msra.mxu0 %v8379
    %8408 = vmatprep.subr.mxu0 0.0
    %8409 = vmatpush1.msra.mxu0 %v8380
    %8410 = vmatprep.subr.mxu0 0.0
    %8411 = vmatpush1.msra.mxu0 0.0
    %8412 = vmatprep.subr.mxu0 0.0
    %8413 = vmatpush1.msra.mxu0 0.0
    %8414 = vmatprep.subr.mxu0 0.0
    %8415 = vmatpush1.msra.mxu0 0.0
    %8416 = vmatprep.subr.mxu0 0.0
    %8417 = vmatpush1.msra.mxu0 0.0
    %8418 = vmatprep.subr.mxu0 0.0
    %8419 = vmatpush1.msra.mxu0 0.0
    %8420 = vmatprep.subr.mxu0 0.0
    %8421 = vmatpush1.msra.mxu0 0.0
    %8422 = vmatprep.subr.mxu0 0.0
    %8423 = vmatpush1.msra.mxu0 0.0
    %8424 = vmatprep.subr.mxu0 0.0
    %8425 = vmatpush1.msra.mxu0 0.0
    %8426 = vmatprep.subr.mxu0 0.0
    %8427 = vmatpush1.msra.mxu0 0.0
    %8428 = vmatprep.subr.mxu0 0.0
    %8429 = vmatpush1.msra.mxu0 0.0
    %8430 = vmatprep.subr.mxu0 0.0
    %8431 = vmatpush1.msra.mxu0 0.0
    %8432 = vmatprep.subr.mxu0 0.0
    %8433 = vmatpush1.msra.mxu0 0.0
    %8434 = vmatprep.subr.mxu0 0.0
    %8435 = vmatpush1.msra.mxu0 0.0
    %8436 = vmatprep.subr.mxu0 0.0
    %8437 = vmatpush1.msra.mxu0 0.0
    %8438 = vmatprep.subr.mxu0 0.0
    %8439 = vmatpush1.msra.mxu0 0.0
    %8440 = vmatprep.subr.mxu0 0.0
    %8441 = vmatpush1.msra.mxu0 0.0
    %8442 = vmatprep.subr.mxu0 0.0
    %8443 = vmatpush1.msra.mxu0 0.0
    %8444 = vmatprep.subr.mxu0 0.0
    %8445 = vmatpush1.msra.mxu0 0.0
    %8446 = vmatprep.subr.mxu0 0.0
    %8447 = vmatpush1.msra.mxu0 0.0
    %8448 = vmatprep.subr.mxu0 0.0
    %8449 = vmatpush1.msra.mxu0 0.0
    %8450 = vmatprep.subr.mxu0 0.0
    %8451 = vmatpush1.msra.mxu0 0.0
    %8452 = vmatprep.subr.mxu0 0.0
    %8453 = vmatpush1.msra.mxu0 0.0
    %8454 = vmatprep.subr.mxu0 0.0
    %8455 = vmatpush1.msra.mxu0 0.0
    %8456 = vmatprep.subr.mxu0 0.0
    %8457 = vmatpush1.msra.mxu0 0.0
    %8458 = vmatprep.mubr.f32.mxu0 0.0
    %8459 = vmatmul.mubr.f32.gmra.mrb[0].mxu0 %v8392
    %v8460 = vpop.f32.mrb[0].mxu0
    %v8461 = vadd.f32 %v8386, %v8460
    %v8462 = vpop.f32.mrb[0].mxu0
    %8463 = vdwg.mxu0
    %vm8464 = vcmask 25600
    %8465 = vst.msk [vmem:[#allocation54] sm:$0x3] %vm8464, %v8461
    // Predicated region
    $region266: #{heart_sound_forward.1} parent=1 // pred_check
      _
    $region267: #{heart_sound_forward.1} parent=1 // pred_check_branch
      %8467 = sbr.rel (0) target = $region269
    $region268: #{heart_sound_forward.1} parent=1 // pred_region
      %s8469 = ssub.s32 32, 32
      %8470 = vsyncadd [#allocation5], %s8469
      %s8472 = sshll.u32 [#allocation54], 4
      %s8473 = int_to_ptr.vmem [resolvable:$true] %s8472
      %8475 = dma.vmem_to_hbm [thread:$0]  %s8473, 32, %s67, [#allocation5]
    $region269: #{heart_sound_forward.1} parent=1 // pred_fallthru
      _
    // Predicated region
    $region270: #{heart_sound_forward.1} parent=1 // pred_check
      _
    $region271: #{heart_sound_forward.1} parent=1 // pred_check_branch
      %8477 = sbr.rel (0) target = $region273
    $region272: #{heart_sound_forward.1} parent=1 // pred_region
      %8478 = dma.done [#allocation5], 32
    $region273: #{heart_sound_forward.1} parent=1 // pred_fallthru
      _
    %8479 = vsyncpa [#allocation4], 1
    %8480 = vsyncpa [#allocation7], 1
    %8481 = vsyncpa [#allocation10], 1
    %8482 = vsyncpa [#allocation13], 1
    %8483 = vsyncpa [#allocation16], 1
    %8484 = vsyncpa [#allocation19], 1
    %8485 = vsyncpa [#allocation22], 1
    %8486 = vsyncpa [#allocation25], 1
    %8487 = vsyncpa [#allocation28], 1
    %8488 = vsyncpa [#allocation31], 1
    %8489 = vsyncpa [#allocation34], 1
    %8490 = vsyncpa [#allocation37], 1
    %8491 = vsyncpa [#allocation40], 1
    %8492 = vsyncpa [#allocation43], 1
    %8493 = vsyncpa [#allocation46], 1
    %8494 = vsyncpa [#allocation49], 1
    %8495 = vsyncpa [#allocation52], 1
    %8496 = vsyncpa [#allocation5], 1

</llo_original>
